<compile_context>
chip_gen: v7x
topology: tpu7x:2x2x1
jax: 0.10.0
libtpu: 0.0.40
codegen_flags: <defaults>
</compile_context>

<pallas_src>
import jax
import jax.numpy as jnp
from jax.experimental import pallas as pl
from jax.experimental.pallas import tpu as pltpu

# ---- model hyperparameters (from the PyTorch module) ----------------------
X_CRIME_INPUT_DIM = 12
X_CRIME_SEQ_LEN = 10
X_DAILY_INPUT_DIM = 20
X_WEEKLY_INPUT_DIM = 3
MODEL_DIM = 64          # transformer_dim
NUM_HEADS = 4
HEAD_DIM = MODEL_DIM // NUM_HEADS
FF_DIM = 128
NUM_LAYERS = 2
FC1_DIM = 128
LN_EPS = 1e-5

DEFAULT_BATCH_TILE = 8    # MT = 80 activation rows/tile; 42 -> 48 padded -> 6 grid steps


def _layer_norm_2d(x, w, b):
    """Fused single-pass LayerNorm over the last axis (f32). x:(M,D), w/b:(1,D)."""
    mu = jnp.mean(x, axis=-1, keepdims=True)
    var = jnp.mean(x * x, axis=-1, keepdims=True) - mu * mu
    return (x - mu) * jax.lax.rsqrt(var + LN_EPS) * w + b


def _aist_kernel(
    # batch-tiled inputs (streamed)
    xc_ref,      # (MT, 12)  f32  crime sequence rows for this batch tile (BT*S rows)
    xdw_ref,     # (BT, 23)  f32  [daily | weekly] inputs
    # VMEM-resident constants (constant index maps)
    pepb_ref,    # (MT, 64)  f32  tiled positional encoding + input-proj bias
    pool_ref,    # (BT, MT)  bf16 mean-over-sequence pooling matrix (entries 1/S)
    bdmadd_ref,  # (MT, MT)  f32  additive block-diagonal attention mask (0 / -1e9)
    hmask_ref,   # (H, 1, 64) f32 per-head lane mask * 1/sqrt(head_dim)
    pw_ref,      # (12, 64)  bf16 input projection
    qkvo_w_ref,  # (L, 64, 384) bf16  [Q | K | Wv_h@Wo_h per head] fused weights
    qkvo_b_ref,  # (L, 1, 384)  f32   matching biases
    ob_ref,      # (L, 1, 64)   f32   attention out-proj bias
    ln1w_ref, ln1b_ref,   # (L,1,64) f32
    l1w_ref, l1b_ref,     # (L,64,128) bf16, (L,1,128) f32
    l2w_ref, l2b_ref,     # (L,128,64) bf16, (L,1,64)  f32
    ln2w_ref, ln2b_ref,   # (L,1,64) f32
    dww_ref, dwb_ref,     # (23,128) bf16, (1,128) f32  block-diag daily/weekly MLP
    f1c_ref, f1dw_ref, f1b_ref,   # (64,128) bf16, (128,128) bf16, (1,128) f32
    f2w_ref, f2b_ref,     # (128,1) bf16, (1,1) f32
    # output
    out_ref,              # (BT, 1) f32
):
    f32 = jnp.float32
    bf16 = jnp.bfloat16
    bdm_add = bdmadd_ref[...]

    # ---- crime transformer: activations as (MT, 64) 2-D slabs ------------------
    h = jnp.dot(xc_ref[...].astype(bf16), pw_ref[...],
                preferred_element_type=f32) + pepb_ref[...]

    for l in range(NUM_LAYERS):
        # fused Q/K/(V@O) projection: one wide (MT,64)x(64,384) MXU matmul
        h16 = h.astype(bf16)
        qkv = jnp.dot(h16, qkvo_w_ref[l], preferred_element_type=f32) + qkvo_b_ref[l]
        q = qkv[:, :MODEL_DIM]                                       # (MT, 64) f32
        k16 = qkv[:, MODEL_DIM:2 * MODEL_DIM].astype(bf16)           # (MT, 64) bf16

        attn = jnp.zeros_like(h)
        for hh in range(NUM_HEADS):
            # per-head value projection with the attention out-projection folded in
            vt16 = qkv[:, (2 + hh) * MODEL_DIM:(3 + hh) * MODEL_DIM].astype(bf16)
            # head selection by lane mask on Q; 1/sqrt(head_dim) is folded in the mask
            qm16 = (q * hmask_ref[hh]).astype(bf16)                  # (MT, 64) bf16
            # dense block-diagonal attention scores (masked lanes contribute 0)
            s = jax.lax.dot_general(qm16, k16, (((1,), (1,)), ((), ())),
                                    preferred_element_type=f32)      # (MT, MT) f32
            s = s + bdm_add                                          # additive mask first
            s = s - jnp.max(s, axis=-1, keepdims=True)
            p = jnp.exp(s)                                           # off-block -> 0
            inv = pl.reciprocal(jnp.sum(p, axis=-1, keepdims=True), approx=True)
            ctx = jnp.dot(p.astype(bf16), vt16, preferred_element_type=f32)  # (MT,64)
            attn = attn + ctx * inv                                  # deferred normalization

        h = _layer_norm_2d(h + attn + ob_ref[l], ln1w_ref[l], ln1b_ref[l])

        # feed-forward
        ff = jnp.maximum(
            jnp.dot(h.astype(bf16), l1w_ref[l], preferred_element_type=f32)
            + l1b_ref[l], 0.0)
        ff = jnp.dot(ff.astype(bf16), l2w_ref[l],
                     preferred_element_type=f32) + l2b_ref[l]
        h = _layer_norm_2d(h + ff, ln2w_ref[l], ln2b_ref[l])

    # mean over the sequence, expressed as a tiny 2-D matmul (no in-kernel reshape)
    crime = jnp.dot(pool_ref[...], h.astype(bf16),
                    preferred_element_type=f32)                      # (BT, 64)

    # daily/weekly MLPs fused into one block-diagonal matmul -> [relu(daily)|relu(weekly)]
    dwfeat = jnp.maximum(
        jnp.dot(xdw_ref[...].astype(bf16), dww_ref[...],
                preferred_element_type=f32) + dwb_ref[...], 0.0)     # (BT, 128)

    # fusion head without concatenation: fc1 split into per-source slabs
    z = jnp.maximum(
        jnp.dot(crime.astype(bf16), f1c_ref[...], preferred_element_type=f32)
        + jnp.dot(dwfeat.astype(bf16), f1dw_ref[...], preferred_element_type=f32)
        + f1b_ref[...], 0.0)                                         # (BT, 128)

    out_ref[...] = (jnp.dot(z.astype(bf16), f2w_ref[...],
                            preferred_element_type=f32) + f2b_ref[...])  # (BT, 1)


def aist_forward(x_crime, x_crime_daily, x_crime_weekly, params,
                 batch_tile=DEFAULT_BATCH_TILE):
    """Batch-tiled Pallas forward. Host side only does layout prep + padding."""
    (pw, pb, pe, inw, inb, ow, ob, ln1w, ln1b, l1w, l1b, l2w, l2b, ln2w, ln2b,
     dw, db, ww, wb, f1w, f1b, f2w, f2b) = params

    f32 = jnp.float32
    bf16 = jnp.bfloat16
    B = x_crime.shape[0]
    S = X_CRIME_SEQ_LEN
    bt = batch_tile
    n_tiles = pl.cdiv(B, bt)
    b_pad = n_tiles * bt
    mt = bt * S
    pad = b_pad - B

    # ---- inputs: pad batch to a tile multiple, fold B*S for the crime branch ----
    xc = jnp.pad(x_crime.astype(f32), ((0, pad), (0, 0)))
    xc = xc.reshape(b_pad * S, X_CRIME_INPUT_DIM)                    # (b_pad*S, 12)
    xdw = jnp.pad(
        jnp.concatenate([x_crime_daily.astype(f32), x_crime_weekly.astype(f32)],
                        axis=-1),
        ((0, pad), (0, 0)))                                          # (b_pad, 23)

    # ---- host-side weight / constant preparation (layout plumbing off-kernel) ---
    pepb = jnp.tile(pe + pb, (bt, 1)).astype(f32)                    # (mt, 64)
    seq_id = jnp.arange(mt) // S
    bdm_add = jnp.where(seq_id[:, None] == seq_id[None, :],
                        0.0, -1e9).astype(f32)                       # (mt, mt)
    pool = ((jnp.arange(bt)[:, None] == seq_id[None, :]).astype(f32) / S
            ).astype(bf16)                                           # (bt, mt)
    lane = jnp.arange(MODEL_DIM) // HEAD_DIM
    scale = float(HEAD_DIM) ** -0.5
    hmask = jnp.stack([((lane == h).astype(f32) * scale)[None, :]
                       for h in range(NUM_HEADS)])                   # (H, 1, 64)

    # Fused per-layer [ Q | K | Wv_h @ Wo_h (per head) ] -> one (64, 384) weight.
    #   (P_h @ V_h) @ Wo_h == P_h @ (x @ (Wv_h @ Wo_h) + bv_h @ Wo_h)
    qkvo_w_list, qkvo_b_list = [], []
    for l in range(NUM_LAYERS):
        wv, bv = inw[l, 2], inb[l, 2]
        vo_w = [wv[:, h * HEAD_DIM:(h + 1) * HEAD_DIM]
                @ ow[l, h * HEAD_DIM:(h + 1) * HEAD_DIM, :] for h in range(NUM_HEADS)]
        vo_b = [bv[:, h * HEAD_DIM:(h + 1) * HEAD_DIM]
                @ ow[l, h * HEAD_DIM:(h + 1) * HEAD_DIM, :] for h in range(NUM_HEADS)]
        qkvo_w_list.append(jnp.concatenate([inw[l, 0], inw[l, 1]] + vo_w, axis=-1))
        qkvo_b_list.append(jnp.concatenate([inb[l, 0], inb[l, 1]] + vo_b, axis=-1))
    qkvo_w = jnp.stack(qkvo_w_list).astype(bf16)                     # (L, 64, 384)
    qkvo_b = jnp.stack(qkvo_b_list).astype(f32)                      # (L, 1, 384)

    # daily/weekly fused into a block-diagonal (23, 128) weight
    dww = jnp.zeros((X_DAILY_INPUT_DIM + X_WEEKLY_INPUT_DIM, 2 * MODEL_DIM), f32)
    dww = dww.at[:X_DAILY_INPUT_DIM, :MODEL_DIM].set(dw)
    dww = dww.at[X_DAILY_INPUT_DIM:, MODEL_DIM:].set(ww)
    dwb = jnp.concatenate([db, wb], axis=-1)                         # (1, 128)
    f1c, f1dw = f1w[:MODEL_DIM], f1w[MODEL_DIM:]                     # (64,128),(128,128)

    consts = [pepb, pool, bdm_add, hmask, pw.astype(bf16),
              qkvo_w, qkvo_b, ob,
              ln1w, ln1b, l1w.astype(bf16), l1b, l2w.astype(bf16), l2b, ln2w, ln2b,
              dww.astype(bf16), dwb, f1c.astype(bf16), f1dw.astype(bf16), f1b,
              f2w.astype(bf16), f2b]

    def const_spec(a):
        # full-array block, constant index map -> DMA'd once, VMEM-resident
        return pl.BlockSpec(a.shape, lambda i, nd=a.ndim: (0,) * nd)

    in_specs = (
        [pl.BlockSpec((mt, X_CRIME_INPUT_DIM), lambda i: (i, 0)),
         pl.BlockSpec((bt, X_DAILY_INPUT_DIM + X_WEEKLY_INPUT_DIM),
                      lambda i: (i, 0))]
        + [const_spec(a) for a in consts])

    # advisory cost estimate (includes the block-diagonal attention inflation)
    flops_tile = (
        2 * mt * X_CRIME_INPUT_DIM * MODEL_DIM
        + NUM_LAYERS * (2 * mt * MODEL_DIM * 6 * MODEL_DIM           # fused qkvo
                        + NUM_HEADS * 4 * mt * mt * MODEL_DIM        # scores + context
                        + 4 * mt * MODEL_DIM * FF_DIM)               # feed-forward
        + 2 * bt * mt * MODEL_DIM
        + 2 * bt * ((X_DAILY_INPUT_DIM + X_WEEKLY_INPUT_DIM) * 2 * MODEL_DIM
                    + 3 * MODEL_DIM * FC1_DIM + FC1_DIM))
    cost = pl.CostEstimate(
        flops=int(n_tiles * flops_tile),
        transcendentals=int(n_tiles * NUM_LAYERS * NUM_HEADS * (mt * mt + mt)),
        bytes_accessed=int(4 * b_pad * (S * X_CRIME_INPUT_DIM + 24)
                           + sum(int(a.size) * a.dtype.itemsize for a in consts)))

    out = pl.pallas_call(
        _aist_kernel,
        out_shape=jax.ShapeDtypeStruct((b_pad, 1), f32),
        grid=(n_tiles,),
        in_specs=in_specs,
        out_specs=pl.BlockSpec((bt, 1), lambda i: (i, 0)),
        compiler_params=pltpu.CompilerParams(
            dimension_semantics=("parallel",)),
        cost_estimate=cost,
    )(xc, xdw, *consts)

    return out[:B]


# --------------------------- parameter init ---------------------------------
def init_params(key):
    ks = iter(jax.random.split(key, 64))

    def w(shape, scale=0.05):
        return (scale * jax.random.normal(next(ks), shape)).astype(jnp.float32)

    def b(shape, scale=0.01):
        return (scale * jax.random.normal(next(ks), shape)).astype(jnp.float32)

    def ln_w():
        return (1.0 + 0.05 * jax.random.normal(next(ks), (1, MODEL_DIM))
                ).astype(jnp.float32)

    pw = w((X_CRIME_INPUT_DIM, MODEL_DIM))
    pb = b((1, MODEL_DIM))
    pe = w((X_CRIME_SEQ_LEN, MODEL_DIM), scale=0.02)

    def stack(fn):
        return jnp.stack([fn() for _ in range(NUM_LAYERS)], axis=0)

    inw = stack(lambda: jnp.stack([w((MODEL_DIM, MODEL_DIM)) for _ in range(3)]))
    inb = stack(lambda: jnp.stack([b((1, MODEL_DIM)) for _ in range(3)]))
    ow = stack(lambda: w((MODEL_DIM, MODEL_DIM)))
    ob = stack(lambda: b((1, MODEL_DIM)))
    ln1w = stack(ln_w)
    ln1b = stack(lambda: b((1, MODEL_DIM)))
    l1w = stack(lambda: w((MODEL_DIM, FF_DIM)))
    l1b = stack(lambda: b((1, FF_DIM)))
    l2w = stack(lambda: w((FF_DIM, MODEL_DIM)))
    l2b = stack(lambda: b((1, MODEL_DIM)))
    ln2w = stack(ln_w)
    ln2b = stack(lambda: b((1, MODEL_DIM)))

    dw = w((X_DAILY_INPUT_DIM, MODEL_DIM))
    db = b((1, MODEL_DIM))
    ww = w((X_WEEKLY_INPUT_DIM, MODEL_DIM))
    wb = b((1, MODEL_DIM))
    f1w = w((3 * MODEL_DIM, FC1_DIM))
    f1b = b((1, FC1_DIM))
    f2w = w((FC1_DIM, 1))
    f2b = b((1, 1))

    return (pw, pb, pe, inw, inb, ow, ob, ln1w, ln1b, l1w, l1b, l2w, l2b,
            ln2w, ln2b, dw, db, ww, wb, f1w, f1b, f2w, f2b)


# --------------------------- pure-JAX reference ------------------------------
def reference_forward(x_crime, x_daily, x_weekly, params):
    (pw, pb, pe, inw, inb, ow, ob, ln1w, ln1b, l1w, l1b, l2w, l2b, ln2w, ln2b,
     dw, db, ww, wb, f1w, f1b, f2w, f2b) = params
    B = x_crime.shape[0]
    x = x_crime.reshape(B, X_CRIME_SEQ_LEN, X_CRIME_INPUT_DIM).astype(jnp.float32)
    h = jnp.einsum("bsi,io->bso", x, pw) + pb[None] + pe[None]

    def ln(y, wgt, bias):
        mu = y.mean(-1, keepdims=True)
        var = ((y - mu) ** 2).mean(-1, keepdims=True)
        return (y - mu) * jax.lax.rsqrt(var + LN_EPS) * wgt[None] + bias[None]

    for l in range(NUM_LAYERS):
        q = jnp.einsum("bsd,de->bse", h, inw[l, 0]) + inb[l, 0][None]
        k = jnp.einsum("bsd,de->bse", h, inw[l, 1]) + inb[l, 1][None]
        v = jnp.einsum("bsd,de->bse", h, inw[l, 2]) + inb[l, 2][None]
        qh = q.reshape(B, X_CRIME_SEQ_LEN, NUM_HEADS, HEAD_DIM)
        kh = k.reshape(B, X_CRIME_SEQ_LEN, NUM_HEADS, HEAD_DIM)
        vh = v.reshape(B, X_CRIME_SEQ_LEN, NUM_HEADS, HEAD_DIM)
        s = jnp.einsum("bqhd,bkhd->bhqk", qh, kh) / jnp.sqrt(jnp.float32(HEAD_DIM))
        p = jax.nn.softmax(s, axis=-1)
        a = jnp.einsum("bhqk,bkhd->bqhd", p, vh).reshape(B, X_CRIME_SEQ_LEN, MODEL_DIM)
        a = jnp.einsum("bsd,de->bse", a, ow[l]) + ob[l][None]
        h = ln(h + a, ln1w[l], ln1b[l])
        ff = jax.nn.relu(jnp.einsum("bsd,de->bse", h, l1w[l]) + l1b[l][None])
        ff = jnp.einsum("bsd,de->bse", ff, l2w[l]) + l2b[l][None]
        h = ln(h + ff, ln2w[l], ln2b[l])

    crime = h.mean(axis=1)
    daily = jax.nn.relu(x_daily.astype(jnp.float32) @ dw + db)
    weekly = jax.nn.relu(x_weekly.astype(jnp.float32) @ ww + wb)
    comb = jnp.concatenate([crime, daily, weekly], axis=-1)
    z = jax.nn.relu(comb @ f1w + f1b)
    return z @ f2w + f2b


if __name__ == "__main__":
    key = jax.random.PRNGKey(0)
    k_in, k_par = jax.random.split(key)
    k1, k2, k3 = jax.random.split(k_in, 3)

    batch_size = 42   # as in the reference spec; padded to the 8-row batch tile
    x_crime = jax.random.uniform(
        k1, (batch_size, X_CRIME_SEQ_LEN * X_CRIME_INPUT_DIM), dtype=jnp.float32)
    x_crime_daily = jax.random.uniform(
        k2, (batch_size, X_DAILY_INPUT_DIM), dtype=jnp.float32)
    x_crime_weekly = jax.random.uniform(
        k3, (batch_size, X_WEEKLY_INPUT_DIM), dtype=jnp.float32)

    params = init_params(k_par)

    out = aist_forward(x_crime, x_crime_daily, x_crime_weekly, params)
    out = jax.block_until_ready(out)
    assert out.shape == (batch_size, 1), out.shape

    ref = reference_forward(x_crime, x_crime_daily, x_crime_weekly, params)
    # bf16 MXU operands + approx reciprocal -> validate against an f32 reference
    # with a bf16-appropriate tolerance.
    assert jnp.allclose(out, ref, rtol=1e-2, atol=1e-2), (
        float(jnp.max(jnp.abs(out - ref))))

    print("KERNEL_OK")
</pallas_src>

<mosaic_0001>
module attributes {stable_mosaic.version = 11 : i64} {
  func.func @_aist_kernel(%arg0: i32, %arg1: memref<80x12xf32, #tpu.memory_space<vmem>>, %arg2: memref<8x23xf32, #tpu.memory_space<vmem>>, %arg3: memref<80x64xf32, #tpu.memory_space<vmem>>, %arg4: memref<8x80xbf16, #tpu.memory_space<vmem>>, %arg5: memref<80x80xf32, #tpu.memory_space<vmem>>, %arg6: memref<4x1x64xf32, #tpu.memory_space<vmem>>, %arg7: memref<12x64xbf16, #tpu.memory_space<vmem>>, %arg8: memref<2x64x384xbf16, #tpu.memory_space<vmem>>, %arg9: memref<2x1x384xf32, #tpu.memory_space<vmem>>, %arg10: memref<2x1x64xf32, #tpu.memory_space<vmem>>, %arg11: memref<2x1x64xf32, #tpu.memory_space<vmem>>, %arg12: memref<2x1x64xf32, #tpu.memory_space<vmem>>, %arg13: memref<2x64x128xbf16, #tpu.memory_space<vmem>>, %arg14: memref<2x1x128xf32, #tpu.memory_space<vmem>>, %arg15: memref<2x128x64xbf16, #tpu.memory_space<vmem>>, %arg16: memref<2x1x64xf32, #tpu.memory_space<vmem>>, %arg17: memref<2x1x64xf32, #tpu.memory_space<vmem>>, %arg18: memref<2x1x64xf32, #tpu.memory_space<vmem>>, %arg19: memref<23x128xbf16, #tpu.memory_space<vmem>>, %arg20: memref<1x128xf32, #tpu.memory_space<vmem>>, %arg21: memref<64x128xbf16, #tpu.memory_space<vmem>>, %arg22: memref<128x128xbf16, #tpu.memory_space<vmem>>, %arg23: memref<1x128xf32, #tpu.memory_space<vmem>>, %arg24: memref<128x1xbf16, #tpu.memory_space<vmem>>, %arg25: memref<1x1xf32, #tpu.memory_space<vmem>>, %arg26: memref<8x1xf32, #tpu.memory_space<vmem>>) attributes {dimension_semantics = [#tpu.dimension_semantics<parallel>], iteration_bounds = array<i64: 6>, scalar_prefetch = 0 : i64, scratch_operands = 0 : i64, tpu.core_type = #tpu.core_type<tc>, window_params = [{transform_indices = @transform_0, window_bounds = array<i64: 80, 12>}, {transform_indices = @transform_1, window_bounds = array<i64: 8, 23>}, {pipeline_mode = #tpu.pipeline_mode<synchronous>, transform_indices = @transform_2, window_bounds = array<i64: 80, 64>}, {pipeline_mode = #tpu.pipeline_mode<synchronous>, transform_indices = @transform_3, window_bounds = array<i64: 8, 80>}, {pipeline_mode = #tpu.pipeline_mode<synchronous>, transform_indices = @transform_4, window_bounds = array<i64: 80, 80>}, {pipeline_mode = #tpu.pipeline_mode<synchronous>, transform_indices = @transform_5, window_bounds = array<i64: 4, 1, 64>}, {pipeline_mode = #tpu.pipeline_mode<synchronous>, transform_indices = @transform_6, window_bounds = array<i64: 12, 64>}, {pipeline_mode = #tpu.pipeline_mode<synchronous>, transform_indices = @transform_7, window_bounds = array<i64: 2, 64, 384>}, {pipeline_mode = #tpu.pipeline_mode<synchronous>, transform_indices = @transform_8, window_bounds = array<i64: 2, 1, 384>}, {pipeline_mode = #tpu.pipeline_mode<synchronous>, transform_indices = @transform_9, window_bounds = array<i64: 2, 1, 64>}, {pipeline_mode = #tpu.pipeline_mode<synchronous>, transform_indices = @transform_10, window_bounds = array<i64: 2, 1, 64>}, {pipeline_mode = #tpu.pipeline_mode<synchronous>, transform_indices = @transform_11, window_bounds = array<i64: 2, 1, 64>}, {pipeline_mode = #tpu.pipeline_mode<synchronous>, transform_indices = @transform_12, window_bounds = array<i64: 2, 64, 128>}, {pipeline_mode = #tpu.pipeline_mode<synchronous>, transform_indices = @transform_13, window_bounds = array<i64: 2, 1, 128>}, {pipeline_mode = #tpu.pipeline_mode<synchronous>, transform_indices = @transform_14, window_bounds = array<i64: 2, 128, 64>}, {pipeline_mode = #tpu.pipeline_mode<synchronous>, transform_indices = @transform_15, window_bounds = array<i64: 2, 1, 64>}, {pipeline_mode = #tpu.pipeline_mode<synchronous>, transform_indices = @transform_16, window_bounds = array<i64: 2, 1, 64>}, {pipeline_mode = #tpu.pipeline_mode<synchronous>, transform_indices = @transform_17, window_bounds = array<i64: 2, 1, 64>}, {pipeline_mode = #tpu.pipeline_mode<synchronous>, transform_indices = @transform_18, window_bounds = array<i64: 23, 128>}, {pipeline_mode = #tpu.pipeline_mode<synchronous>, transform_indices = @transform_19, window_bounds = array<i64: 1, 128>}, {pipeline_mode = #tpu.pipeline_mode<synchronous>, transform_indices = @transform_20, window_bounds = array<i64: 64, 128>}, {pipeline_mode = #tpu.pipeline_mode<synchronous>, transform_indices = @transform_21, window_bounds = array<i64: 128, 128>}, {pipeline_mode = #tpu.pipeline_mode<synchronous>, transform_indices = @transform_22, window_bounds = array<i64: 1, 128>}, {pipeline_mode = #tpu.pipeline_mode<synchronous>, transform_indices = @transform_23, window_bounds = array<i64: 128, 1>}, {pipeline_mode = #tpu.pipeline_mode<synchronous>, transform_indices = @transform_24, window_bounds = array<i64: 1, 1>}, {transform_indices = @transform_25, window_bounds = array<i64: 8, 1>}]} {
    %c0 = arith.constant 0 : index
    %c0_0 = arith.constant 0 : index
    %0 = vector.load %arg5[%c0, %c0_0] : memref<80x80xf32, #tpu.memory_space<vmem>>, vector<80x80xf32>
    %c0_1 = arith.constant 0 : index
    %c0_2 = arith.constant 0 : index
    %1 = vector.load %arg1[%c0_1, %c0_2] : memref<80x12xf32, #tpu.memory_space<vmem>>, vector<80x12xf32>
    %2 = arith.truncf %1 : vector<80x12xf32> to vector<80x12xbf16>
    %c0_3 = arith.constant 0 : index
    %c0_4 = arith.constant 0 : index
    %3 = vector.load %arg7[%c0_3, %c0_4] : memref<12x64xbf16, #tpu.memory_space<vmem>>, vector<12x64xbf16>
    %cst = arith.constant dense<0.000000e+00> : vector<80x64xf32>
    %4 = tpu.matmul %2, %3, %cst {dimension_numbers = #tpu.dot_dimension_numbers<[1], [0], [0], [1], [0, 0, 1, 1], [], []>} : vector<80x12xbf16>, vector<12x64xbf16>, vector<80x64xf32> -> vector<80x64xf32>
    %c0_5 = arith.constant 0 : index
    %c0_6 = arith.constant 0 : index
    %5 = vector.load %arg3[%c0_5, %c0_6] : memref<80x64xf32, #tpu.memory_space<vmem>>, vector<80x64xf32>
    %6 = arith.addf %4, %5 : vector<80x64xf32>
    %7 = arith.truncf %6 : vector<80x64xf32> to vector<80x64xbf16>
    %c0_7 = arith.constant 0 : index
    %c0_8 = arith.constant 0 : index
    %c0_9 = arith.constant 0 : index
    %8 = vector.load %arg8[%c0_7, %c0_8, %c0_9] : memref<2x64x384xbf16, #tpu.memory_space<vmem>>, vector<1x64x384xbf16>
    %9 = vector.shape_cast %8 : vector<1x64x384xbf16> to vector<64x384xbf16>
    %cst_10 = arith.constant dense<0.000000e+00> : vector<80x384xf32>
    %10 = tpu.matmul %7, %9, %cst_10 {dimension_numbers = #tpu.dot_dimension_numbers<[1], [0], [0], [1], [0, 0, 1, 1], [], []>} : vector<80x64xbf16>, vector<64x384xbf16>, vector<80x384xf32> -> vector<80x384xf32>
    %c0_11 = arith.constant 0 : index
    %c0_12 = arith.constant 0 : index
    %c0_13 = arith.constant 0 : index
    %11 = vector.load %arg9[%c0_11, %c0_12, %c0_13] : memref<2x1x384xf32, #tpu.memory_space<vmem>>, vector<1x1x384xf32>
    %12 = vector.shape_cast %11 : vector<1x1x384xf32> to vector<1x384xf32>
    %13 = vector.broadcast %12 : vector<1x384xf32> to vector<80x384xf32>
    %14 = arith.addf %10, %13 : vector<80x384xf32>
    %15 = vector.extract_strided_slice %14 {offsets = [0, 0], sizes = [80, 64], strides = [1, 1]} : vector<80x384xf32> to vector<80x64xf32>
    %16 = vector.extract_strided_slice %14 {offsets = [0, 64], sizes = [80, 64], strides = [1, 1]} : vector<80x384xf32> to vector<80x64xf32>
    %17 = arith.truncf %16 : vector<80x64xf32> to vector<80x64xbf16>
    %cst_14 = arith.constant 0.000000e+00 : f32
    %18 = vector.broadcast %cst_14 : f32 to vector<80x64xf32>
    %19 = vector.extract_strided_slice %14 {offsets = [0, 128], sizes = [80, 64], strides = [1, 1]} : vector<80x384xf32> to vector<80x64xf32>
    %20 = arith.truncf %19 : vector<80x64xf32> to vector<80x64xbf16>
    %c0_15 = arith.constant 0 : index
    %c0_16 = arith.constant 0 : index
    %c0_17 = arith.constant 0 : index
    %21 = vector.load %arg6[%c0_15, %c0_16, %c0_17] : memref<4x1x64xf32, #tpu.memory_space<vmem>>, vector<1x1x64xf32>
    %22 = vector.shape_cast %21 : vector<1x1x64xf32> to vector<1x64xf32>
    %23 = vector.broadcast %22 : vector<1x64xf32> to vector<80x64xf32>
    %24 = arith.mulf %15, %23 : vector<80x64xf32>
    %25 = arith.truncf %24 : vector<80x64xf32> to vector<80x64xbf16>
    %cst_18 = arith.constant dense<0.000000e+00> : vector<80x80xf32>
    %26 = tpu.matmul %25, %17, %cst_18 {dimension_numbers = #tpu.dot_dimension_numbers<[1], [1], [0], [0], [0, 0, 1, 0], [], []>} : vector<80x64xbf16>, vector<80x64xbf16>, vector<80x80xf32> -> vector<80x80xf32>
    %27 = arith.addf %26, %0 : vector<80x80xf32>
    %cst_19 = arith.constant dense<0xFF800000> : vector<80xf32>
    %28 = vector.multi_reduction <maximumf>, %27, %cst_19 [1] : vector<80x80xf32> to vector<80xf32>
    %29 = vector.shape_cast %28 : vector<80xf32> to vector<80x1xf32>
    %30 = vector.broadcast %29 : vector<80x1xf32> to vector<80x80xf32>
    %31 = arith.subf %27, %30 : vector<80x80xf32>
    %32 = math.exp %31 : vector<80x80xf32>
    %cst_20 = arith.constant dense<0.000000e+00> : vector<80xf32>
    %33 = vector.multi_reduction <add>, %32, %cst_20 [1] : vector<80x80xf32> to vector<80xf32>
    %34 = vector.shape_cast %33 : vector<80xf32> to vector<80x1xf32>
    %35 = tpu.reciprocal %34 {approx = true} : vector<80x1xf32> -> vector<80x1xf32>
    %36 = arith.truncf %32 : vector<80x80xf32> to vector<80x80xbf16>
    %cst_21 = arith.constant dense<0.000000e+00> : vector<80x64xf32>
    %37 = tpu.matmul %36, %20, %cst_21 {dimension_numbers = #tpu.dot_dimension_numbers<[1], [0], [0], [1], [0, 0, 1, 1], [], []>} : vector<80x80xbf16>, vector<80x64xbf16>, vector<80x64xf32> -> vector<80x64xf32>
    %38 = vector.broadcast %35 : vector<80x1xf32> to vector<80x64xf32>
    %39 = arith.mulf %37, %38 : vector<80x64xf32>
    %40 = arith.addf %18, %39 : vector<80x64xf32>
    %41 = vector.extract_strided_slice %14 {offsets = [0, 192], sizes = [80, 64], strides = [1, 1]} : vector<80x384xf32> to vector<80x64xf32>
    %42 = arith.truncf %41 : vector<80x64xf32> to vector<80x64xbf16>
    %c1 = arith.constant 1 : index
    %c0_22 = arith.constant 0 : index
    %c0_23 = arith.constant 0 : index
    %43 = vector.load %arg6[%c1, %c0_22, %c0_23] : memref<4x1x64xf32, #tpu.memory_space<vmem>>, vector<1x1x64xf32>
    %44 = vector.shape_cast %43 : vector<1x1x64xf32> to vector<1x64xf32>
    %45 = vector.broadcast %44 : vector<1x64xf32> to vector<80x64xf32>
    %46 = arith.mulf %15, %45 : vector<80x64xf32>
    %47 = arith.truncf %46 : vector<80x64xf32> to vector<80x64xbf16>
    %cst_24 = arith.constant dense<0.000000e+00> : vector<80x80xf32>
    %48 = tpu.matmul %47, %17, %cst_24 {dimension_numbers = #tpu.dot_dimension_numbers<[1], [1], [0], [0], [0, 0, 1, 0], [], []>} : vector<80x64xbf16>, vector<80x64xbf16>, vector<80x80xf32> -> vector<80x80xf32>
    %49 = arith.addf %48, %0 : vector<80x80xf32>
    %cst_25 = arith.constant dense<0xFF800000> : vector<80xf32>
    %50 = vector.multi_reduction <maximumf>, %49, %cst_25 [1] : vector<80x80xf32> to vector<80xf32>
    %51 = vector.shape_cast %50 : vector<80xf32> to vector<80x1xf32>
    %52 = vector.broadcast %51 : vector<80x1xf32> to vector<80x80xf32>
    %53 = arith.subf %49, %52 : vector<80x80xf32>
    %54 = math.exp %53 : vector<80x80xf32>
    %cst_26 = arith.constant dense<0.000000e+00> : vector<80xf32>
    %55 = vector.multi_reduction <add>, %54, %cst_26 [1] : vector<80x80xf32> to vector<80xf32>
    %56 = vector.shape_cast %55 : vector<80xf32> to vector<80x1xf32>
    %57 = tpu.reciprocal %56 {approx = true} : vector<80x1xf32> -> vector<80x1xf32>
    %58 = arith.truncf %54 : vector<80x80xf32> to vector<80x80xbf16>
    %cst_27 = arith.constant dense<0.000000e+00> : vector<80x64xf32>
    %59 = tpu.matmul %58, %42, %cst_27 {dimension_numbers = #tpu.dot_dimension_numbers<[1], [0], [0], [1], [0, 0, 1, 1], [], []>} : vector<80x80xbf16>, vector<80x64xbf16>, vector<80x64xf32> -> vector<80x64xf32>
    %60 = vector.broadcast %57 : vector<80x1xf32> to vector<80x64xf32>
    %61 = arith.mulf %59, %60 : vector<80x64xf32>
    %62 = arith.addf %40, %61 : vector<80x64xf32>
    %63 = vector.extract_strided_slice %14 {offsets = [0, 256], sizes = [80, 64], strides = [1, 1]} : vector<80x384xf32> to vector<80x64xf32>
    %64 = arith.truncf %63 : vector<80x64xf32> to vector<80x64xbf16>
    %c2 = arith.constant 2 : index
    %c0_28 = arith.constant 0 : index
    %c0_29 = arith.constant 0 : index
    %65 = vector.load %arg6[%c2, %c0_28, %c0_29] : memref<4x1x64xf32, #tpu.memory_space<vmem>>, vector<1x1x64xf32>
    %66 = vector.shape_cast %65 : vector<1x1x64xf32> to vector<1x64xf32>
    %67 = vector.broadcast %66 : vector<1x64xf32> to vector<80x64xf32>
    %68 = arith.mulf %15, %67 : vector<80x64xf32>
    %69 = arith.truncf %68 : vector<80x64xf32> to vector<80x64xbf16>
    %cst_30 = arith.constant dense<0.000000e+00> : vector<80x80xf32>
    %70 = tpu.matmul %69, %17, %cst_30 {dimension_numbers = #tpu.dot_dimension_numbers<[1], [1], [0], [0], [0, 0, 1, 0], [], []>} : vector<80x64xbf16>, vector<80x64xbf16>, vector<80x80xf32> -> vector<80x80xf32>
    %71 = arith.addf %70, %0 : vector<80x80xf32>
    %cst_31 = arith.constant dense<0xFF800000> : vector<80xf32>
    %72 = vector.multi_reduction <maximumf>, %71, %cst_31 [1] : vector<80x80xf32> to vector<80xf32>
    %73 = vector.shape_cast %72 : vector<80xf32> to vector<80x1xf32>
    %74 = vector.broadcast %73 : vector<80x1xf32> to vector<80x80xf32>
    %75 = arith.subf %71, %74 : vector<80x80xf32>
    %76 = math.exp %75 : vector<80x80xf32>
    %cst_32 = arith.constant dense<0.000000e+00> : vector<80xf32>
    %77 = vector.multi_reduction <add>, %76, %cst_32 [1] : vector<80x80xf32> to vector<80xf32>
    %78 = vector.shape_cast %77 : vector<80xf32> to vector<80x1xf32>
    %79 = tpu.reciprocal %78 {approx = true} : vector<80x1xf32> -> vector<80x1xf32>
    %80 = arith.truncf %76 : vector<80x80xf32> to vector<80x80xbf16>
    %cst_33 = arith.constant dense<0.000000e+00> : vector<80x64xf32>
    %81 = tpu.matmul %80, %64, %cst_33 {dimension_numbers = #tpu.dot_dimension_numbers<[1], [0], [0], [1], [0, 0, 1, 1], [], []>} : vector<80x80xbf16>, vector<80x64xbf16>, vector<80x64xf32> -> vector<80x64xf32>
    %82 = vector.broadcast %79 : vector<80x1xf32> to vector<80x64xf32>
    %83 = arith.mulf %81, %82 : vector<80x64xf32>
    %84 = arith.addf %62, %83 : vector<80x64xf32>
    %85 = vector.extract_strided_slice %14 {offsets = [0, 320], sizes = [80, 64], strides = [1, 1]} : vector<80x384xf32> to vector<80x64xf32>
    %86 = arith.truncf %85 : vector<80x64xf32> to vector<80x64xbf16>
    %c3 = arith.constant 3 : index
    %c0_34 = arith.constant 0 : index
    %c0_35 = arith.constant 0 : index
    %87 = vector.load %arg6[%c3, %c0_34, %c0_35] : memref<4x1x64xf32, #tpu.memory_space<vmem>>, vector<1x1x64xf32>
    %88 = vector.shape_cast %87 : vector<1x1x64xf32> to vector<1x64xf32>
    %89 = vector.broadcast %88 : vector<1x64xf32> to vector<80x64xf32>
    %90 = arith.mulf %15, %89 : vector<80x64xf32>
    %91 = arith.truncf %90 : vector<80x64xf32> to vector<80x64xbf16>
    %cst_36 = arith.constant dense<0.000000e+00> : vector<80x80xf32>
    %92 = tpu.matmul %91, %17, %cst_36 {dimension_numbers = #tpu.dot_dimension_numbers<[1], [1], [0], [0], [0, 0, 1, 0], [], []>} : vector<80x64xbf16>, vector<80x64xbf16>, vector<80x80xf32> -> vector<80x80xf32>
    %93 = arith.addf %92, %0 : vector<80x80xf32>
    %cst_37 = arith.constant dense<0xFF800000> : vector<80xf32>
    %94 = vector.multi_reduction <maximumf>, %93, %cst_37 [1] : vector<80x80xf32> to vector<80xf32>
    %95 = vector.shape_cast %94 : vector<80xf32> to vector<80x1xf32>
    %96 = vector.broadcast %95 : vector<80x1xf32> to vector<80x80xf32>
    %97 = arith.subf %93, %96 : vector<80x80xf32>
    %98 = math.exp %97 : vector<80x80xf32>
    %cst_38 = arith.constant dense<0.000000e+00> : vector<80xf32>
    %99 = vector.multi_reduction <add>, %98, %cst_38 [1] : vector<80x80xf32> to vector<80xf32>
    %100 = vector.shape_cast %99 : vector<80xf32> to vector<80x1xf32>
    %101 = tpu.reciprocal %100 {approx = true} : vector<80x1xf32> -> vector<80x1xf32>
    %102 = arith.truncf %98 : vector<80x80xf32> to vector<80x80xbf16>
    %cst_39 = arith.constant dense<0.000000e+00> : vector<80x64xf32>
    %103 = tpu.matmul %102, %86, %cst_39 {dimension_numbers = #tpu.dot_dimension_numbers<[1], [0], [0], [1], [0, 0, 1, 1], [], []>} : vector<80x80xbf16>, vector<80x64xbf16>, vector<80x64xf32> -> vector<80x64xf32>
    %104 = vector.broadcast %101 : vector<80x1xf32> to vector<80x64xf32>
    %105 = arith.mulf %103, %104 : vector<80x64xf32>
    %106 = arith.addf %84, %105 : vector<80x64xf32>
    %107 = arith.addf %6, %106 : vector<80x64xf32>
    %c0_40 = arith.constant 0 : index
    %c0_41 = arith.constant 0 : index
    %c0_42 = arith.constant 0 : index
    %108 = vector.load %arg10[%c0_40, %c0_41, %c0_42] : memref<2x1x64xf32, #tpu.memory_space<vmem>>, vector<1x1x64xf32>
    %109 = vector.shape_cast %108 : vector<1x1x64xf32> to vector<1x64xf32>
    %110 = vector.broadcast %109 : vector<1x64xf32> to vector<80x64xf32>
    %111 = arith.addf %107, %110 : vector<80x64xf32>
    %c0_43 = arith.constant 0 : index
    %c0_44 = arith.constant 0 : index
    %c0_45 = arith.constant 0 : index
    %112 = vector.load %arg11[%c0_43, %c0_44, %c0_45] : memref<2x1x64xf32, #tpu.memory_space<vmem>>, vector<1x1x64xf32>
    %113 = vector.shape_cast %112 : vector<1x1x64xf32> to vector<1x64xf32>
    %c0_46 = arith.constant 0 : index
    %c0_47 = arith.constant 0 : index
    %c0_48 = arith.constant 0 : index
    %114 = vector.load %arg12[%c0_46, %c0_47, %c0_48] : memref<2x1x64xf32, #tpu.memory_space<vmem>>, vector<1x1x64xf32>
    %115 = vector.shape_cast %114 : vector<1x1x64xf32> to vector<1x64xf32>
    %cst_49 = arith.constant dense<0.000000e+00> : vector<80xf32>
    %116 = vector.multi_reduction <add>, %111, %cst_49 [1] : vector<80x64xf32> to vector<80xf32>
    %117 = vector.shape_cast %116 : vector<80xf32> to vector<80x1xf32>
    %cst_50 = arith.constant 6.400000e+01 : f32
    %118 = vector.broadcast %cst_50 : f32 to vector<80x1xf32>
    %119 = arith.divf %117, %118 : vector<80x1xf32>
    %120 = arith.mulf %111, %111 : vector<80x64xf32>
    %cst_51 = arith.constant dense<0.000000e+00> : vector<80xf32>
    %121 = vector.multi_reduction <add>, %120, %cst_51 [1] : vector<80x64xf32> to vector<80xf32>
    %122 = vector.shape_cast %121 : vector<80xf32> to vector<80x1xf32>
    %cst_52 = arith.constant 6.400000e+01 : f32
    %123 = vector.broadcast %cst_52 : f32 to vector<80x1xf32>
    %124 = arith.divf %122, %123 : vector<80x1xf32>
    %125 = arith.mulf %119, %119 : vector<80x1xf32>
    %126 = arith.subf %124, %125 : vector<80x1xf32>
    %127 = vector.broadcast %119 : vector<80x1xf32> to vector<80x64xf32>
    %128 = arith.subf %111, %127 : vector<80x64xf32>
    %cst_53 = arith.constant 9.99999974E-6 : f32
    %129 = vector.broadcast %cst_53 : f32 to vector<80x1xf32>
    %130 = arith.addf %126, %129 : vector<80x1xf32>
    %131 = math.rsqrt %130 : vector<80x1xf32>
    %132 = vector.broadcast %131 : vector<80x1xf32> to vector<80x64xf32>
    %133 = arith.mulf %128, %132 : vector<80x64xf32>
    %134 = vector.broadcast %113 : vector<1x64xf32> to vector<80x64xf32>
    %135 = arith.mulf %133, %134 : vector<80x64xf32>
    %136 = vector.broadcast %115 : vector<1x64xf32> to vector<80x64xf32>
    %137 = arith.addf %135, %136 : vector<80x64xf32>
    %138 = arith.truncf %137 : vector<80x64xf32> to vector<80x64xbf16>
    %c0_54 = arith.constant 0 : index
    %c0_55 = arith.constant 0 : index
    %c0_56 = arith.constant 0 : index
    %139 = vector.load %arg13[%c0_54, %c0_55, %c0_56] : memref<2x64x128xbf16, #tpu.memory_space<vmem>>, vector<1x64x128xbf16>
    %140 = vector.shape_cast %139 : vector<1x64x128xbf16> to vector<64x128xbf16>
    %cst_57 = arith.constant dense<0.000000e+00> : vector<80x128xf32>
    %141 = tpu.matmul %138, %140, %cst_57 {dimension_numbers = #tpu.dot_dimension_numbers<[1], [0], [0], [1], [0, 0, 1, 1], [], []>} : vector<80x64xbf16>, vector<64x128xbf16>, vector<80x128xf32> -> vector<80x128xf32>
    %c0_58 = arith.constant 0 : index
    %c0_59 = arith.constant 0 : index
    %c0_60 = arith.constant 0 : index
    %142 = vector.load %arg14[%c0_58, %c0_59, %c0_60] : memref<2x1x128xf32, #tpu.memory_space<vmem>>, vector<1x1x128xf32>
    %143 = vector.shape_cast %142 : vector<1x1x128xf32> to vector<1x128xf32>
    %144 = vector.broadcast %143 : vector<1x128xf32> to vector<80x128xf32>
    %145 = arith.addf %141, %144 : vector<80x128xf32>
    %cst_61 = arith.constant 0.000000e+00 : f32
    %146 = vector.broadcast %cst_61 : f32 to vector<80x128xf32>
    %147 = arith.maximumf %145, %146 : vector<80x128xf32>
    %148 = arith.truncf %147 : vector<80x128xf32> to vector<80x128xbf16>
    %c0_62 = arith.constant 0 : index
    %c0_63 = arith.constant 0 : index
    %c0_64 = arith.constant 0 : index
    %149 = vector.load %arg15[%c0_62, %c0_63, %c0_64] : memref<2x128x64xbf16, #tpu.memory_space<vmem>>, vector<1x128x64xbf16>
    %150 = vector.shape_cast %149 : vector<1x128x64xbf16> to vector<128x64xbf16>
    %cst_65 = arith.constant dense<0.000000e+00> : vector<80x64xf32>
    %151 = tpu.matmul %148, %150, %cst_65 {dimension_numbers = #tpu.dot_dimension_numbers<[1], [0], [0], [1], [0, 0, 1, 1], [], []>} : vector<80x128xbf16>, vector<128x64xbf16>, vector<80x64xf32> -> vector<80x64xf32>
    %c0_66 = arith.constant 0 : index
    %c0_67 = arith.constant 0 : index
    %c0_68 = arith.constant 0 : index
    %152 = vector.load %arg16[%c0_66, %c0_67, %c0_68] : memref<2x1x64xf32, #tpu.memory_space<vmem>>, vector<1x1x64xf32>
    %153 = vector.shape_cast %152 : vector<1x1x64xf32> to vector<1x64xf32>
    %154 = vector.broadcast %153 : vector<1x64xf32> to vector<80x64xf32>
    %155 = arith.addf %151, %154 : vector<80x64xf32>
    %156 = arith.addf %137, %155 : vector<80x64xf32>
    %c0_69 = arith.constant 0 : index
    %c0_70 = arith.constant 0 : index
    %c0_71 = arith.constant 0 : index
    %157 = vector.load %arg17[%c0_69, %c0_70, %c0_71] : memref<2x1x64xf32, #tpu.memory_space<vmem>>, vector<1x1x64xf32>
    %158 = vector.shape_cast %157 : vector<1x1x64xf32> to vector<1x64xf32>
    %c0_72 = arith.constant 0 : index
    %c0_73 = arith.constant 0 : index
    %c0_74 = arith.constant 0 : index
    %159 = vector.load %arg18[%c0_72, %c0_73, %c0_74] : memref<2x1x64xf32, #tpu.memory_space<vmem>>, vector<1x1x64xf32>
    %160 = vector.shape_cast %159 : vector<1x1x64xf32> to vector<1x64xf32>
    %cst_75 = arith.constant dense<0.000000e+00> : vector<80xf32>
    %161 = vector.multi_reduction <add>, %156, %cst_75 [1] : vector<80x64xf32> to vector<80xf32>
    %162 = vector.shape_cast %161 : vector<80xf32> to vector<80x1xf32>
    %cst_76 = arith.constant 6.400000e+01 : f32
    %163 = vector.broadcast %cst_76 : f32 to vector<80x1xf32>
    %164 = arith.divf %162, %163 : vector<80x1xf32>
    %165 = arith.mulf %156, %156 : vector<80x64xf32>
    %cst_77 = arith.constant dense<0.000000e+00> : vector<80xf32>
    %166 = vector.multi_reduction <add>, %165, %cst_77 [1] : vector<80x64xf32> to vector<80xf32>
    %167 = vector.shape_cast %166 : vector<80xf32> to vector<80x1xf32>
    %cst_78 = arith.constant 6.400000e+01 : f32
    %168 = vector.broadcast %cst_78 : f32 to vector<80x1xf32>
    %169 = arith.divf %167, %168 : vector<80x1xf32>
    %170 = arith.mulf %164, %164 : vector<80x1xf32>
    %171 = arith.subf %169, %170 : vector<80x1xf32>
    %172 = vector.broadcast %164 : vector<80x1xf32> to vector<80x64xf32>
    %173 = arith.subf %156, %172 : vector<80x64xf32>
    %cst_79 = arith.constant 9.99999974E-6 : f32
    %174 = vector.broadcast %cst_79 : f32 to vector<80x1xf32>
    %175 = arith.addf %171, %174 : vector<80x1xf32>
    %176 = math.rsqrt %175 : vector<80x1xf32>
    %177 = vector.broadcast %176 : vector<80x1xf32> to vector<80x64xf32>
    %178 = arith.mulf %173, %177 : vector<80x64xf32>
    %179 = vector.broadcast %158 : vector<1x64xf32> to vector<80x64xf32>
    %180 = arith.mulf %178, %179 : vector<80x64xf32>
    %181 = vector.broadcast %160 : vector<1x64xf32> to vector<80x64xf32>
    %182 = arith.addf %180, %181 : vector<80x64xf32>
    %183 = arith.truncf %182 : vector<80x64xf32> to vector<80x64xbf16>
    %c1_80 = arith.constant 1 : index
    %c0_81 = arith.constant 0 : index
    %c0_82 = arith.constant 0 : index
    %184 = vector.load %arg8[%c1_80, %c0_81, %c0_82] : memref<2x64x384xbf16, #tpu.memory_space<vmem>>, vector<1x64x384xbf16>
    %185 = vector.shape_cast %184 : vector<1x64x384xbf16> to vector<64x384xbf16>
    %cst_83 = arith.constant dense<0.000000e+00> : vector<80x384xf32>
    %186 = tpu.matmul %183, %185, %cst_83 {dimension_numbers = #tpu.dot_dimension_numbers<[1], [0], [0], [1], [0, 0, 1, 1], [], []>} : vector<80x64xbf16>, vector<64x384xbf16>, vector<80x384xf32> -> vector<80x384xf32>
    %c1_84 = arith.constant 1 : index
    %c0_85 = arith.constant 0 : index
    %c0_86 = arith.constant 0 : index
    %187 = vector.load %arg9[%c1_84, %c0_85, %c0_86] : memref<2x1x384xf32, #tpu.memory_space<vmem>>, vector<1x1x384xf32>
    %188 = vector.shape_cast %187 : vector<1x1x384xf32> to vector<1x384xf32>
    %189 = vector.broadcast %188 : vector<1x384xf32> to vector<80x384xf32>
    %190 = arith.addf %186, %189 : vector<80x384xf32>
    %191 = vector.extract_strided_slice %190 {offsets = [0, 0], sizes = [80, 64], strides = [1, 1]} : vector<80x384xf32> to vector<80x64xf32>
    %192 = vector.extract_strided_slice %190 {offsets = [0, 64], sizes = [80, 64], strides = [1, 1]} : vector<80x384xf32> to vector<80x64xf32>
    %193 = arith.truncf %192 : vector<80x64xf32> to vector<80x64xbf16>
    %cst_87 = arith.constant 0.000000e+00 : f32
    %194 = vector.broadcast %cst_87 : f32 to vector<80x64xf32>
    %195 = vector.extract_strided_slice %190 {offsets = [0, 128], sizes = [80, 64], strides = [1, 1]} : vector<80x384xf32> to vector<80x64xf32>
    %196 = arith.truncf %195 : vector<80x64xf32> to vector<80x64xbf16>
    %c0_88 = arith.constant 0 : index
    %c0_89 = arith.constant 0 : index
    %c0_90 = arith.constant 0 : index
    %197 = vector.load %arg6[%c0_88, %c0_89, %c0_90] : memref<4x1x64xf32, #tpu.memory_space<vmem>>, vector<1x1x64xf32>
    %198 = vector.shape_cast %197 : vector<1x1x64xf32> to vector<1x64xf32>
    %199 = vector.broadcast %198 : vector<1x64xf32> to vector<80x64xf32>
    %200 = arith.mulf %191, %199 : vector<80x64xf32>
    %201 = arith.truncf %200 : vector<80x64xf32> to vector<80x64xbf16>
    %cst_91 = arith.constant dense<0.000000e+00> : vector<80x80xf32>
    %202 = tpu.matmul %201, %193, %cst_91 {dimension_numbers = #tpu.dot_dimension_numbers<[1], [1], [0], [0], [0, 0, 1, 0], [], []>} : vector<80x64xbf16>, vector<80x64xbf16>, vector<80x80xf32> -> vector<80x80xf32>
    %203 = arith.addf %202, %0 : vector<80x80xf32>
    %cst_92 = arith.constant dense<0xFF800000> : vector<80xf32>
    %204 = vector.multi_reduction <maximumf>, %203, %cst_92 [1] : vector<80x80xf32> to vector<80xf32>
    %205 = vector.shape_cast %204 : vector<80xf32> to vector<80x1xf32>
    %206 = vector.broadcast %205 : vector<80x1xf32> to vector<80x80xf32>
    %207 = arith.subf %203, %206 : vector<80x80xf32>
    %208 = math.exp %207 : vector<80x80xf32>
    %cst_93 = arith.constant dense<0.000000e+00> : vector<80xf32>
    %209 = vector.multi_reduction <add>, %208, %cst_93 [1] : vector<80x80xf32> to vector<80xf32>
    %210 = vector.shape_cast %209 : vector<80xf32> to vector<80x1xf32>
    %211 = tpu.reciprocal %210 {approx = true} : vector<80x1xf32> -> vector<80x1xf32>
    %212 = arith.truncf %208 : vector<80x80xf32> to vector<80x80xbf16>
    %cst_94 = arith.constant dense<0.000000e+00> : vector<80x64xf32>
    %213 = tpu.matmul %212, %196, %cst_94 {dimension_numbers = #tpu.dot_dimension_numbers<[1], [0], [0], [1], [0, 0, 1, 1], [], []>} : vector<80x80xbf16>, vector<80x64xbf16>, vector<80x64xf32> -> vector<80x64xf32>
    %214 = vector.broadcast %211 : vector<80x1xf32> to vector<80x64xf32>
    %215 = arith.mulf %213, %214 : vector<80x64xf32>
    %216 = arith.addf %194, %215 : vector<80x64xf32>
    %217 = vector.extract_strided_slice %190 {offsets = [0, 192], sizes = [80, 64], strides = [1, 1]} : vector<80x384xf32> to vector<80x64xf32>
    %218 = arith.truncf %217 : vector<80x64xf32> to vector<80x64xbf16>
    %c1_95 = arith.constant 1 : index
    %c0_96 = arith.constant 0 : index
    %c0_97 = arith.constant 0 : index
    %219 = vector.load %arg6[%c1_95, %c0_96, %c0_97] : memref<4x1x64xf32, #tpu.memory_space<vmem>>, vector<1x1x64xf32>
    %220 = vector.shape_cast %219 : vector<1x1x64xf32> to vector<1x64xf32>
    %221 = vector.broadcast %220 : vector<1x64xf32> to vector<80x64xf32>
    %222 = arith.mulf %191, %221 : vector<80x64xf32>
    %223 = arith.truncf %222 : vector<80x64xf32> to vector<80x64xbf16>
    %cst_98 = arith.constant dense<0.000000e+00> : vector<80x80xf32>
    %224 = tpu.matmul %223, %193, %cst_98 {dimension_numbers = #tpu.dot_dimension_numbers<[1], [1], [0], [0], [0, 0, 1, 0], [], []>} : vector<80x64xbf16>, vector<80x64xbf16>, vector<80x80xf32> -> vector<80x80xf32>
    %225 = arith.addf %224, %0 : vector<80x80xf32>
    %cst_99 = arith.constant dense<0xFF800000> : vector<80xf32>
    %226 = vector.multi_reduction <maximumf>, %225, %cst_99 [1] : vector<80x80xf32> to vector<80xf32>
    %227 = vector.shape_cast %226 : vector<80xf32> to vector<80x1xf32>
    %228 = vector.broadcast %227 : vector<80x1xf32> to vector<80x80xf32>
    %229 = arith.subf %225, %228 : vector<80x80xf32>
    %230 = math.exp %229 : vector<80x80xf32>
    %cst_100 = arith.constant dense<0.000000e+00> : vector<80xf32>
    %231 = vector.multi_reduction <add>, %230, %cst_100 [1] : vector<80x80xf32> to vector<80xf32>
    %232 = vector.shape_cast %231 : vector<80xf32> to vector<80x1xf32>
    %233 = tpu.reciprocal %232 {approx = true} : vector<80x1xf32> -> vector<80x1xf32>
    %234 = arith.truncf %230 : vector<80x80xf32> to vector<80x80xbf16>
    %cst_101 = arith.constant dense<0.000000e+00> : vector<80x64xf32>
    %235 = tpu.matmul %234, %218, %cst_101 {dimension_numbers = #tpu.dot_dimension_numbers<[1], [0], [0], [1], [0, 0, 1, 1], [], []>} : vector<80x80xbf16>, vector<80x64xbf16>, vector<80x64xf32> -> vector<80x64xf32>
    %236 = vector.broadcast %233 : vector<80x1xf32> to vector<80x64xf32>
    %237 = arith.mulf %235, %236 : vector<80x64xf32>
    %238 = arith.addf %216, %237 : vector<80x64xf32>
    %239 = vector.extract_strided_slice %190 {offsets = [0, 256], sizes = [80, 64], strides = [1, 1]} : vector<80x384xf32> to vector<80x64xf32>
    %240 = arith.truncf %239 : vector<80x64xf32> to vector<80x64xbf16>
    %c2_102 = arith.constant 2 : index
    %c0_103 = arith.constant 0 : index
    %c0_104 = arith.constant 0 : index
    %241 = vector.load %arg6[%c2_102, %c0_103, %c0_104] : memref<4x1x64xf32, #tpu.memory_space<vmem>>, vector<1x1x64xf32>
    %242 = vector.shape_cast %241 : vector<1x1x64xf32> to vector<1x64xf32>
    %243 = vector.broadcast %242 : vector<1x64xf32> to vector<80x64xf32>
    %244 = arith.mulf %191, %243 : vector<80x64xf32>
    %245 = arith.truncf %244 : vector<80x64xf32> to vector<80x64xbf16>
    %cst_105 = arith.constant dense<0.000000e+00> : vector<80x80xf32>
    %246 = tpu.matmul %245, %193, %cst_105 {dimension_numbers = #tpu.dot_dimension_numbers<[1], [1], [0], [0], [0, 0, 1, 0], [], []>} : vector<80x64xbf16>, vector<80x64xbf16>, vector<80x80xf32> -> vector<80x80xf32>
    %247 = arith.addf %246, %0 : vector<80x80xf32>
    %cst_106 = arith.constant dense<0xFF800000> : vector<80xf32>
    %248 = vector.multi_reduction <maximumf>, %247, %cst_106 [1] : vector<80x80xf32> to vector<80xf32>
    %249 = vector.shape_cast %248 : vector<80xf32> to vector<80x1xf32>
    %250 = vector.broadcast %249 : vector<80x1xf32> to vector<80x80xf32>
    %251 = arith.subf %247, %250 : vector<80x80xf32>
    %252 = math.exp %251 : vector<80x80xf32>
    %cst_107 = arith.constant dense<0.000000e+00> : vector<80xf32>
    %253 = vector.multi_reduction <add>, %252, %cst_107 [1] : vector<80x80xf32> to vector<80xf32>
    %254 = vector.shape_cast %253 : vector<80xf32> to vector<80x1xf32>
    %255 = tpu.reciprocal %254 {approx = true} : vector<80x1xf32> -> vector<80x1xf32>
    %256 = arith.truncf %252 : vector<80x80xf32> to vector<80x80xbf16>
    %cst_108 = arith.constant dense<0.000000e+00> : vector<80x64xf32>
    %257 = tpu.matmul %256, %240, %cst_108 {dimension_numbers = #tpu.dot_dimension_numbers<[1], [0], [0], [1], [0, 0, 1, 1], [], []>} : vector<80x80xbf16>, vector<80x64xbf16>, vector<80x64xf32> -> vector<80x64xf32>
    %258 = vector.broadcast %255 : vector<80x1xf32> to vector<80x64xf32>
    %259 = arith.mulf %257, %258 : vector<80x64xf32>
    %260 = arith.addf %238, %259 : vector<80x64xf32>
    %261 = vector.extract_strided_slice %190 {offsets = [0, 320], sizes = [80, 64], strides = [1, 1]} : vector<80x384xf32> to vector<80x64xf32>
    %262 = arith.truncf %261 : vector<80x64xf32> to vector<80x64xbf16>
    %c3_109 = arith.constant 3 : index
    %c0_110 = arith.constant 0 : index
    %c0_111 = arith.constant 0 : index
    %263 = vector.load %arg6[%c3_109, %c0_110, %c0_111] : memref<4x1x64xf32, #tpu.memory_space<vmem>>, vector<1x1x64xf32>
    %264 = vector.shape_cast %263 : vector<1x1x64xf32> to vector<1x64xf32>
    %265 = vector.broadcast %264 : vector<1x64xf32> to vector<80x64xf32>
    %266 = arith.mulf %191, %265 : vector<80x64xf32>
    %267 = arith.truncf %266 : vector<80x64xf32> to vector<80x64xbf16>
    %cst_112 = arith.constant dense<0.000000e+00> : vector<80x80xf32>
    %268 = tpu.matmul %267, %193, %cst_112 {dimension_numbers = #tpu.dot_dimension_numbers<[1], [1], [0], [0], [0, 0, 1, 0], [], []>} : vector<80x64xbf16>, vector<80x64xbf16>, vector<80x80xf32> -> vector<80x80xf32>
    %269 = arith.addf %268, %0 : vector<80x80xf32>
    %cst_113 = arith.constant dense<0xFF800000> : vector<80xf32>
    %270 = vector.multi_reduction <maximumf>, %269, %cst_113 [1] : vector<80x80xf32> to vector<80xf32>
    %271 = vector.shape_cast %270 : vector<80xf32> to vector<80x1xf32>
    %272 = vector.broadcast %271 : vector<80x1xf32> to vector<80x80xf32>
    %273 = arith.subf %269, %272 : vector<80x80xf32>
    %274 = math.exp %273 : vector<80x80xf32>
    %cst_114 = arith.constant dense<0.000000e+00> : vector<80xf32>
    %275 = vector.multi_reduction <add>, %274, %cst_114 [1] : vector<80x80xf32> to vector<80xf32>
    %276 = vector.shape_cast %275 : vector<80xf32> to vector<80x1xf32>
    %277 = tpu.reciprocal %276 {approx = true} : vector<80x1xf32> -> vector<80x1xf32>
    %278 = arith.truncf %274 : vector<80x80xf32> to vector<80x80xbf16>
    %cst_115 = arith.constant dense<0.000000e+00> : vector<80x64xf32>
    %279 = tpu.matmul %278, %262, %cst_115 {dimension_numbers = #tpu.dot_dimension_numbers<[1], [0], [0], [1], [0, 0, 1, 1], [], []>} : vector<80x80xbf16>, vector<80x64xbf16>, vector<80x64xf32> -> vector<80x64xf32>
    %280 = vector.broadcast %277 : vector<80x1xf32> to vector<80x64xf32>
    %281 = arith.mulf %279, %280 : vector<80x64xf32>
    %282 = arith.addf %260, %281 : vector<80x64xf32>
    %283 = arith.addf %182, %282 : vector<80x64xf32>
    %c1_116 = arith.constant 1 : index
    %c0_117 = arith.constant 0 : index
    %c0_118 = arith.constant 0 : index
    %284 = vector.load %arg10[%c1_116, %c0_117, %c0_118] : memref<2x1x64xf32, #tpu.memory_space<vmem>>, vector<1x1x64xf32>
    %285 = vector.shape_cast %284 : vector<1x1x64xf32> to vector<1x64xf32>
    %286 = vector.broadcast %285 : vector<1x64xf32> to vector<80x64xf32>
    %287 = arith.addf %283, %286 : vector<80x64xf32>
    %c1_119 = arith.constant 1 : index
    %c0_120 = arith.constant 0 : index
    %c0_121 = arith.constant 0 : index
    %288 = vector.load %arg11[%c1_119, %c0_120, %c0_121] : memref<2x1x64xf32, #tpu.memory_space<vmem>>, vector<1x1x64xf32>
    %289 = vector.shape_cast %288 : vector<1x1x64xf32> to vector<1x64xf32>
    %c1_122 = arith.constant 1 : index
    %c0_123 = arith.constant 0 : index
    %c0_124 = arith.constant 0 : index
    %290 = vector.load %arg12[%c1_122, %c0_123, %c0_124] : memref<2x1x64xf32, #tpu.memory_space<vmem>>, vector<1x1x64xf32>
    %291 = vector.shape_cast %290 : vector<1x1x64xf32> to vector<1x64xf32>
    %cst_125 = arith.constant dense<0.000000e+00> : vector<80xf32>
    %292 = vector.multi_reduction <add>, %287, %cst_125 [1] : vector<80x64xf32> to vector<80xf32>
    %293 = vector.shape_cast %292 : vector<80xf32> to vector<80x1xf32>
    %cst_126 = arith.constant 6.400000e+01 : f32
    %294 = vector.broadcast %cst_126 : f32 to vector<80x1xf32>
    %295 = arith.divf %293, %294 : vector<80x1xf32>
    %296 = arith.mulf %287, %287 : vector<80x64xf32>
    %cst_127 = arith.constant dense<0.000000e+00> : vector<80xf32>
    %297 = vector.multi_reduction <add>, %296, %cst_127 [1] : vector<80x64xf32> to vector<80xf32>
    %298 = vector.shape_cast %297 : vector<80xf32> to vector<80x1xf32>
    %cst_128 = arith.constant 6.400000e+01 : f32
    %299 = vector.broadcast %cst_128 : f32 to vector<80x1xf32>
    %300 = arith.divf %298, %299 : vector<80x1xf32>
    %301 = arith.mulf %295, %295 : vector<80x1xf32>
    %302 = arith.subf %300, %301 : vector<80x1xf32>
    %303 = vector.broadcast %295 : vector<80x1xf32> to vector<80x64xf32>
    %304 = arith.subf %287, %303 : vector<80x64xf32>
    %cst_129 = arith.constant 9.99999974E-6 : f32
    %305 = vector.broadcast %cst_129 : f32 to vector<80x1xf32>
    %306 = arith.addf %302, %305 : vector<80x1xf32>
    %307 = math.rsqrt %306 : vector<80x1xf32>
    %308 = vector.broadcast %307 : vector<80x1xf32> to vector<80x64xf32>
    %309 = arith.mulf %304, %308 : vector<80x64xf32>
    %310 = vector.broadcast %289 : vector<1x64xf32> to vector<80x64xf32>
    %311 = arith.mulf %309, %310 : vector<80x64xf32>
    %312 = vector.broadcast %291 : vector<1x64xf32> to vector<80x64xf32>
    %313 = arith.addf %311, %312 : vector<80x64xf32>
    %314 = arith.truncf %313 : vector<80x64xf32> to vector<80x64xbf16>
    %c1_130 = arith.constant 1 : index
    %c0_131 = arith.constant 0 : index
    %c0_132 = arith.constant 0 : index
    %315 = vector.load %arg13[%c1_130, %c0_131, %c0_132] : memref<2x64x128xbf16, #tpu.memory_space<vmem>>, vector<1x64x128xbf16>
    %316 = vector.shape_cast %315 : vector<1x64x128xbf16> to vector<64x128xbf16>
    %cst_133 = arith.constant dense<0.000000e+00> : vector<80x128xf32>
    %317 = tpu.matmul %314, %316, %cst_133 {dimension_numbers = #tpu.dot_dimension_numbers<[1], [0], [0], [1], [0, 0, 1, 1], [], []>} : vector<80x64xbf16>, vector<64x128xbf16>, vector<80x128xf32> -> vector<80x128xf32>
    %c1_134 = arith.constant 1 : index
    %c0_135 = arith.constant 0 : index
    %c0_136 = arith.constant 0 : index
    %318 = vector.load %arg14[%c1_134, %c0_135, %c0_136] : memref<2x1x128xf32, #tpu.memory_space<vmem>>, vector<1x1x128xf32>
    %319 = vector.shape_cast %318 : vector<1x1x128xf32> to vector<1x128xf32>
    %320 = vector.broadcast %319 : vector<1x128xf32> to vector<80x128xf32>
    %321 = arith.addf %317, %320 : vector<80x128xf32>
    %cst_137 = arith.constant 0.000000e+00 : f32
    %322 = vector.broadcast %cst_137 : f32 to vector<80x128xf32>
    %323 = arith.maximumf %321, %322 : vector<80x128xf32>
    %324 = arith.truncf %323 : vector<80x128xf32> to vector<80x128xbf16>
    %c1_138 = arith.constant 1 : index
    %c0_139 = arith.constant 0 : index
    %c0_140 = arith.constant 0 : index
    %325 = vector.load %arg15[%c1_138, %c0_139, %c0_140] : memref<2x128x64xbf16, #tpu.memory_space<vmem>>, vector<1x128x64xbf16>
    %326 = vector.shape_cast %325 : vector<1x128x64xbf16> to vector<128x64xbf16>
    %cst_141 = arith.constant dense<0.000000e+00> : vector<80x64xf32>
    %327 = tpu.matmul %324, %326, %cst_141 {dimension_numbers = #tpu.dot_dimension_numbers<[1], [0], [0], [1], [0, 0, 1, 1], [], []>} : vector<80x128xbf16>, vector<128x64xbf16>, vector<80x64xf32> -> vector<80x64xf32>
    %c1_142 = arith.constant 1 : index
    %c0_143 = arith.constant 0 : index
    %c0_144 = arith.constant 0 : index
    %328 = vector.load %arg16[%c1_142, %c0_143, %c0_144] : memref<2x1x64xf32, #tpu.memory_space<vmem>>, vector<1x1x64xf32>
    %329 = vector.shape_cast %328 : vector<1x1x64xf32> to vector<1x64xf32>
    %330 = vector.broadcast %329 : vector<1x64xf32> to vector<80x64xf32>
    %331 = arith.addf %327, %330 : vector<80x64xf32>
    %332 = arith.addf %313, %331 : vector<80x64xf32>
    %c1_145 = arith.constant 1 : index
    %c0_146 = arith.constant 0 : index
    %c0_147 = arith.constant 0 : index
    %333 = vector.load %arg17[%c1_145, %c0_146, %c0_147] : memref<2x1x64xf32, #tpu.memory_space<vmem>>, vector<1x1x64xf32>
    %334 = vector.shape_cast %333 : vector<1x1x64xf32> to vector<1x64xf32>
    %c1_148 = arith.constant 1 : index
    %c0_149 = arith.constant 0 : index
    %c0_150 = arith.constant 0 : index
    %335 = vector.load %arg18[%c1_148, %c0_149, %c0_150] : memref<2x1x64xf32, #tpu.memory_space<vmem>>, vector<1x1x64xf32>
    %336 = vector.shape_cast %335 : vector<1x1x64xf32> to vector<1x64xf32>
    %cst_151 = arith.constant dense<0.000000e+00> : vector<80xf32>
    %337 = vector.multi_reduction <add>, %332, %cst_151 [1] : vector<80x64xf32> to vector<80xf32>
    %338 = vector.shape_cast %337 : vector<80xf32> to vector<80x1xf32>
    %cst_152 = arith.constant 6.400000e+01 : f32
    %339 = vector.broadcast %cst_152 : f32 to vector<80x1xf32>
    %340 = arith.divf %338, %339 : vector<80x1xf32>
    %341 = arith.mulf %332, %332 : vector<80x64xf32>
    %cst_153 = arith.constant dense<0.000000e+00> : vector<80xf32>
    %342 = vector.multi_reduction <add>, %341, %cst_153 [1] : vector<80x64xf32> to vector<80xf32>
    %343 = vector.shape_cast %342 : vector<80xf32> to vector<80x1xf32>
    %cst_154 = arith.constant 6.400000e+01 : f32
    %344 = vector.broadcast %cst_154 : f32 to vector<80x1xf32>
    %345 = arith.divf %343, %344 : vector<80x1xf32>
    %346 = arith.mulf %340, %340 : vector<80x1xf32>
    %347 = arith.subf %345, %346 : vector<80x1xf32>
    %348 = vector.broadcast %340 : vector<80x1xf32> to vector<80x64xf32>
    %349 = arith.subf %332, %348 : vector<80x64xf32>
    %cst_155 = arith.constant 9.99999974E-6 : f32
    %350 = vector.broadcast %cst_155 : f32 to vector<80x1xf32>
    %351 = arith.addf %347, %350 : vector<80x1xf32>
    %352 = math.rsqrt %351 : vector<80x1xf32>
    %353 = vector.broadcast %352 : vector<80x1xf32> to vector<80x64xf32>
    %354 = arith.mulf %349, %353 : vector<80x64xf32>
    %355 = vector.broadcast %334 : vector<1x64xf32> to vector<80x64xf32>
    %356 = arith.mulf %354, %355 : vector<80x64xf32>
    %357 = vector.broadcast %336 : vector<1x64xf32> to vector<80x64xf32>
    %358 = arith.addf %356, %357 : vector<80x64xf32>
    %c0_156 = arith.constant 0 : index
    %c0_157 = arith.constant 0 : index
    %359 = vector.load %arg4[%c0_156, %c0_157] : memref<8x80xbf16, #tpu.memory_space<vmem>>, vector<8x80xbf16>
    %360 = arith.truncf %358 : vector<80x64xf32> to vector<80x64xbf16>
    %cst_158 = arith.constant dense<0.000000e+00> : vector<8x64xf32>
    %361 = tpu.matmul %359, %360, %cst_158 {dimension_numbers = #tpu.dot_dimension_numbers<[1], [0], [0], [1], [0, 0, 1, 1], [], []>} : vector<8x80xbf16>, vector<80x64xbf16>, vector<8x64xf32> -> vector<8x64xf32>
    %c0_159 = arith.constant 0 : index
    %c0_160 = arith.constant 0 : index
    %362 = vector.load %arg2[%c0_159, %c0_160] : memref<8x23xf32, #tpu.memory_space<vmem>>, vector<8x23xf32>
    %363 = arith.truncf %362 : vector<8x23xf32> to vector<8x23xbf16>
    %c0_161 = arith.constant 0 : index
    %c0_162 = arith.constant 0 : index
    %364 = vector.load %arg19[%c0_161, %c0_162] : memref<23x128xbf16, #tpu.memory_space<vmem>>, vector<23x128xbf16>
    %cst_163 = arith.constant dense<0.000000e+00> : vector<8x128xf32>
    %365 = tpu.matmul %363, %364, %cst_163 {dimension_numbers = #tpu.dot_dimension_numbers<[1], [0], [0], [1], [0, 0, 1, 1], [], []>} : vector<8x23xbf16>, vector<23x128xbf16>, vector<8x128xf32> -> vector<8x128xf32>
    %c0_164 = arith.constant 0 : index
    %c0_165 = arith.constant 0 : index
    %366 = vector.load %arg20[%c0_164, %c0_165] : memref<1x128xf32, #tpu.memory_space<vmem>>, vector<1x128xf32>
    %367 = vector.broadcast %366 : vector<1x128xf32> to vector<8x128xf32>
    %368 = arith.addf %365, %367 : vector<8x128xf32>
    %cst_166 = arith.constant 0.000000e+00 : f32
    %369 = vector.broadcast %cst_166 : f32 to vector<8x128xf32>
    %370 = arith.maximumf %368, %369 : vector<8x128xf32>
    %371 = arith.truncf %361 : vector<8x64xf32> to vector<8x64xbf16>
    %c0_167 = arith.constant 0 : index
    %c0_168 = arith.constant 0 : index
    %372 = vector.load %arg21[%c0_167, %c0_168] : memref<64x128xbf16, #tpu.memory_space<vmem>>, vector<64x128xbf16>
    %cst_169 = arith.constant dense<0.000000e+00> : vector<8x128xf32>
    %373 = tpu.matmul %371, %372, %cst_169 {dimension_numbers = #tpu.dot_dimension_numbers<[1], [0], [0], [1], [0, 0, 1, 1], [], []>} : vector<8x64xbf16>, vector<64x128xbf16>, vector<8x128xf32> -> vector<8x128xf32>
    %374 = arith.truncf %370 : vector<8x128xf32> to vector<8x128xbf16>
    %c0_170 = arith.constant 0 : index
    %c0_171 = arith.constant 0 : index
    %375 = vector.load %arg22[%c0_170, %c0_171] : memref<128x128xbf16, #tpu.memory_space<vmem>>, vector<128x128xbf16>
    %cst_172 = arith.constant dense<0.000000e+00> : vector<8x128xf32>
    %376 = tpu.matmul %374, %375, %cst_172 {dimension_numbers = #tpu.dot_dimension_numbers<[1], [0], [0], [1], [0, 0, 1, 1], [], []>} : vector<8x128xbf16>, vector<128x128xbf16>, vector<8x128xf32> -> vector<8x128xf32>
    %377 = arith.addf %373, %376 : vector<8x128xf32>
    %c0_173 = arith.constant 0 : index
    %c0_174 = arith.constant 0 : index
    %378 = vector.load %arg23[%c0_173, %c0_174] : memref<1x128xf32, #tpu.memory_space<vmem>>, vector<1x128xf32>
    %379 = vector.broadcast %378 : vector<1x128xf32> to vector<8x128xf32>
    %380 = arith.addf %377, %379 : vector<8x128xf32>
    %cst_175 = arith.constant 0.000000e+00 : f32
    %381 = vector.broadcast %cst_175 : f32 to vector<8x128xf32>
    %382 = arith.maximumf %380, %381 : vector<8x128xf32>
    %383 = arith.truncf %382 : vector<8x128xf32> to vector<8x128xbf16>
    %c0_176 = arith.constant 0 : index
    %c0_177 = arith.constant 0 : index
    %384 = vector.load %arg24[%c0_176, %c0_177] : memref<128x1xbf16, #tpu.memory_space<vmem>>, vector<128x1xbf16>
    %cst_178 = arith.constant dense<0.000000e+00> : vector<8x1xf32>
    %385 = tpu.matmul %383, %384, %cst_178 {dimension_numbers = #tpu.dot_dimension_numbers<[1], [0], [0], [1], [0, 0, 1, 1], [], []>} : vector<8x128xbf16>, vector<128x1xbf16>, vector<8x1xf32> -> vector<8x1xf32>
    %c0_179 = arith.constant 0 : index
    %c0_180 = arith.constant 0 : index
    %386 = vector.load %arg25[%c0_179, %c0_180] : memref<1x1xf32, #tpu.memory_space<vmem>>, vector<1x1xf32>
    %387 = vector.broadcast %386 : vector<1x1xf32> to vector<8x1xf32>
    %388 = arith.addf %385, %387 : vector<8x1xf32>
    %c0_181 = arith.constant 0 : index
    %c0_182 = arith.constant 0 : index
    %389 = vector.load %arg26[%c0_181, %c0_182] : memref<8x1xf32, #tpu.memory_space<vmem>>, vector<8x1xf32>
    tpu.vector_store %arg26[%c0_181, %c0_182], %388 {strides = array<i32>} : memref<8x1xf32, #tpu.memory_space<vmem>>, vector<8x1xf32>,
    return
  }
  func.func @transform_0(%arg0: i32) -> (i32, i32) {
    %c0_i32 = arith.constant 0 : i32
    %c0_i32_0 = arith.constant 0 : i32
    return %arg0, %c0_i32 : i32, i32
  }
  func.func @transform_1(%arg0: i32) -> (i32, i32) {
    %c0_i32 = arith.constant 0 : i32
    %c0_i32_0 = arith.constant 0 : i32
    return %arg0, %c0_i32 : i32, i32
  }
  func.func @transform_2(%arg0: i32) -> (i32, i32) {
    %c0_i32 = arith.constant 0 : i32
    %c0_i32_0 = arith.constant 0 : i32
    %c0_i32_1 = arith.constant 0 : i32
    return %c0_i32, %c0_i32_0 : i32, i32
  }
  func.func @transform_3(%arg0: i32) -> (i32, i32) {
    %c0_i32 = arith.constant 0 : i32
    %c0_i32_0 = arith.constant 0 : i32
    %c0_i32_1 = arith.constant 0 : i32
    return %c0_i32, %c0_i32_0 : i32, i32
  }
  func.func @transform_4(%arg0: i32) -> (i32, i32) {
    %c0_i32 = arith.constant 0 : i32
    %c0_i32_0 = arith.constant 0 : i32
    %c0_i32_1 = arith.constant 0 : i32
    return %c0_i32, %c0_i32_0 : i32, i32
  }
  func.func @transform_5(%arg0: i32) -> (i32, i32, i32) {
    %c0_i32 = arith.constant 0 : i32
    %c0_i32_0 = arith.constant 0 : i32
    %c0_i32_1 = arith.constant 0 : i32
    %c0_i32_2 = arith.constant 0 : i32
    return %c0_i32, %c0_i32_0, %c0_i32_1 : i32, i32, i32
  }
  func.func @transform_6(%arg0: i32) -> (i32, i32) {
    %c0_i32 = arith.constant 0 : i32
    %c0_i32_0 = arith.constant 0 : i32
    %c0_i32_1 = arith.constant 0 : i32
    return %c0_i32, %c0_i32_0 : i32, i32
  }
  func.func @transform_7(%arg0: i32) -> (i32, i32, i32) {
    %c0_i32 = arith.constant 0 : i32
    %c0_i32_0 = arith.constant 0 : i32
    %c0_i32_1 = arith.constant 0 : i32
    %c0_i32_2 = arith.constant 0 : i32
    return %c0_i32, %c0_i32_0, %c0_i32_1 : i32, i32, i32
  }
  func.func @transform_8(%arg0: i32) -> (i32, i32, i32) {
    %c0_i32 = arith.constant 0 : i32
    %c0_i32_0 = arith.constant 0 : i32
    %c0_i32_1 = arith.constant 0 : i32
    %c0_i32_2 = arith.constant 0 : i32
    return %c0_i32, %c0_i32_0, %c0_i32_1 : i32, i32, i32
  }
  func.func @transform_9(%arg0: i32) -> (i32, i32, i32) {
    %c0_i32 = arith.constant 0 : i32
    %c0_i32_0 = arith.constant 0 : i32
    %c0_i32_1 = arith.constant 0 : i32
    %c0_i32_2 = arith.constant 0 : i32
    return %c0_i32, %c0_i32_0, %c0_i32_1 : i32, i32, i32
  }
  func.func @transform_10(%arg0: i32) -> (i32, i32, i32) {
    %c0_i32 = arith.constant 0 : i32
    %c0_i32_0 = arith.constant 0 : i32
    %c0_i32_1 = arith.constant 0 : i32
    %c0_i32_2 = arith.constant 0 : i32
    return %c0_i32, %c0_i32_0, %c0_i32_1 : i32, i32, i32
  }
  func.func @transform_11(%arg0: i32) -> (i32, i32, i32) {
    %c0_i32 = arith.constant 0 : i32
    %c0_i32_0 = arith.constant 0 : i32
    %c0_i32_1 = arith.constant 0 : i32
    %c0_i32_2 = arith.constant 0 : i32
    return %c0_i32, %c0_i32_0, %c0_i32_1 : i32, i32, i32
  }
  func.func @transform_12(%arg0: i32) -> (i32, i32, i32) {
    %c0_i32 = arith.constant 0 : i32
    %c0_i32_0 = arith.constant 0 : i32
    %c0_i32_1 = arith.constant 0 : i32
    %c0_i32_2 = arith.constant 0 : i32
    return %c0_i32, %c0_i32_0, %c0_i32_1 : i32, i32, i32
  }
  func.func @transform_13(%arg0: i32) -> (i32, i32, i32) {
    %c0_i32 = arith.constant 0 : i32
    %c0_i32_0 = arith.constant 0 : i32
    %c0_i32_1 = arith.constant 0 : i32
    %c0_i32_2 = arith.constant 0 : i32
    return %c0_i32, %c0_i32_0, %c0_i32_1 : i32, i32, i32
  }
  func.func @transform_14(%arg0: i32) -> (i32, i32, i32) {
    %c0_i32 = arith.constant 0 : i32
    %c0_i32_0 = arith.constant 0 : i32
    %c0_i32_1 = arith.constant 0 : i32
    %c0_i32_2 = arith.constant 0 : i32
    return %c0_i32, %c0_i32_0, %c0_i32_1 : i32, i32, i32
  }
  func.func @transform_15(%arg0: i32) -> (i32, i32, i32) {
    %c0_i32 = arith.constant 0 : i32
    %c0_i32_0 = arith.constant 0 : i32
    %c0_i32_1 = arith.constant 0 : i32
    %c0_i32_2 = arith.constant 0 : i32
    return %c0_i32, %c0_i32_0, %c0_i32_1 : i32, i32, i32
  }
  func.func @transform_16(%arg0: i32) -> (i32, i32, i32) {
    %c0_i32 = arith.constant 0 : i32
    %c0_i32_0 = arith.constant 0 : i32
    %c0_i32_1 = arith.constant 0 : i32
    %c0_i32_2 = arith.constant 0 : i32
    return %c0_i32, %c0_i32_0, %c0_i32_1 : i32, i32, i32
  }
  func.func @transform_17(%arg0: i32) -> (i32, i32, i32) {
    %c0_i32 = arith.constant 0 : i32
    %c0_i32_0 = arith.constant 0 : i32
    %c0_i32_1 = arith.constant 0 : i32
    %c0_i32_2 = arith.constant 0 : i32
    return %c0_i32, %c0_i32_0, %c0_i32_1 : i32, i32, i32
  }
  func.func @transform_18(%arg0: i32) -> (i32, i32) {
    %c0_i32 = arith.constant 0 : i32
    %c0_i32_0 = arith.constant 0 : i32
    %c0_i32_1 = arith.constant 0 : i32
    return %c0_i32, %c0_i32_0 : i32, i32
  }
  func.func @transform_19(%arg0: i32) -> (i32, i32) {
    %c0_i32 = arith.constant 0 : i32
    %c0_i32_0 = arith.constant 0 : i32
    %c0_i32_1 = arith.constant 0 : i32
    return %c0_i32, %c0_i32_0 : i32, i32
  }
  func.func @transform_20(%arg0: i32) -> (i32, i32) {
    %c0_i32 = arith.constant 0 : i32
    %c0_i32_0 = arith.constant 0 : i32
    %c0_i32_1 = arith.constant 0 : i32
    return %c0_i32, %c0_i32_0 : i32, i32
  }
  func.func @transform_21(%arg0: i32) -> (i32, i32) {
    %c0_i32 = arith.constant 0 : i32
    %c0_i32_0 = arith.constant 0 : i32
    %c0_i32_1 = arith.constant 0 : i32
    return %c0_i32, %c0_i32_0 : i32, i32
  }
  func.func @transform_22(%arg0: i32) -> (i32, i32) {
    %c0_i32 = arith.constant 0 : i32
    %c0_i32_0 = arith.constant 0 : i32
    %c0_i32_1 = arith.constant 0 : i32
    return %c0_i32, %c0_i32_0 : i32, i32
  }
  func.func @transform_23(%arg0: i32) -> (i32, i32) {
    %c0_i32 = arith.constant 0 : i32
    %c0_i32_0 = arith.constant 0 : i32
    %c0_i32_1 = arith.constant 0 : i32
    return %c0_i32, %c0_i32_0 : i32, i32
  }
  func.func @transform_24(%arg0: i32) -> (i32, i32) {
    %c0_i32 = arith.constant 0 : i32
    %c0_i32_0 = arith.constant 0 : i32
    %c0_i32_1 = arith.constant 0 : i32
    return %c0_i32, %c0_i32_0 : i32, i32
  }
  func.func @transform_25(%arg0: i32) -> (i32, i32) {
    %c0_i32 = arith.constant 0 : i32
    %c0_i32_0 = arith.constant 0 : i32
    return %arg0, %c0_i32 : i32, i32
  }
}

</mosaic_0001>

<llo_original>
// kernel: tpu_custom_call.1
$region0: #{tpu_custom_call.1}
  #allocation0 [shape = 'u32[]', space=smem, size = 0x4, offset = 0x4, fixed_abs, tag = 'smem constant byte address 0x4 - core index']
  #allocation1 [shape = 'u32[144,128]{1,0:T(1,128)}', space=vmem, size = 0x12000, scoped, tag = 'internal scratch']
  #allocation2 [shape = 'f32[1,1]{1,0:T(1,128)S(1)}', space=vmem, size = 0x200, scoped, tag = 'scoped memory for tpu_custom_call.1']
  %s0 = inlined_call_operand.vmem [shape: f32[480,12], index: 0, kind: input, shape index: {}]
  %s1 = inlined_call_operand.vmem [shape: f32[48,23], index: 1, kind: input, shape index: {}]
  %s2 = inlined_call_operand.vmem [shape: f32[80,64], index: 2, kind: input, shape index: {}]
  %s3 = inlined_call_operand.vmem [shape: bf16[8,80], index: 3, kind: input, shape index: {}]
  %s4 = inlined_call_operand.vmem [shape: f32[80,80], index: 4, kind: input, shape index: {}]
  %s5 = inlined_call_operand.vmem [shape: f32[4,1,64], index: 5, kind: input, shape index: {}]
  %s6 = inlined_call_operand.vmem [shape: bf16[12,64], index: 6, kind: input, shape index: {}]
  %s7 = inlined_call_operand.vmem [shape: bf16[2,64,384], index: 7, kind: input, shape index: {}]
  %s8 = inlined_call_operand.vmem [shape: f32[2,1,384], index: 8, kind: input, shape index: {}]
  %s9 = inlined_call_operand.vmem [shape: f32[2,1,64], index: 9, kind: input, shape index: {}]
  %s10 = inlined_call_operand.vmem [shape: f32[2,1,64], index: 10, kind: input, shape index: {}]
  %s11 = inlined_call_operand.vmem [shape: f32[2,1,64], index: 11, kind: input, shape index: {}]
  %s12 = inlined_call_operand.vmem [shape: bf16[2,64,128], index: 12, kind: input, shape index: {}]
  %s13 = inlined_call_operand.vmem [shape: f32[2,1,128], index: 13, kind: input, shape index: {}]
  %s14 = inlined_call_operand.vmem [shape: bf16[2,128,64], index: 14, kind: input, shape index: {}]
  %s15 = inlined_call_operand.vmem [shape: f32[2,1,64], index: 15, kind: input, shape index: {}]
  %s16 = inlined_call_operand.vmem [shape: f32[2,1,64], index: 16, kind: input, shape index: {}]
  %s17 = inlined_call_operand.vmem [shape: f32[2,1,64], index: 17, kind: input, shape index: {}]
  %s18 = inlined_call_operand.vmem [shape: bf16[23,128], index: 18, kind: input, shape index: {}]
  %s19 = inlined_call_operand.vmem [shape: f32[1,128], index: 19, kind: input, shape index: {}]
  %s20 = inlined_call_operand.vmem [shape: bf16[64,128], index: 20, kind: input, shape index: {}]
  %s21 = inlined_call_operand.vmem [shape: bf16[128,128], index: 21, kind: input, shape index: {}]
  %s22 = inlined_call_operand.vmem [shape: f32[1,128], index: 22, kind: input, shape index: {}]
  %s23 = inlined_call_operand.vmem [shape: bf16[128,1], index: 23, kind: input, shape index: {}]
  %s24 = inlined_call_operand.<no memory space> [shape: f32[1,1], index: 24, kind: input, shape index: {}]
  %s25 = inlined_call_operand.vmem [shape: f32[48,1], index: 25, kind: output, shape index: {}]
  %s26 = sld [smem:[#allocation0]]
  $region133: #{tpu_custom_call.1} parent=0
    _
  %s28 = ssub.s32 1, %s26
  %s29 = scalar_select 0, %s28, %s26
  %v30 = vstv %s24
  %31 = vst [vmem:[#allocation2] sm:$0x1] %v30
  loop: start=0, step=1, limit=8
  $region2: #{tpu_custom_call.1} parent=0 // loop_pre_header
    _
  $region3: #{tpu_custom_call.1} parent=0 // loop_header
    %s33 = sphi 0, %s37
    %p34 = scmp.ge.s32.totalorder %s33, 8
    %s43 = sphi 0, %s45
    %s46 = sphi 0, %s43
    %s47 = sphi 0, %s46
    %s63 = sphi 0, %s47
    %s69 = sphi 0, %s71
    %s72 = sphi 0, %s69
    %s73 = sphi 0, %s72
    %s89 = sphi 0, %s73
    %s93 = sphi 0, %s93
    %s95 = sphi 0, %s93
    %s96 = sphi 0, %s95
    %s110 = sphi 0, %s96
    %s114 = sphi 0, %s114
    %s116 = sphi 0, %s114
    %s117 = sphi 0, %s116
    %s131 = sphi 0, %s117
    %s135 = sphi 0, %s135
    %s137 = sphi 0, %s135
    %s138 = sphi 0, %s137
    %s152 = sphi 0, %s138
    %s156 = sphi 0, %s156
    %s158 = sphi 0, %s156
    %s159 = sphi 0, %s158
    %s173 = sphi 0, %s159
    %s177 = sphi 0, %s177
    %s179 = sphi 0, %s177
    %s180 = sphi 0, %s179
    %s194 = sphi 0, %s180
    %s198 = sphi 0, %s198
    %s200 = sphi 0, %s198
    %s201 = sphi 0, %s200
    %s215 = sphi 0, %s201
    %s219 = sphi 0, %s219
    %s221 = sphi 0, %s219
    %s222 = sphi 0, %s221
    %s236 = sphi 0, %s222
    %s240 = sphi 0, %s240
    %s242 = sphi 0, %s240
    %s243 = sphi 0, %s242
    %s257 = sphi 0, %s243
    %s261 = sphi 0, %s261
    %s263 = sphi 0, %s261
    %s264 = sphi 0, %s263
    %s278 = sphi 0, %s264
    %s282 = sphi 0, %s282
    %s284 = sphi 0, %s282
    %s285 = sphi 0, %s284
    %s299 = sphi 0, %s285
    %s303 = sphi 0, %s303
    %s305 = sphi 0, %s303
    %s306 = sphi 0, %s305
    %s320 = sphi 0, %s306
    %s324 = sphi 0, %s324
    %s326 = sphi 0, %s324
    %s327 = sphi 0, %s326
    %s341 = sphi 0, %s327
    %s345 = sphi 0, %s345
    %s347 = sphi 0, %s345
    %s348 = sphi 0, %s347
    %s362 = sphi 0, %s348
    %s366 = sphi 0, %s366
    %s368 = sphi 0, %s366
    %s369 = sphi 0, %s368
    %s383 = sphi 0, %s369
    %s387 = sphi 0, %s387
    %s389 = sphi 0, %s387
    %s390 = sphi 0, %s389
    %s404 = sphi 0, %s390
    %s408 = sphi 0, %s408
    %s410 = sphi 0, %s408
    %s411 = sphi 0, %s410
    %s425 = sphi 0, %s411
    %s429 = sphi 0, %s429
    %s431 = sphi 0, %s429
    %s432 = sphi 0, %s431
    %s446 = sphi 0, %s432
    %s450 = sphi 0, %s450
    %s452 = sphi 0, %s450
    %s453 = sphi 0, %s452
    %s467 = sphi 0, %s453
    %s471 = sphi 0, %s471
    %s473 = sphi 0, %s471
    %s474 = sphi 0, %s473
    %s488 = sphi 0, %s474
    %s492 = sphi 0, %s492
    %s494 = sphi 0, %s492
    %s495 = sphi 0, %s494
    %s509 = sphi 0, %s495
    %s513 = sphi 0, %s513
    %s515 = sphi 0, %s513
    %s516 = sphi 0, %s515
    %s530 = sphi 0, %s516
    %s534 = sphi 0, %s534
    %s536 = sphi 0, %s534
    %s537 = sphi 0, %s536
    %s551 = sphi 0, %s537
    %s555 = sphi 0, %s555
    %s557 = sphi 0, %s555
    %s558 = sphi 0, %s557
    %s572 = sphi 0, %s558
    %s578 = sphi 0, %s580
    %s581 = sphi 0, %s578
    %s582 = sphi 0, %s581
    %s598 = sphi 0, %s582
  $region4: #{tpu_custom_call.1} parent=0 // loop_header_branch
    %36 = sbr.rel (%p34) target = $region8
  $region5: #{tpu_custom_call.1} parent=0 // loop_body
    %s38 = ssub.s32 %s33, 1
    %s39 = ssub.s32 %s33, 2
    %s40 = sadd.s32 %s33, 1
    %s41 = ssub.s32 %s33, %s40
    %p42 = scmp.eq.s32.totalorder %s41, 0
    %s44 = sadd.s32 %s43, 1
    %s45 = scalar_select %p42, %s43, %s44
    %p48 = pneg %p42
    %p49 = scmp.eq.s32.totalorder %s33, 5
    %p50 = por %p48, %p49
    %p51 = scmp.ne.s32.totalorder %s43, %s46
    %p52 = scmp.eq.s32.totalorder %s33, 0
    %p53 = por %p51, %p52
    %p54 = scmp.ne.s32.totalorder %s43, %s46
    %p55 = scmp.eq.s32.totalorder %s38, 5
    %p56 = por %p54, %p55
    %p57 = scmp.ne.s32.totalorder %s46, %s47
    %p58 = scmp.eq.s32.totalorder %s38, 0
    %p59 = por %p57, %p58
    %p60 = scmp.ne.s32.totalorder %s46, %s47
    %p61 = scmp.eq.s32.totalorder %s39, 5
    %p62 = por %p60, %p61
    %p64 = scmp.ne.s32.totalorder %s47, %s63
    %p65 = scmp.eq.s32.totalorder %s39, 0
    %p66 = por %p64, %p65
    %s67 = ssub.s32 %s33, %s40
    %p68 = scmp.eq.s32.totalorder %s67, 0
    %s70 = sadd.s32 %s69, 1
    %s71 = scalar_select %p68, %s69, %s70
    %p74 = pneg %p68
    %p75 = scmp.eq.s32.totalorder %s33, 5
    %p76 = por %p74, %p75
    %p77 = scmp.ne.s32.totalorder %s69, %s72
    %p78 = scmp.eq.s32.totalorder %s33, 0
    %p79 = por %p77, %p78
    %p80 = scmp.ne.s32.totalorder %s69, %s72
    %p81 = scmp.eq.s32.totalorder %s38, 5
    %p82 = por %p80, %p81
    %p83 = scmp.ne.s32.totalorder %s72, %s73
    %p84 = scmp.eq.s32.totalorder %s38, 0
    %p85 = por %p83, %p84
    %p86 = scmp.ne.s32.totalorder %s72, %s73
    %p87 = scmp.eq.s32.totalorder %s39, 5
    %p88 = por %p86, %p87
    %p90 = scmp.ne.s32.totalorder %s73, %s89
    %p91 = scmp.eq.s32.totalorder %s39, 0
    %p92 = por %p90, %p91
    %s94 = sadd.s32 %s93, 1
    %p97 = scmp.eq.s32.totalorder %s33, 5
    %p98 = scmp.ne.s32.totalorder %s93, %s95
    %p99 = scmp.eq.s32.totalorder %s33, 0
    %p100 = por %p98, %p99
    %p101 = scmp.ne.s32.totalorder %s93, %s95
    %p102 = scmp.eq.s32.totalorder %s38, 5
    %p103 = por %p101, %p102
    %p104 = scmp.ne.s32.totalorder %s95, %s96
    %p105 = scmp.eq.s32.totalorder %s38, 0
    %p106 = por %p104, %p105
    %p107 = scmp.ne.s32.totalorder %s95, %s96
    %p108 = scmp.eq.s32.totalorder %s39, 5
    %p109 = por %p107, %p108
    %p111 = scmp.ne.s32.totalorder %s96, %s110
    %p112 = scmp.eq.s32.totalorder %s39, 0
    %p113 = por %p111, %p112
    %s115 = sadd.s32 %s114, 1
    %p118 = scmp.eq.s32.totalorder %s33, 5
    %p119 = scmp.ne.s32.totalorder %s114, %s116
    %p120 = scmp.eq.s32.totalorder %s33, 0
    %p121 = por %p119, %p120
    %p122 = scmp.ne.s32.totalorder %s114, %s116
    %p123 = scmp.eq.s32.totalorder %s38, 5
    %p124 = por %p122, %p123
    %p125 = scmp.ne.s32.totalorder %s116, %s117
    %p126 = scmp.eq.s32.totalorder %s38, 0
    %p127 = por %p125, %p126
    %p128 = scmp.ne.s32.totalorder %s116, %s117
    %p129 = scmp.eq.s32.totalorder %s39, 5
    %p130 = por %p128, %p129
    %p132 = scmp.ne.s32.totalorder %s117, %s131
    %p133 = scmp.eq.s32.totalorder %s39, 0
    %p134 = por %p132, %p133
    %s136 = sadd.s32 %s135, 1
    %p139 = scmp.eq.s32.totalorder %s33, 5
    %p140 = scmp.ne.s32.totalorder %s135, %s137
    %p141 = scmp.eq.s32.totalorder %s33, 0
    %p142 = por %p140, %p141
    %p143 = scmp.ne.s32.totalorder %s135, %s137
    %p144 = scmp.eq.s32.totalorder %s38, 5
    %p145 = por %p143, %p144
    %p146 = scmp.ne.s32.totalorder %s137, %s138
    %p147 = scmp.eq.s32.totalorder %s38, 0
    %p148 = por %p146, %p147
    %p149 = scmp.ne.s32.totalorder %s137, %s138
    %p150 = scmp.eq.s32.totalorder %s39, 5
    %p151 = por %p149, %p150
    %p153 = scmp.ne.s32.totalorder %s138, %s152
    %p154 = scmp.eq.s32.totalorder %s39, 0
    %p155 = por %p153, %p154
    %s157 = sadd.s32 %s156, 1
    %p160 = scmp.eq.s32.totalorder %s33, 5
    %p161 = scmp.ne.s32.totalorder %s156, %s158
    %p162 = scmp.eq.s32.totalorder %s33, 0
    %p163 = por %p161, %p162
    %p164 = scmp.ne.s32.totalorder %s156, %s158
    %p165 = scmp.eq.s32.totalorder %s38, 5
    %p166 = por %p164, %p165
    %p167 = scmp.ne.s32.totalorder %s158, %s159
    %p168 = scmp.eq.s32.totalorder %s38, 0
    %p169 = por %p167, %p168
    %p170 = scmp.ne.s32.totalorder %s158, %s159
    %p171 = scmp.eq.s32.totalorder %s39, 5
    %p172 = por %p170, %p171
    %p174 = scmp.ne.s32.totalorder %s159, %s173
    %p175 = scmp.eq.s32.totalorder %s39, 0
    %p176 = por %p174, %p175
    %s178 = sadd.s32 %s177, 1
    %p181 = scmp.eq.s32.totalorder %s33, 5
    %p182 = scmp.ne.s32.totalorder %s177, %s179
    %p183 = scmp.eq.s32.totalorder %s33, 0
    %p184 = por %p182, %p183
    %p185 = scmp.ne.s32.totalorder %s177, %s179
    %p186 = scmp.eq.s32.totalorder %s38, 5
    %p187 = por %p185, %p186
    %p188 = scmp.ne.s32.totalorder %s179, %s180
    %p189 = scmp.eq.s32.totalorder %s38, 0
    %p190 = por %p188, %p189
    %p191 = scmp.ne.s32.totalorder %s179, %s180
    %p192 = scmp.eq.s32.totalorder %s39, 5
    %p193 = por %p191, %p192
    %p195 = scmp.ne.s32.totalorder %s180, %s194
    %p196 = scmp.eq.s32.totalorder %s39, 0
    %p197 = por %p195, %p196
    %s199 = sadd.s32 %s198, 1
    %p202 = scmp.eq.s32.totalorder %s33, 5
    %p203 = scmp.ne.s32.totalorder %s198, %s200
    %p204 = scmp.eq.s32.totalorder %s33, 0
    %p205 = por %p203, %p204
    %p206 = scmp.ne.s32.totalorder %s198, %s200
    %p207 = scmp.eq.s32.totalorder %s38, 5
    %p208 = por %p206, %p207
    %p209 = scmp.ne.s32.totalorder %s200, %s201
    %p210 = scmp.eq.s32.totalorder %s38, 0
    %p211 = por %p209, %p210
    %p212 = scmp.ne.s32.totalorder %s200, %s201
    %p213 = scmp.eq.s32.totalorder %s39, 5
    %p214 = por %p212, %p213
    %p216 = scmp.ne.s32.totalorder %s201, %s215
    %p217 = scmp.eq.s32.totalorder %s39, 0
    %p218 = por %p216, %p217
    %s220 = sadd.s32 %s219, 1
    %p223 = scmp.eq.s32.totalorder %s33, 5
    %p224 = scmp.ne.s32.totalorder %s219, %s221
    %p225 = scmp.eq.s32.totalorder %s33, 0
    %p226 = por %p224, %p225
    %p227 = scmp.ne.s32.totalorder %s219, %s221
    %p228 = scmp.eq.s32.totalorder %s38, 5
    %p229 = por %p227, %p228
    %p230 = scmp.ne.s32.totalorder %s221, %s222
    %p231 = scmp.eq.s32.totalorder %s38, 0
    %p232 = por %p230, %p231
    %p233 = scmp.ne.s32.totalorder %s221, %s222
    %p234 = scmp.eq.s32.totalorder %s39, 5
    %p235 = por %p233, %p234
    %p237 = scmp.ne.s32.totalorder %s222, %s236
    %p238 = scmp.eq.s32.totalorder %s39, 0
    %p239 = por %p237, %p238
    %s241 = sadd.s32 %s240, 1
    %p244 = scmp.eq.s32.totalorder %s33, 5
    %p245 = scmp.ne.s32.totalorder %s240, %s242
    %p246 = scmp.eq.s32.totalorder %s33, 0
    %p247 = por %p245, %p246
    %p248 = scmp.ne.s32.totalorder %s240, %s242
    %p249 = scmp.eq.s32.totalorder %s38, 5
    %p250 = por %p248, %p249
    %p251 = scmp.ne.s32.totalorder %s242, %s243
    %p252 = scmp.eq.s32.totalorder %s38, 0
    %p253 = por %p251, %p252
    %p254 = scmp.ne.s32.totalorder %s242, %s243
    %p255 = scmp.eq.s32.totalorder %s39, 5
    %p256 = por %p254, %p255
    %p258 = scmp.ne.s32.totalorder %s243, %s257
    %p259 = scmp.eq.s32.totalorder %s39, 0
    %p260 = por %p258, %p259
    %s262 = sadd.s32 %s261, 1
    %p265 = scmp.eq.s32.totalorder %s33, 5
    %p266 = scmp.ne.s32.totalorder %s261, %s263
    %p267 = scmp.eq.s32.totalorder %s33, 0
    %p268 = por %p266, %p267
    %p269 = scmp.ne.s32.totalorder %s261, %s263
    %p270 = scmp.eq.s32.totalorder %s38, 5
    %p271 = por %p269, %p270
    %p272 = scmp.ne.s32.totalorder %s263, %s264
    %p273 = scmp.eq.s32.totalorder %s38, 0
    %p274 = por %p272, %p273
    %p275 = scmp.ne.s32.totalorder %s263, %s264
    %p276 = scmp.eq.s32.totalorder %s39, 5
    %p277 = por %p275, %p276
    %p279 = scmp.ne.s32.totalorder %s264, %s278
    %p280 = scmp.eq.s32.totalorder %s39, 0
    %p281 = por %p279, %p280
    %s283 = sadd.s32 %s282, 1
    %p286 = scmp.eq.s32.totalorder %s33, 5
    %p287 = scmp.ne.s32.totalorder %s282, %s284
    %p288 = scmp.eq.s32.totalorder %s33, 0
    %p289 = por %p287, %p288
    %p290 = scmp.ne.s32.totalorder %s282, %s284
    %p291 = scmp.eq.s32.totalorder %s38, 5
    %p292 = por %p290, %p291
    %p293 = scmp.ne.s32.totalorder %s284, %s285
    %p294 = scmp.eq.s32.totalorder %s38, 0
    %p295 = por %p293, %p294
    %p296 = scmp.ne.s32.totalorder %s284, %s285
    %p297 = scmp.eq.s32.totalorder %s39, 5
    %p298 = por %p296, %p297
    %p300 = scmp.ne.s32.totalorder %s285, %s299
    %p301 = scmp.eq.s32.totalorder %s39, 0
    %p302 = por %p300, %p301
    %s304 = sadd.s32 %s303, 1
    %p307 = scmp.eq.s32.totalorder %s33, 5
    %p308 = scmp.ne.s32.totalorder %s303, %s305
    %p309 = scmp.eq.s32.totalorder %s33, 0
    %p310 = por %p308, %p309
    %p311 = scmp.ne.s32.totalorder %s303, %s305
    %p312 = scmp.eq.s32.totalorder %s38, 5
    %p313 = por %p311, %p312
    %p314 = scmp.ne.s32.totalorder %s305, %s306
    %p315 = scmp.eq.s32.totalorder %s38, 0
    %p316 = por %p314, %p315
    %p317 = scmp.ne.s32.totalorder %s305, %s306
    %p318 = scmp.eq.s32.totalorder %s39, 5
    %p319 = por %p317, %p318
    %p321 = scmp.ne.s32.totalorder %s306, %s320
    %p322 = scmp.eq.s32.totalorder %s39, 0
    %p323 = por %p321, %p322
    %s325 = sadd.s32 %s324, 1
    %p328 = scmp.eq.s32.totalorder %s33, 5
    %p329 = scmp.ne.s32.totalorder %s324, %s326
    %p330 = scmp.eq.s32.totalorder %s33, 0
    %p331 = por %p329, %p330
    %p332 = scmp.ne.s32.totalorder %s324, %s326
    %p333 = scmp.eq.s32.totalorder %s38, 5
    %p334 = por %p332, %p333
    %p335 = scmp.ne.s32.totalorder %s326, %s327
    %p336 = scmp.eq.s32.totalorder %s38, 0
    %p337 = por %p335, %p336
    %p338 = scmp.ne.s32.totalorder %s326, %s327
    %p339 = scmp.eq.s32.totalorder %s39, 5
    %p340 = por %p338, %p339
    %p342 = scmp.ne.s32.totalorder %s327, %s341
    %p343 = scmp.eq.s32.totalorder %s39, 0
    %p344 = por %p342, %p343
    %s346 = sadd.s32 %s345, 1
    %p349 = scmp.eq.s32.totalorder %s33, 5
    %p350 = scmp.ne.s32.totalorder %s345, %s347
    %p351 = scmp.eq.s32.totalorder %s33, 0
    %p352 = por %p350, %p351
    %p353 = scmp.ne.s32.totalorder %s345, %s347
    %p354 = scmp.eq.s32.totalorder %s38, 5
    %p355 = por %p353, %p354
    %p356 = scmp.ne.s32.totalorder %s347, %s348
    %p357 = scmp.eq.s32.totalorder %s38, 0
    %p358 = por %p356, %p357
    %p359 = scmp.ne.s32.totalorder %s347, %s348
    %p360 = scmp.eq.s32.totalorder %s39, 5
    %p361 = por %p359, %p360
    %p363 = scmp.ne.s32.totalorder %s348, %s362
    %p364 = scmp.eq.s32.totalorder %s39, 0
    %p365 = por %p363, %p364
    %s367 = sadd.s32 %s366, 1
    %p370 = scmp.eq.s32.totalorder %s33, 5
    %p371 = scmp.ne.s32.totalorder %s366, %s368
    %p372 = scmp.eq.s32.totalorder %s33, 0
    %p373 = por %p371, %p372
    %p374 = scmp.ne.s32.totalorder %s366, %s368
    %p375 = scmp.eq.s32.totalorder %s38, 5
    %p376 = por %p374, %p375
    %p377 = scmp.ne.s32.totalorder %s368, %s369
    %p378 = scmp.eq.s32.totalorder %s38, 0
    %p379 = por %p377, %p378
    %p380 = scmp.ne.s32.totalorder %s368, %s369
    %p381 = scmp.eq.s32.totalorder %s39, 5
    %p382 = por %p380, %p381
    %p384 = scmp.ne.s32.totalorder %s369, %s383
    %p385 = scmp.eq.s32.totalorder %s39, 0
    %p386 = por %p384, %p385
    %s388 = sadd.s32 %s387, 1
    %p391 = scmp.eq.s32.totalorder %s33, 5
    %p392 = scmp.ne.s32.totalorder %s387, %s389
    %p393 = scmp.eq.s32.totalorder %s33, 0
    %p394 = por %p392, %p393
    %p395 = scmp.ne.s32.totalorder %s387, %s389
    %p396 = scmp.eq.s32.totalorder %s38, 5
    %p397 = por %p395, %p396
    %p398 = scmp.ne.s32.totalorder %s389, %s390
    %p399 = scmp.eq.s32.totalorder %s38, 0
    %p400 = por %p398, %p399
    %p401 = scmp.ne.s32.totalorder %s389, %s390
    %p402 = scmp.eq.s32.totalorder %s39, 5
    %p403 = por %p401, %p402
    %p405 = scmp.ne.s32.totalorder %s390, %s404
    %p406 = scmp.eq.s32.totalorder %s39, 0
    %p407 = por %p405, %p406
    %s409 = sadd.s32 %s408, 1
    %p412 = scmp.eq.s32.totalorder %s33, 5
    %p413 = scmp.ne.s32.totalorder %s408, %s410
    %p414 = scmp.eq.s32.totalorder %s33, 0
    %p415 = por %p413, %p414
    %p416 = scmp.ne.s32.totalorder %s408, %s410
    %p417 = scmp.eq.s32.totalorder %s38, 5
    %p418 = por %p416, %p417
    %p419 = scmp.ne.s32.totalorder %s410, %s411
    %p420 = scmp.eq.s32.totalorder %s38, 0
    %p421 = por %p419, %p420
    %p422 = scmp.ne.s32.totalorder %s410, %s411
    %p423 = scmp.eq.s32.totalorder %s39, 5
    %p424 = por %p422, %p423
    %p426 = scmp.ne.s32.totalorder %s411, %s425
    %p427 = scmp.eq.s32.totalorder %s39, 0
    %p428 = por %p426, %p427
    %s430 = sadd.s32 %s429, 1
    %p433 = scmp.eq.s32.totalorder %s33, 5
    %p434 = scmp.ne.s32.totalorder %s429, %s431
    %p435 = scmp.eq.s32.totalorder %s33, 0
    %p436 = por %p434, %p435
    %p437 = scmp.ne.s32.totalorder %s429, %s431
    %p438 = scmp.eq.s32.totalorder %s38, 5
    %p439 = por %p437, %p438
    %p440 = scmp.ne.s32.totalorder %s431, %s432
    %p441 = scmp.eq.s32.totalorder %s38, 0
    %p442 = por %p440, %p441
    %p443 = scmp.ne.s32.totalorder %s431, %s432
    %p444 = scmp.eq.s32.totalorder %s39, 5
    %p445 = por %p443, %p444
    %p447 = scmp.ne.s32.totalorder %s432, %s446
    %p448 = scmp.eq.s32.totalorder %s39, 0
    %p449 = por %p447, %p448
    %s451 = sadd.s32 %s450, 1
    %p454 = scmp.eq.s32.totalorder %s33, 5
    %p455 = scmp.ne.s32.totalorder %s450, %s452
    %p456 = scmp.eq.s32.totalorder %s33, 0
    %p457 = por %p455, %p456
    %p458 = scmp.ne.s32.totalorder %s450, %s452
    %p459 = scmp.eq.s32.totalorder %s38, 5
    %p460 = por %p458, %p459
    %p461 = scmp.ne.s32.totalorder %s452, %s453
    %p462 = scmp.eq.s32.totalorder %s38, 0
    %p463 = por %p461, %p462
    %p464 = scmp.ne.s32.totalorder %s452, %s453
    %p465 = scmp.eq.s32.totalorder %s39, 5
    %p466 = por %p464, %p465
    %p468 = scmp.ne.s32.totalorder %s453, %s467
    %p469 = scmp.eq.s32.totalorder %s39, 0
    %p470 = por %p468, %p469
    %s472 = sadd.s32 %s471, 1
    %p475 = scmp.eq.s32.totalorder %s33, 5
    %p476 = scmp.ne.s32.totalorder %s471, %s473
    %p477 = scmp.eq.s32.totalorder %s33, 0
    %p478 = por %p476, %p477
    %p479 = scmp.ne.s32.totalorder %s471, %s473
    %p480 = scmp.eq.s32.totalorder %s38, 5
    %p481 = por %p479, %p480
    %p482 = scmp.ne.s32.totalorder %s473, %s474
    %p483 = scmp.eq.s32.totalorder %s38, 0
    %p484 = por %p482, %p483
    %p485 = scmp.ne.s32.totalorder %s473, %s474
    %p486 = scmp.eq.s32.totalorder %s39, 5
    %p487 = por %p485, %p486
    %p489 = scmp.ne.s32.totalorder %s474, %s488
    %p490 = scmp.eq.s32.totalorder %s39, 0
    %p491 = por %p489, %p490
    %s493 = sadd.s32 %s492, 1
    %p496 = scmp.eq.s32.totalorder %s33, 5
    %p497 = scmp.ne.s32.totalorder %s492, %s494
    %p498 = scmp.eq.s32.totalorder %s33, 0
    %p499 = por %p497, %p498
    %p500 = scmp.ne.s32.totalorder %s492, %s494
    %p501 = scmp.eq.s32.totalorder %s38, 5
    %p502 = por %p500, %p501
    %p503 = scmp.ne.s32.totalorder %s494, %s495
    %p504 = scmp.eq.s32.totalorder %s38, 0
    %p505 = por %p503, %p504
    %p506 = scmp.ne.s32.totalorder %s494, %s495
    %p507 = scmp.eq.s32.totalorder %s39, 5
    %p508 = por %p506, %p507
    %p510 = scmp.ne.s32.totalorder %s495, %s509
    %p511 = scmp.eq.s32.totalorder %s39, 0
    %p512 = por %p510, %p511
    %s514 = sadd.s32 %s513, 1
    %p517 = scmp.eq.s32.totalorder %s33, 5
    %p518 = scmp.ne.s32.totalorder %s513, %s515
    %p519 = scmp.eq.s32.totalorder %s33, 0
    %p520 = por %p518, %p519
    %p521 = scmp.ne.s32.totalorder %s513, %s515
    %p522 = scmp.eq.s32.totalorder %s38, 5
    %p523 = por %p521, %p522
    %p524 = scmp.ne.s32.totalorder %s515, %s516
    %p525 = scmp.eq.s32.totalorder %s38, 0
    %p526 = por %p524, %p525
    %p527 = scmp.ne.s32.totalorder %s515, %s516
    %p528 = scmp.eq.s32.totalorder %s39, 5
    %p529 = por %p527, %p528
    %p531 = scmp.ne.s32.totalorder %s516, %s530
    %p532 = scmp.eq.s32.totalorder %s39, 0
    %p533 = por %p531, %p532
    %s535 = sadd.s32 %s534, 1
    %p538 = scmp.eq.s32.totalorder %s33, 5
    %p539 = scmp.ne.s32.totalorder %s534, %s536
    %p540 = scmp.eq.s32.totalorder %s33, 0
    %p541 = por %p539, %p540
    %p542 = scmp.ne.s32.totalorder %s534, %s536
    %p543 = scmp.eq.s32.totalorder %s38, 5
    %p544 = por %p542, %p543
    %p545 = scmp.ne.s32.totalorder %s536, %s537
    %p546 = scmp.eq.s32.totalorder %s38, 0
    %p547 = por %p545, %p546
    %p548 = scmp.ne.s32.totalorder %s536, %s537
    %p549 = scmp.eq.s32.totalorder %s39, 5
    %p550 = por %p548, %p549
    %p552 = scmp.ne.s32.totalorder %s537, %s551
    %p553 = scmp.eq.s32.totalorder %s39, 0
    %p554 = por %p552, %p553
    %s556 = sadd.s32 %s555, 1
    %p559 = scmp.eq.s32.totalorder %s33, 5
    %p560 = scmp.ne.s32.totalorder %s555, %s557
    %p561 = scmp.eq.s32.totalorder %s33, 0
    %p562 = por %p560, %p561
    %p563 = scmp.ne.s32.totalorder %s555, %s557
    %p564 = scmp.eq.s32.totalorder %s38, 5
    %p565 = por %p563, %p564
    %p566 = scmp.ne.s32.totalorder %s557, %s558
    %p567 = scmp.eq.s32.totalorder %s38, 0
    %p568 = por %p566, %p567
    %p569 = scmp.ne.s32.totalorder %s557, %s558
    %p570 = scmp.eq.s32.totalorder %s39, 5
    %p571 = por %p569, %p570
    %p573 = scmp.ne.s32.totalorder %s558, %s572
    %p574 = scmp.eq.s32.totalorder %s39, 0
    %p575 = por %p573, %p574
    %s576 = ssub.s32 %s33, %s40
    %p577 = scmp.eq.s32.totalorder %s576, 0
    %s579 = sadd.s32 %s578, 1
    %s580 = scalar_select %p577, %s578, %s579
    %p583 = pneg %p577
    %p584 = scmp.eq.s32.totalorder %s33, 5
    %p585 = por %p583, %p584
    %p586 = scmp.ne.s32.totalorder %s578, %s581
    %p587 = scmp.eq.s32.totalorder %s33, 0
    %p588 = por %p586, %p587
    %p589 = scmp.ne.s32.totalorder %s578, %s581
    %p590 = scmp.eq.s32.totalorder %s38, 5
    %p591 = por %p589, %p590
    %p592 = scmp.ne.s32.totalorder %s581, %s582
    %p593 = scmp.eq.s32.totalorder %s38, 0
    %p594 = por %p592, %p593
    %p595 = scmp.ne.s32.totalorder %s581, %s582
    %p596 = scmp.eq.s32.totalorder %s39, 5
    %p597 = por %p595, %p596
    %p599 = scmp.ne.s32.totalorder %s582, %s598
    %p600 = scmp.eq.s32.totalorder %s39, 0
    %p601 = por %p599, %p600
    %p602 = scmp.le.s32.totalorder 1, %s33
    %p603 = scmp.lt.s32.totalorder %s33, 7
    %p604 = pnand %p602, %p603
    %p605 = pneg %p604
    // Predicated region
    $region9: #{tpu_custom_call.1} parent=5 // pred_check
      _
    $region10: #{tpu_custom_call.1} parent=5 // pred_check_branch
      %607 = sbr.rel (%p604) target = $region12
    $region11: #{tpu_custom_call.1} parent=5 // pred_region
      %s608 = ssub.s32 %s33, 1
      // Predicated region
      $region13: #{tpu_custom_call.1} parent=11 // pred_check
        %p609 = pneg %p106
      $region14: #{tpu_custom_call.1} parent=11 // pred_check_branch
        %611 = sbr.rel (%p609) target = $region16
      $region15: #{tpu_custom_call.1} parent=11 // pred_region
        _
      $region16: #{tpu_custom_call.1} parent=11 // pred_fallthru
        _
      // Predicated region
      $region17: #{tpu_custom_call.1} parent=11 // pred_check
        %p612 = pneg %p127
      $region18: #{tpu_custom_call.1} parent=11 // pred_check_branch
        %614 = sbr.rel (%p612) target = $region20
      $region19: #{tpu_custom_call.1} parent=11 // pred_region
        _
      $region20: #{tpu_custom_call.1} parent=11 // pred_fallthru
        _
      // Predicated region
      $region21: #{tpu_custom_call.1} parent=11 // pred_check
        %p615 = pneg %p148
      $region22: #{tpu_custom_call.1} parent=11 // pred_check_branch
        %617 = sbr.rel (%p615) target = $region24
      $region23: #{tpu_custom_call.1} parent=11 // pred_region
        _
      $region24: #{tpu_custom_call.1} parent=11 // pred_fallthru
        _
      // Predicated region
      $region25: #{tpu_custom_call.1} parent=11 // pred_check
        %p618 = pneg %p169
      $region26: #{tpu_custom_call.1} parent=11 // pred_check_branch
        %620 = sbr.rel (%p618) target = $region28
      $region27: #{tpu_custom_call.1} parent=11 // pred_region
        _
      $region28: #{tpu_custom_call.1} parent=11 // pred_fallthru
        _
      // Predicated region
      $region29: #{tpu_custom_call.1} parent=11 // pred_check
        %p621 = pneg %p190
      $region30: #{tpu_custom_call.1} parent=11 // pred_check_branch
        %623 = sbr.rel (%p621) target = $region32
      $region31: #{tpu_custom_call.1} parent=11 // pred_region
        _
      $region32: #{tpu_custom_call.1} parent=11 // pred_fallthru
        _
      // Predicated region
      $region33: #{tpu_custom_call.1} parent=11 // pred_check
        %p624 = pneg %p211
      $region34: #{tpu_custom_call.1} parent=11 // pred_check_branch
        %626 = sbr.rel (%p624) target = $region36
      $region35: #{tpu_custom_call.1} parent=11 // pred_region
        _
      $region36: #{tpu_custom_call.1} parent=11 // pred_fallthru
        _
      // Predicated region
      $region37: #{tpu_custom_call.1} parent=11 // pred_check
        %p627 = pneg %p232
      $region38: #{tpu_custom_call.1} parent=11 // pred_check_branch
        %629 = sbr.rel (%p627) target = $region40
      $region39: #{tpu_custom_call.1} parent=11 // pred_region
        _
      $region40: #{tpu_custom_call.1} parent=11 // pred_fallthru
        _
      // Predicated region
      $region41: #{tpu_custom_call.1} parent=11 // pred_check
        %p630 = pneg %p253
      $region42: #{tpu_custom_call.1} parent=11 // pred_check_branch
        %632 = sbr.rel (%p630) target = $region44
      $region43: #{tpu_custom_call.1} parent=11 // pred_region
        _
      $region44: #{tpu_custom_call.1} parent=11 // pred_fallthru
        _
      // Predicated region
      $region45: #{tpu_custom_call.1} parent=11 // pred_check
        %p633 = pneg %p274
      $region46: #{tpu_custom_call.1} parent=11 // pred_check_branch
        %635 = sbr.rel (%p633) target = $region48
      $region47: #{tpu_custom_call.1} parent=11 // pred_region
        _
      $region48: #{tpu_custom_call.1} parent=11 // pred_fallthru
        _
      // Predicated region
      $region49: #{tpu_custom_call.1} parent=11 // pred_check
        %p636 = pneg %p295
      $region50: #{tpu_custom_call.1} parent=11 // pred_check_branch
        %638 = sbr.rel (%p636) target = $region52
      $region51: #{tpu_custom_call.1} parent=11 // pred_region
        _
      $region52: #{tpu_custom_call.1} parent=11 // pred_fallthru
        _
      // Predicated region
      $region53: #{tpu_custom_call.1} parent=11 // pred_check
        %p639 = pneg %p316
      $region54: #{tpu_custom_call.1} parent=11 // pred_check_branch
        %641 = sbr.rel (%p639) target = $region56
      $region55: #{tpu_custom_call.1} parent=11 // pred_region
        _
      $region56: #{tpu_custom_call.1} parent=11 // pred_fallthru
        _
      // Predicated region
      $region57: #{tpu_custom_call.1} parent=11 // pred_check
        %p642 = pneg %p337
      $region58: #{tpu_custom_call.1} parent=11 // pred_check_branch
        %644 = sbr.rel (%p642) target = $region60
      $region59: #{tpu_custom_call.1} parent=11 // pred_region
        _
      $region60: #{tpu_custom_call.1} parent=11 // pred_fallthru
        _
      // Predicated region
      $region61: #{tpu_custom_call.1} parent=11 // pred_check
        %p645 = pneg %p358
      $region62: #{tpu_custom_call.1} parent=11 // pred_check_branch
        %647 = sbr.rel (%p645) target = $region64
      $region63: #{tpu_custom_call.1} parent=11 // pred_region
        _
      $region64: #{tpu_custom_call.1} parent=11 // pred_fallthru
        _
      // Predicated region
      $region65: #{tpu_custom_call.1} parent=11 // pred_check
        %p648 = pneg %p379
      $region66: #{tpu_custom_call.1} parent=11 // pred_check_branch
        %650 = sbr.rel (%p648) target = $region68
      $region67: #{tpu_custom_call.1} parent=11 // pred_region
        _
      $region68: #{tpu_custom_call.1} parent=11 // pred_fallthru
        _
      // Predicated region
      $region69: #{tpu_custom_call.1} parent=11 // pred_check
        %p651 = pneg %p400
      $region70: #{tpu_custom_call.1} parent=11 // pred_check_branch
        %653 = sbr.rel (%p651) target = $region72
      $region71: #{tpu_custom_call.1} parent=11 // pred_region
        _
      $region72: #{tpu_custom_call.1} parent=11 // pred_fallthru
        _
      // Predicated region
      $region73: #{tpu_custom_call.1} parent=11 // pred_check
        %p654 = pneg %p421
      $region74: #{tpu_custom_call.1} parent=11 // pred_check_branch
        %656 = sbr.rel (%p654) target = $region76
      $region75: #{tpu_custom_call.1} parent=11 // pred_region
        _
      $region76: #{tpu_custom_call.1} parent=11 // pred_fallthru
        _
      // Predicated region
      $region77: #{tpu_custom_call.1} parent=11 // pred_check
        %p657 = pneg %p442
      $region78: #{tpu_custom_call.1} parent=11 // pred_check_branch
        %659 = sbr.rel (%p657) target = $region80
      $region79: #{tpu_custom_call.1} parent=11 // pred_region
        _
      $region80: #{tpu_custom_call.1} parent=11 // pred_fallthru
        _
      // Predicated region
      $region81: #{tpu_custom_call.1} parent=11 // pred_check
        %p660 = pneg %p463
      $region82: #{tpu_custom_call.1} parent=11 // pred_check_branch
        %662 = sbr.rel (%p660) target = $region84
      $region83: #{tpu_custom_call.1} parent=11 // pred_region
        _
      $region84: #{tpu_custom_call.1} parent=11 // pred_fallthru
        _
      // Predicated region
      $region85: #{tpu_custom_call.1} parent=11 // pred_check
        %p663 = pneg %p484
      $region86: #{tpu_custom_call.1} parent=11 // pred_check_branch
        %665 = sbr.rel (%p663) target = $region88
      $region87: #{tpu_custom_call.1} parent=11 // pred_region
        _
      $region88: #{tpu_custom_call.1} parent=11 // pred_fallthru
        _
      // Predicated region
      $region89: #{tpu_custom_call.1} parent=11 // pred_check
        %p666 = pneg %p505
      $region90: #{tpu_custom_call.1} parent=11 // pred_check_branch
        %668 = sbr.rel (%p666) target = $region92
      $region91: #{tpu_custom_call.1} parent=11 // pred_region
        _
      $region92: #{tpu_custom_call.1} parent=11 // pred_fallthru
        _
      // Predicated region
      $region93: #{tpu_custom_call.1} parent=11 // pred_check
        %p669 = pneg %p526
      $region94: #{tpu_custom_call.1} parent=11 // pred_check_branch
        %671 = sbr.rel (%p669) target = $region96
      $region95: #{tpu_custom_call.1} parent=11 // pred_region
        _
      $region96: #{tpu_custom_call.1} parent=11 // pred_fallthru
        _
      // Predicated region
      $region97: #{tpu_custom_call.1} parent=11 // pred_check
        %p672 = pneg %p547
      $region98: #{tpu_custom_call.1} parent=11 // pred_check_branch
        %674 = sbr.rel (%p672) target = $region100
      $region99: #{tpu_custom_call.1} parent=11 // pred_region
        _
      $region100: #{tpu_custom_call.1} parent=11 // pred_fallthru
        _
      // Predicated region
      $region101: #{tpu_custom_call.1} parent=11 // pred_check
        %p675 = pneg %p568
      $region102: #{tpu_custom_call.1} parent=11 // pred_check_branch
        %677 = sbr.rel (%p675) target = $region104
      $region103: #{tpu_custom_call.1} parent=11 // pred_region
        _
      $region104: #{tpu_custom_call.1} parent=11 // pred_fallthru
        _
    $region12: #{tpu_custom_call.1} parent=5 // pred_fallthru
      _
    %p678 = scmp.lt.s32.totalorder %s33, 6
    // Predicated region
    $region105: #{tpu_custom_call.1} parent=5 // pred_check
      %p679 = pneg %p678
    $region106: #{tpu_custom_call.1} parent=5 // pred_check_branch
      %681 = sbr.rel (%p679) target = $region108
    $region107: #{tpu_custom_call.1} parent=5 // pred_region
      // Predicated region
      $region109: #{tpu_custom_call.1} parent=107 // pred_check
        %p682 = pneg %p53
      $region110: #{tpu_custom_call.1} parent=107 // pred_check_branch
        %684 = sbr.rel (%p682) target = $region112
      $region111: #{tpu_custom_call.1} parent=107 // pred_region
        %s685 = smul.u32 10, %s33
        %p686 = scmp.lt.s32.totalorder %s685, 59
        %s687 = scalar_select %p686, %s685, 59
        %s688 = smul.addr %s687, 8
        %s689 = scalar_lea.vmem %s0, %s688
        %s690 = smul.u32 10, %s33
      $region112: #{tpu_custom_call.1} parent=107 // pred_fallthru
        _
      // Predicated region
      $region113: #{tpu_custom_call.1} parent=107 // pred_check
        %p691 = pneg %p79
      $region114: #{tpu_custom_call.1} parent=107 // pred_check_branch
        %693 = sbr.rel (%p691) target = $region116
      $region115: #{tpu_custom_call.1} parent=107 // pred_region
        %p694 = scmp.lt.s32.totalorder %s33, 5
        %s695 = scalar_select %p694, %s33, 5
        %s696 = smul.addr %s695, 8
        %s697 = scalar_lea.vmem %s1, %s696
      $region116: #{tpu_custom_call.1} parent=107 // pred_fallthru
        _
    $region108: #{tpu_custom_call.1} parent=5 // pred_fallthru
      _
    %p698 = scmp.le.s32.totalorder 1, %s33
    %p699 = scmp.lt.s32.totalorder %s33, 7
    %p700 = pnand %p698, %p699
    %p701 = pneg %p700
    // Predicated region
    $region117: #{tpu_custom_call.1} parent=5 // pred_check
      _
    $region118: #{tpu_custom_call.1} parent=5 // pred_check_branch
      %703 = sbr.rel (%p700) target = $region120
    $region119: #{tpu_custom_call.1} parent=5 // pred_region
      %s704 = ssub.s32 %s33, 1
      %s705 = smul.u32 10, %s38
      %p706 = scmp.lt.s32.totalorder %s705, 59
      %s707 = scalar_select %p706, %s705, 59
      %s708 = smul.addr %s707, 8
      %s709 = scalar_lea.vmem %s0, %s708
      %p710 = pneg %p59
      %p711 = pneg %p56
      %p712 = scmp.lt.s32.totalorder %s38, 5
      %s713 = scalar_select %p712, %s38, 5
      %s714 = smul.addr %s713, 8
      %s715 = scalar_lea.vmem %s1, %s714
      %p716 = pneg %p85
      %p717 = pneg %p82
      %p718 = pneg %p106
      %p719 = pneg %p103
      %p720 = pneg %p127
      %p721 = pneg %p124
      %p722 = pneg %p148
      %p723 = pneg %p145
      %p724 = pneg %p169
      %p725 = pneg %p166
      %p726 = pneg %p190
      %p727 = pneg %p187
      %p728 = pneg %p211
      %p729 = pneg %p208
      %p730 = pneg %p232
      %p731 = pneg %p229
      %p732 = pneg %p253
      %p733 = pneg %p250
      %p734 = pneg %p274
      %p735 = pneg %p271
      %p736 = pneg %p295
      %p737 = pneg %p292
      %p738 = pneg %p316
      %p739 = pneg %p313
      %p740 = pneg %p337
      %p741 = pneg %p334
      %p742 = pneg %p358
      %p743 = pneg %p355
      %p744 = pneg %p379
      %p745 = pneg %p376
      %p746 = pneg %p400
      %p747 = pneg %p397
      %p748 = pneg %p421
      %p749 = pneg %p418
      %p750 = pneg %p442
      %p751 = pneg %p439
      %p752 = pneg %p463
      %p753 = pneg %p460
      %p754 = pneg %p484
      %p755 = pneg %p481
      %p756 = pneg %p505
      %p757 = pneg %p502
      %p758 = pneg %p526
      %p759 = pneg %p523
      %p760 = pneg %p547
      %p761 = pneg %p544
      %p762 = pneg %p568
      %p763 = pneg %p565
      %p764 = pneg %p594
      %p765 = pneg %p591
      %p766 = scmp.lt.s32.totalorder %s38, 5
      %s767 = scalar_select %p766, %s38, 5
      %s768 = smul.addr %s767, 8
      %s769 = scalar_lea.vmem %s25, %s768
      %s770 = smul.u32 10, %s38
      %p771 = scmp.lt.s32.totalorder %s770, 59
      %s772 = scalar_select %p771, %s770, 59
      %s773 = smul.addr %s772, 8
      %s774 = scalar_lea.vmem %s0, %s773
      %s775 = smul.u32 10, %s38
      %p776 = scmp.lt.s32.totalorder %s38, 5
      %s777 = scalar_select %p776, %s38, 5
      %s778 = smul.addr %s777, 8
      %s779 = scalar_lea.vmem %s1, %s778
      %p780 = scmp.lt.s32.totalorder %s38, 5
      %s781 = scalar_select %p780, %s38, 5
      %s782 = smul.addr %s781, 8
      %s783 = scalar_lea.vmem %s25, %s782
      %v785 = vld [vmem:[%s4] sm:$0xff]
      %v786 = vld [vmem:[%s4 + $0x8] sm:$0xff]
      %v787 = vld [vmem:[%s4 + $0x10] sm:$0xff]
      %v788 = vld [vmem:[%s4 + $0x18] sm:$0xff]
      %v789 = vld [vmem:[%s4 + $0x20] sm:$0xff]
      %v790 = vld [vmem:[%s4 + $0x28] sm:$0xff]
      %v791 = vld [vmem:[%s4 + $0x30] sm:$0xff]
      %v792 = vld [vmem:[%s4 + $0x38] sm:$0xff]
      %v793 = vld [vmem:[%s4 + $0x40] sm:$0xff]
      %v794 = vld [vmem:[%s4 + $0x48] sm:$0xff]
      %v795 = vld [vmem:[%s774] sm:$0xff]
      %v796 = vld [vmem:[%s774 + $0x8] sm:$0xff]
      %v797 = vld [vmem:[%s774 + $0x10] sm:$0xff]
      %v798 = vld [vmem:[%s774 + $0x18] sm:$0xff]
      %v799 = vld [vmem:[%s774 + $0x20] sm:$0xff]
      %v800 = vld [vmem:[%s774 + $0x28] sm:$0xff]
      %v801 = vld [vmem:[%s774 + $0x30] sm:$0xff]
      %v802 = vld [vmem:[%s774 + $0x38] sm:$0xff]
      %v803 = vld [vmem:[%s774 + $0x40] sm:$0xff]
      %v804 = vld [vmem:[%s774 + $0x48] sm:$0xff]
      %v805 = vpack.c.bf16 %v796, %v795
      %v806 = vpack.c.bf16 %v798, %v797
      %v807 = vpack.c.bf16 %v800, %v799
      %v808 = vpack.c.bf16 %v802, %v801
      %v809 = vpack.c.bf16 %v804, %v803
      %v810 = vld [vmem:[%s6] sm:$0xf]
      %v811 = vld [vmem:[%s6 + $0x4] sm:$0x3]
      %v812 = vld [vmem:[%s2] sm:$0xff]
      %v813 = vld [vmem:[%s2 + $0x8] sm:$0xff]
      %v814 = vld [vmem:[%s2 + $0x10] sm:$0xff]
      %v815 = vld [vmem:[%s2 + $0x18] sm:$0xff]
      %v816 = vld [vmem:[%s2 + $0x20] sm:$0xff]
      %v817 = vld [vmem:[%s2 + $0x28] sm:$0xff]
      %v818 = vld [vmem:[%s2 + $0x30] sm:$0xff]
      %v819 = vld [vmem:[%s2 + $0x38] sm:$0xff]
      %v820 = vld [vmem:[%s2 + $0x40] sm:$0xff]
      %v821 = vld [vmem:[%s2 + $0x48] sm:$0xff]
      %v824 = vunpack.c.l.b16 %v810
      %v825 = vunpack.c.l.b16 %v811
      %v826 = vpack.c.b16 %v825, %v824
      %vm827 = vcmask 97280
      %v829 = vsel %vm827, %v805, 0
      %v832 = vsel %vm827, %v806, 0
      %v835 = vsel %vm827, %v807, 0
      %v838 = vsel %vm827, %v808, 0
      %v841 = vsel %vm827, %v809, 0
      %vm843 = vcmask 1045504
      %v845 = vsel %vm843, %v826, 0
      %847 = vmatprep.subr.bf16.mxu0 0
      %848 = vmatpush1.bf16.msra.mxu0 %v845
      %849 = vmatprep.subr.bf16.mxu0 0
      %850 = vmatpush1.bf16.msra.mxu0 0
      %851 = vmatprep.subr.bf16.mxu0 0
      %852 = vmatpush1.bf16.msra.mxu0 0
      %853 = vmatprep.subr.bf16.mxu0 0
      %854 = vmatpush1.bf16.msra.mxu0 0
      %855 = vmatprep.subr.bf16.mxu0 0
      %856 = vmatpush1.bf16.msra.mxu0 0
      %857 = vmatprep.subr.bf16.mxu0 0
      %858 = vmatpush1.bf16.msra.mxu0 0
      %859 = vmatprep.subr.bf16.mxu0 0
      %860 = vmatpush1.bf16.msra.mxu0 0
      %861 = vmatprep.subr.bf16.mxu0 0
      %862 = vmatpush1.bf16.msra.mxu0 0
      %863 = vmatprep.subr.bf16.mxu0 0
      %864 = vmatpush1.bf16.msra.mxu0 0
      %865 = vmatprep.subr.bf16.mxu0 0
      %866 = vmatpush1.bf16.msra.mxu0 0
      %867 = vmatprep.subr.bf16.mxu0 0
      %868 = vmatpush1.bf16.msra.mxu0 0
      %869 = vmatprep.subr.bf16.mxu0 0
      %870 = vmatpush1.bf16.msra.mxu0 0
      %871 = vmatprep.subr.bf16.mxu0 0
      %872 = vmatpush1.bf16.msra.mxu0 0
      %873 = vmatprep.subr.bf16.mxu0 0
      %874 = vmatpush1.bf16.msra.mxu0 0
      %875 = vmatprep.subr.bf16.mxu0 0
      %876 = vmatpush1.bf16.msra.mxu0 0
      %877 = vmatprep.subr.bf16.mxu0 0
      %878 = vmatpush1.bf16.msra.mxu0 0
      %879 = vmatprep.mubr.bf16.mxu0 0
      %880 = vmatmul.mubr.bf16.gmra.mrb[0].mxu0 %v829
      %v881 = vpop.f32.mrb[0].mxu0
      %v882 = vadd.f32 %v812, %v881
      %v883 = vpop.f32.mrb[0].mxu0
      %v884 = vpop.f32.mrb[0].mxu0
      %v885 = vadd.f32 %v813, %v884
      %v886 = vpop.f32.mrb[0].mxu0
      %887 = vmatprep.mubr.bf16.mxu0 0
      %888 = vmatmul.mubr.bf16.gmra.mrb[0].mxu0 %v832
      %v889 = vpop.f32.mrb[0].mxu0
      %v890 = vadd.f32 %v814, %v889
      %v891 = vpop.f32.mrb[0].mxu0
      %v892 = vpop.f32.mrb[0].mxu0
      %v893 = vadd.f32 %v815, %v892
      %v894 = vpop.f32.mrb[0].mxu0
      %895 = vmatprep.mubr.bf16.mxu0 0
      %896 = vmatmul.mubr.bf16.gmra.mrb[0].mxu0 %v835
      %v897 = vpop.f32.mrb[0].mxu0
      %v898 = vadd.f32 %v816, %v897
      %v899 = vpop.f32.mrb[0].mxu0
      %v900 = vpop.f32.mrb[0].mxu0
      %v901 = vadd.f32 %v817, %v900
      %v902 = vpop.f32.mrb[0].mxu0
      %903 = vmatprep.mubr.bf16.mxu0 0
      %904 = vmatmul.mubr.bf16.gmra.mrb[0].mxu0 %v838
      %v905 = vpop.f32.mrb[0].mxu0
      %v906 = vadd.f32 %v818, %v905
      %v907 = vpop.f32.mrb[0].mxu0
      %v908 = vpop.f32.mrb[0].mxu0
      %v909 = vadd.f32 %v819, %v908
      %v910 = vpop.f32.mrb[0].mxu0
      %911 = vmatprep.mubr.bf16.mxu0 0
      %912 = vmatmul.mubr.bf16.gmra.mrb[0].mxu0 %v841
      %v913 = vpop.f32.mrb[0].mxu0
      %v914 = vadd.f32 %v820, %v913
      %v915 = vpop.f32.mrb[0].mxu0
      %v916 = vpop.f32.mrb[0].mxu0
      %v917 = vadd.f32 %v821, %v916
      %v918 = vpop.f32.mrb[0].mxu0
      %919 = vdwg.mxu0
      %v920 = vpack.c.bf16 %v885, %v882
      %v921 = vpack.c.bf16 %v893, %v890
      %v922 = vpack.c.bf16 %v901, %v898
      %v923 = vpack.c.bf16 %v909, %v906
      %v924 = vpack.c.bf16 %v917, %v914
      %v925 = vld [vmem:[%s7] sm:$0xff]
      %v926 = vld [vmem:[%s7 + $0x8] sm:$0xf]
      %v927 = vld [vmem:[%s7 + $0xc] sm:$0xff]
      %v928 = vld [vmem:[%s7 + $0x14] sm:$0xf]
      %v929 = vld [vmem:[%s7 + $0x18] sm:$0xff]
      %v930 = vld [vmem:[%s7 + $0x20] sm:$0xf]
      %v931 = vld [vmem:[%s7 + $0x24] sm:$0xff]
      %v932 = vld [vmem:[%s7 + $0x2c] sm:$0xf]
      %v933 = vld [vmem:[%s7 + $0x30] sm:$0xff]
      %v934 = vld [vmem:[%s7 + $0x38] sm:$0xf]
      %v935 = vld [vmem:[%s7 + $0x3c] sm:$0xff]
      %v936 = vld [vmem:[%s7 + $0x44] sm:$0xf]
      %v937 = vld [vmem:[%s7 + $0x48] sm:$0xff]
      %v938 = vld [vmem:[%s7 + $0x50] sm:$0xf]
      %v939 = vld [vmem:[%s7 + $0x54] sm:$0xff]
      %v940 = vld [vmem:[%s7 + $0x5c] sm:$0xf]
      %v941 = vld [vmem:[%s8] sm:$0x7]
      %v943 = vlaneseq
      %v944 = vshrl.u32 %v943, 7
      %v945 = vsub.s32 0, %v944
      %v946 = vrot.slane %v941, %v945
      %v947 = vlaneseq
      %v948 = vshrl.u32 %v947, 7
      %v949 = vsub.s32 1, %v948
      %v950 = vrot.slane %v941, %v949
      %v951 = vlaneseq
      %v952 = vshrl.u32 %v951, 7
      %v953 = vsub.s32 2, %v952
      %v954 = vrot.slane %v941, %v953
      %v974 = vunpack.c.l.b16 %v925
      %v975 = vunpack.c.h.b16 %v925
      %v976 = vunpack.c.l.b16 %v926
      %v977 = vunpack.c.l.b16 %v927
      %v978 = vunpack.c.h.b16 %v927
      %v979 = vunpack.c.l.b16 %v928
      %v980 = vunpack.c.l.b16 %v929
      %v981 = vunpack.c.h.b16 %v929
      %v982 = vunpack.c.l.b16 %v930
      %v983 = vunpack.c.l.b16 %v931
      %v984 = vunpack.c.h.b16 %v931
      %v985 = vunpack.c.l.b16 %v932
      %v986 = vunpack.c.l.b16 %v933
      %v987 = vunpack.c.h.b16 %v933
      %v988 = vunpack.c.l.b16 %v934
      %v989 = vunpack.c.l.b16 %v935
      %v990 = vunpack.c.h.b16 %v935
      %v991 = vunpack.c.l.b16 %v936
      %v992 = vunpack.c.l.b16 %v937
      %v993 = vunpack.c.h.b16 %v937
      %v994 = vunpack.c.l.b16 %v938
      %v995 = vunpack.c.l.b16 %v939
      %v996 = vunpack.c.h.b16 %v939
      %v997 = vunpack.c.l.b16 %v940
      %v998 = vpack.c.b16 %v977, %v974
      %v999 = vpack.c.b16 %v978, %v975
      %v1000 = vpack.c.b16 %v979, %v976
      %v1001 = vpack.c.b16 %v983, %v980
      %v1002 = vpack.c.b16 %v984, %v981
      %v1003 = vpack.c.b16 %v985, %v982
      %v1004 = vpack.c.b16 %v989, %v986
      %v1005 = vpack.c.b16 %v990, %v987
      %v1006 = vpack.c.b16 %v991, %v988
      %v1007 = vpack.c.b16 %v995, %v992
      %v1008 = vpack.c.b16 %v996, %v993
      %v1009 = vpack.c.b16 %v997, %v994
      %vm1022 = vcmask 523264
      %v1024 = vsel %vm1022, %v920, 0
      %v1027 = vsel %vm1022, %v921, 0
      %v1030 = vsel %vm1022, %v922, 0
      %v1033 = vsel %vm1022, %v923, 0
      %v1036 = vsel %vm1022, %v924, 0
      %1038 = vmatprep.subr.bf16.mxu0 %v999
      %1039 = vmatpush1.bf16.msra.mxu0 %v998
      %1040 = vmatprep.subr.bf16.mxu0 %v1002
      %1041 = vmatpush1.bf16.msra.mxu0 %v1001
      %1042 = vmatprep.subr.bf16.mxu0 %v1005
      %1043 = vmatpush1.bf16.msra.mxu0 %v1004
      %1044 = vmatprep.subr.bf16.mxu0 %v1008
      %1045 = vmatpush1.bf16.msra.mxu0 %v1007
      %1046 = vmatprep.subr.bf16.mxu0 0
      %1047 = vmatpush1.bf16.msra.mxu0 0
      %1048 = vmatprep.subr.bf16.mxu0 0
      %1049 = vmatpush1.bf16.msra.mxu0 0
      %1050 = vmatprep.subr.bf16.mxu0 0
      %1051 = vmatpush1.bf16.msra.mxu0 0
      %1052 = vmatprep.subr.bf16.mxu0 0
      %1053 = vmatpush1.bf16.msra.mxu0 0
      %1054 = vmatprep.subr.bf16.mxu0 0
      %1055 = vmatpush1.bf16.msra.mxu0 0
      %1056 = vmatprep.subr.bf16.mxu0 0
      %1057 = vmatpush1.bf16.msra.mxu0 0
      %1058 = vmatprep.subr.bf16.mxu0 0
      %1059 = vmatpush1.bf16.msra.mxu0 0
      %1060 = vmatprep.subr.bf16.mxu0 0
      %1061 = vmatpush1.bf16.msra.mxu0 0
      %1062 = vmatprep.subr.bf16.mxu0 0
      %1063 = vmatpush1.bf16.msra.mxu0 0
      %1064 = vmatprep.subr.bf16.mxu0 0
      %1065 = vmatpush1.bf16.msra.mxu0 0
      %1066 = vmatprep.subr.bf16.mxu0 0
      %1067 = vmatpush1.bf16.msra.mxu0 0
      %1068 = vmatprep.subr.bf16.mxu0 0
      %1069 = vmatpush1.bf16.msra.mxu0 0
      %1070 = vmatprep.mubr.bf16.mxu0 0
      %1071 = vmatmul.mubr.bf16.gmra.mrb[0].mxu0 %v1024
      %v1072 = vpop.f32.mrb[0].mxu0
      %v1073 = vadd.f32 %v946, %v1072
      %v1074 = vpop.f32.mrb[0].mxu0
      %v1075 = vadd.f32 %v950, %v1074
      %v1076 = vpop.f32.mrb[0].mxu0
      %v1077 = vadd.f32 %v946, %v1076
      %v1078 = vpop.f32.mrb[0].mxu0
      %v1079 = vadd.f32 %v950, %v1078
      %1080 = vmatprep.mubr.bf16.mxu0 0
      %1081 = vmatmul.mubr.bf16.gmra.mrb[0].mxu0 %v1027
      %v1082 = vpop.f32.mrb[0].mxu0
      %v1083 = vadd.f32 %v946, %v1082
      %v1084 = vpop.f32.mrb[0].mxu0
      %v1085 = vadd.f32 %v950, %v1084
      %v1086 = vpop.f32.mrb[0].mxu0
      %v1087 = vadd.f32 %v946, %v1086
      %v1088 = vpop.f32.mrb[0].mxu0
      %v1089 = vadd.f32 %v950, %v1088
      %1090 = vmatprep.mubr.bf16.mxu0 0
      %1091 = vmatmul.mubr.bf16.gmra.mrb[0].mxu0 %v1030
      %v1092 = vpop.f32.mrb[0].mxu0
      %v1093 = vadd.f32 %v946, %v1092
      %v1094 = vpop.f32.mrb[0].mxu0
      %v1095 = vadd.f32 %v950, %v1094
      %v1096 = vpop.f32.mrb[0].mxu0
      %v1097 = vadd.f32 %v946, %v1096
      %v1098 = vpop.f32.mrb[0].mxu0
      %v1099 = vadd.f32 %v950, %v1098
      %1100 = vmatprep.mubr.bf16.mxu0 0
      %1101 = vmatmul.mubr.bf16.gmra.mrb[0].mxu0 %v1033
      %v1102 = vpop.f32.mrb[0].mxu0
      %v1103 = vadd.f32 %v946, %v1102
      %v1104 = vpop.f32.mrb[0].mxu0
      %v1105 = vadd.f32 %v950, %v1104
      %v1106 = vpop.f32.mrb[0].mxu0
      %v1107 = vadd.f32 %v946, %v1106
      %v1108 = vpop.f32.mrb[0].mxu0
      %v1109 = vadd.f32 %v950, %v1108
      %1110 = vmatprep.mubr.bf16.mxu0 0
      %1111 = vmatmul.mubr.bf16.gmra.mrb[0].mxu0 %v1036
      %v1112 = vpop.f32.mrb[0].mxu0
      %v1113 = vadd.f32 %v946, %v1112
      %v1114 = vpop.f32.mrb[0].mxu0
      %v1115 = vadd.f32 %v950, %v1114
      %v1116 = vpop.f32.mrb[0].mxu0
      %v1117 = vadd.f32 %v946, %v1116
      %v1118 = vpop.f32.mrb[0].mxu0
      %v1119 = vadd.f32 %v950, %v1118
      %1120 = vdwg.mxu0
      %1121 = vmatprep.subr.bf16.mxu0 0
      %1122 = vmatpush1.bf16.msra.mxu0 %v1000
      %1123 = vmatprep.subr.bf16.mxu0 0
      %1124 = vmatpush1.bf16.msra.mxu0 %v1003
      %1125 = vmatprep.subr.bf16.mxu0 0
      %1126 = vmatpush1.bf16.msra.mxu0 %v1006
      %1127 = vmatprep.subr.bf16.mxu0 0
      %1128 = vmatpush1.bf16.msra.mxu0 %v1009
      %1129 = vmatprep.subr.bf16.mxu0 0
      %1130 = vmatpush1.bf16.msra.mxu0 0
      %1131 = vmatprep.subr.bf16.mxu0 0
      %1132 = vmatpush1.bf16.msra.mxu0 0
      %1133 = vmatprep.subr.bf16.mxu0 0
      %1134 = vmatpush1.bf16.msra.mxu0 0
      %1135 = vmatprep.subr.bf16.mxu0 0
      %1136 = vmatpush1.bf16.msra.mxu0 0
      %1137 = vmatprep.subr.bf16.mxu0 0
      %1138 = vmatpush1.bf16.msra.mxu0 0
      %1139 = vmatprep.subr.bf16.mxu0 0
      %1140 = vmatpush1.bf16.msra.mxu0 0
      %1141 = vmatprep.subr.bf16.mxu0 0
      %1142 = vmatpush1.bf16.msra.mxu0 0
      %1143 = vmatprep.subr.bf16.mxu0 0
      %1144 = vmatpush1.bf16.msra.mxu0 0
      %1145 = vmatprep.subr.bf16.mxu0 0
      %1146 = vmatpush1.bf16.msra.mxu0 0
      %1147 = vmatprep.subr.bf16.mxu0 0
      %1148 = vmatpush1.bf16.msra.mxu0 0
      %1149 = vmatprep.subr.bf16.mxu0 0
      %1150 = vmatpush1.bf16.msra.mxu0 0
      %1151 = vmatprep.subr.bf16.mxu0 0
      %1152 = vmatpush1.bf16.msra.mxu0 0
      %1153 = vmatprep.mubr.bf16.mxu0 0
      %1154 = vmatmul.mubr.bf16.gmra.mrb[0].mxu0 %v1024
      %v1155 = vpop.f32.mrb[0].mxu0
      %v1156 = vadd.f32 %v954, %v1155
      %v1157 = vpop.f32.mrb[0].mxu0
      %v1158 = vpop.f32.mrb[0].mxu0
      %v1159 = vadd.f32 %v954, %v1158
      %v1160 = vpop.f32.mrb[0].mxu0
      %1161 = vmatprep.mubr.bf16.mxu0 0
      %1162 = vmatmul.mubr.bf16.gmra.mrb[0].mxu0 %v1027
      %v1163 = vpop.f32.mrb[0].mxu0
      %v1164 = vadd.f32 %v954, %v1163
      %v1165 = vpop.f32.mrb[0].mxu0
      %v1166 = vpop.f32.mrb[0].mxu0
      %v1167 = vadd.f32 %v954, %v1166
      %v1168 = vpop.f32.mrb[0].mxu0
      %1169 = vmatprep.mubr.bf16.mxu0 0
      %1170 = vmatmul.mubr.bf16.gmra.mrb[0].mxu0 %v1030
      %v1171 = vpop.f32.mrb[0].mxu0
      %v1172 = vadd.f32 %v954, %v1171
      %v1173 = vpop.f32.mrb[0].mxu0
      %v1174 = vpop.f32.mrb[0].mxu0
      %v1175 = vadd.f32 %v954, %v1174
      %v1176 = vpop.f32.mrb[0].mxu0
      %1177 = vmatprep.mubr.bf16.mxu0 0
      %1178 = vmatmul.mubr.bf16.gmra.mrb[0].mxu0 %v1033
      %v1179 = vpop.f32.mrb[0].mxu0
      %v1180 = vadd.f32 %v954, %v1179
      %v1181 = vpop.f32.mrb[0].mxu0
      %v1182 = vpop.f32.mrb[0].mxu0
      %v1183 = vadd.f32 %v954, %v1182
      %v1184 = vpop.f32.mrb[0].mxu0
      %1185 = vmatprep.mubr.bf16.mxu0 0
      %1186 = vmatmul.mubr.bf16.gmra.mrb[0].mxu0 %v1036
      %v1187 = vpop.f32.mrb[0].mxu0
      %v1188 = vadd.f32 %v954, %v1187
      %v1189 = vpop.f32.mrb[0].mxu0
      %v1190 = vpop.f32.mrb[0].mxu0
      %v1191 = vadd.f32 %v954, %v1190
      %v1192 = vpop.f32.mrb[0].mxu0
      %1193 = vdwg.mxu0
      %v1194 = vpack.c.bf16 %v1077, %v1073
      %v1195 = vpack.c.bf16 %v1087, %v1083
      %v1196 = vpack.c.bf16 %v1097, %v1093
      %v1197 = vpack.c.bf16 %v1107, %v1103
      %v1198 = vpack.c.bf16 %v1117, %v1113
      %v1199 = vpack.c.bf16 %v1079, %v1075
      %v1200 = vpack.c.bf16 %v1089, %v1085
      %v1201 = vpack.c.bf16 %v1099, %v1095
      %v1202 = vpack.c.bf16 %v1109, %v1105
      %v1203 = vpack.c.bf16 %v1119, %v1115
      %v1204 = vld [vmem:[%s5] sm:$0x1]
      %v1206 = vlaneseq
      %v1207 = vshrl.u32 %v1206, 7
      %v1208 = vsub.s32 0, %v1207
      %v1209 = vrot.slane %v1204, %v1208
      %v1211 = vmul.f32 %v1073, %v1209
      %v1212 = vmul.f32 %v1077, %v1209
      %v1213 = vmul.f32 %v1083, %v1209
      %v1214 = vmul.f32 %v1087, %v1209
      %v1215 = vmul.f32 %v1093, %v1209
      %v1216 = vmul.f32 %v1097, %v1209
      %v1217 = vmul.f32 %v1103, %v1209
      %v1218 = vmul.f32 %v1107, %v1209
      %v1219 = vmul.f32 %v1113, %v1209
      %v1220 = vmul.f32 %v1117, %v1209
      %v1221 = vpack.c.bf16 %v1212, %v1211
      %v1222 = vpack.c.bf16 %v1214, %v1213
      %v1223 = vpack.c.bf16 %v1216, %v1215
      %v1224 = vpack.c.bf16 %v1218, %v1217
      %v1225 = vpack.c.bf16 %v1220, %v1219
      %1231 = vrot.lane.b32.xlu0 %v1194, 64
      %v1232 = vpop.permute.xlu0 %1231
      %1233 = vrot.lane.b32.xlu0 %v1195, 64
      %v1234 = vpop.permute.xlu0 %1233
      %1235 = vrot.lane.b32.xlu0 %v1196, 64
      %v1236 = vpop.permute.xlu0 %1235
      %1237 = vrot.lane.b32.xlu0 %v1197, 64
      %v1238 = vpop.permute.xlu0 %1237
      %1239 = vrot.lane.b32.xlu0 %v1198, 64
      %v1240 = vpop.permute.xlu0 %1239
      %v1242 = vsel %vm1022, %v1221, 0
      %v1245 = vsel %vm1022, %v1222, 0
      %v1248 = vsel %vm1022, %v1223, 0
      %v1251 = vsel %vm1022, %v1224, 0
      %v1254 = vsel %vm1022, %v1225, 0
      %v1257 = vsel %vm1022, %v1232, 0
      %v1260 = vsel %vm1022, %v1234, 0
      %v1263 = vsel %vm1022, %v1236, 0
      %v1266 = vsel %vm1022, %v1238, 0
      %v1269 = vsel %vm1022, %v1240, 0
      %1271 = vmatprep.subr.bf16.mxu0 0
      %1272 = vmatpush1.bf16.xpose.msra.mxu0 %v1257
      %1273 = vmatprep.subr.bf16.mxu0 0
      %1274 = vmatpush1.bf16.xpose.msra.mxu0 %v1260
      %1275 = vmatprep.subr.bf16.mxu0 0
      %1276 = vmatpush1.bf16.xpose.msra.mxu0 %v1263
      %1277 = vmatprep.subr.bf16.mxu0 0
      %1278 = vmatpush1.bf16.xpose.msra.mxu0 %v1266
      %1279 = vmatprep.subr.bf16.mxu0 0
      %1280 = vmatpush1.bf16.xpose.msra.mxu0 %v1269
      %1281 = vmatprep.subr.bf16.mxu0 0
      %1282 = vmatpush1.bf16.xpose.msra.mxu0 0
      %1283 = vmatprep.subr.bf16.mxu0 0
      %1284 = vmatpush1.bf16.xpose.msra.mxu0 0
      %1285 = vmatprep.subr.bf16.mxu0 0
      %1286 = vmatpush1.bf16.xpose.msra.mxu0 0
      %1287 = vmatprep.subr.bf16.mxu0 0
      %1288 = vmatpush1.bf16.xpose.msra.mxu0 0
      %1289 = vmatprep.subr.bf16.mxu0 0
      %1290 = vmatpush1.bf16.xpose.msra.mxu0 0
      %1291 = vmatprep.subr.bf16.mxu0 0
      %1292 = vmatpush1.bf16.xpose.msra.mxu0 0
      %1293 = vmatprep.subr.bf16.mxu0 0
      %1294 = vmatpush1.bf16.xpose.msra.mxu0 0
      %1295 = vmatprep.subr.bf16.mxu0 0
      %1296 = vmatpush1.bf16.xpose.msra.mxu0 0
      %1297 = vmatprep.subr.bf16.mxu0 0
      %1298 = vmatpush1.bf16.xpose.msra.mxu0 0
      %1299 = vmatprep.subr.bf16.mxu0 0
      %1300 = vmatpush1.bf16.xpose.msra.mxu0 0
      %1301 = vmatprep.subr.bf16.mxu0 0
      %1302 = vmatpush1.bf16.xpose.msra.mxu0 0
      %1303 = vmatprep.mubr.bf16.mxu0 0
      %1304 = vmatmul.mubr.bf16.gmra.mrb[0].mxu0 %v1242
      %v1305 = vpop.f32.mrb[0].mxu0
      %v1306 = vadd.f32 %v785, %v1305
      %v1307 = vpop.f32.mrb[0].mxu0
      %v1308 = vpop.f32.mrb[0].mxu0
      %v1309 = vadd.f32 %v786, %v1308
      %v1310 = vpop.f32.mrb[0].mxu0
      %1311 = vmatprep.mubr.bf16.mxu0 0
      %1312 = vmatmul.mubr.bf16.gmra.mrb[0].mxu0 %v1245
      %v1313 = vpop.f32.mrb[0].mxu0
      %v1314 = vadd.f32 %v787, %v1313
      %v1315 = vpop.f32.mrb[0].mxu0
      %v1316 = vpop.f32.mrb[0].mxu0
      %v1317 = vadd.f32 %v788, %v1316
      %v1318 = vpop.f32.mrb[0].mxu0
      %1319 = vmatprep.mubr.bf16.mxu0 0
      %1320 = vmatmul.mubr.bf16.gmra.mrb[0].mxu0 %v1248
      %v1321 = vpop.f32.mrb[0].mxu0
      %v1322 = vadd.f32 %v789, %v1321
      %v1323 = vpop.f32.mrb[0].mxu0
      %v1324 = vpop.f32.mrb[0].mxu0
      %v1325 = vadd.f32 %v790, %v1324
      %v1326 = vpop.f32.mrb[0].mxu0
      %1327 = vmatprep.mubr.bf16.mxu0 0
      %1328 = vmatmul.mubr.bf16.gmra.mrb[0].mxu0 %v1251
      %v1329 = vpop.f32.mrb[0].mxu0
      %v1330 = vadd.f32 %v791, %v1329
      %v1331 = vpop.f32.mrb[0].mxu0
      %v1332 = vpop.f32.mrb[0].mxu0
      %v1333 = vadd.f32 %v792, %v1332
      %v1334 = vpop.f32.mrb[0].mxu0
      %1335 = vmatprep.mubr.bf16.mxu0 0
      %1336 = vmatmul.mubr.bf16.gmra.mrb[0].mxu0 %v1254
      %v1337 = vpop.f32.mrb[0].mxu0
      %v1338 = vadd.f32 %v793, %v1337
      %v1339 = vpop.f32.mrb[0].mxu0
      %v1340 = vpop.f32.mrb[0].mxu0
      %v1341 = vadd.f32 %v794, %v1340
      %v1342 = vpop.f32.mrb[0].mxu0
      %1343 = vdwg.mxu0
      %vm1344 = vcmask 654336
      %v1345 = vsel %vm1344, %v1306, -inf
      %1346 = vmax.xlane.f32.xlu0 %v1345
      %v1347 = vpop.xlane.xlu0 %1346
      %v1348 = vsel %vm1344, %v1309, -inf
      %1349 = vmax.xlane.f32.xlu0 %v1348
      %v1350 = vpop.xlane.xlu0 %1349
      %v1351 = vsel %vm1344, %v1314, -inf
      %1352 = vmax.xlane.f32.xlu0 %v1351
      %v1353 = vpop.xlane.xlu0 %1352
      %v1354 = vsel %vm1344, %v1317, -inf
      %1355 = vmax.xlane.f32.xlu0 %v1354
      %v1356 = vpop.xlane.xlu0 %1355
      %v1357 = vsel %vm1344, %v1322, -inf
      %1358 = vmax.xlane.f32.xlu0 %v1357
      %v1359 = vpop.xlane.xlu0 %1358
      %v1360 = vsel %vm1344, %v1325, -inf
      %1361 = vmax.xlane.f32.xlu0 %v1360
      %v1362 = vpop.xlane.xlu0 %1361
      %v1363 = vsel %vm1344, %v1330, -inf
      %1364 = vmax.xlane.f32.xlu0 %v1363
      %v1365 = vpop.xlane.xlu0 %1364
      %v1366 = vsel %vm1344, %v1333, -inf
      %1367 = vmax.xlane.f32.xlu0 %v1366
      %v1368 = vpop.xlane.xlu0 %1367
      %v1369 = vsel %vm1344, %v1338, -inf
      %1370 = vmax.xlane.f32.xlu0 %v1369
      %v1371 = vpop.xlane.xlu0 %1370
      %v1372 = vsel %vm1344, %v1341, -inf
      %1373 = vmax.xlane.f32.xlu0 %v1372
      %v1374 = vpop.xlane.xlu0 %1373
      %v1375 = vsub.f32 %v1306, %v1347
      %v1376 = vsub.f32 %v1309, %v1350
      %v1377 = vsub.f32 %v1314, %v1353
      %v1378 = vsub.f32 %v1317, %v1356
      %v1379 = vsub.f32 %v1322, %v1359
      %v1380 = vsub.f32 %v1325, %v1362
      %v1381 = vsub.f32 %v1330, %v1365
      %v1382 = vsub.f32 %v1333, %v1368
      %v1383 = vsub.f32 %v1338, %v1371
      %v1384 = vsub.f32 %v1341, %v1374
      %v1385 = vmul.f32 %v1375, 1.442695
      %v1386 = vpow.pop %v1385
      %v1387 = vmul.f32 %v1376, 1.442695
      %v1388 = vpow.pop %v1387
      %v1389 = vmul.f32 %v1377, 1.442695
      %v1390 = vpow.pop %v1389
      %v1391 = vmul.f32 %v1378, 1.442695
      %v1392 = vpow.pop %v1391
      %v1393 = vmul.f32 %v1379, 1.442695
      %v1394 = vpow.pop %v1393
      %v1395 = vmul.f32 %v1380, 1.442695
      %v1396 = vpow.pop %v1395
      %v1397 = vmul.f32 %v1381, 1.442695
      %v1398 = vpow.pop %v1397
      %v1399 = vmul.f32 %v1382, 1.442695
      %v1400 = vpow.pop %v1399
      %v1401 = vmul.f32 %v1383, 1.442695
      %v1402 = vpow.pop %v1401
      %v1403 = vmul.f32 %v1384, 1.442695
      %v1404 = vpow.pop %v1403
      %v1405 = vsel %vm1344, %v1386, 0.0
      %1406 = vadd.xlane.f32.xlu0 %v1405
      %v1407 = vpop.xlane.xlu0 %1406
      %v1408 = vsel %vm1344, %v1388, 0.0
      %1409 = vadd.xlane.f32.xlu0 %v1408
      %v1410 = vpop.xlane.xlu0 %1409
      %v1411 = vsel %vm1344, %v1390, 0.0
      %1412 = vadd.xlane.f32.xlu0 %v1411
      %v1413 = vpop.xlane.xlu0 %1412
      %v1414 = vsel %vm1344, %v1392, 0.0
      %1415 = vadd.xlane.f32.xlu0 %v1414
      %v1416 = vpop.xlane.xlu0 %1415
      %v1417 = vsel %vm1344, %v1394, 0.0
      %1418 = vadd.xlane.f32.xlu0 %v1417
      %v1419 = vpop.xlane.xlu0 %1418
      %v1420 = vsel %vm1344, %v1396, 0.0
      %1421 = vadd.xlane.f32.xlu0 %v1420
      %v1422 = vpop.xlane.xlu0 %1421
      %v1423 = vsel %vm1344, %v1398, 0.0
      %1424 = vadd.xlane.f32.xlu0 %v1423
      %v1425 = vpop.xlane.xlu0 %1424
      %v1426 = vsel %vm1344, %v1400, 0.0
      %1427 = vadd.xlane.f32.xlu0 %v1426
      %v1428 = vpop.xlane.xlu0 %1427
      %v1429 = vsel %vm1344, %v1402, 0.0
      %1430 = vadd.xlane.f32.xlu0 %v1429
      %v1431 = vpop.xlane.xlu0 %1430
      %v1432 = vsel %vm1344, %v1404, 0.0
      %1433 = vadd.xlane.f32.xlu0 %v1432
      %v1434 = vpop.xlane.xlu0 %1433
      %v1435 = vrcp.pop %v1407
      %v1436 = vrcp.pop %v1410
      %v1437 = vrcp.pop %v1413
      %v1438 = vrcp.pop %v1416
      %v1439 = vrcp.pop %v1419
      %v1440 = vrcp.pop %v1422
      %v1441 = vrcp.pop %v1425
      %v1442 = vrcp.pop %v1428
      %v1443 = vrcp.pop %v1431
      %v1444 = vrcp.pop %v1434
      %v1445 = vpack.c.bf16 %v1388, %v1386
      %v1446 = vpack.c.bf16 %v1392, %v1390
      %v1447 = vpack.c.bf16 %v1396, %v1394
      %v1448 = vpack.c.bf16 %v1400, %v1398
      %v1449 = vpack.c.bf16 %v1404, %v1402
      %v1451 = vsel %vm1344, %v1445, 0
      %v1454 = vsel %vm1344, %v1446, 0
      %v1457 = vsel %vm1344, %v1447, 0
      %v1460 = vsel %vm1344, %v1448, 0
      %v1463 = vsel %vm1344, %v1449, 0
      %1465 = vmatprep.subr.bf16.mxu0 0
      %1466 = vmatpush1.bf16.msra.mxu0 %v1199
      %1467 = vmatprep.subr.bf16.mxu0 0
      %1468 = vmatpush1.bf16.msra.mxu0 %v1200
      %1469 = vmatprep.subr.bf16.mxu0 0
      %1470 = vmatpush1.bf16.msra.mxu0 %v1201
      %1471 = vmatprep.subr.bf16.mxu0 0
      %1472 = vmatpush1.bf16.msra.mxu0 %v1202
      %1473 = vmatprep.subr.bf16.mxu0 0
      %1474 = vmatpush1.bf16.msra.mxu0 %v1203
      %1475 = vmatprep.subr.bf16.mxu0 0
      %1476 = vmatpush1.bf16.msra.mxu0 0
      %1477 = vmatprep.subr.bf16.mxu0 0
      %1478 = vmatpush1.bf16.msra.mxu0 0
      %1479 = vmatprep.subr.bf16.mxu0 0
      %1480 = vmatpush1.bf16.msra.mxu0 0
      %1481 = vmatprep.subr.bf16.mxu0 0
      %1482 = vmatpush1.bf16.msra.mxu0 0
      %1483 = vmatprep.subr.bf16.mxu0 0
      %1484 = vmatpush1.bf16.msra.mxu0 0
      %1485 = vmatprep.subr.bf16.mxu0 0
      %1486 = vmatpush1.bf16.msra.mxu0 0
      %1487 = vmatprep.subr.bf16.mxu0 0
      %1488 = vmatpush1.bf16.msra.mxu0 0
      %1489 = vmatprep.subr.bf16.mxu0 0
      %1490 = vmatpush1.bf16.msra.mxu0 0
      %1491 = vmatprep.subr.bf16.mxu0 0
      %1492 = vmatpush1.bf16.msra.mxu0 0
      %1493 = vmatprep.subr.bf16.mxu0 0
      %1494 = vmatpush1.bf16.msra.mxu0 0
      %1495 = vmatprep.subr.bf16.mxu0 0
      %1496 = vmatpush1.bf16.msra.mxu0 0
      %1497 = vmatprep.mubr.bf16.mxu0 0
      %1498 = vmatmul.mubr.bf16.gmra.mrb[0].mxu0 %v1451
      %v1499 = vpop.f32.mrb[0].mxu0
      %v1500 = vadd.f32 0.0, %v1499
      %v1501 = vpop.f32.mrb[0].mxu0
      %v1502 = vpop.f32.mrb[0].mxu0
      %v1503 = vadd.f32 0.0, %v1502
      %v1504 = vpop.f32.mrb[0].mxu0
      %1505 = vmatprep.mubr.bf16.mxu0 0
      %1506 = vmatmul.mubr.bf16.gmra.mrb[0].mxu0 %v1454
      %v1507 = vpop.f32.mrb[0].mxu0
      %v1508 = vadd.f32 0.0, %v1507
      %v1509 = vpop.f32.mrb[0].mxu0
      %v1510 = vpop.f32.mrb[0].mxu0
      %v1511 = vadd.f32 0.0, %v1510
      %v1512 = vpop.f32.mrb[0].mxu0
      %1513 = vmatprep.mubr.bf16.mxu0 0
      %1514 = vmatmul.mubr.bf16.gmra.mrb[0].mxu0 %v1457
      %v1515 = vpop.f32.mrb[0].mxu0
      %v1516 = vadd.f32 0.0, %v1515
      %v1517 = vpop.f32.mrb[0].mxu0
      %v1518 = vpop.f32.mrb[0].mxu0
      %v1519 = vadd.f32 0.0, %v1518
      %v1520 = vpop.f32.mrb[0].mxu0
      %1521 = vmatprep.mubr.bf16.mxu0 0
      %1522 = vmatmul.mubr.bf16.gmra.mrb[0].mxu0 %v1460
      %v1523 = vpop.f32.mrb[0].mxu0
      %v1524 = vadd.f32 0.0, %v1523
      %v1525 = vpop.f32.mrb[0].mxu0
      %v1526 = vpop.f32.mrb[0].mxu0
      %v1527 = vadd.f32 0.0, %v1526
      %v1528 = vpop.f32.mrb[0].mxu0
      %1529 = vmatprep.mubr.bf16.mxu0 0
      %1530 = vmatmul.mubr.bf16.gmra.mrb[0].mxu0 %v1463
      %v1531 = vpop.f32.mrb[0].mxu0
      %v1532 = vadd.f32 0.0, %v1531
      %v1533 = vpop.f32.mrb[0].mxu0
      %v1534 = vpop.f32.mrb[0].mxu0
      %v1535 = vadd.f32 0.0, %v1534
      %v1536 = vpop.f32.mrb[0].mxu0
      %1537 = vdwg.mxu0
      %v1538 = vmul.f32 %v1500, %v1435
      %v1539 = vmul.f32 %v1503, %v1436
      %v1540 = vmul.f32 %v1508, %v1437
      %v1541 = vmul.f32 %v1511, %v1438
      %v1542 = vmul.f32 %v1516, %v1439
      %v1543 = vmul.f32 %v1519, %v1440
      %v1544 = vmul.f32 %v1524, %v1441
      %v1545 = vmul.f32 %v1527, %v1442
      %v1546 = vmul.f32 %v1532, %v1443
      %v1547 = vmul.f32 %v1535, %v1444
      %v1548 = vadd.f32 %v1538, 0.0
      %v1549 = vadd.f32 %v1539, 0.0
      %v1550 = vadd.f32 %v1540, 0.0
      %v1551 = vadd.f32 %v1541, 0.0
      %v1552 = vadd.f32 %v1542, 0.0
      %v1553 = vadd.f32 %v1543, 0.0
      %v1554 = vadd.f32 %v1544, 0.0
      %v1555 = vadd.f32 %v1545, 0.0
      %v1556 = vadd.f32 %v1546, 0.0
      %v1557 = vadd.f32 %v1547, 0.0
      %s1558 = scalar_lea.vmem %s5, 1
      %v1559 = vld [vmem:[%s1558] sm:$0x1]
      %v1561 = vlaneseq
      %v1562 = vshrl.u32 %v1561, 7
      %v1563 = vsub.s32 0, %v1562
      %v1564 = vrot.slane %v1559, %v1563
      %v1566 = vmul.f32 %v1073, %v1564
      %v1567 = vmul.f32 %v1077, %v1564
      %v1568 = vmul.f32 %v1083, %v1564
      %v1569 = vmul.f32 %v1087, %v1564
      %v1570 = vmul.f32 %v1093, %v1564
      %v1571 = vmul.f32 %v1097, %v1564
      %v1572 = vmul.f32 %v1103, %v1564
      %v1573 = vmul.f32 %v1107, %v1564
      %v1574 = vmul.f32 %v1113, %v1564
      %v1575 = vmul.f32 %v1117, %v1564
      %v1576 = vpack.c.bf16 %v1567, %v1566
      %v1577 = vpack.c.bf16 %v1569, %v1568
      %v1578 = vpack.c.bf16 %v1571, %v1570
      %v1579 = vpack.c.bf16 %v1573, %v1572
      %v1580 = vpack.c.bf16 %v1575, %v1574
      %v1582 = vsel %vm1022, %v1576, 0
      %v1585 = vsel %vm1022, %v1577, 0
      %v1588 = vsel %vm1022, %v1578, 0
      %v1591 = vsel %vm1022, %v1579, 0
      %v1594 = vsel %vm1022, %v1580, 0
      %1596 = vmatprep.subr.bf16.mxu0 0
      %1597 = vmatpush1.bf16.xpose.msra.mxu0 %v1257
      %1598 = vmatprep.subr.bf16.mxu0 0
      %1599 = vmatpush1.bf16.xpose.msra.mxu0 %v1260
      %1600 = vmatprep.subr.bf16.mxu0 0
      %1601 = vmatpush1.bf16.xpose.msra.mxu0 %v1263
      %1602 = vmatprep.subr.bf16.mxu0 0
      %1603 = vmatpush1.bf16.xpose.msra.mxu0 %v1266
      %1604 = vmatprep.subr.bf16.mxu0 0
      %1605 = vmatpush1.bf16.xpose.msra.mxu0 %v1269
      %1606 = vmatprep.subr.bf16.mxu0 0
      %1607 = vmatpush1.bf16.xpose.msra.mxu0 0
      %1608 = vmatprep.subr.bf16.mxu0 0
      %1609 = vmatpush1.bf16.xpose.msra.mxu0 0
      %1610 = vmatprep.subr.bf16.mxu0 0
      %1611 = vmatpush1.bf16.xpose.msra.mxu0 0
      %1612 = vmatprep.subr.bf16.mxu0 0
      %1613 = vmatpush1.bf16.xpose.msra.mxu0 0
      %1614 = vmatprep.subr.bf16.mxu0 0
      %1615 = vmatpush1.bf16.xpose.msra.mxu0 0
      %1616 = vmatprep.subr.bf16.mxu0 0
      %1617 = vmatpush1.bf16.xpose.msra.mxu0 0
      %1618 = vmatprep.subr.bf16.mxu0 0
      %1619 = vmatpush1.bf16.xpose.msra.mxu0 0
      %1620 = vmatprep.subr.bf16.mxu0 0
      %1621 = vmatpush1.bf16.xpose.msra.mxu0 0
      %1622 = vmatprep.subr.bf16.mxu0 0
      %1623 = vmatpush1.bf16.xpose.msra.mxu0 0
      %1624 = vmatprep.subr.bf16.mxu0 0
      %1625 = vmatpush1.bf16.xpose.msra.mxu0 0
      %1626 = vmatprep.subr.bf16.mxu0 0
      %1627 = vmatpush1.bf16.xpose.msra.mxu0 0
      %1628 = vmatprep.mubr.bf16.mxu0 0
      %1629 = vmatmul.mubr.bf16.gmra.mrb[0].mxu0 %v1582
      %v1630 = vpop.f32.mrb[0].mxu0
      %v1631 = vadd.f32 %v785, %v1630
      %v1632 = vpop.f32.mrb[0].mxu0
      %v1633 = vpop.f32.mrb[0].mxu0
      %v1634 = vadd.f32 %v786, %v1633
      %v1635 = vpop.f32.mrb[0].mxu0
      %1636 = vmatprep.mubr.bf16.mxu0 0
      %1637 = vmatmul.mubr.bf16.gmra.mrb[0].mxu0 %v1585
      %v1638 = vpop.f32.mrb[0].mxu0
      %v1639 = vadd.f32 %v787, %v1638
      %v1640 = vpop.f32.mrb[0].mxu0
      %v1641 = vpop.f32.mrb[0].mxu0
      %v1642 = vadd.f32 %v788, %v1641
      %v1643 = vpop.f32.mrb[0].mxu0
      %1644 = vmatprep.mubr.bf16.mxu0 0
      %1645 = vmatmul.mubr.bf16.gmra.mrb[0].mxu0 %v1588
      %v1646 = vpop.f32.mrb[0].mxu0
      %v1647 = vadd.f32 %v789, %v1646
      %v1648 = vpop.f32.mrb[0].mxu0
      %v1649 = vpop.f32.mrb[0].mxu0
      %v1650 = vadd.f32 %v790, %v1649
      %v1651 = vpop.f32.mrb[0].mxu0
      %1652 = vmatprep.mubr.bf16.mxu0 0
      %1653 = vmatmul.mubr.bf16.gmra.mrb[0].mxu0 %v1591
      %v1654 = vpop.f32.mrb[0].mxu0
      %v1655 = vadd.f32 %v791, %v1654
      %v1656 = vpop.f32.mrb[0].mxu0
      %v1657 = vpop.f32.mrb[0].mxu0
      %v1658 = vadd.f32 %v792, %v1657
      %v1659 = vpop.f32.mrb[0].mxu0
      %1660 = vmatprep.mubr.bf16.mxu0 0
      %1661 = vmatmul.mubr.bf16.gmra.mrb[0].mxu0 %v1594
      %v1662 = vpop.f32.mrb[0].mxu0
      %v1663 = vadd.f32 %v793, %v1662
      %v1664 = vpop.f32.mrb[0].mxu0
      %v1665 = vpop.f32.mrb[0].mxu0
      %v1666 = vadd.f32 %v794, %v1665
      %v1667 = vpop.f32.mrb[0].mxu0
      %1668 = vdwg.mxu0
      %v1669 = vsel %vm1344, %v1631, -inf
      %1670 = vmax.xlane.f32.xlu0 %v1669
      %v1671 = vpop.xlane.xlu0 %1670
      %v1672 = vsel %vm1344, %v1634, -inf
      %1673 = vmax.xlane.f32.xlu0 %v1672
      %v1674 = vpop.xlane.xlu0 %1673
      %v1675 = vsel %vm1344, %v1639, -inf
      %1676 = vmax.xlane.f32.xlu0 %v1675
      %v1677 = vpop.xlane.xlu0 %1676
      %v1678 = vsel %vm1344, %v1642, -inf
      %1679 = vmax.xlane.f32.xlu0 %v1678
      %v1680 = vpop.xlane.xlu0 %1679
      %v1681 = vsel %vm1344, %v1647, -inf
      %1682 = vmax.xlane.f32.xlu0 %v1681
      %v1683 = vpop.xlane.xlu0 %1682
      %v1684 = vsel %vm1344, %v1650, -inf
      %1685 = vmax.xlane.f32.xlu0 %v1684
      %v1686 = vpop.xlane.xlu0 %1685
      %v1687 = vsel %vm1344, %v1655, -inf
      %1688 = vmax.xlane.f32.xlu0 %v1687
      %v1689 = vpop.xlane.xlu0 %1688
      %v1690 = vsel %vm1344, %v1658, -inf
      %1691 = vmax.xlane.f32.xlu0 %v1690
      %v1692 = vpop.xlane.xlu0 %1691
      %v1693 = vsel %vm1344, %v1663, -inf
      %1694 = vmax.xlane.f32.xlu0 %v1693
      %v1695 = vpop.xlane.xlu0 %1694
      %v1696 = vsel %vm1344, %v1666, -inf
      %1697 = vmax.xlane.f32.xlu0 %v1696
      %v1698 = vpop.xlane.xlu0 %1697
      %v1699 = vsub.f32 %v1631, %v1671
      %v1700 = vsub.f32 %v1634, %v1674
      %v1701 = vsub.f32 %v1639, %v1677
      %v1702 = vsub.f32 %v1642, %v1680
      %v1703 = vsub.f32 %v1647, %v1683
      %v1704 = vsub.f32 %v1650, %v1686
      %v1705 = vsub.f32 %v1655, %v1689
      %v1706 = vsub.f32 %v1658, %v1692
      %v1707 = vsub.f32 %v1663, %v1695
      %v1708 = vsub.f32 %v1666, %v1698
      %v1709 = vmul.f32 %v1699, 1.442695
      %v1710 = vpow.pop %v1709
      %v1711 = vmul.f32 %v1700, 1.442695
      %v1712 = vpow.pop %v1711
      %v1713 = vmul.f32 %v1701, 1.442695
      %v1714 = vpow.pop %v1713
      %v1715 = vmul.f32 %v1702, 1.442695
      %v1716 = vpow.pop %v1715
      %v1717 = vmul.f32 %v1703, 1.442695
      %v1718 = vpow.pop %v1717
      %v1719 = vmul.f32 %v1704, 1.442695
      %v1720 = vpow.pop %v1719
      %v1721 = vmul.f32 %v1705, 1.442695
      %v1722 = vpow.pop %v1721
      %v1723 = vmul.f32 %v1706, 1.442695
      %v1724 = vpow.pop %v1723
      %v1725 = vmul.f32 %v1707, 1.442695
      %v1726 = vpow.pop %v1725
      %v1727 = vmul.f32 %v1708, 1.442695
      %v1728 = vpow.pop %v1727
      %v1729 = vsel %vm1344, %v1710, 0.0
      %1730 = vadd.xlane.f32.xlu0 %v1729
      %v1731 = vpop.xlane.xlu0 %1730
      %v1732 = vsel %vm1344, %v1712, 0.0
      %1733 = vadd.xlane.f32.xlu0 %v1732
      %v1734 = vpop.xlane.xlu0 %1733
      %v1735 = vsel %vm1344, %v1714, 0.0
      %1736 = vadd.xlane.f32.xlu0 %v1735
      %v1737 = vpop.xlane.xlu0 %1736
      %v1738 = vsel %vm1344, %v1716, 0.0
      %1739 = vadd.xlane.f32.xlu0 %v1738
      %v1740 = vpop.xlane.xlu0 %1739
      %v1741 = vsel %vm1344, %v1718, 0.0
      %1742 = vadd.xlane.f32.xlu0 %v1741
      %v1743 = vpop.xlane.xlu0 %1742
      %v1744 = vsel %vm1344, %v1720, 0.0
      %1745 = vadd.xlane.f32.xlu0 %v1744
      %v1746 = vpop.xlane.xlu0 %1745
      %v1747 = vsel %vm1344, %v1722, 0.0
      %1748 = vadd.xlane.f32.xlu0 %v1747
      %v1749 = vpop.xlane.xlu0 %1748
      %v1750 = vsel %vm1344, %v1724, 0.0
      %1751 = vadd.xlane.f32.xlu0 %v1750
      %v1752 = vpop.xlane.xlu0 %1751
      %v1753 = vsel %vm1344, %v1726, 0.0
      %1754 = vadd.xlane.f32.xlu0 %v1753
      %v1755 = vpop.xlane.xlu0 %1754
      %v1756 = vsel %vm1344, %v1728, 0.0
      %1757 = vadd.xlane.f32.xlu0 %v1756
      %v1758 = vpop.xlane.xlu0 %1757
      %v1759 = vrcp.pop %v1731
      %v1760 = vrcp.pop %v1734
      %v1761 = vrcp.pop %v1737
      %v1762 = vrcp.pop %v1740
      %v1763 = vrcp.pop %v1743
      %v1764 = vrcp.pop %v1746
      %v1765 = vrcp.pop %v1749
      %v1766 = vrcp.pop %v1752
      %v1767 = vrcp.pop %v1755
      %v1768 = vrcp.pop %v1758
      %v1769 = vpack.c.bf16 %v1712, %v1710
      %v1770 = vpack.c.bf16 %v1716, %v1714
      %v1771 = vpack.c.bf16 %v1720, %v1718
      %v1772 = vpack.c.bf16 %v1724, %v1722
      %v1773 = vpack.c.bf16 %v1728, %v1726
      %1779 = vrot.lane.b32.xlu0 %v1199, 64
      %v1780 = vpop.permute.xlu0 %1779
      %1781 = vrot.lane.b32.xlu0 %v1200, 64
      %v1782 = vpop.permute.xlu0 %1781
      %1783 = vrot.lane.b32.xlu0 %v1201, 64
      %v1784 = vpop.permute.xlu0 %1783
      %1785 = vrot.lane.b32.xlu0 %v1202, 64
      %v1786 = vpop.permute.xlu0 %1785
      %1787 = vrot.lane.b32.xlu0 %v1203, 64
      %v1788 = vpop.permute.xlu0 %1787
      %v1795 = vsel %vm1344, %v1769, 0
      %v1798 = vsel %vm1344, %v1770, 0
      %v1801 = vsel %vm1344, %v1771, 0
      %v1804 = vsel %vm1344, %v1772, 0
      %v1807 = vsel %vm1344, %v1773, 0
      %1809 = vmatprep.subr.bf16.mxu0 0
      %1810 = vmatpush1.bf16.msra.mxu0 %v1780
      %1811 = vmatprep.subr.bf16.mxu0 0
      %1812 = vmatpush1.bf16.msra.mxu0 %v1782
      %1813 = vmatprep.subr.bf16.mxu0 0
      %1814 = vmatpush1.bf16.msra.mxu0 %v1784
      %1815 = vmatprep.subr.bf16.mxu0 0
      %1816 = vmatpush1.bf16.msra.mxu0 %v1786
      %1817 = vmatprep.subr.bf16.mxu0 0
      %1818 = vmatpush1.bf16.msra.mxu0 %v1788
      %1819 = vmatprep.subr.bf16.mxu0 0
      %1820 = vmatpush1.bf16.msra.mxu0 0
      %1821 = vmatprep.subr.bf16.mxu0 0
      %1822 = vmatpush1.bf16.msra.mxu0 0
      %1823 = vmatprep.subr.bf16.mxu0 0
      %1824 = vmatpush1.bf16.msra.mxu0 0
      %1825 = vmatprep.subr.bf16.mxu0 0
      %1826 = vmatpush1.bf16.msra.mxu0 0
      %1827 = vmatprep.subr.bf16.mxu0 0
      %1828 = vmatpush1.bf16.msra.mxu0 0
      %1829 = vmatprep.subr.bf16.mxu0 0
      %1830 = vmatpush1.bf16.msra.mxu0 0
      %1831 = vmatprep.subr.bf16.mxu0 0
      %1832 = vmatpush1.bf16.msra.mxu0 0
      %1833 = vmatprep.subr.bf16.mxu0 0
      %1834 = vmatpush1.bf16.msra.mxu0 0
      %1835 = vmatprep.subr.bf16.mxu0 0
      %1836 = vmatpush1.bf16.msra.mxu0 0
      %1837 = vmatprep.subr.bf16.mxu0 0
      %1838 = vmatpush1.bf16.msra.mxu0 0
      %1839 = vmatprep.subr.bf16.mxu0 0
      %1840 = vmatpush1.bf16.msra.mxu0 0
      %1841 = vmatprep.mubr.bf16.mxu0 0
      %1842 = vmatmul.mubr.bf16.gmra.mrb[0].mxu0 %v1795
      %v1843 = vpop.f32.mrb[0].mxu0
      %v1844 = vadd.f32 0.0, %v1843
      %v1845 = vpop.f32.mrb[0].mxu0
      %v1846 = vpop.f32.mrb[0].mxu0
      %v1847 = vadd.f32 0.0, %v1846
      %v1848 = vpop.f32.mrb[0].mxu0
      %1849 = vmatprep.mubr.bf16.mxu0 0
      %1850 = vmatmul.mubr.bf16.gmra.mrb[0].mxu0 %v1798
      %v1851 = vpop.f32.mrb[0].mxu0
      %v1852 = vadd.f32 0.0, %v1851
      %v1853 = vpop.f32.mrb[0].mxu0
      %v1854 = vpop.f32.mrb[0].mxu0
      %v1855 = vadd.f32 0.0, %v1854
      %v1856 = vpop.f32.mrb[0].mxu0
      %1857 = vmatprep.mubr.bf16.mxu0 0
      %1858 = vmatmul.mubr.bf16.gmra.mrb[0].mxu0 %v1801
      %v1859 = vpop.f32.mrb[0].mxu0
      %v1860 = vadd.f32 0.0, %v1859
      %v1861 = vpop.f32.mrb[0].mxu0
      %v1862 = vpop.f32.mrb[0].mxu0
      %v1863 = vadd.f32 0.0, %v1862
      %v1864 = vpop.f32.mrb[0].mxu0
      %1865 = vmatprep.mubr.bf16.mxu0 0
      %1866 = vmatmul.mubr.bf16.gmra.mrb[0].mxu0 %v1804
      %v1867 = vpop.f32.mrb[0].mxu0
      %v1868 = vadd.f32 0.0, %v1867
      %v1869 = vpop.f32.mrb[0].mxu0
      %v1870 = vpop.f32.mrb[0].mxu0
      %v1871 = vadd.f32 0.0, %v1870
      %v1872 = vpop.f32.mrb[0].mxu0
      %1873 = vmatprep.mubr.bf16.mxu0 0
      %1874 = vmatmul.mubr.bf16.gmra.mrb[0].mxu0 %v1807
      %v1875 = vpop.f32.mrb[0].mxu0
      %v1876 = vadd.f32 0.0, %v1875
      %v1877 = vpop.f32.mrb[0].mxu0
      %v1878 = vpop.f32.mrb[0].mxu0
      %v1879 = vadd.f32 0.0, %v1878
      %v1880 = vpop.f32.mrb[0].mxu0
      %1881 = vdwg.mxu0
      %v1882 = vmul.f32 %v1844, %v1759
      %v1883 = vmul.f32 %v1847, %v1760
      %v1884 = vmul.f32 %v1852, %v1761
      %v1885 = vmul.f32 %v1855, %v1762
      %v1886 = vmul.f32 %v1860, %v1763
      %v1887 = vmul.f32 %v1863, %v1764
      %v1888 = vmul.f32 %v1868, %v1765
      %v1889 = vmul.f32 %v1871, %v1766
      %v1890 = vmul.f32 %v1876, %v1767
      %v1891 = vmul.f32 %v1879, %v1768
      %v1892 = vadd.f32 %v1548, %v1882
      %v1893 = vadd.f32 %v1549, %v1883
      %v1894 = vadd.f32 %v1550, %v1884
      %v1895 = vadd.f32 %v1551, %v1885
      %v1896 = vadd.f32 %v1552, %v1886
      %v1897 = vadd.f32 %v1553, %v1887
      %v1898 = vadd.f32 %v1554, %v1888
      %v1899 = vadd.f32 %v1555, %v1889
      %v1900 = vadd.f32 %v1556, %v1890
      %v1901 = vadd.f32 %v1557, %v1891
      %v1902 = vpack.c.bf16 %v1159, %v1156
      %v1903 = vpack.c.bf16 %v1167, %v1164
      %v1904 = vpack.c.bf16 %v1175, %v1172
      %v1905 = vpack.c.bf16 %v1183, %v1180
      %v1906 = vpack.c.bf16 %v1191, %v1188
      %s1907 = scalar_lea.vmem %s5, 2
      %v1908 = vld [vmem:[%s1907] sm:$0x1]
      %v1910 = vlaneseq
      %v1911 = vshrl.u32 %v1910, 7
      %v1912 = vsub.s32 0, %v1911
      %v1913 = vrot.slane %v1908, %v1912
      %v1915 = vmul.f32 %v1073, %v1913
      %v1916 = vmul.f32 %v1077, %v1913
      %v1917 = vmul.f32 %v1083, %v1913
      %v1918 = vmul.f32 %v1087, %v1913
      %v1919 = vmul.f32 %v1093, %v1913
      %v1920 = vmul.f32 %v1097, %v1913
      %v1921 = vmul.f32 %v1103, %v1913
      %v1922 = vmul.f32 %v1107, %v1913
      %v1923 = vmul.f32 %v1113, %v1913
      %v1924 = vmul.f32 %v1117, %v1913
      %v1925 = vpack.c.bf16 %v1916, %v1915
      %v1926 = vpack.c.bf16 %v1918, %v1917
      %v1927 = vpack.c.bf16 %v1920, %v1919
      %v1928 = vpack.c.bf16 %v1922, %v1921
      %v1929 = vpack.c.bf16 %v1924, %v1923
      %v1931 = vsel %vm1022, %v1925, 0
      %v1934 = vsel %vm1022, %v1926, 0
      %v1937 = vsel %vm1022, %v1927, 0
      %v1940 = vsel %vm1022, %v1928, 0
      %v1943 = vsel %vm1022, %v1929, 0
      %1945 = vmatprep.subr.bf16.mxu0 0
      %1946 = vmatpush1.bf16.xpose.msra.mxu0 %v1257
      %1947 = vmatprep.subr.bf16.mxu0 0
      %1948 = vmatpush1.bf16.xpose.msra.mxu0 %v1260
      %1949 = vmatprep.subr.bf16.mxu0 0
      %1950 = vmatpush1.bf16.xpose.msra.mxu0 %v1263
      %1951 = vmatprep.subr.bf16.mxu0 0
      %1952 = vmatpush1.bf16.xpose.msra.mxu0 %v1266
      %1953 = vmatprep.subr.bf16.mxu0 0
      %1954 = vmatpush1.bf16.xpose.msra.mxu0 %v1269
      %1955 = vmatprep.subr.bf16.mxu0 0
      %1956 = vmatpush1.bf16.xpose.msra.mxu0 0
      %1957 = vmatprep.subr.bf16.mxu0 0
      %1958 = vmatpush1.bf16.xpose.msra.mxu0 0
      %1959 = vmatprep.subr.bf16.mxu0 0
      %1960 = vmatpush1.bf16.xpose.msra.mxu0 0
      %1961 = vmatprep.subr.bf16.mxu0 0
      %1962 = vmatpush1.bf16.xpose.msra.mxu0 0
      %1963 = vmatprep.subr.bf16.mxu0 0
      %1964 = vmatpush1.bf16.xpose.msra.mxu0 0
      %1965 = vmatprep.subr.bf16.mxu0 0
      %1966 = vmatpush1.bf16.xpose.msra.mxu0 0
      %1967 = vmatprep.subr.bf16.mxu0 0
      %1968 = vmatpush1.bf16.xpose.msra.mxu0 0
      %1969 = vmatprep.subr.bf16.mxu0 0
      %1970 = vmatpush1.bf16.xpose.msra.mxu0 0
      %1971 = vmatprep.subr.bf16.mxu0 0
      %1972 = vmatpush1.bf16.xpose.msra.mxu0 0
      %1973 = vmatprep.subr.bf16.mxu0 0
      %1974 = vmatpush1.bf16.xpose.msra.mxu0 0
      %1975 = vmatprep.subr.bf16.mxu0 0
      %1976 = vmatpush1.bf16.xpose.msra.mxu0 0
      %1977 = vmatprep.mubr.bf16.mxu0 0
      %1978 = vmatmul.mubr.bf16.gmra.mrb[0].mxu0 %v1931
      %v1979 = vpop.f32.mrb[0].mxu0
      %v1980 = vadd.f32 %v785, %v1979
      %v1981 = vpop.f32.mrb[0].mxu0
      %v1982 = vpop.f32.mrb[0].mxu0
      %v1983 = vadd.f32 %v786, %v1982
      %v1984 = vpop.f32.mrb[0].mxu0
      %1985 = vmatprep.mubr.bf16.mxu0 0
      %1986 = vmatmul.mubr.bf16.gmra.mrb[0].mxu0 %v1934
      %v1987 = vpop.f32.mrb[0].mxu0
      %v1988 = vadd.f32 %v787, %v1987
      %v1989 = vpop.f32.mrb[0].mxu0
      %v1990 = vpop.f32.mrb[0].mxu0
      %v1991 = vadd.f32 %v788, %v1990
      %v1992 = vpop.f32.mrb[0].mxu0
      %1993 = vmatprep.mubr.bf16.mxu0 0
      %1994 = vmatmul.mubr.bf16.gmra.mrb[0].mxu0 %v1937
      %v1995 = vpop.f32.mrb[0].mxu0
      %v1996 = vadd.f32 %v789, %v1995
      %v1997 = vpop.f32.mrb[0].mxu0
      %v1998 = vpop.f32.mrb[0].mxu0
      %v1999 = vadd.f32 %v790, %v1998
      %v2000 = vpop.f32.mrb[0].mxu0
      %2001 = vmatprep.mubr.bf16.mxu0 0
      %2002 = vmatmul.mubr.bf16.gmra.mrb[0].mxu0 %v1940
      %v2003 = vpop.f32.mrb[0].mxu0
      %v2004 = vadd.f32 %v791, %v2003
      %v2005 = vpop.f32.mrb[0].mxu0
      %v2006 = vpop.f32.mrb[0].mxu0
      %v2007 = vadd.f32 %v792, %v2006
      %v2008 = vpop.f32.mrb[0].mxu0
      %2009 = vmatprep.mubr.bf16.mxu0 0
      %2010 = vmatmul.mubr.bf16.gmra.mrb[0].mxu0 %v1943
      %v2011 = vpop.f32.mrb[0].mxu0
      %v2012 = vadd.f32 %v793, %v2011
      %v2013 = vpop.f32.mrb[0].mxu0
      %v2014 = vpop.f32.mrb[0].mxu0
      %v2015 = vadd.f32 %v794, %v2014
      %v2016 = vpop.f32.mrb[0].mxu0
      %2017 = vdwg.mxu0
      %v2018 = vsel %vm1344, %v1980, -inf
      %2019 = vmax.xlane.f32.xlu0 %v2018
      %v2020 = vpop.xlane.xlu0 %2019
      %v2021 = vsel %vm1344, %v1983, -inf
      %2022 = vmax.xlane.f32.xlu0 %v2021
      %v2023 = vpop.xlane.xlu0 %2022
      %v2024 = vsel %vm1344, %v1988, -inf
      %2025 = vmax.xlane.f32.xlu0 %v2024
      %v2026 = vpop.xlane.xlu0 %2025
      %v2027 = vsel %vm1344, %v1991, -inf
      %2028 = vmax.xlane.f32.xlu0 %v2027
      %v2029 = vpop.xlane.xlu0 %2028
      %v2030 = vsel %vm1344, %v1996, -inf
      %2031 = vmax.xlane.f32.xlu0 %v2030
      %v2032 = vpop.xlane.xlu0 %2031
      %v2033 = vsel %vm1344, %v1999, -inf
      %2034 = vmax.xlane.f32.xlu0 %v2033
      %v2035 = vpop.xlane.xlu0 %2034
      %v2036 = vsel %vm1344, %v2004, -inf
      %2037 = vmax.xlane.f32.xlu0 %v2036
      %v2038 = vpop.xlane.xlu0 %2037
      %v2039 = vsel %vm1344, %v2007, -inf
      %2040 = vmax.xlane.f32.xlu0 %v2039
      %v2041 = vpop.xlane.xlu0 %2040
      %v2042 = vsel %vm1344, %v2012, -inf
      %2043 = vmax.xlane.f32.xlu0 %v2042
      %v2044 = vpop.xlane.xlu0 %2043
      %v2045 = vsel %vm1344, %v2015, -inf
      %2046 = vmax.xlane.f32.xlu0 %v2045
      %v2047 = vpop.xlane.xlu0 %2046
      %v2048 = vsub.f32 %v1980, %v2020
      %v2049 = vsub.f32 %v1983, %v2023
      %v2050 = vsub.f32 %v1988, %v2026
      %v2051 = vsub.f32 %v1991, %v2029
      %v2052 = vsub.f32 %v1996, %v2032
      %v2053 = vsub.f32 %v1999, %v2035
      %v2054 = vsub.f32 %v2004, %v2038
      %v2055 = vsub.f32 %v2007, %v2041
      %v2056 = vsub.f32 %v2012, %v2044
      %v2057 = vsub.f32 %v2015, %v2047
      %v2058 = vmul.f32 %v2048, 1.442695
      %v2059 = vpow.pop %v2058
      %v2060 = vmul.f32 %v2049, 1.442695
      %v2061 = vpow.pop %v2060
      %v2062 = vmul.f32 %v2050, 1.442695
      %v2063 = vpow.pop %v2062
      %v2064 = vmul.f32 %v2051, 1.442695
      %v2065 = vpow.pop %v2064
      %v2066 = vmul.f32 %v2052, 1.442695
      %v2067 = vpow.pop %v2066
      %v2068 = vmul.f32 %v2053, 1.442695
      %v2069 = vpow.pop %v2068
      %v2070 = vmul.f32 %v2054, 1.442695
      %v2071 = vpow.pop %v2070
      %v2072 = vmul.f32 %v2055, 1.442695
      %v2073 = vpow.pop %v2072
      %v2074 = vmul.f32 %v2056, 1.442695
      %v2075 = vpow.pop %v2074
      %v2076 = vmul.f32 %v2057, 1.442695
      %v2077 = vpow.pop %v2076
      %v2078 = vsel %vm1344, %v2059, 0.0
      %2079 = vadd.xlane.f32.xlu0 %v2078
      %v2080 = vpop.xlane.xlu0 %2079
      %v2081 = vsel %vm1344, %v2061, 0.0
      %2082 = vadd.xlane.f32.xlu0 %v2081
      %v2083 = vpop.xlane.xlu0 %2082
      %v2084 = vsel %vm1344, %v2063, 0.0
      %2085 = vadd.xlane.f32.xlu0 %v2084
      %v2086 = vpop.xlane.xlu0 %2085
      %v2087 = vsel %vm1344, %v2065, 0.0
      %2088 = vadd.xlane.f32.xlu0 %v2087
      %v2089 = vpop.xlane.xlu0 %2088
      %v2090 = vsel %vm1344, %v2067, 0.0
      %2091 = vadd.xlane.f32.xlu0 %v2090
      %v2092 = vpop.xlane.xlu0 %2091
      %v2093 = vsel %vm1344, %v2069, 0.0
      %2094 = vadd.xlane.f32.xlu0 %v2093
      %v2095 = vpop.xlane.xlu0 %2094
      %v2096 = vsel %vm1344, %v2071, 0.0
      %2097 = vadd.xlane.f32.xlu0 %v2096
      %v2098 = vpop.xlane.xlu0 %2097
      %v2099 = vsel %vm1344, %v2073, 0.0
      %2100 = vadd.xlane.f32.xlu0 %v2099
      %v2101 = vpop.xlane.xlu0 %2100
      %v2102 = vsel %vm1344, %v2075, 0.0
      %2103 = vadd.xlane.f32.xlu0 %v2102
      %v2104 = vpop.xlane.xlu0 %2103
      %v2105 = vsel %vm1344, %v2077, 0.0
      %2106 = vadd.xlane.f32.xlu0 %v2105
      %v2107 = vpop.xlane.xlu0 %2106
      %v2108 = vrcp.pop %v2080
      %v2109 = vrcp.pop %v2083
      %v2110 = vrcp.pop %v2086
      %v2111 = vrcp.pop %v2089
      %v2112 = vrcp.pop %v2092
      %v2113 = vrcp.pop %v2095
      %v2114 = vrcp.pop %v2098
      %v2115 = vrcp.pop %v2101
      %v2116 = vrcp.pop %v2104
      %v2117 = vrcp.pop %v2107
      %v2118 = vpack.c.bf16 %v2061, %v2059
      %v2119 = vpack.c.bf16 %v2065, %v2063
      %v2120 = vpack.c.bf16 %v2069, %v2067
      %v2121 = vpack.c.bf16 %v2073, %v2071
      %v2122 = vpack.c.bf16 %v2077, %v2075
      %v2124 = vsel %vm1344, %v2118, 0
      %v2127 = vsel %vm1344, %v2119, 0
      %v2130 = vsel %vm1344, %v2120, 0
      %v2133 = vsel %vm1344, %v2121, 0
      %v2136 = vsel %vm1344, %v2122, 0
      %2138 = vmatprep.subr.bf16.mxu0 0
      %2139 = vmatpush1.bf16.msra.mxu0 %v1902
      %2140 = vmatprep.subr.bf16.mxu0 0
      %2141 = vmatpush1.bf16.msra.mxu0 %v1903
      %2142 = vmatprep.subr.bf16.mxu0 0
      %2143 = vmatpush1.bf16.msra.mxu0 %v1904
      %2144 = vmatprep.subr.bf16.mxu0 0
      %2145 = vmatpush1.bf16.msra.mxu0 %v1905
      %2146 = vmatprep.subr.bf16.mxu0 0
      %2147 = vmatpush1.bf16.msra.mxu0 %v1906
      %2148 = vmatprep.subr.bf16.mxu0 0
      %2149 = vmatpush1.bf16.msra.mxu0 0
      %2150 = vmatprep.subr.bf16.mxu0 0
      %2151 = vmatpush1.bf16.msra.mxu0 0
      %2152 = vmatprep.subr.bf16.mxu0 0
      %2153 = vmatpush1.bf16.msra.mxu0 0
      %2154 = vmatprep.subr.bf16.mxu0 0
      %2155 = vmatpush1.bf16.msra.mxu0 0
      %2156 = vmatprep.subr.bf16.mxu0 0
      %2157 = vmatpush1.bf16.msra.mxu0 0
      %2158 = vmatprep.subr.bf16.mxu0 0
      %2159 = vmatpush1.bf16.msra.mxu0 0
      %2160 = vmatprep.subr.bf16.mxu0 0
      %2161 = vmatpush1.bf16.msra.mxu0 0
      %2162 = vmatprep.subr.bf16.mxu0 0
      %2163 = vmatpush1.bf16.msra.mxu0 0
      %2164 = vmatprep.subr.bf16.mxu0 0
      %2165 = vmatpush1.bf16.msra.mxu0 0
      %2166 = vmatprep.subr.bf16.mxu0 0
      %2167 = vmatpush1.bf16.msra.mxu0 0
      %2168 = vmatprep.subr.bf16.mxu0 0
      %2169 = vmatpush1.bf16.msra.mxu0 0
      %2170 = vmatprep.mubr.bf16.mxu0 0
      %2171 = vmatmul.mubr.bf16.gmra.mrb[0].mxu0 %v2124
      %v2172 = vpop.f32.mrb[0].mxu0
      %v2173 = vadd.f32 0.0, %v2172
      %v2174 = vpop.f32.mrb[0].mxu0
      %v2175 = vpop.f32.mrb[0].mxu0
      %v2176 = vadd.f32 0.0, %v2175
      %v2177 = vpop.f32.mrb[0].mxu0
      %2178 = vmatprep.mubr.bf16.mxu0 0
      %2179 = vmatmul.mubr.bf16.gmra.mrb[0].mxu0 %v2127
      %v2180 = vpop.f32.mrb[0].mxu0
      %v2181 = vadd.f32 0.0, %v2180
      %v2182 = vpop.f32.mrb[0].mxu0
      %v2183 = vpop.f32.mrb[0].mxu0
      %v2184 = vadd.f32 0.0, %v2183
      %v2185 = vpop.f32.mrb[0].mxu0
      %2186 = vmatprep.mubr.bf16.mxu0 0
      %2187 = vmatmul.mubr.bf16.gmra.mrb[0].mxu0 %v2130
      %v2188 = vpop.f32.mrb[0].mxu0
      %v2189 = vadd.f32 0.0, %v2188
      %v2190 = vpop.f32.mrb[0].mxu0
      %v2191 = vpop.f32.mrb[0].mxu0
      %v2192 = vadd.f32 0.0, %v2191
      %v2193 = vpop.f32.mrb[0].mxu0
      %2194 = vmatprep.mubr.bf16.mxu0 0
      %2195 = vmatmul.mubr.bf16.gmra.mrb[0].mxu0 %v2133
      %v2196 = vpop.f32.mrb[0].mxu0
      %v2197 = vadd.f32 0.0, %v2196
      %v2198 = vpop.f32.mrb[0].mxu0
      %v2199 = vpop.f32.mrb[0].mxu0
      %v2200 = vadd.f32 0.0, %v2199
      %v2201 = vpop.f32.mrb[0].mxu0
      %2202 = vmatprep.mubr.bf16.mxu0 0
      %2203 = vmatmul.mubr.bf16.gmra.mrb[0].mxu0 %v2136
      %v2204 = vpop.f32.mrb[0].mxu0
      %v2205 = vadd.f32 0.0, %v2204
      %v2206 = vpop.f32.mrb[0].mxu0
      %v2207 = vpop.f32.mrb[0].mxu0
      %v2208 = vadd.f32 0.0, %v2207
      %v2209 = vpop.f32.mrb[0].mxu0
      %2210 = vdwg.mxu0
      %v2211 = vmul.f32 %v2173, %v2108
      %v2212 = vmul.f32 %v2176, %v2109
      %v2213 = vmul.f32 %v2181, %v2110
      %v2214 = vmul.f32 %v2184, %v2111
      %v2215 = vmul.f32 %v2189, %v2112
      %v2216 = vmul.f32 %v2192, %v2113
      %v2217 = vmul.f32 %v2197, %v2114
      %v2218 = vmul.f32 %v2200, %v2115
      %v2219 = vmul.f32 %v2205, %v2116
      %v2220 = vmul.f32 %v2208, %v2117
      %v2221 = vadd.f32 %v1892, %v2211
      %v2222 = vadd.f32 %v1893, %v2212
      %v2223 = vadd.f32 %v1894, %v2213
      %v2224 = vadd.f32 %v1895, %v2214
      %v2225 = vadd.f32 %v1896, %v2215
      %v2226 = vadd.f32 %v1897, %v2216
      %v2227 = vadd.f32 %v1898, %v2217
      %v2228 = vadd.f32 %v1899, %v2218
      %v2229 = vadd.f32 %v1900, %v2219
      %v2230 = vadd.f32 %v1901, %v2220
      %s2231 = scalar_lea.vmem %s5, 3
      %v2232 = vld [vmem:[%s2231] sm:$0x1]
      %v2234 = vlaneseq
      %v2235 = vshrl.u32 %v2234, 7
      %v2236 = vsub.s32 0, %v2235
      %v2237 = vrot.slane %v2232, %v2236
      %v2239 = vmul.f32 %v1073, %v2237
      %v2240 = vmul.f32 %v1077, %v2237
      %v2241 = vmul.f32 %v1083, %v2237
      %v2242 = vmul.f32 %v1087, %v2237
      %v2243 = vmul.f32 %v1093, %v2237
      %v2244 = vmul.f32 %v1097, %v2237
      %v2245 = vmul.f32 %v1103, %v2237
      %v2246 = vmul.f32 %v1107, %v2237
      %v2247 = vmul.f32 %v1113, %v2237
      %v2248 = vmul.f32 %v1117, %v2237
      %v2249 = vpack.c.bf16 %v2240, %v2239
      %v2250 = vpack.c.bf16 %v2242, %v2241
      %v2251 = vpack.c.bf16 %v2244, %v2243
      %v2252 = vpack.c.bf16 %v2246, %v2245
      %v2253 = vpack.c.bf16 %v2248, %v2247
      %v2255 = vsel %vm1022, %v2249, 0
      %v2258 = vsel %vm1022, %v2250, 0
      %v2261 = vsel %vm1022, %v2251, 0
      %v2264 = vsel %vm1022, %v2252, 0
      %v2267 = vsel %vm1022, %v2253, 0
      %2269 = vmatprep.subr.bf16.mxu0 0
      %2270 = vmatpush1.bf16.xpose.msra.mxu0 %v1257
      %2271 = vmatprep.subr.bf16.mxu0 0
      %2272 = vmatpush1.bf16.xpose.msra.mxu0 %v1260
      %2273 = vmatprep.subr.bf16.mxu0 0
      %2274 = vmatpush1.bf16.xpose.msra.mxu0 %v1263
      %2275 = vmatprep.subr.bf16.mxu0 0
      %2276 = vmatpush1.bf16.xpose.msra.mxu0 %v1266
      %2277 = vmatprep.subr.bf16.mxu0 0
      %2278 = vmatpush1.bf16.xpose.msra.mxu0 %v1269
      %2279 = vmatprep.subr.bf16.mxu0 0
      %2280 = vmatpush1.bf16.xpose.msra.mxu0 0
      %2281 = vmatprep.subr.bf16.mxu0 0
      %2282 = vmatpush1.bf16.xpose.msra.mxu0 0
      %2283 = vmatprep.subr.bf16.mxu0 0
      %2284 = vmatpush1.bf16.xpose.msra.mxu0 0
      %2285 = vmatprep.subr.bf16.mxu0 0
      %2286 = vmatpush1.bf16.xpose.msra.mxu0 0
      %2287 = vmatprep.subr.bf16.mxu0 0
      %2288 = vmatpush1.bf16.xpose.msra.mxu0 0
      %2289 = vmatprep.subr.bf16.mxu0 0
      %2290 = vmatpush1.bf16.xpose.msra.mxu0 0
      %2291 = vmatprep.subr.bf16.mxu0 0
      %2292 = vmatpush1.bf16.xpose.msra.mxu0 0
      %2293 = vmatprep.subr.bf16.mxu0 0
      %2294 = vmatpush1.bf16.xpose.msra.mxu0 0
      %2295 = vmatprep.subr.bf16.mxu0 0
      %2296 = vmatpush1.bf16.xpose.msra.mxu0 0
      %2297 = vmatprep.subr.bf16.mxu0 0
      %2298 = vmatpush1.bf16.xpose.msra.mxu0 0
      %2299 = vmatprep.subr.bf16.mxu0 0
      %2300 = vmatpush1.bf16.xpose.msra.mxu0 0
      %2301 = vmatprep.mubr.bf16.mxu0 0
      %2302 = vmatmul.mubr.bf16.gmra.mrb[0].mxu0 %v2255
      %v2303 = vpop.f32.mrb[0].mxu0
      %v2304 = vadd.f32 %v785, %v2303
      %v2305 = vpop.f32.mrb[0].mxu0
      %v2306 = vpop.f32.mrb[0].mxu0
      %v2307 = vadd.f32 %v786, %v2306
      %v2308 = vpop.f32.mrb[0].mxu0
      %2309 = vmatprep.mubr.bf16.mxu0 0
      %2310 = vmatmul.mubr.bf16.gmra.mrb[0].mxu0 %v2258
      %v2311 = vpop.f32.mrb[0].mxu0
      %v2312 = vadd.f32 %v787, %v2311
      %v2313 = vpop.f32.mrb[0].mxu0
      %v2314 = vpop.f32.mrb[0].mxu0
      %v2315 = vadd.f32 %v788, %v2314
      %v2316 = vpop.f32.mrb[0].mxu0
      %2317 = vmatprep.mubr.bf16.mxu0 0
      %2318 = vmatmul.mubr.bf16.gmra.mrb[0].mxu0 %v2261
      %v2319 = vpop.f32.mrb[0].mxu0
      %v2320 = vadd.f32 %v789, %v2319
      %v2321 = vpop.f32.mrb[0].mxu0
      %v2322 = vpop.f32.mrb[0].mxu0
      %v2323 = vadd.f32 %v790, %v2322
      %v2324 = vpop.f32.mrb[0].mxu0
      %2325 = vmatprep.mubr.bf16.mxu0 0
      %2326 = vmatmul.mubr.bf16.gmra.mrb[0].mxu0 %v2264
      %v2327 = vpop.f32.mrb[0].mxu0
      %v2328 = vadd.f32 %v791, %v2327
      %v2329 = vpop.f32.mrb[0].mxu0
      %v2330 = vpop.f32.mrb[0].mxu0
      %v2331 = vadd.f32 %v792, %v2330
      %v2332 = vpop.f32.mrb[0].mxu0
      %2333 = vmatprep.mubr.bf16.mxu0 0
      %2334 = vmatmul.mubr.bf16.gmra.mrb[0].mxu0 %v2267
      %v2335 = vpop.f32.mrb[0].mxu0
      %v2336 = vadd.f32 %v793, %v2335
      %v2337 = vpop.f32.mrb[0].mxu0
      %v2338 = vpop.f32.mrb[0].mxu0
      %v2339 = vadd.f32 %v794, %v2338
      %v2340 = vpop.f32.mrb[0].mxu0
      %2341 = vdwg.mxu0
      %v2342 = vsel %vm1344, %v2304, -inf
      %2343 = vmax.xlane.f32.xlu0 %v2342
      %v2344 = vpop.xlane.xlu0 %2343
      %v2345 = vsel %vm1344, %v2307, -inf
      %2346 = vmax.xlane.f32.xlu0 %v2345
      %v2347 = vpop.xlane.xlu0 %2346
      %v2348 = vsel %vm1344, %v2312, -inf
      %2349 = vmax.xlane.f32.xlu0 %v2348
      %v2350 = vpop.xlane.xlu0 %2349
      %v2351 = vsel %vm1344, %v2315, -inf
      %2352 = vmax.xlane.f32.xlu0 %v2351
      %v2353 = vpop.xlane.xlu0 %2352
      %v2354 = vsel %vm1344, %v2320, -inf
      %2355 = vmax.xlane.f32.xlu0 %v2354
      %v2356 = vpop.xlane.xlu0 %2355
      %v2357 = vsel %vm1344, %v2323, -inf
      %2358 = vmax.xlane.f32.xlu0 %v2357
      %v2359 = vpop.xlane.xlu0 %2358
      %v2360 = vsel %vm1344, %v2328, -inf
      %2361 = vmax.xlane.f32.xlu0 %v2360
      %v2362 = vpop.xlane.xlu0 %2361
      %v2363 = vsel %vm1344, %v2331, -inf
      %2364 = vmax.xlane.f32.xlu0 %v2363
      %v2365 = vpop.xlane.xlu0 %2364
      %v2366 = vsel %vm1344, %v2336, -inf
      %2367 = vmax.xlane.f32.xlu0 %v2366
      %v2368 = vpop.xlane.xlu0 %2367
      %v2369 = vsel %vm1344, %v2339, -inf
      %2370 = vmax.xlane.f32.xlu0 %v2369
      %v2371 = vpop.xlane.xlu0 %2370
      %v2372 = vsub.f32 %v2304, %v2344
      %v2373 = vsub.f32 %v2307, %v2347
      %v2374 = vsub.f32 %v2312, %v2350
      %v2375 = vsub.f32 %v2315, %v2353
      %v2376 = vsub.f32 %v2320, %v2356
      %v2377 = vsub.f32 %v2323, %v2359
      %v2378 = vsub.f32 %v2328, %v2362
      %v2379 = vsub.f32 %v2331, %v2365
      %v2380 = vsub.f32 %v2336, %v2368
      %v2381 = vsub.f32 %v2339, %v2371
      %v2382 = vmul.f32 %v2372, 1.442695
      %v2383 = vpow.pop %v2382
      %v2384 = vmul.f32 %v2373, 1.442695
      %v2385 = vpow.pop %v2384
      %v2386 = vmul.f32 %v2374, 1.442695
      %v2387 = vpow.pop %v2386
      %v2388 = vmul.f32 %v2375, 1.442695
      %v2389 = vpow.pop %v2388
      %v2390 = vmul.f32 %v2376, 1.442695
      %v2391 = vpow.pop %v2390
      %v2392 = vmul.f32 %v2377, 1.442695
      %v2393 = vpow.pop %v2392
      %v2394 = vmul.f32 %v2378, 1.442695
      %v2395 = vpow.pop %v2394
      %v2396 = vmul.f32 %v2379, 1.442695
      %v2397 = vpow.pop %v2396
      %v2398 = vmul.f32 %v2380, 1.442695
      %v2399 = vpow.pop %v2398
      %v2400 = vmul.f32 %v2381, 1.442695
      %v2401 = vpow.pop %v2400
      %v2402 = vsel %vm1344, %v2383, 0.0
      %2403 = vadd.xlane.f32.xlu0 %v2402
      %v2404 = vpop.xlane.xlu0 %2403
      %v2405 = vsel %vm1344, %v2385, 0.0
      %2406 = vadd.xlane.f32.xlu0 %v2405
      %v2407 = vpop.xlane.xlu0 %2406
      %v2408 = vsel %vm1344, %v2387, 0.0
      %2409 = vadd.xlane.f32.xlu0 %v2408
      %v2410 = vpop.xlane.xlu0 %2409
      %v2411 = vsel %vm1344, %v2389, 0.0
      %2412 = vadd.xlane.f32.xlu0 %v2411
      %v2413 = vpop.xlane.xlu0 %2412
      %v2414 = vsel %vm1344, %v2391, 0.0
      %2415 = vadd.xlane.f32.xlu0 %v2414
      %v2416 = vpop.xlane.xlu0 %2415
      %v2417 = vsel %vm1344, %v2393, 0.0
      %2418 = vadd.xlane.f32.xlu0 %v2417
      %v2419 = vpop.xlane.xlu0 %2418
      %v2420 = vsel %vm1344, %v2395, 0.0
      %2421 = vadd.xlane.f32.xlu0 %v2420
      %v2422 = vpop.xlane.xlu0 %2421
      %v2423 = vsel %vm1344, %v2397, 0.0
      %2424 = vadd.xlane.f32.xlu0 %v2423
      %v2425 = vpop.xlane.xlu0 %2424
      %v2426 = vsel %vm1344, %v2399, 0.0
      %2427 = vadd.xlane.f32.xlu0 %v2426
      %v2428 = vpop.xlane.xlu0 %2427
      %v2429 = vsel %vm1344, %v2401, 0.0
      %2430 = vadd.xlane.f32.xlu0 %v2429
      %v2431 = vpop.xlane.xlu0 %2430
      %v2432 = vrcp.pop %v2404
      %v2433 = vrcp.pop %v2407
      %v2434 = vrcp.pop %v2410
      %v2435 = vrcp.pop %v2413
      %v2436 = vrcp.pop %v2416
      %v2437 = vrcp.pop %v2419
      %v2438 = vrcp.pop %v2422
      %v2439 = vrcp.pop %v2425
      %v2440 = vrcp.pop %v2428
      %v2441 = vrcp.pop %v2431
      %v2442 = vpack.c.bf16 %v2385, %v2383
      %v2443 = vpack.c.bf16 %v2389, %v2387
      %v2444 = vpack.c.bf16 %v2393, %v2391
      %v2445 = vpack.c.bf16 %v2397, %v2395
      %v2446 = vpack.c.bf16 %v2401, %v2399
      %2452 = vrot.lane.b32.xlu0 %v1902, 64
      %v2453 = vpop.permute.xlu0 %2452
      %2454 = vrot.lane.b32.xlu0 %v1903, 64
      %v2455 = vpop.permute.xlu0 %2454
      %2456 = vrot.lane.b32.xlu0 %v1904, 64
      %v2457 = vpop.permute.xlu0 %2456
      %2458 = vrot.lane.b32.xlu0 %v1905, 64
      %v2459 = vpop.permute.xlu0 %2458
      %2460 = vrot.lane.b32.xlu0 %v1906, 64
      %v2461 = vpop.permute.xlu0 %2460
      %v2468 = vsel %vm1344, %v2442, 0
      %v2471 = vsel %vm1344, %v2443, 0
      %v2474 = vsel %vm1344, %v2444, 0
      %v2477 = vsel %vm1344, %v2445, 0
      %v2480 = vsel %vm1344, %v2446, 0
      %2482 = vmatprep.subr.bf16.mxu0 0
      %2483 = vmatpush1.bf16.msra.mxu0 %v2453
      %2484 = vmatprep.subr.bf16.mxu0 0
      %2485 = vmatpush1.bf16.msra.mxu0 %v2455
      %2486 = vmatprep.subr.bf16.mxu0 0
      %2487 = vmatpush1.bf16.msra.mxu0 %v2457
      %2488 = vmatprep.subr.bf16.mxu0 0
      %2489 = vmatpush1.bf16.msra.mxu0 %v2459
      %2490 = vmatprep.subr.bf16.mxu0 0
      %2491 = vmatpush1.bf16.msra.mxu0 %v2461
      %2492 = vmatprep.subr.bf16.mxu0 0
      %2493 = vmatpush1.bf16.msra.mxu0 0
      %2494 = vmatprep.subr.bf16.mxu0 0
      %2495 = vmatpush1.bf16.msra.mxu0 0
      %2496 = vmatprep.subr.bf16.mxu0 0
      %2497 = vmatpush1.bf16.msra.mxu0 0
      %2498 = vmatprep.subr.bf16.mxu0 0
      %2499 = vmatpush1.bf16.msra.mxu0 0
      %2500 = vmatprep.subr.bf16.mxu0 0
      %2501 = vmatpush1.bf16.msra.mxu0 0
      %2502 = vmatprep.subr.bf16.mxu0 0
      %2503 = vmatpush1.bf16.msra.mxu0 0
      %2504 = vmatprep.subr.bf16.mxu0 0
      %2505 = vmatpush1.bf16.msra.mxu0 0
      %2506 = vmatprep.subr.bf16.mxu0 0
      %2507 = vmatpush1.bf16.msra.mxu0 0
      %2508 = vmatprep.subr.bf16.mxu0 0
      %2509 = vmatpush1.bf16.msra.mxu0 0
      %2510 = vmatprep.subr.bf16.mxu0 0
      %2511 = vmatpush1.bf16.msra.mxu0 0
      %2512 = vmatprep.subr.bf16.mxu0 0
      %2513 = vmatpush1.bf16.msra.mxu0 0
      %2514 = vmatprep.mubr.bf16.mxu0 0
      %2515 = vmatmul.mubr.bf16.gmra.mrb[0].mxu0 %v2468
      %v2516 = vpop.f32.mrb[0].mxu0
      %v2517 = vadd.f32 0.0, %v2516
      %v2518 = vpop.f32.mrb[0].mxu0
      %v2519 = vpop.f32.mrb[0].mxu0
      %v2520 = vadd.f32 0.0, %v2519
      %v2521 = vpop.f32.mrb[0].mxu0
      %2522 = vmatprep.mubr.bf16.mxu0 0
      %2523 = vmatmul.mubr.bf16.gmra.mrb[0].mxu0 %v2471
      %v2524 = vpop.f32.mrb[0].mxu0
      %v2525 = vadd.f32 0.0, %v2524
      %v2526 = vpop.f32.mrb[0].mxu0
      %v2527 = vpop.f32.mrb[0].mxu0
      %v2528 = vadd.f32 0.0, %v2527
      %v2529 = vpop.f32.mrb[0].mxu0
      %2530 = vmatprep.mubr.bf16.mxu0 0
      %2531 = vmatmul.mubr.bf16.gmra.mrb[0].mxu0 %v2474
      %v2532 = vpop.f32.mrb[0].mxu0
      %v2533 = vadd.f32 0.0, %v2532
      %v2534 = vpop.f32.mrb[0].mxu0
      %v2535 = vpop.f32.mrb[0].mxu0
      %v2536 = vadd.f32 0.0, %v2535
      %v2537 = vpop.f32.mrb[0].mxu0
      %2538 = vmatprep.mubr.bf16.mxu0 0
      %2539 = vmatmul.mubr.bf16.gmra.mrb[0].mxu0 %v2477
      %v2540 = vpop.f32.mrb[0].mxu0
      %v2541 = vadd.f32 0.0, %v2540
      %v2542 = vpop.f32.mrb[0].mxu0
      %v2543 = vpop.f32.mrb[0].mxu0
      %v2544 = vadd.f32 0.0, %v2543
      %v2545 = vpop.f32.mrb[0].mxu0
      %2546 = vmatprep.mubr.bf16.mxu0 0
      %2547 = vmatmul.mubr.bf16.gmra.mrb[0].mxu0 %v2480
      %v2548 = vpop.f32.mrb[0].mxu0
      %v2549 = vadd.f32 0.0, %v2548
      %v2550 = vpop.f32.mrb[0].mxu0
      %v2551 = vpop.f32.mrb[0].mxu0
      %v2552 = vadd.f32 0.0, %v2551
      %v2553 = vpop.f32.mrb[0].mxu0
      %2554 = vdwg.mxu0
      %v2555 = vmul.f32 %v2517, %v2432
      %v2556 = vmul.f32 %v2520, %v2433
      %v2557 = vmul.f32 %v2525, %v2434
      %v2558 = vmul.f32 %v2528, %v2435
      %v2559 = vmul.f32 %v2533, %v2436
      %v2560 = vmul.f32 %v2536, %v2437
      %v2561 = vmul.f32 %v2541, %v2438
      %v2562 = vmul.f32 %v2544, %v2439
      %v2563 = vmul.f32 %v2549, %v2440
      %v2564 = vmul.f32 %v2552, %v2441
      %v2565 = vadd.f32 %v2221, %v2555
      %v2566 = vadd.f32 %v2222, %v2556
      %v2567 = vadd.f32 %v2223, %v2557
      %v2568 = vadd.f32 %v2224, %v2558
      %v2569 = vadd.f32 %v2225, %v2559
      %v2570 = vadd.f32 %v2226, %v2560
      %v2571 = vadd.f32 %v2227, %v2561
      %v2572 = vadd.f32 %v2228, %v2562
      %v2573 = vadd.f32 %v2229, %v2563
      %v2574 = vadd.f32 %v2230, %v2564
      %v2575 = vadd.f32 %v882, %v2565
      %v2576 = vadd.f32 %v885, %v2566
      %v2577 = vadd.f32 %v890, %v2567
      %v2578 = vadd.f32 %v893, %v2568
      %v2579 = vadd.f32 %v898, %v2569
      %v2580 = vadd.f32 %v901, %v2570
      %v2581 = vadd.f32 %v906, %v2571
      %v2582 = vadd.f32 %v909, %v2572
      %v2583 = vadd.f32 %v914, %v2573
      %v2584 = vadd.f32 %v917, %v2574
      %v2585 = vld [vmem:[%s9] sm:$0x1]
      %v2587 = vlaneseq
      %v2588 = vshrl.u32 %v2587, 7
      %v2589 = vsub.s32 0, %v2588
      %v2590 = vrot.slane %v2585, %v2589
      %v2592 = vadd.f32 %v2575, %v2590
      %v2593 = vadd.f32 %v2576, %v2590
      %v2594 = vadd.f32 %v2577, %v2590
      %v2595 = vadd.f32 %v2578, %v2590
      %v2596 = vadd.f32 %v2579, %v2590
      %v2597 = vadd.f32 %v2580, %v2590
      %v2598 = vadd.f32 %v2581, %v2590
      %v2599 = vadd.f32 %v2582, %v2590
      %v2600 = vadd.f32 %v2583, %v2590
      %v2601 = vadd.f32 %v2584, %v2590
      %v2602 = vld [vmem:[%s10] sm:$0x1]
      %v2603 = vld [vmem:[%s11] sm:$0x1]
      %v2604 = vsel %vm1022, %v2592, 0.0
      %2605 = vadd.xlane.f32.xlu0 %v2604
      %v2606 = vpop.xlane.xlu0 %2605
      %v2607 = vsel %vm1022, %v2593, 0.0
      %2608 = vadd.xlane.f32.xlu0 %v2607
      %v2609 = vpop.xlane.xlu0 %2608
      %v2610 = vsel %vm1022, %v2594, 0.0
      %2611 = vadd.xlane.f32.xlu0 %v2610
      %v2612 = vpop.xlane.xlu0 %2611
      %v2613 = vsel %vm1022, %v2595, 0.0
      %2614 = vadd.xlane.f32.xlu0 %v2613
      %v2615 = vpop.xlane.xlu0 %2614
      %v2616 = vsel %vm1022, %v2596, 0.0
      %2617 = vadd.xlane.f32.xlu0 %v2616
      %v2618 = vpop.xlane.xlu0 %2617
      %v2619 = vsel %vm1022, %v2597, 0.0
      %2620 = vadd.xlane.f32.xlu0 %v2619
      %v2621 = vpop.xlane.xlu0 %2620
      %v2622 = vsel %vm1022, %v2598, 0.0
      %2623 = vadd.xlane.f32.xlu0 %v2622
      %v2624 = vpop.xlane.xlu0 %2623
      %v2625 = vsel %vm1022, %v2599, 0.0
      %2626 = vadd.xlane.f32.xlu0 %v2625
      %v2627 = vpop.xlane.xlu0 %2626
      %v2628 = vsel %vm1022, %v2600, 0.0
      %2629 = vadd.xlane.f32.xlu0 %v2628
      %v2630 = vpop.xlane.xlu0 %2629
      %v2631 = vsel %vm1022, %v2601, 0.0
      %2632 = vadd.xlane.f32.xlu0 %v2631
      %v2633 = vpop.xlane.xlu0 %2632
      %v2634 = vrcp.pop 64.0
      %v2635 = vmul.f32 %v2606, %v2634
      %v2636 = vmul.f32 %v2609, %v2634
      %v2637 = vmul.f32 %v2612, %v2634
      %v2638 = vmul.f32 %v2615, %v2634
      %v2639 = vmul.f32 %v2618, %v2634
      %v2640 = vmul.f32 %v2621, %v2634
      %v2641 = vmul.f32 %v2624, %v2634
      %v2642 = vmul.f32 %v2627, %v2634
      %v2643 = vmul.f32 %v2630, %v2634
      %v2644 = vmul.f32 %v2633, %v2634
      %v2645 = vmul.f32 %v2592, %v2592
      %v2646 = vmul.f32 %v2593, %v2593
      %v2647 = vmul.f32 %v2594, %v2594
      %v2648 = vmul.f32 %v2595, %v2595
      %v2649 = vmul.f32 %v2596, %v2596
      %v2650 = vmul.f32 %v2597, %v2597
      %v2651 = vmul.f32 %v2598, %v2598
      %v2652 = vmul.f32 %v2599, %v2599
      %v2653 = vmul.f32 %v2600, %v2600
      %v2654 = vmul.f32 %v2601, %v2601
      %v2655 = vsel %vm1022, %v2645, 0.0
      %2656 = vadd.xlane.f32.xlu0 %v2655
      %v2657 = vpop.xlane.xlu0 %2656
      %v2658 = vsel %vm1022, %v2646, 0.0
      %2659 = vadd.xlane.f32.xlu0 %v2658
      %v2660 = vpop.xlane.xlu0 %2659
      %v2661 = vsel %vm1022, %v2647, 0.0
      %2662 = vadd.xlane.f32.xlu0 %v2661
      %v2663 = vpop.xlane.xlu0 %2662
      %v2664 = vsel %vm1022, %v2648, 0.0
      %2665 = vadd.xlane.f32.xlu0 %v2664
      %v2666 = vpop.xlane.xlu0 %2665
      %v2667 = vsel %vm1022, %v2649, 0.0
      %2668 = vadd.xlane.f32.xlu0 %v2667
      %v2669 = vpop.xlane.xlu0 %2668
      %v2670 = vsel %vm1022, %v2650, 0.0
      %2671 = vadd.xlane.f32.xlu0 %v2670
      %v2672 = vpop.xlane.xlu0 %2671
      %v2673 = vsel %vm1022, %v2651, 0.0
      %2674 = vadd.xlane.f32.xlu0 %v2673
      %v2675 = vpop.xlane.xlu0 %2674
      %v2676 = vsel %vm1022, %v2652, 0.0
      %2677 = vadd.xlane.f32.xlu0 %v2676
      %v2678 = vpop.xlane.xlu0 %2677
      %v2679 = vsel %vm1022, %v2653, 0.0
      %2680 = vadd.xlane.f32.xlu0 %v2679
      %v2681 = vpop.xlane.xlu0 %2680
      %v2682 = vsel %vm1022, %v2654, 0.0
      %2683 = vadd.xlane.f32.xlu0 %v2682
      %v2684 = vpop.xlane.xlu0 %2683
      %v2685 = vmul.f32 %v2657, %v2634
      %v2686 = vmul.f32 %v2660, %v2634
      %v2687 = vmul.f32 %v2663, %v2634
      %v2688 = vmul.f32 %v2666, %v2634
      %v2689 = vmul.f32 %v2669, %v2634
      %v2690 = vmul.f32 %v2672, %v2634
      %v2691 = vmul.f32 %v2675, %v2634
      %v2692 = vmul.f32 %v2678, %v2634
      %v2693 = vmul.f32 %v2681, %v2634
      %v2694 = vmul.f32 %v2684, %v2634
      %v2695 = vmul.f32 %v2635, %v2635
      %v2696 = vmul.f32 %v2636, %v2636
      %v2697 = vmul.f32 %v2637, %v2637
      %v2698 = vmul.f32 %v2638, %v2638
      %v2699 = vmul.f32 %v2639, %v2639
      %v2700 = vmul.f32 %v2640, %v2640
      %v2701 = vmul.f32 %v2641, %v2641
      %v2702 = vmul.f32 %v2642, %v2642
      %v2703 = vmul.f32 %v2643, %v2643
      %v2704 = vmul.f32 %v2644, %v2644
      %v2705 = vsub.f32 %v2685, %v2695
      %v2706 = vsub.f32 %v2686, %v2696
      %v2707 = vsub.f32 %v2687, %v2697
      %v2708 = vsub.f32 %v2688, %v2698
      %v2709 = vsub.f32 %v2689, %v2699
      %v2710 = vsub.f32 %v2690, %v2700
      %v2711 = vsub.f32 %v2691, %v2701
      %v2712 = vsub.f32 %v2692, %v2702
      %v2713 = vsub.f32 %v2693, %v2703
      %v2714 = vsub.f32 %v2694, %v2704
      %v2715 = vsub.f32 %v2592, %v2635
      %v2716 = vsub.f32 %v2593, %v2636
      %v2717 = vsub.f32 %v2594, %v2637
      %v2718 = vsub.f32 %v2595, %v2638
      %v2719 = vsub.f32 %v2596, %v2639
      %v2720 = vsub.f32 %v2597, %v2640
      %v2721 = vsub.f32 %v2598, %v2641
      %v2722 = vsub.f32 %v2599, %v2642
      %v2723 = vsub.f32 %v2600, %v2643
      %v2724 = vsub.f32 %v2601, %v2644
      %v2725 = vadd.f32 %v2705, 1e-05
      %v2726 = vadd.f32 %v2706, 1e-05
      %v2727 = vadd.f32 %v2707, 1e-05
      %v2728 = vadd.f32 %v2708, 1e-05
      %v2729 = vadd.f32 %v2709, 1e-05
      %v2730 = vadd.f32 %v2710, 1e-05
      %v2731 = vadd.f32 %v2711, 1e-05
      %v2732 = vadd.f32 %v2712, 1e-05
      %v2733 = vadd.f32 %v2713, 1e-05
      %v2734 = vadd.f32 %v2714, 1e-05
      %v2735 = vrsqrt.pop %v2725
      %v2736 = vrsqrt.pop %v2726
      %v2737 = vrsqrt.pop %v2727
      %v2738 = vrsqrt.pop %v2728
      %v2739 = vrsqrt.pop %v2729
      %v2740 = vrsqrt.pop %v2730
      %v2741 = vrsqrt.pop %v2731
      %v2742 = vrsqrt.pop %v2732
      %v2743 = vrsqrt.pop %v2733
      %v2744 = vrsqrt.pop %v2734
      %v2745 = vmul.f32 %v2715, %v2735
      %v2746 = vmul.f32 %v2716, %v2736
      %v2747 = vmul.f32 %v2717, %v2737
      %v2748 = vmul.f32 %v2718, %v2738
      %v2749 = vmul.f32 %v2719, %v2739
      %v2750 = vmul.f32 %v2720, %v2740
      %v2751 = vmul.f32 %v2721, %v2741
      %v2752 = vmul.f32 %v2722, %v2742
      %v2753 = vmul.f32 %v2723, %v2743
      %v2754 = vmul.f32 %v2724, %v2744
      %v2756 = vlaneseq
      %v2757 = vshrl.u32 %v2756, 7
      %v2758 = vsub.s32 0, %v2757
      %v2759 = vrot.slane %v2602, %v2758
      %v2761 = vmul.f32 %v2745, %v2759
      %v2762 = vmul.f32 %v2746, %v2759
      %v2763 = vmul.f32 %v2747, %v2759
      %v2764 = vmul.f32 %v2748, %v2759
      %v2765 = vmul.f32 %v2749, %v2759
      %v2766 = vmul.f32 %v2750, %v2759
      %v2767 = vmul.f32 %v2751, %v2759
      %v2768 = vmul.f32 %v2752, %v2759
      %v2769 = vmul.f32 %v2753, %v2759
      %v2770 = vmul.f32 %v2754, %v2759
      %v2772 = vlaneseq
      %v2773 = vshrl.u32 %v2772, 7
      %v2774 = vsub.s32 0, %v2773
      %v2775 = vrot.slane %v2603, %v2774
      %v2777 = vadd.f32 %v2761, %v2775
      %v2778 = vadd.f32 %v2762, %v2775
      %v2779 = vadd.f32 %v2763, %v2775
      %v2780 = vadd.f32 %v2764, %v2775
      %v2781 = vadd.f32 %v2765, %v2775
      %v2782 = vadd.f32 %v2766, %v2775
      %v2783 = vadd.f32 %v2767, %v2775
      %v2784 = vadd.f32 %v2768, %v2775
      %v2785 = vadd.f32 %v2769, %v2775
      %v2786 = vadd.f32 %v2770, %v2775
      %v2787 = vpack.c.bf16 %v2778, %v2777
      %v2788 = vpack.c.bf16 %v2780, %v2779
      %v2789 = vpack.c.bf16 %v2782, %v2781
      %v2790 = vpack.c.bf16 %v2784, %v2783
      %v2791 = vpack.c.bf16 %v2786, %v2785
      %v2792 = vld [vmem:[%s12] sm:$0xf]
      %v2793 = vld [vmem:[%s12 + $0x4] sm:$0xf]
      %v2794 = vld [vmem:[%s12 + $0x8] sm:$0xf]
      %v2795 = vld [vmem:[%s12 + $0xc] sm:$0xf]
      %v2796 = vld [vmem:[%s12 + $0x10] sm:$0xf]
      %v2797 = vld [vmem:[%s12 + $0x14] sm:$0xf]
      %v2798 = vld [vmem:[%s12 + $0x18] sm:$0xf]
      %v2799 = vld [vmem:[%s12 + $0x1c] sm:$0xf]
      %v2800 = vld [vmem:[%s13] sm:$0x1]
      %v2802 = vlaneseq
      %v2803 = vshrl.u32 %v2802, 7
      %v2804 = vsub.s32 0, %v2803
      %v2805 = vrot.slane %v2800, %v2804
      %v2815 = vunpack.c.l.b16 %v2792
      %v2816 = vunpack.c.l.b16 %v2793
      %v2817 = vunpack.c.l.b16 %v2794
      %v2818 = vunpack.c.l.b16 %v2795
      %v2819 = vunpack.c.l.b16 %v2796
      %v2820 = vunpack.c.l.b16 %v2797
      %v2821 = vunpack.c.l.b16 %v2798
      %v2822 = vunpack.c.l.b16 %v2799
      %v2823 = vpack.c.b16 %v2816, %v2815
      %v2824 = vpack.c.b16 %v2818, %v2817
      %v2825 = vpack.c.b16 %v2820, %v2819
      %v2826 = vpack.c.b16 %v2822, %v2821
      %v2832 = vsel %vm1022, %v2787, 0
      %v2835 = vsel %vm1022, %v2788, 0
      %v2838 = vsel %vm1022, %v2789, 0
      %v2841 = vsel %vm1022, %v2790, 0
      %v2844 = vsel %vm1022, %v2791, 0
      %2846 = vmatprep.subr.bf16.mxu0 0
      %2847 = vmatpush1.bf16.msra.mxu0 %v2823
      %2848 = vmatprep.subr.bf16.mxu0 0
      %2849 = vmatpush1.bf16.msra.mxu0 %v2824
      %2850 = vmatprep.subr.bf16.mxu0 0
      %2851 = vmatpush1.bf16.msra.mxu0 %v2825
      %2852 = vmatprep.subr.bf16.mxu0 0
      %2853 = vmatpush1.bf16.msra.mxu0 %v2826
      %2854 = vmatprep.subr.bf16.mxu0 0
      %2855 = vmatpush1.bf16.msra.mxu0 0
      %2856 = vmatprep.subr.bf16.mxu0 0
      %2857 = vmatpush1.bf16.msra.mxu0 0
      %2858 = vmatprep.subr.bf16.mxu0 0
      %2859 = vmatpush1.bf16.msra.mxu0 0
      %2860 = vmatprep.subr.bf16.mxu0 0
      %2861 = vmatpush1.bf16.msra.mxu0 0
      %2862 = vmatprep.subr.bf16.mxu0 0
      %2863 = vmatpush1.bf16.msra.mxu0 0
      %2864 = vmatprep.subr.bf16.mxu0 0
      %2865 = vmatpush1.bf16.msra.mxu0 0
      %2866 = vmatprep.subr.bf16.mxu0 0
      %2867 = vmatpush1.bf16.msra.mxu0 0
      %2868 = vmatprep.subr.bf16.mxu0 0
      %2869 = vmatpush1.bf16.msra.mxu0 0
      %2870 = vmatprep.subr.bf16.mxu0 0
      %2871 = vmatpush1.bf16.msra.mxu0 0
      %2872 = vmatprep.subr.bf16.mxu0 0
      %2873 = vmatpush1.bf16.msra.mxu0 0
      %2874 = vmatprep.subr.bf16.mxu0 0
      %2875 = vmatpush1.bf16.msra.mxu0 0
      %2876 = vmatprep.subr.bf16.mxu0 0
      %2877 = vmatpush1.bf16.msra.mxu0 0
      %2878 = vmatprep.mubr.bf16.mxu0 0
      %2879 = vmatmul.mubr.bf16.gmra.mrb[0].mxu0 %v2832
      %v2880 = vpop.f32.mrb[0].mxu0
      %v2881 = vadd.f32 %v2805, %v2880
      %v2882 = vpop.f32.mrb[0].mxu0
      %v2883 = vpop.f32.mrb[0].mxu0
      %v2884 = vadd.f32 %v2805, %v2883
      %v2885 = vpop.f32.mrb[0].mxu0
      %2886 = vmatprep.mubr.bf16.mxu0 0
      %2887 = vmatmul.mubr.bf16.gmra.mrb[0].mxu0 %v2835
      %v2888 = vpop.f32.mrb[0].mxu0
      %v2889 = vadd.f32 %v2805, %v2888
      %v2890 = vpop.f32.mrb[0].mxu0
      %v2891 = vpop.f32.mrb[0].mxu0
      %v2892 = vadd.f32 %v2805, %v2891
      %v2893 = vpop.f32.mrb[0].mxu0
      %2894 = vmatprep.mubr.bf16.mxu0 0
      %2895 = vmatmul.mubr.bf16.gmra.mrb[0].mxu0 %v2838
      %v2896 = vpop.f32.mrb[0].mxu0
      %v2897 = vadd.f32 %v2805, %v2896
      %v2898 = vpop.f32.mrb[0].mxu0
      %v2899 = vpop.f32.mrb[0].mxu0
      %v2900 = vadd.f32 %v2805, %v2899
      %v2901 = vpop.f32.mrb[0].mxu0
      %2902 = vmatprep.mubr.bf16.mxu0 0
      %2903 = vmatmul.mubr.bf16.gmra.mrb[0].mxu0 %v2841
      %v2904 = vpop.f32.mrb[0].mxu0
      %v2905 = vadd.f32 %v2805, %v2904
      %v2906 = vpop.f32.mrb[0].mxu0
      %v2907 = vpop.f32.mrb[0].mxu0
      %v2908 = vadd.f32 %v2805, %v2907
      %v2909 = vpop.f32.mrb[0].mxu0
      %2910 = vmatprep.mubr.bf16.mxu0 0
      %2911 = vmatmul.mubr.bf16.gmra.mrb[0].mxu0 %v2844
      %v2912 = vpop.f32.mrb[0].mxu0
      %v2913 = vadd.f32 %v2805, %v2912
      %v2914 = vpop.f32.mrb[0].mxu0
      %v2915 = vpop.f32.mrb[0].mxu0
      %v2916 = vadd.f32 %v2805, %v2915
      %v2917 = vpop.f32.mrb[0].mxu0
      %2918 = vdwg.mxu0
      %v2919 = vmax.f32 %v2881, 0.0
      %v2920 = vmax.f32 %v2884, 0.0
      %v2921 = vmax.f32 %v2889, 0.0
      %v2922 = vmax.f32 %v2892, 0.0
      %v2923 = vmax.f32 %v2897, 0.0
      %v2924 = vmax.f32 %v2900, 0.0
      %v2925 = vmax.f32 %v2905, 0.0
      %v2926 = vmax.f32 %v2908, 0.0
      %v2927 = vmax.f32 %v2913, 0.0
      %v2928 = vmax.f32 %v2916, 0.0
      %v2929 = vpack.c.bf16 %v2920, %v2919
      %v2930 = vpack.c.bf16 %v2922, %v2921
      %v2931 = vpack.c.bf16 %v2924, %v2923
      %v2932 = vpack.c.bf16 %v2926, %v2925
      %v2933 = vpack.c.bf16 %v2928, %v2927
      %v2934 = vld [vmem:[%s14] sm:$0xf]
      %v2935 = vld [vmem:[%s14 + $0x4] sm:$0xf]
      %v2936 = vld [vmem:[%s14 + $0x8] sm:$0xf]
      %v2937 = vld [vmem:[%s14 + $0xc] sm:$0xf]
      %v2938 = vld [vmem:[%s14 + $0x10] sm:$0xf]
      %v2939 = vld [vmem:[%s14 + $0x14] sm:$0xf]
      %v2940 = vld [vmem:[%s14 + $0x18] sm:$0xf]
      %v2941 = vld [vmem:[%s14 + $0x1c] sm:$0xf]
      %v2942 = vld [vmem:[%s14 + $0x20] sm:$0xf]
      %v2943 = vld [vmem:[%s14 + $0x24] sm:$0xf]
      %v2944 = vld [vmem:[%s14 + $0x28] sm:$0xf]
      %v2945 = vld [vmem:[%s14 + $0x2c] sm:$0xf]
      %v2946 = vld [vmem:[%s14 + $0x30] sm:$0xf]
      %v2947 = vld [vmem:[%s14 + $0x34] sm:$0xf]
      %v2948 = vld [vmem:[%s14 + $0x38] sm:$0xf]
      %v2949 = vld [vmem:[%s14 + $0x3c] sm:$0xf]
      %v2950 = vld [vmem:[%s15] sm:$0x1]
      %v2952 = vlaneseq
      %v2953 = vshrl.u32 %v2952, 7
      %v2954 = vsub.s32 0, %v2953
      %v2955 = vrot.slane %v2950, %v2954
      %v2973 = vunpack.c.l.b16 %v2934
      %v2974 = vunpack.c.l.b16 %v2935
      %v2975 = vunpack.c.l.b16 %v2936
      %v2976 = vunpack.c.l.b16 %v2937
      %v2977 = vunpack.c.l.b16 %v2938
      %v2978 = vunpack.c.l.b16 %v2939
      %v2979 = vunpack.c.l.b16 %v2940
      %v2980 = vunpack.c.l.b16 %v2941
      %v2981 = vunpack.c.l.b16 %v2942
      %v2982 = vunpack.c.l.b16 %v2943
      %v2983 = vunpack.c.l.b16 %v2944
      %v2984 = vunpack.c.l.b16 %v2945
      %v2985 = vunpack.c.l.b16 %v2946
      %v2986 = vunpack.c.l.b16 %v2947
      %v2987 = vunpack.c.l.b16 %v2948
      %v2988 = vunpack.c.l.b16 %v2949
      %v2989 = vpack.c.b16 %v2974, %v2973
      %v2990 = vpack.c.b16 %v2976, %v2975
      %v2991 = vpack.c.b16 %v2978, %v2977
      %v2992 = vpack.c.b16 %v2980, %v2979
      %v2993 = vpack.c.b16 %v2982, %v2981
      %v2994 = vpack.c.b16 %v2984, %v2983
      %v2995 = vpack.c.b16 %v2986, %v2985
      %v2996 = vpack.c.b16 %v2988, %v2987
      %3005 = vmatprep.subr.bf16.mxu0 0
      %3006 = vmatpush1.bf16.msra.mxu0 %v2989
      %3007 = vmatprep.subr.bf16.mxu0 0
      %3008 = vmatpush1.bf16.msra.mxu0 %v2990
      %3009 = vmatprep.subr.bf16.mxu0 0
      %3010 = vmatpush1.bf16.msra.mxu0 %v2991
      %3011 = vmatprep.subr.bf16.mxu0 0
      %3012 = vmatpush1.bf16.msra.mxu0 %v2992
      %3013 = vmatprep.subr.bf16.mxu0 0
      %3014 = vmatpush1.bf16.msra.mxu0 %v2993
      %3015 = vmatprep.subr.bf16.mxu0 0
      %3016 = vmatpush1.bf16.msra.mxu0 %v2994
      %3017 = vmatprep.subr.bf16.mxu0 0
      %3018 = vmatpush1.bf16.msra.mxu0 %v2995
      %3019 = vmatprep.subr.bf16.mxu0 0
      %3020 = vmatpush1.bf16.msra.mxu0 %v2996
      %3021 = vmatprep.subr.bf16.mxu0 0
      %3022 = vmatpush1.bf16.msra.mxu0 0
      %3023 = vmatprep.subr.bf16.mxu0 0
      %3024 = vmatpush1.bf16.msra.mxu0 0
      %3025 = vmatprep.subr.bf16.mxu0 0
      %3026 = vmatpush1.bf16.msra.mxu0 0
      %3027 = vmatprep.subr.bf16.mxu0 0
      %3028 = vmatpush1.bf16.msra.mxu0 0
      %3029 = vmatprep.subr.bf16.mxu0 0
      %3030 = vmatpush1.bf16.msra.mxu0 0
      %3031 = vmatprep.subr.bf16.mxu0 0
      %3032 = vmatpush1.bf16.msra.mxu0 0
      %3033 = vmatprep.subr.bf16.mxu0 0
      %3034 = vmatpush1.bf16.msra.mxu0 0
      %3035 = vmatprep.subr.bf16.mxu0 0
      %3036 = vmatpush1.bf16.msra.mxu0 0
      %3037 = vmatprep.mubr.bf16.mxu0 0
      %3038 = vmatmul.mubr.bf16.gmra.mrb[0].mxu0 %v2929
      %v3039 = vpop.f32.mrb[0].mxu0
      %v3040 = vadd.f32 %v2955, %v3039
      %v3041 = vpop.f32.mrb[0].mxu0
      %v3042 = vpop.f32.mrb[0].mxu0
      %v3043 = vadd.f32 %v2955, %v3042
      %v3044 = vpop.f32.mrb[0].mxu0
      %3045 = vmatprep.mubr.bf16.mxu0 0
      %3046 = vmatmul.mubr.bf16.gmra.mrb[0].mxu0 %v2930
      %v3047 = vpop.f32.mrb[0].mxu0
      %v3048 = vadd.f32 %v2955, %v3047
      %v3049 = vpop.f32.mrb[0].mxu0
      %v3050 = vpop.f32.mrb[0].mxu0
      %v3051 = vadd.f32 %v2955, %v3050
      %v3052 = vpop.f32.mrb[0].mxu0
      %3053 = vmatprep.mubr.bf16.mxu0 0
      %3054 = vmatmul.mubr.bf16.gmra.mrb[0].mxu0 %v2931
      %v3055 = vpop.f32.mrb[0].mxu0
      %v3056 = vadd.f32 %v2955, %v3055
      %v3057 = vpop.f32.mrb[0].mxu0
      %v3058 = vpop.f32.mrb[0].mxu0
      %v3059 = vadd.f32 %v2955, %v3058
      %v3060 = vpop.f32.mrb[0].mxu0
      %3061 = vmatprep.mubr.bf16.mxu0 0
      %3062 = vmatmul.mubr.bf16.gmra.mrb[0].mxu0 %v2932
      %v3063 = vpop.f32.mrb[0].mxu0
      %v3064 = vadd.f32 %v2955, %v3063
      %v3065 = vpop.f32.mrb[0].mxu0
      %v3066 = vpop.f32.mrb[0].mxu0
      %v3067 = vadd.f32 %v2955, %v3066
      %v3068 = vpop.f32.mrb[0].mxu0
      %3069 = vmatprep.mubr.bf16.mxu0 0
      %3070 = vmatmul.mubr.bf16.gmra.mrb[0].mxu0 %v2933
      %v3071 = vpop.f32.mrb[0].mxu0
      %v3072 = vadd.f32 %v2955, %v3071
      %v3073 = vpop.f32.mrb[0].mxu0
      %v3074 = vpop.f32.mrb[0].mxu0
      %v3075 = vadd.f32 %v2955, %v3074
      %v3076 = vpop.f32.mrb[0].mxu0
      %3077 = vdwg.mxu0
      %v3078 = vadd.f32 %v2777, %v3040
      %v3079 = vadd.f32 %v2778, %v3043
      %v3080 = vadd.f32 %v2779, %v3048
      %v3081 = vadd.f32 %v2780, %v3051
      %v3082 = vadd.f32 %v2781, %v3056
      %v3083 = vadd.f32 %v2782, %v3059
      %v3084 = vadd.f32 %v2783, %v3064
      %v3085 = vadd.f32 %v2784, %v3067
      %v3086 = vadd.f32 %v2785, %v3072
      %v3087 = vadd.f32 %v2786, %v3075
      %v3088 = vld [vmem:[%s16] sm:$0x1]
      %v3089 = vld [vmem:[%s17] sm:$0x1]
      %v3090 = vsel %vm1022, %v3078, 0.0
      %3091 = vadd.xlane.f32.xlu0 %v3090
      %v3092 = vpop.xlane.xlu0 %3091
      %v3093 = vsel %vm1022, %v3079, 0.0
      %3094 = vadd.xlane.f32.xlu0 %v3093
      %v3095 = vpop.xlane.xlu0 %3094
      %v3096 = vsel %vm1022, %v3080, 0.0
      %3097 = vadd.xlane.f32.xlu0 %v3096
      %v3098 = vpop.xlane.xlu0 %3097
      %v3099 = vsel %vm1022, %v3081, 0.0
      %3100 = vadd.xlane.f32.xlu0 %v3099
      %v3101 = vpop.xlane.xlu0 %3100
      %v3102 = vsel %vm1022, %v3082, 0.0
      %3103 = vadd.xlane.f32.xlu0 %v3102
      %v3104 = vpop.xlane.xlu0 %3103
      %v3105 = vsel %vm1022, %v3083, 0.0
      %3106 = vadd.xlane.f32.xlu0 %v3105
      %v3107 = vpop.xlane.xlu0 %3106
      %v3108 = vsel %vm1022, %v3084, 0.0
      %3109 = vadd.xlane.f32.xlu0 %v3108
      %v3110 = vpop.xlane.xlu0 %3109
      %v3111 = vsel %vm1022, %v3085, 0.0
      %3112 = vadd.xlane.f32.xlu0 %v3111
      %v3113 = vpop.xlane.xlu0 %3112
      %v3114 = vsel %vm1022, %v3086, 0.0
      %3115 = vadd.xlane.f32.xlu0 %v3114
      %v3116 = vpop.xlane.xlu0 %3115
      %v3117 = vsel %vm1022, %v3087, 0.0
      %3118 = vadd.xlane.f32.xlu0 %v3117
      %v3119 = vpop.xlane.xlu0 %3118
      %v3120 = vmul.f32 %v3092, %v2634
      %v3121 = vmul.f32 %v3095, %v2634
      %v3122 = vmul.f32 %v3098, %v2634
      %v3123 = vmul.f32 %v3101, %v2634
      %v3124 = vmul.f32 %v3104, %v2634
      %v3125 = vmul.f32 %v3107, %v2634
      %v3126 = vmul.f32 %v3110, %v2634
      %v3127 = vmul.f32 %v3113, %v2634
      %v3128 = vmul.f32 %v3116, %v2634
      %v3129 = vmul.f32 %v3119, %v2634
      %v3130 = vmul.f32 %v3078, %v3078
      %v3131 = vmul.f32 %v3079, %v3079
      %v3132 = vmul.f32 %v3080, %v3080
      %v3133 = vmul.f32 %v3081, %v3081
      %v3134 = vmul.f32 %v3082, %v3082
      %v3135 = vmul.f32 %v3083, %v3083
      %v3136 = vmul.f32 %v3084, %v3084
      %v3137 = vmul.f32 %v3085, %v3085
      %v3138 = vmul.f32 %v3086, %v3086
      %v3139 = vmul.f32 %v3087, %v3087
      %v3140 = vsel %vm1022, %v3130, 0.0
      %3141 = vadd.xlane.f32.xlu0 %v3140
      %v3142 = vpop.xlane.xlu0 %3141
      %v3143 = vsel %vm1022, %v3131, 0.0
      %3144 = vadd.xlane.f32.xlu0 %v3143
      %v3145 = vpop.xlane.xlu0 %3144
      %v3146 = vsel %vm1022, %v3132, 0.0
      %3147 = vadd.xlane.f32.xlu0 %v3146
      %v3148 = vpop.xlane.xlu0 %3147
      %v3149 = vsel %vm1022, %v3133, 0.0
      %3150 = vadd.xlane.f32.xlu0 %v3149
      %v3151 = vpop.xlane.xlu0 %3150
      %v3152 = vsel %vm1022, %v3134, 0.0
      %3153 = vadd.xlane.f32.xlu0 %v3152
      %v3154 = vpop.xlane.xlu0 %3153
      %v3155 = vsel %vm1022, %v3135, 0.0
      %3156 = vadd.xlane.f32.xlu0 %v3155
      %v3157 = vpop.xlane.xlu0 %3156
      %v3158 = vsel %vm1022, %v3136, 0.0
      %3159 = vadd.xlane.f32.xlu0 %v3158
      %v3160 = vpop.xlane.xlu0 %3159
      %v3161 = vsel %vm1022, %v3137, 0.0
      %3162 = vadd.xlane.f32.xlu0 %v3161
      %v3163 = vpop.xlane.xlu0 %3162
      %v3164 = vsel %vm1022, %v3138, 0.0
      %3165 = vadd.xlane.f32.xlu0 %v3164
      %v3166 = vpop.xlane.xlu0 %3165
      %v3167 = vsel %vm1022, %v3139, 0.0
      %3168 = vadd.xlane.f32.xlu0 %v3167
      %v3169 = vpop.xlane.xlu0 %3168
      %v3170 = vmul.f32 %v3142, %v2634
      %v3171 = vmul.f32 %v3145, %v2634
      %v3172 = vmul.f32 %v3148, %v2634
      %v3173 = vmul.f32 %v3151, %v2634
      %v3174 = vmul.f32 %v3154, %v2634
      %v3175 = vmul.f32 %v3157, %v2634
      %v3176 = vmul.f32 %v3160, %v2634
      %v3177 = vmul.f32 %v3163, %v2634
      %v3178 = vmul.f32 %v3166, %v2634
      %v3179 = vmul.f32 %v3169, %v2634
      %v3180 = vmul.f32 %v3120, %v3120
      %v3181 = vmul.f32 %v3121, %v3121
      %v3182 = vmul.f32 %v3122, %v3122
      %v3183 = vmul.f32 %v3123, %v3123
      %v3184 = vmul.f32 %v3124, %v3124
      %v3185 = vmul.f32 %v3125, %v3125
      %v3186 = vmul.f32 %v3126, %v3126
      %v3187 = vmul.f32 %v3127, %v3127
      %v3188 = vmul.f32 %v3128, %v3128
      %v3189 = vmul.f32 %v3129, %v3129
      %v3190 = vsub.f32 %v3170, %v3180
      %v3191 = vsub.f32 %v3171, %v3181
      %v3192 = vsub.f32 %v3172, %v3182
      %v3193 = vsub.f32 %v3173, %v3183
      %v3194 = vsub.f32 %v3174, %v3184
      %v3195 = vsub.f32 %v3175, %v3185
      %v3196 = vsub.f32 %v3176, %v3186
      %v3197 = vsub.f32 %v3177, %v3187
      %v3198 = vsub.f32 %v3178, %v3188
      %v3199 = vsub.f32 %v3179, %v3189
      %v3200 = vsub.f32 %v3078, %v3120
      %v3201 = vsub.f32 %v3079, %v3121
      %v3202 = vsub.f32 %v3080, %v3122
      %v3203 = vsub.f32 %v3081, %v3123
      %v3204 = vsub.f32 %v3082, %v3124
      %v3205 = vsub.f32 %v3083, %v3125
      %v3206 = vsub.f32 %v3084, %v3126
      %v3207 = vsub.f32 %v3085, %v3127
      %v3208 = vsub.f32 %v3086, %v3128
      %v3209 = vsub.f32 %v3087, %v3129
      %v3210 = vadd.f32 %v3190, 1e-05
      %v3211 = vadd.f32 %v3191, 1e-05
      %v3212 = vadd.f32 %v3192, 1e-05
      %v3213 = vadd.f32 %v3193, 1e-05
      %v3214 = vadd.f32 %v3194, 1e-05
      %v3215 = vadd.f32 %v3195, 1e-05
      %v3216 = vadd.f32 %v3196, 1e-05
      %v3217 = vadd.f32 %v3197, 1e-05
      %v3218 = vadd.f32 %v3198, 1e-05
      %v3219 = vadd.f32 %v3199, 1e-05
      %v3220 = vrsqrt.pop %v3210
      %v3221 = vrsqrt.pop %v3211
      %v3222 = vrsqrt.pop %v3212
      %v3223 = vrsqrt.pop %v3213
      %v3224 = vrsqrt.pop %v3214
      %v3225 = vrsqrt.pop %v3215
      %v3226 = vrsqrt.pop %v3216
      %v3227 = vrsqrt.pop %v3217
      %v3228 = vrsqrt.pop %v3218
      %v3229 = vrsqrt.pop %v3219
      %v3230 = vmul.f32 %v3200, %v3220
      %v3231 = vmul.f32 %v3201, %v3221
      %v3232 = vmul.f32 %v3202, %v3222
      %v3233 = vmul.f32 %v3203, %v3223
      %v3234 = vmul.f32 %v3204, %v3224
      %v3235 = vmul.f32 %v3205, %v3225
      %v3236 = vmul.f32 %v3206, %v3226
      %v3237 = vmul.f32 %v3207, %v3227
      %v3238 = vmul.f32 %v3208, %v3228
      %v3239 = vmul.f32 %v3209, %v3229
      %v3241 = vlaneseq
      %v3242 = vshrl.u32 %v3241, 7
      %v3243 = vsub.s32 0, %v3242
      %v3244 = vrot.slane %v3088, %v3243
      %v3246 = vmul.f32 %v3230, %v3244
      %v3247 = vmul.f32 %v3231, %v3244
      %v3248 = vmul.f32 %v3232, %v3244
      %v3249 = vmul.f32 %v3233, %v3244
      %v3250 = vmul.f32 %v3234, %v3244
      %v3251 = vmul.f32 %v3235, %v3244
      %v3252 = vmul.f32 %v3236, %v3244
      %v3253 = vmul.f32 %v3237, %v3244
      %v3254 = vmul.f32 %v3238, %v3244
      %v3255 = vmul.f32 %v3239, %v3244
      %v3257 = vlaneseq
      %v3258 = vshrl.u32 %v3257, 7
      %v3259 = vsub.s32 0, %v3258
      %v3260 = vrot.slane %v3089, %v3259
      %v3262 = vadd.f32 %v3246, %v3260
      %v3263 = vadd.f32 %v3247, %v3260
      %v3264 = vadd.f32 %v3248, %v3260
      %v3265 = vadd.f32 %v3249, %v3260
      %v3266 = vadd.f32 %v3250, %v3260
      %v3267 = vadd.f32 %v3251, %v3260
      %v3268 = vadd.f32 %v3252, %v3260
      %v3269 = vadd.f32 %v3253, %v3260
      %v3270 = vadd.f32 %v3254, %v3260
      %v3271 = vadd.f32 %v3255, %v3260
      %v3272 = vpack.c.bf16 %v3263, %v3262
      %v3273 = vpack.c.bf16 %v3265, %v3264
      %v3274 = vpack.c.bf16 %v3267, %v3266
      %v3275 = vpack.c.bf16 %v3269, %v3268
      %v3276 = vpack.c.bf16 %v3271, %v3270
      %s3277 = scalar_lea.vmem %s7, 96
      %v3278 = vld [vmem:[%s3277] sm:$0xff]
      %v3279 = vld [vmem:[%s3277 + $0x8] sm:$0xf]
      %v3280 = vld [vmem:[%s3277 + $0xc] sm:$0xff]
      %v3281 = vld [vmem:[%s3277 + $0x14] sm:$0xf]
      %v3282 = vld [vmem:[%s3277 + $0x18] sm:$0xff]
      %v3283 = vld [vmem:[%s3277 + $0x20] sm:$0xf]
      %v3284 = vld [vmem:[%s3277 + $0x24] sm:$0xff]
      %v3285 = vld [vmem:[%s3277 + $0x2c] sm:$0xf]
      %v3286 = vld [vmem:[%s3277 + $0x30] sm:$0xff]
      %v3287 = vld [vmem:[%s3277 + $0x38] sm:$0xf]
      %v3288 = vld [vmem:[%s3277 + $0x3c] sm:$0xff]
      %v3289 = vld [vmem:[%s3277 + $0x44] sm:$0xf]
      %v3290 = vld [vmem:[%s3277 + $0x48] sm:$0xff]
      %v3291 = vld [vmem:[%s3277 + $0x50] sm:$0xf]
      %v3292 = vld [vmem:[%s3277 + $0x54] sm:$0xff]
      %v3293 = vld [vmem:[%s3277 + $0x5c] sm:$0xf]
      %s3294 = scalar_lea.vmem %s8, 3
      %v3295 = vld [vmem:[%s3294] sm:$0x7]
      %v3297 = vlaneseq
      %v3298 = vshrl.u32 %v3297, 7
      %v3299 = vsub.s32 0, %v3298
      %v3300 = vrot.slane %v3295, %v3299
      %v3301 = vlaneseq
      %v3302 = vshrl.u32 %v3301, 7
      %v3303 = vsub.s32 1, %v3302
      %v3304 = vrot.slane %v3295, %v3303
      %v3305 = vlaneseq
      %v3306 = vshrl.u32 %v3305, 7
      %v3307 = vsub.s32 2, %v3306
      %v3308 = vrot.slane %v3295, %v3307
      %v3328 = vunpack.c.l.b16 %v3278
      %v3329 = vunpack.c.h.b16 %v3278
      %v3330 = vunpack.c.l.b16 %v3279
      %v3331 = vunpack.c.l.b16 %v3280
      %v3332 = vunpack.c.h.b16 %v3280
      %v3333 = vunpack.c.l.b16 %v3281
      %v3334 = vunpack.c.l.b16 %v3282
      %v3335 = vunpack.c.h.b16 %v3282
      %v3336 = vunpack.c.l.b16 %v3283
      %v3337 = vunpack.c.l.b16 %v3284
      %v3338 = vunpack.c.h.b16 %v3284
      %v3339 = vunpack.c.l.b16 %v3285
      %v3340 = vunpack.c.l.b16 %v3286
      %v3341 = vunpack.c.h.b16 %v3286
      %v3342 = vunpack.c.l.b16 %v3287
      %v3343 = vunpack.c.l.b16 %v3288
      %v3344 = vunpack.c.h.b16 %v3288
      %v3345 = vunpack.c.l.b16 %v3289
      %v3346 = vunpack.c.l.b16 %v3290
      %v3347 = vunpack.c.h.b16 %v3290
      %v3348 = vunpack.c.l.b16 %v3291
      %v3349 = vunpack.c.l.b16 %v3292
      %v3350 = vunpack.c.h.b16 %v3292
      %v3351 = vunpack.c.l.b16 %v3293
      %v3352 = vpack.c.b16 %v3331, %v3328
      %v3353 = vpack.c.b16 %v3332, %v3329
      %v3354 = vpack.c.b16 %v3333, %v3330
      %v3355 = vpack.c.b16 %v3337, %v3334
      %v3356 = vpack.c.b16 %v3338, %v3335
      %v3357 = vpack.c.b16 %v3339, %v3336
      %v3358 = vpack.c.b16 %v3343, %v3340
      %v3359 = vpack.c.b16 %v3344, %v3341
      %v3360 = vpack.c.b16 %v3345, %v3342
      %v3361 = vpack.c.b16 %v3349, %v3346
      %v3362 = vpack.c.b16 %v3350, %v3347
      %v3363 = vpack.c.b16 %v3351, %v3348
      %v3377 = vsel %vm1022, %v3272, 0
      %v3380 = vsel %vm1022, %v3273, 0
      %v3383 = vsel %vm1022, %v3274, 0
      %v3386 = vsel %vm1022, %v3275, 0
      %v3389 = vsel %vm1022, %v3276, 0
      %3391 = vmatprep.subr.bf16.mxu0 %v3353
      %3392 = vmatpush1.bf16.msra.mxu0 %v3352
      %3393 = vmatprep.subr.bf16.mxu0 %v3356
      %3394 = vmatpush1.bf16.msra.mxu0 %v3355
      %3395 = vmatprep.subr.bf16.mxu0 %v3359
      %3396 = vmatpush1.bf16.msra.mxu0 %v3358
      %3397 = vmatprep.subr.bf16.mxu0 %v3362
      %3398 = vmatpush1.bf16.msra.mxu0 %v3361
      %3399 = vmatprep.subr.bf16.mxu0 0
      %3400 = vmatpush1.bf16.msra.mxu0 0
      %3401 = vmatprep.subr.bf16.mxu0 0
      %3402 = vmatpush1.bf16.msra.mxu0 0
      %3403 = vmatprep.subr.bf16.mxu0 0
      %3404 = vmatpush1.bf16.msra.mxu0 0
      %3405 = vmatprep.subr.bf16.mxu0 0
      %3406 = vmatpush1.bf16.msra.mxu0 0
      %3407 = vmatprep.subr.bf16.mxu0 0
      %3408 = vmatpush1.bf16.msra.mxu0 0
      %3409 = vmatprep.subr.bf16.mxu0 0
      %3410 = vmatpush1.bf16.msra.mxu0 0
      %3411 = vmatprep.subr.bf16.mxu0 0
      %3412 = vmatpush1.bf16.msra.mxu0 0
      %3413 = vmatprep.subr.bf16.mxu0 0
      %3414 = vmatpush1.bf16.msra.mxu0 0
      %3415 = vmatprep.subr.bf16.mxu0 0
      %3416 = vmatpush1.bf16.msra.mxu0 0
      %3417 = vmatprep.subr.bf16.mxu0 0
      %3418 = vmatpush1.bf16.msra.mxu0 0
      %3419 = vmatprep.subr.bf16.mxu0 0
      %3420 = vmatpush1.bf16.msra.mxu0 0
      %3421 = vmatprep.subr.bf16.mxu0 0
      %3422 = vmatpush1.bf16.msra.mxu0 0
      %3423 = vmatprep.mubr.bf16.mxu0 0
      %3424 = vmatmul.mubr.bf16.gmra.mrb[0].mxu0 %v3377
      %v3425 = vpop.f32.mrb[0].mxu0
      %v3426 = vadd.f32 %v3300, %v3425
      %v3427 = vpop.f32.mrb[0].mxu0
      %v3428 = vadd.f32 %v3304, %v3427
      %v3429 = vpop.f32.mrb[0].mxu0
      %v3430 = vadd.f32 %v3300, %v3429
      %v3431 = vpop.f32.mrb[0].mxu0
      %v3432 = vadd.f32 %v3304, %v3431
      %3433 = vmatprep.mubr.bf16.mxu0 0
      %3434 = vmatmul.mubr.bf16.gmra.mrb[0].mxu0 %v3380
      %v3435 = vpop.f32.mrb[0].mxu0
      %v3436 = vadd.f32 %v3300, %v3435
      %v3437 = vpop.f32.mrb[0].mxu0
      %v3438 = vadd.f32 %v3304, %v3437
      %v3439 = vpop.f32.mrb[0].mxu0
      %v3440 = vadd.f32 %v3300, %v3439
      %v3441 = vpop.f32.mrb[0].mxu0
      %v3442 = vadd.f32 %v3304, %v3441
      %3443 = vmatprep.mubr.bf16.mxu0 0
      %3444 = vmatmul.mubr.bf16.gmra.mrb[0].mxu0 %v3383
      %v3445 = vpop.f32.mrb[0].mxu0
      %v3446 = vadd.f32 %v3300, %v3445
      %v3447 = vpop.f32.mrb[0].mxu0
      %v3448 = vadd.f32 %v3304, %v3447
      %v3449 = vpop.f32.mrb[0].mxu0
      %v3450 = vadd.f32 %v3300, %v3449
      %v3451 = vpop.f32.mrb[0].mxu0
      %v3452 = vadd.f32 %v3304, %v3451
      %3453 = vmatprep.mubr.bf16.mxu0 0
      %3454 = vmatmul.mubr.bf16.gmra.mrb[0].mxu0 %v3386
      %v3455 = vpop.f32.mrb[0].mxu0
      %v3456 = vadd.f32 %v3300, %v3455
      %v3457 = vpop.f32.mrb[0].mxu0
      %v3458 = vadd.f32 %v3304, %v3457
      %v3459 = vpop.f32.mrb[0].mxu0
      %v3460 = vadd.f32 %v3300, %v3459
      %v3461 = vpop.f32.mrb[0].mxu0
      %v3462 = vadd.f32 %v3304, %v3461
      %3463 = vmatprep.mubr.bf16.mxu0 0
      %3464 = vmatmul.mubr.bf16.gmra.mrb[0].mxu0 %v3389
      %v3465 = vpop.f32.mrb[0].mxu0
      %v3466 = vadd.f32 %v3300, %v3465
      %v3467 = vpop.f32.mrb[0].mxu0
      %v3468 = vadd.f32 %v3304, %v3467
      %v3469 = vpop.f32.mrb[0].mxu0
      %v3470 = vadd.f32 %v3300, %v3469
      %v3471 = vpop.f32.mrb[0].mxu0
      %v3472 = vadd.f32 %v3304, %v3471
      %3473 = vdwg.mxu0
      %3474 = vmatprep.subr.bf16.mxu0 0
      %3475 = vmatpush1.bf16.msra.mxu0 %v3354
      %3476 = vmatprep.subr.bf16.mxu0 0
      %3477 = vmatpush1.bf16.msra.mxu0 %v3357
      %3478 = vmatprep.subr.bf16.mxu0 0
      %3479 = vmatpush1.bf16.msra.mxu0 %v3360
      %3480 = vmatprep.subr.bf16.mxu0 0
      %3481 = vmatpush1.bf16.msra.mxu0 %v3363
      %3482 = vmatprep.subr.bf16.mxu0 0
      %3483 = vmatpush1.bf16.msra.mxu0 0
      %3484 = vmatprep.subr.bf16.mxu0 0
      %3485 = vmatpush1.bf16.msra.mxu0 0
      %3486 = vmatprep.subr.bf16.mxu0 0
      %3487 = vmatpush1.bf16.msra.mxu0 0
      %3488 = vmatprep.subr.bf16.mxu0 0
      %3489 = vmatpush1.bf16.msra.mxu0 0
      %3490 = vmatprep.subr.bf16.mxu0 0
      %3491 = vmatpush1.bf16.msra.mxu0 0
      %3492 = vmatprep.subr.bf16.mxu0 0
      %3493 = vmatpush1.bf16.msra.mxu0 0
      %3494 = vmatprep.subr.bf16.mxu0 0
      %3495 = vmatpush1.bf16.msra.mxu0 0
      %3496 = vmatprep.subr.bf16.mxu0 0
      %3497 = vmatpush1.bf16.msra.mxu0 0
      %3498 = vmatprep.subr.bf16.mxu0 0
      %3499 = vmatpush1.bf16.msra.mxu0 0
      %3500 = vmatprep.subr.bf16.mxu0 0
      %3501 = vmatpush1.bf16.msra.mxu0 0
      %3502 = vmatprep.subr.bf16.mxu0 0
      %3503 = vmatpush1.bf16.msra.mxu0 0
      %3504 = vmatprep.subr.bf16.mxu0 0
      %3505 = vmatpush1.bf16.msra.mxu0 0
      %3506 = vmatprep.mubr.bf16.mxu0 0
      %3507 = vmatmul.mubr.bf16.gmra.mrb[0].mxu0 %v3377
      %v3508 = vpop.f32.mrb[0].mxu0
      %v3509 = vadd.f32 %v3308, %v3508
      %v3510 = vpop.f32.mrb[0].mxu0
      %v3511 = vpop.f32.mrb[0].mxu0
      %v3512 = vadd.f32 %v3308, %v3511
      %v3513 = vpop.f32.mrb[0].mxu0
      %3514 = vmatprep.mubr.bf16.mxu0 0
      %3515 = vmatmul.mubr.bf16.gmra.mrb[0].mxu0 %v3380
      %v3516 = vpop.f32.mrb[0].mxu0
      %v3517 = vadd.f32 %v3308, %v3516
      %v3518 = vpop.f32.mrb[0].mxu0
      %v3519 = vpop.f32.mrb[0].mxu0
      %v3520 = vadd.f32 %v3308, %v3519
      %v3521 = vpop.f32.mrb[0].mxu0
      %3522 = vmatprep.mubr.bf16.mxu0 0
      %3523 = vmatmul.mubr.bf16.gmra.mrb[0].mxu0 %v3383
      %v3524 = vpop.f32.mrb[0].mxu0
      %v3525 = vadd.f32 %v3308, %v3524
      %v3526 = vpop.f32.mrb[0].mxu0
      %v3527 = vpop.f32.mrb[0].mxu0
      %v3528 = vadd.f32 %v3308, %v3527
      %v3529 = vpop.f32.mrb[0].mxu0
      %3530 = vmatprep.mubr.bf16.mxu0 0
      %3531 = vmatmul.mubr.bf16.gmra.mrb[0].mxu0 %v3386
      %v3532 = vpop.f32.mrb[0].mxu0
      %v3533 = vadd.f32 %v3308, %v3532
      %v3534 = vpop.f32.mrb[0].mxu0
      %v3535 = vpop.f32.mrb[0].mxu0
      %v3536 = vadd.f32 %v3308, %v3535
      %v3537 = vpop.f32.mrb[0].mxu0
      %3538 = vmatprep.mubr.bf16.mxu0 0
      %3539 = vmatmul.mubr.bf16.gmra.mrb[0].mxu0 %v3389
      %v3540 = vpop.f32.mrb[0].mxu0
      %v3541 = vadd.f32 %v3308, %v3540
      %v3542 = vpop.f32.mrb[0].mxu0
      %v3543 = vpop.f32.mrb[0].mxu0
      %v3544 = vadd.f32 %v3308, %v3543
      %v3545 = vpop.f32.mrb[0].mxu0
      %3546 = vdwg.mxu0
      %v3547 = vpack.c.bf16 %v3430, %v3426
      %v3548 = vpack.c.bf16 %v3440, %v3436
      %v3549 = vpack.c.bf16 %v3450, %v3446
      %v3550 = vpack.c.bf16 %v3460, %v3456
      %v3551 = vpack.c.bf16 %v3470, %v3466
      %v3552 = vpack.c.bf16 %v3432, %v3428
      %v3553 = vpack.c.bf16 %v3442, %v3438
      %v3554 = vpack.c.bf16 %v3452, %v3448
      %v3555 = vpack.c.bf16 %v3462, %v3458
      %v3556 = vpack.c.bf16 %v3472, %v3468
      %v3557 = vmul.f32 %v3426, %v1209
      %v3558 = vmul.f32 %v3430, %v1209
      %v3559 = vmul.f32 %v3436, %v1209
      %v3560 = vmul.f32 %v3440, %v1209
      %v3561 = vmul.f32 %v3446, %v1209
      %v3562 = vmul.f32 %v3450, %v1209
      %v3563 = vmul.f32 %v3456, %v1209
      %v3564 = vmul.f32 %v3460, %v1209
      %v3565 = vmul.f32 %v3466, %v1209
      %v3566 = vmul.f32 %v3470, %v1209
      %v3567 = vpack.c.bf16 %v3558, %v3557
      %v3568 = vpack.c.bf16 %v3560, %v3559
      %v3569 = vpack.c.bf16 %v3562, %v3561
      %v3570 = vpack.c.bf16 %v3564, %v3563
      %v3571 = vpack.c.bf16 %v3566, %v3565
      %3577 = vrot.lane.b32.xlu0 %v3547, 64
      %v3578 = vpop.permute.xlu0 %3577
      %3579 = vrot.lane.b32.xlu0 %v3548, 64
      %v3580 = vpop.permute.xlu0 %3579
      %3581 = vrot.lane.b32.xlu0 %v3549, 64
      %v3582 = vpop.permute.xlu0 %3581
      %3583 = vrot.lane.b32.xlu0 %v3550, 64
      %v3584 = vpop.permute.xlu0 %3583
      %3585 = vrot.lane.b32.xlu0 %v3551, 64
      %v3586 = vpop.permute.xlu0 %3585
      %v3588 = vsel %vm1022, %v3567, 0
      %v3591 = vsel %vm1022, %v3568, 0
      %v3594 = vsel %vm1022, %v3569, 0
      %v3597 = vsel %vm1022, %v3570, 0
      %v3600 = vsel %vm1022, %v3571, 0
      %v3603 = vsel %vm1022, %v3578, 0
      %v3606 = vsel %vm1022, %v3580, 0
      %v3609 = vsel %vm1022, %v3582, 0
      %v3612 = vsel %vm1022, %v3584, 0
      %v3615 = vsel %vm1022, %v3586, 0
      %3617 = vmatprep.subr.bf16.mxu0 0
      %3618 = vmatpush1.bf16.xpose.msra.mxu0 %v3603
      %3619 = vmatprep.subr.bf16.mxu0 0
      %3620 = vmatpush1.bf16.xpose.msra.mxu0 %v3606
      %3621 = vmatprep.subr.bf16.mxu0 0
      %3622 = vmatpush1.bf16.xpose.msra.mxu0 %v3609
      %3623 = vmatprep.subr.bf16.mxu0 0
      %3624 = vmatpush1.bf16.xpose.msra.mxu0 %v3612
      %3625 = vmatprep.subr.bf16.mxu0 0
      %3626 = vmatpush1.bf16.xpose.msra.mxu0 %v3615
      %3627 = vmatprep.subr.bf16.mxu0 0
      %3628 = vmatpush1.bf16.xpose.msra.mxu0 0
      %3629 = vmatprep.subr.bf16.mxu0 0
      %3630 = vmatpush1.bf16.xpose.msra.mxu0 0
      %3631 = vmatprep.subr.bf16.mxu0 0
      %3632 = vmatpush1.bf16.xpose.msra.mxu0 0
      %3633 = vmatprep.subr.bf16.mxu0 0
      %3634 = vmatpush1.bf16.xpose.msra.mxu0 0
      %3635 = vmatprep.subr.bf16.mxu0 0
      %3636 = vmatpush1.bf16.xpose.msra.mxu0 0
      %3637 = vmatprep.subr.bf16.mxu0 0
      %3638 = vmatpush1.bf16.xpose.msra.mxu0 0
      %3639 = vmatprep.subr.bf16.mxu0 0
      %3640 = vmatpush1.bf16.xpose.msra.mxu0 0
      %3641 = vmatprep.subr.bf16.mxu0 0
      %3642 = vmatpush1.bf16.xpose.msra.mxu0 0
      %3643 = vmatprep.subr.bf16.mxu0 0
      %3644 = vmatpush1.bf16.xpose.msra.mxu0 0
      %3645 = vmatprep.subr.bf16.mxu0 0
      %3646 = vmatpush1.bf16.xpose.msra.mxu0 0
      %3647 = vmatprep.subr.bf16.mxu0 0
      %3648 = vmatpush1.bf16.xpose.msra.mxu0 0
      %3649 = vmatprep.mubr.bf16.mxu0 0
      %3650 = vmatmul.mubr.bf16.gmra.mrb[0].mxu0 %v3588
      %v3651 = vpop.f32.mrb[0].mxu0
      %v3652 = vadd.f32 %v785, %v3651
      %v3653 = vpop.f32.mrb[0].mxu0
      %v3654 = vpop.f32.mrb[0].mxu0
      %v3655 = vadd.f32 %v786, %v3654
      %v3656 = vpop.f32.mrb[0].mxu0
      %3657 = vmatprep.mubr.bf16.mxu0 0
      %3658 = vmatmul.mubr.bf16.gmra.mrb[0].mxu0 %v3591
      %v3659 = vpop.f32.mrb[0].mxu0
      %v3660 = vadd.f32 %v787, %v3659
      %v3661 = vpop.f32.mrb[0].mxu0
      %v3662 = vpop.f32.mrb[0].mxu0
      %v3663 = vadd.f32 %v788, %v3662
      %v3664 = vpop.f32.mrb[0].mxu0
      %3665 = vmatprep.mubr.bf16.mxu0 0
      %3666 = vmatmul.mubr.bf16.gmra.mrb[0].mxu0 %v3594
      %v3667 = vpop.f32.mrb[0].mxu0
      %v3668 = vadd.f32 %v789, %v3667
      %v3669 = vpop.f32.mrb[0].mxu0
      %v3670 = vpop.f32.mrb[0].mxu0
      %v3671 = vadd.f32 %v790, %v3670
      %v3672 = vpop.f32.mrb[0].mxu0
      %3673 = vmatprep.mubr.bf16.mxu0 0
      %3674 = vmatmul.mubr.bf16.gmra.mrb[0].mxu0 %v3597
      %v3675 = vpop.f32.mrb[0].mxu0
      %v3676 = vadd.f32 %v791, %v3675
      %v3677 = vpop.f32.mrb[0].mxu0
      %v3678 = vpop.f32.mrb[0].mxu0
      %v3679 = vadd.f32 %v792, %v3678
      %v3680 = vpop.f32.mrb[0].mxu0
      %3681 = vmatprep.mubr.bf16.mxu0 0
      %3682 = vmatmul.mubr.bf16.gmra.mrb[0].mxu0 %v3600
      %v3683 = vpop.f32.mrb[0].mxu0
      %v3684 = vadd.f32 %v793, %v3683
      %v3685 = vpop.f32.mrb[0].mxu0
      %v3686 = vpop.f32.mrb[0].mxu0
      %v3687 = vadd.f32 %v794, %v3686
      %v3688 = vpop.f32.mrb[0].mxu0
      %3689 = vdwg.mxu0
      %v3690 = vsel %vm1344, %v3652, -inf
      %3691 = vmax.xlane.f32.xlu0 %v3690
      %v3692 = vpop.xlane.xlu0 %3691
      %v3693 = vsel %vm1344, %v3655, -inf
      %3694 = vmax.xlane.f32.xlu0 %v3693
      %v3695 = vpop.xlane.xlu0 %3694
      %v3696 = vsel %vm1344, %v3660, -inf
      %3697 = vmax.xlane.f32.xlu0 %v3696
      %v3698 = vpop.xlane.xlu0 %3697
      %v3699 = vsel %vm1344, %v3663, -inf
      %3700 = vmax.xlane.f32.xlu0 %v3699
      %v3701 = vpop.xlane.xlu0 %3700
      %v3702 = vsel %vm1344, %v3668, -inf
      %3703 = vmax.xlane.f32.xlu0 %v3702
      %v3704 = vpop.xlane.xlu0 %3703
      %v3705 = vsel %vm1344, %v3671, -inf
      %3706 = vmax.xlane.f32.xlu0 %v3705
      %v3707 = vpop.xlane.xlu0 %3706
      %v3708 = vsel %vm1344, %v3676, -inf
      %3709 = vmax.xlane.f32.xlu0 %v3708
      %v3710 = vpop.xlane.xlu0 %3709
      %v3711 = vsel %vm1344, %v3679, -inf
      %3712 = vmax.xlane.f32.xlu0 %v3711
      %v3713 = vpop.xlane.xlu0 %3712
      %v3714 = vsel %vm1344, %v3684, -inf
      %3715 = vmax.xlane.f32.xlu0 %v3714
      %v3716 = vpop.xlane.xlu0 %3715
      %v3717 = vsel %vm1344, %v3687, -inf
      %3718 = vmax.xlane.f32.xlu0 %v3717
      %v3719 = vpop.xlane.xlu0 %3718
      %v3720 = vsub.f32 %v3652, %v3692
      %v3721 = vsub.f32 %v3655, %v3695
      %v3722 = vsub.f32 %v3660, %v3698
      %v3723 = vsub.f32 %v3663, %v3701
      %v3724 = vsub.f32 %v3668, %v3704
      %v3725 = vsub.f32 %v3671, %v3707
      %v3726 = vsub.f32 %v3676, %v3710
      %v3727 = vsub.f32 %v3679, %v3713
      %v3728 = vsub.f32 %v3684, %v3716
      %v3729 = vsub.f32 %v3687, %v3719
      %v3730 = vmul.f32 %v3720, 1.442695
      %v3731 = vpow.pop %v3730
      %v3732 = vmul.f32 %v3721, 1.442695
      %v3733 = vpow.pop %v3732
      %v3734 = vmul.f32 %v3722, 1.442695
      %v3735 = vpow.pop %v3734
      %v3736 = vmul.f32 %v3723, 1.442695
      %v3737 = vpow.pop %v3736
      %v3738 = vmul.f32 %v3724, 1.442695
      %v3739 = vpow.pop %v3738
      %v3740 = vmul.f32 %v3725, 1.442695
      %v3741 = vpow.pop %v3740
      %v3742 = vmul.f32 %v3726, 1.442695
      %v3743 = vpow.pop %v3742
      %v3744 = vmul.f32 %v3727, 1.442695
      %v3745 = vpow.pop %v3744
      %v3746 = vmul.f32 %v3728, 1.442695
      %v3747 = vpow.pop %v3746
      %v3748 = vmul.f32 %v3729, 1.442695
      %v3749 = vpow.pop %v3748
      %v3750 = vsel %vm1344, %v3731, 0.0
      %3751 = vadd.xlane.f32.xlu0 %v3750
      %v3752 = vpop.xlane.xlu0 %3751
      %v3753 = vsel %vm1344, %v3733, 0.0
      %3754 = vadd.xlane.f32.xlu0 %v3753
      %v3755 = vpop.xlane.xlu0 %3754
      %v3756 = vsel %vm1344, %v3735, 0.0
      %3757 = vadd.xlane.f32.xlu0 %v3756
      %v3758 = vpop.xlane.xlu0 %3757
      %v3759 = vsel %vm1344, %v3737, 0.0
      %3760 = vadd.xlane.f32.xlu0 %v3759
      %v3761 = vpop.xlane.xlu0 %3760
      %v3762 = vsel %vm1344, %v3739, 0.0
      %3763 = vadd.xlane.f32.xlu0 %v3762
      %v3764 = vpop.xlane.xlu0 %3763
      %v3765 = vsel %vm1344, %v3741, 0.0
      %3766 = vadd.xlane.f32.xlu0 %v3765
      %v3767 = vpop.xlane.xlu0 %3766
      %v3768 = vsel %vm1344, %v3743, 0.0
      %3769 = vadd.xlane.f32.xlu0 %v3768
      %v3770 = vpop.xlane.xlu0 %3769
      %v3771 = vsel %vm1344, %v3745, 0.0
      %3772 = vadd.xlane.f32.xlu0 %v3771
      %v3773 = vpop.xlane.xlu0 %3772
      %v3774 = vsel %vm1344, %v3747, 0.0
      %3775 = vadd.xlane.f32.xlu0 %v3774
      %v3776 = vpop.xlane.xlu0 %3775
      %v3777 = vsel %vm1344, %v3749, 0.0
      %3778 = vadd.xlane.f32.xlu0 %v3777
      %v3779 = vpop.xlane.xlu0 %3778
      %v3780 = vrcp.pop %v3752
      %v3781 = vrcp.pop %v3755
      %v3782 = vrcp.pop %v3758
      %v3783 = vrcp.pop %v3761
      %v3784 = vrcp.pop %v3764
      %v3785 = vrcp.pop %v3767
      %v3786 = vrcp.pop %v3770
      %v3787 = vrcp.pop %v3773
      %v3788 = vrcp.pop %v3776
      %v3789 = vrcp.pop %v3779
      %v3790 = vpack.c.bf16 %v3733, %v3731
      %v3791 = vpack.c.bf16 %v3737, %v3735
      %v3792 = vpack.c.bf16 %v3741, %v3739
      %v3793 = vpack.c.bf16 %v3745, %v3743
      %v3794 = vpack.c.bf16 %v3749, %v3747
      %v3796 = vsel %vm1344, %v3790, 0
      %v3799 = vsel %vm1344, %v3791, 0
      %v3802 = vsel %vm1344, %v3792, 0
      %v3805 = vsel %vm1344, %v3793, 0
      %v3808 = vsel %vm1344, %v3794, 0
      %3810 = vmatprep.subr.bf16.mxu0 0
      %3811 = vmatpush1.bf16.msra.mxu0 %v3552
      %3812 = vmatprep.subr.bf16.mxu0 0
      %3813 = vmatpush1.bf16.msra.mxu0 %v3553
      %3814 = vmatprep.subr.bf16.mxu0 0
      %3815 = vmatpush1.bf16.msra.mxu0 %v3554
      %3816 = vmatprep.subr.bf16.mxu0 0
      %3817 = vmatpush1.bf16.msra.mxu0 %v3555
      %3818 = vmatprep.subr.bf16.mxu0 0
      %3819 = vmatpush1.bf16.msra.mxu0 %v3556
      %3820 = vmatprep.subr.bf16.mxu0 0
      %3821 = vmatpush1.bf16.msra.mxu0 0
      %3822 = vmatprep.subr.bf16.mxu0 0
      %3823 = vmatpush1.bf16.msra.mxu0 0
      %3824 = vmatprep.subr.bf16.mxu0 0
      %3825 = vmatpush1.bf16.msra.mxu0 0
      %3826 = vmatprep.subr.bf16.mxu0 0
      %3827 = vmatpush1.bf16.msra.mxu0 0
      %3828 = vmatprep.subr.bf16.mxu0 0
      %3829 = vmatpush1.bf16.msra.mxu0 0
      %3830 = vmatprep.subr.bf16.mxu0 0
      %3831 = vmatpush1.bf16.msra.mxu0 0
      %3832 = vmatprep.subr.bf16.mxu0 0
      %3833 = vmatpush1.bf16.msra.mxu0 0
      %3834 = vmatprep.subr.bf16.mxu0 0
      %3835 = vmatpush1.bf16.msra.mxu0 0
      %3836 = vmatprep.subr.bf16.mxu0 0
      %3837 = vmatpush1.bf16.msra.mxu0 0
      %3838 = vmatprep.subr.bf16.mxu0 0
      %3839 = vmatpush1.bf16.msra.mxu0 0
      %3840 = vmatprep.subr.bf16.mxu0 0
      %3841 = vmatpush1.bf16.msra.mxu0 0
      %3842 = vmatprep.mubr.bf16.mxu0 0
      %3843 = vmatmul.mubr.bf16.gmra.mrb[0].mxu0 %v3796
      %v3844 = vpop.f32.mrb[0].mxu0
      %v3845 = vadd.f32 0.0, %v3844
      %v3846 = vpop.f32.mrb[0].mxu0
      %v3847 = vpop.f32.mrb[0].mxu0
      %v3848 = vadd.f32 0.0, %v3847
      %v3849 = vpop.f32.mrb[0].mxu0
      %3850 = vmatprep.mubr.bf16.mxu0 0
      %3851 = vmatmul.mubr.bf16.gmra.mrb[0].mxu0 %v3799
      %v3852 = vpop.f32.mrb[0].mxu0
      %v3853 = vadd.f32 0.0, %v3852
      %v3854 = vpop.f32.mrb[0].mxu0
      %v3855 = vpop.f32.mrb[0].mxu0
      %v3856 = vadd.f32 0.0, %v3855
      %v3857 = vpop.f32.mrb[0].mxu0
      %3858 = vmatprep.mubr.bf16.mxu0 0
      %3859 = vmatmul.mubr.bf16.gmra.mrb[0].mxu0 %v3802
      %v3860 = vpop.f32.mrb[0].mxu0
      %v3861 = vadd.f32 0.0, %v3860
      %v3862 = vpop.f32.mrb[0].mxu0
      %v3863 = vpop.f32.mrb[0].mxu0
      %v3864 = vadd.f32 0.0, %v3863
      %v3865 = vpop.f32.mrb[0].mxu0
      %3866 = vmatprep.mubr.bf16.mxu0 0
      %3867 = vmatmul.mubr.bf16.gmra.mrb[0].mxu0 %v3805
      %v3868 = vpop.f32.mrb[0].mxu0
      %v3869 = vadd.f32 0.0, %v3868
      %v3870 = vpop.f32.mrb[0].mxu0
      %v3871 = vpop.f32.mrb[0].mxu0
      %v3872 = vadd.f32 0.0, %v3871
      %v3873 = vpop.f32.mrb[0].mxu0
      %3874 = vmatprep.mubr.bf16.mxu0 0
      %3875 = vmatmul.mubr.bf16.gmra.mrb[0].mxu0 %v3808
      %v3876 = vpop.f32.mrb[0].mxu0
      %v3877 = vadd.f32 0.0, %v3876
      %v3878 = vpop.f32.mrb[0].mxu0
      %v3879 = vpop.f32.mrb[0].mxu0
      %v3880 = vadd.f32 0.0, %v3879
      %v3881 = vpop.f32.mrb[0].mxu0
      %3882 = vdwg.mxu0
      %v3883 = vmul.f32 %v3845, %v3780
      %v3884 = vmul.f32 %v3848, %v3781
      %v3885 = vmul.f32 %v3853, %v3782
      %v3886 = vmul.f32 %v3856, %v3783
      %v3887 = vmul.f32 %v3861, %v3784
      %v3888 = vmul.f32 %v3864, %v3785
      %v3889 = vmul.f32 %v3869, %v3786
      %v3890 = vmul.f32 %v3872, %v3787
      %v3891 = vmul.f32 %v3877, %v3788
      %v3892 = vmul.f32 %v3880, %v3789
      %v3893 = vadd.f32 %v3883, 0.0
      %v3894 = vadd.f32 %v3884, 0.0
      %v3895 = vadd.f32 %v3885, 0.0
      %v3896 = vadd.f32 %v3886, 0.0
      %v3897 = vadd.f32 %v3887, 0.0
      %v3898 = vadd.f32 %v3888, 0.0
      %v3899 = vadd.f32 %v3889, 0.0
      %v3900 = vadd.f32 %v3890, 0.0
      %v3901 = vadd.f32 %v3891, 0.0
      %v3902 = vadd.f32 %v3892, 0.0
      %v3903 = vmul.f32 %v3426, %v1564
      %v3904 = vmul.f32 %v3430, %v1564
      %v3905 = vmul.f32 %v3436, %v1564
      %v3906 = vmul.f32 %v3440, %v1564
      %v3907 = vmul.f32 %v3446, %v1564
      %v3908 = vmul.f32 %v3450, %v1564
      %v3909 = vmul.f32 %v3456, %v1564
      %v3910 = vmul.f32 %v3460, %v1564
      %v3911 = vmul.f32 %v3466, %v1564
      %v3912 = vmul.f32 %v3470, %v1564
      %v3913 = vpack.c.bf16 %v3904, %v3903
      %v3914 = vpack.c.bf16 %v3906, %v3905
      %v3915 = vpack.c.bf16 %v3908, %v3907
      %v3916 = vpack.c.bf16 %v3910, %v3909
      %v3917 = vpack.c.bf16 %v3912, %v3911
      %v3919 = vsel %vm1022, %v3913, 0
      %v3922 = vsel %vm1022, %v3914, 0
      %v3925 = vsel %vm1022, %v3915, 0
      %v3928 = vsel %vm1022, %v3916, 0
      %v3931 = vsel %vm1022, %v3917, 0
      %3933 = vmatprep.subr.bf16.mxu0 0
      %3934 = vmatpush1.bf16.xpose.msra.mxu0 %v3603
      %3935 = vmatprep.subr.bf16.mxu0 0
      %3936 = vmatpush1.bf16.xpose.msra.mxu0 %v3606
      %3937 = vmatprep.subr.bf16.mxu0 0
      %3938 = vmatpush1.bf16.xpose.msra.mxu0 %v3609
      %3939 = vmatprep.subr.bf16.mxu0 0
      %3940 = vmatpush1.bf16.xpose.msra.mxu0 %v3612
      %3941 = vmatprep.subr.bf16.mxu0 0
      %3942 = vmatpush1.bf16.xpose.msra.mxu0 %v3615
      %3943 = vmatprep.subr.bf16.mxu0 0
      %3944 = vmatpush1.bf16.xpose.msra.mxu0 0
      %3945 = vmatprep.subr.bf16.mxu0 0
      %3946 = vmatpush1.bf16.xpose.msra.mxu0 0
      %3947 = vmatprep.subr.bf16.mxu0 0
      %3948 = vmatpush1.bf16.xpose.msra.mxu0 0
      %3949 = vmatprep.subr.bf16.mxu0 0
      %3950 = vmatpush1.bf16.xpose.msra.mxu0 0
      %3951 = vmatprep.subr.bf16.mxu0 0
      %3952 = vmatpush1.bf16.xpose.msra.mxu0 0
      %3953 = vmatprep.subr.bf16.mxu0 0
      %3954 = vmatpush1.bf16.xpose.msra.mxu0 0
      %3955 = vmatprep.subr.bf16.mxu0 0
      %3956 = vmatpush1.bf16.xpose.msra.mxu0 0
      %3957 = vmatprep.subr.bf16.mxu0 0
      %3958 = vmatpush1.bf16.xpose.msra.mxu0 0
      %3959 = vmatprep.subr.bf16.mxu0 0
      %3960 = vmatpush1.bf16.xpose.msra.mxu0 0
      %3961 = vmatprep.subr.bf16.mxu0 0
      %3962 = vmatpush1.bf16.xpose.msra.mxu0 0
      %3963 = vmatprep.subr.bf16.mxu0 0
      %3964 = vmatpush1.bf16.xpose.msra.mxu0 0
      %3965 = vmatprep.mubr.bf16.mxu0 0
      %3966 = vmatmul.mubr.bf16.gmra.mrb[0].mxu0 %v3919
      %v3967 = vpop.f32.mrb[0].mxu0
      %v3968 = vadd.f32 %v785, %v3967
      %v3969 = vpop.f32.mrb[0].mxu0
      %v3970 = vpop.f32.mrb[0].mxu0
      %v3971 = vadd.f32 %v786, %v3970
      %v3972 = vpop.f32.mrb[0].mxu0
      %3973 = vmatprep.mubr.bf16.mxu0 0
      %3974 = vmatmul.mubr.bf16.gmra.mrb[0].mxu0 %v3922
      %v3975 = vpop.f32.mrb[0].mxu0
      %v3976 = vadd.f32 %v787, %v3975
      %v3977 = vpop.f32.mrb[0].mxu0
      %v3978 = vpop.f32.mrb[0].mxu0
      %v3979 = vadd.f32 %v788, %v3978
      %v3980 = vpop.f32.mrb[0].mxu0
      %3981 = vmatprep.mubr.bf16.mxu0 0
      %3982 = vmatmul.mubr.bf16.gmra.mrb[0].mxu0 %v3925
      %v3983 = vpop.f32.mrb[0].mxu0
      %v3984 = vadd.f32 %v789, %v3983
      %v3985 = vpop.f32.mrb[0].mxu0
      %v3986 = vpop.f32.mrb[0].mxu0
      %v3987 = vadd.f32 %v790, %v3986
      %v3988 = vpop.f32.mrb[0].mxu0
      %3989 = vmatprep.mubr.bf16.mxu0 0
      %3990 = vmatmul.mubr.bf16.gmra.mrb[0].mxu0 %v3928
      %v3991 = vpop.f32.mrb[0].mxu0
      %v3992 = vadd.f32 %v791, %v3991
      %v3993 = vpop.f32.mrb[0].mxu0
      %v3994 = vpop.f32.mrb[0].mxu0
      %v3995 = vadd.f32 %v792, %v3994
      %v3996 = vpop.f32.mrb[0].mxu0
      %3997 = vmatprep.mubr.bf16.mxu0 0
      %3998 = vmatmul.mubr.bf16.gmra.mrb[0].mxu0 %v3931
      %v3999 = vpop.f32.mrb[0].mxu0
      %v4000 = vadd.f32 %v793, %v3999
      %v4001 = vpop.f32.mrb[0].mxu0
      %v4002 = vpop.f32.mrb[0].mxu0
      %v4003 = vadd.f32 %v794, %v4002
      %v4004 = vpop.f32.mrb[0].mxu0
      %4005 = vdwg.mxu0
      %v4006 = vsel %vm1344, %v3968, -inf
      %4007 = vmax.xlane.f32.xlu0 %v4006
      %v4008 = vpop.xlane.xlu0 %4007
      %v4009 = vsel %vm1344, %v3971, -inf
      %4010 = vmax.xlane.f32.xlu0 %v4009
      %v4011 = vpop.xlane.xlu0 %4010
      %v4012 = vsel %vm1344, %v3976, -inf
      %4013 = vmax.xlane.f32.xlu0 %v4012
      %v4014 = vpop.xlane.xlu0 %4013
      %v4015 = vsel %vm1344, %v3979, -inf
      %4016 = vmax.xlane.f32.xlu0 %v4015
      %v4017 = vpop.xlane.xlu0 %4016
      %v4018 = vsel %vm1344, %v3984, -inf
      %4019 = vmax.xlane.f32.xlu0 %v4018
      %v4020 = vpop.xlane.xlu0 %4019
      %v4021 = vsel %vm1344, %v3987, -inf
      %4022 = vmax.xlane.f32.xlu0 %v4021
      %v4023 = vpop.xlane.xlu0 %4022
      %v4024 = vsel %vm1344, %v3992, -inf
      %4025 = vmax.xlane.f32.xlu0 %v4024
      %v4026 = vpop.xlane.xlu0 %4025
      %v4027 = vsel %vm1344, %v3995, -inf
      %4028 = vmax.xlane.f32.xlu0 %v4027
      %v4029 = vpop.xlane.xlu0 %4028
      %v4030 = vsel %vm1344, %v4000, -inf
      %4031 = vmax.xlane.f32.xlu0 %v4030
      %v4032 = vpop.xlane.xlu0 %4031
      %v4033 = vsel %vm1344, %v4003, -inf
      %4034 = vmax.xlane.f32.xlu0 %v4033
      %v4035 = vpop.xlane.xlu0 %4034
      %v4036 = vsub.f32 %v3968, %v4008
      %v4037 = vsub.f32 %v3971, %v4011
      %v4038 = vsub.f32 %v3976, %v4014
      %v4039 = vsub.f32 %v3979, %v4017
      %v4040 = vsub.f32 %v3984, %v4020
      %v4041 = vsub.f32 %v3987, %v4023
      %v4042 = vsub.f32 %v3992, %v4026
      %v4043 = vsub.f32 %v3995, %v4029
      %v4044 = vsub.f32 %v4000, %v4032
      %v4045 = vsub.f32 %v4003, %v4035
      %v4046 = vmul.f32 %v4036, 1.442695
      %v4047 = vpow.pop %v4046
      %v4048 = vmul.f32 %v4037, 1.442695
      %v4049 = vpow.pop %v4048
      %v4050 = vmul.f32 %v4038, 1.442695
      %v4051 = vpow.pop %v4050
      %v4052 = vmul.f32 %v4039, 1.442695
      %v4053 = vpow.pop %v4052
      %v4054 = vmul.f32 %v4040, 1.442695
      %v4055 = vpow.pop %v4054
      %v4056 = vmul.f32 %v4041, 1.442695
      %v4057 = vpow.pop %v4056
      %v4058 = vmul.f32 %v4042, 1.442695
      %v4059 = vpow.pop %v4058
      %v4060 = vmul.f32 %v4043, 1.442695
      %v4061 = vpow.pop %v4060
      %v4062 = vmul.f32 %v4044, 1.442695
      %v4063 = vpow.pop %v4062
      %v4064 = vmul.f32 %v4045, 1.442695
      %v4065 = vpow.pop %v4064
      %v4066 = vsel %vm1344, %v4047, 0.0
      %4067 = vadd.xlane.f32.xlu0 %v4066
      %v4068 = vpop.xlane.xlu0 %4067
      %v4069 = vsel %vm1344, %v4049, 0.0
      %4070 = vadd.xlane.f32.xlu0 %v4069
      %v4071 = vpop.xlane.xlu0 %4070
      %v4072 = vsel %vm1344, %v4051, 0.0
      %4073 = vadd.xlane.f32.xlu0 %v4072
      %v4074 = vpop.xlane.xlu0 %4073
      %v4075 = vsel %vm1344, %v4053, 0.0
      %4076 = vadd.xlane.f32.xlu0 %v4075
      %v4077 = vpop.xlane.xlu0 %4076
      %v4078 = vsel %vm1344, %v4055, 0.0
      %4079 = vadd.xlane.f32.xlu0 %v4078
      %v4080 = vpop.xlane.xlu0 %4079
      %v4081 = vsel %vm1344, %v4057, 0.0
      %4082 = vadd.xlane.f32.xlu0 %v4081
      %v4083 = vpop.xlane.xlu0 %4082
      %v4084 = vsel %vm1344, %v4059, 0.0
      %4085 = vadd.xlane.f32.xlu0 %v4084
      %v4086 = vpop.xlane.xlu0 %4085
      %v4087 = vsel %vm1344, %v4061, 0.0
      %4088 = vadd.xlane.f32.xlu0 %v4087
      %v4089 = vpop.xlane.xlu0 %4088
      %v4090 = vsel %vm1344, %v4063, 0.0
      %4091 = vadd.xlane.f32.xlu0 %v4090
      %v4092 = vpop.xlane.xlu0 %4091
      %v4093 = vsel %vm1344, %v4065, 0.0
      %4094 = vadd.xlane.f32.xlu0 %v4093
      %v4095 = vpop.xlane.xlu0 %4094
      %v4096 = vrcp.pop %v4068
      %v4097 = vrcp.pop %v4071
      %v4098 = vrcp.pop %v4074
      %v4099 = vrcp.pop %v4077
      %v4100 = vrcp.pop %v4080
      %v4101 = vrcp.pop %v4083
      %v4102 = vrcp.pop %v4086
      %v4103 = vrcp.pop %v4089
      %v4104 = vrcp.pop %v4092
      %v4105 = vrcp.pop %v4095
      %v4106 = vpack.c.bf16 %v4049, %v4047
      %v4107 = vpack.c.bf16 %v4053, %v4051
      %v4108 = vpack.c.bf16 %v4057, %v4055
      %v4109 = vpack.c.bf16 %v4061, %v4059
      %v4110 = vpack.c.bf16 %v4065, %v4063
      %4116 = vrot.lane.b32.xlu0 %v3552, 64
      %v4117 = vpop.permute.xlu0 %4116
      %4118 = vrot.lane.b32.xlu0 %v3553, 64
      %v4119 = vpop.permute.xlu0 %4118
      %4120 = vrot.lane.b32.xlu0 %v3554, 64
      %v4121 = vpop.permute.xlu0 %4120
      %4122 = vrot.lane.b32.xlu0 %v3555, 64
      %v4123 = vpop.permute.xlu0 %4122
      %4124 = vrot.lane.b32.xlu0 %v3556, 64
      %v4125 = vpop.permute.xlu0 %4124
      %v4132 = vsel %vm1344, %v4106, 0
      %v4135 = vsel %vm1344, %v4107, 0
      %v4138 = vsel %vm1344, %v4108, 0
      %v4141 = vsel %vm1344, %v4109, 0
      %v4144 = vsel %vm1344, %v4110, 0
      %4146 = vmatprep.subr.bf16.mxu0 0
      %4147 = vmatpush1.bf16.msra.mxu0 %v4117
      %4148 = vmatprep.subr.bf16.mxu0 0
      %4149 = vmatpush1.bf16.msra.mxu0 %v4119
      %4150 = vmatprep.subr.bf16.mxu0 0
      %4151 = vmatpush1.bf16.msra.mxu0 %v4121
      %4152 = vmatprep.subr.bf16.mxu0 0
      %4153 = vmatpush1.bf16.msra.mxu0 %v4123
      %4154 = vmatprep.subr.bf16.mxu0 0
      %4155 = vmatpush1.bf16.msra.mxu0 %v4125
      %4156 = vmatprep.subr.bf16.mxu0 0
      %4157 = vmatpush1.bf16.msra.mxu0 0
      %4158 = vmatprep.subr.bf16.mxu0 0
      %4159 = vmatpush1.bf16.msra.mxu0 0
      %4160 = vmatprep.subr.bf16.mxu0 0
      %4161 = vmatpush1.bf16.msra.mxu0 0
      %4162 = vmatprep.subr.bf16.mxu0 0
      %4163 = vmatpush1.bf16.msra.mxu0 0
      %4164 = vmatprep.subr.bf16.mxu0 0
      %4165 = vmatpush1.bf16.msra.mxu0 0
      %4166 = vmatprep.subr.bf16.mxu0 0
      %4167 = vmatpush1.bf16.msra.mxu0 0
      %4168 = vmatprep.subr.bf16.mxu0 0
      %4169 = vmatpush1.bf16.msra.mxu0 0
      %4170 = vmatprep.subr.bf16.mxu0 0
      %4171 = vmatpush1.bf16.msra.mxu0 0
      %4172 = vmatprep.subr.bf16.mxu0 0
      %4173 = vmatpush1.bf16.msra.mxu0 0
      %4174 = vmatprep.subr.bf16.mxu0 0
      %4175 = vmatpush1.bf16.msra.mxu0 0
      %4176 = vmatprep.subr.bf16.mxu0 0
      %4177 = vmatpush1.bf16.msra.mxu0 0
      %4178 = vmatprep.mubr.bf16.mxu0 0
      %4179 = vmatmul.mubr.bf16.gmra.mrb[0].mxu0 %v4132
      %v4180 = vpop.f32.mrb[0].mxu0
      %v4181 = vadd.f32 0.0, %v4180
      %v4182 = vpop.f32.mrb[0].mxu0
      %v4183 = vpop.f32.mrb[0].mxu0
      %v4184 = vadd.f32 0.0, %v4183
      %v4185 = vpop.f32.mrb[0].mxu0
      %4186 = vmatprep.mubr.bf16.mxu0 0
      %4187 = vmatmul.mubr.bf16.gmra.mrb[0].mxu0 %v4135
      %v4188 = vpop.f32.mrb[0].mxu0
      %v4189 = vadd.f32 0.0, %v4188
      %v4190 = vpop.f32.mrb[0].mxu0
      %v4191 = vpop.f32.mrb[0].mxu0
      %v4192 = vadd.f32 0.0, %v4191
      %v4193 = vpop.f32.mrb[0].mxu0
      %4194 = vmatprep.mubr.bf16.mxu0 0
      %4195 = vmatmul.mubr.bf16.gmra.mrb[0].mxu0 %v4138
      %v4196 = vpop.f32.mrb[0].mxu0
      %v4197 = vadd.f32 0.0, %v4196
      %v4198 = vpop.f32.mrb[0].mxu0
      %v4199 = vpop.f32.mrb[0].mxu0
      %v4200 = vadd.f32 0.0, %v4199
      %v4201 = vpop.f32.mrb[0].mxu0
      %4202 = vmatprep.mubr.bf16.mxu0 0
      %4203 = vmatmul.mubr.bf16.gmra.mrb[0].mxu0 %v4141
      %v4204 = vpop.f32.mrb[0].mxu0
      %v4205 = vadd.f32 0.0, %v4204
      %v4206 = vpop.f32.mrb[0].mxu0
      %v4207 = vpop.f32.mrb[0].mxu0
      %v4208 = vadd.f32 0.0, %v4207
      %v4209 = vpop.f32.mrb[0].mxu0
      %4210 = vmatprep.mubr.bf16.mxu0 0
      %4211 = vmatmul.mubr.bf16.gmra.mrb[0].mxu0 %v4144
      %v4212 = vpop.f32.mrb[0].mxu0
      %v4213 = vadd.f32 0.0, %v4212
      %v4214 = vpop.f32.mrb[0].mxu0
      %v4215 = vpop.f32.mrb[0].mxu0
      %v4216 = vadd.f32 0.0, %v4215
      %v4217 = vpop.f32.mrb[0].mxu0
      %4218 = vdwg.mxu0
      %v4219 = vmul.f32 %v4181, %v4096
      %v4220 = vmul.f32 %v4184, %v4097
      %v4221 = vmul.f32 %v4189, %v4098
      %v4222 = vmul.f32 %v4192, %v4099
      %v4223 = vmul.f32 %v4197, %v4100
      %v4224 = vmul.f32 %v4200, %v4101
      %v4225 = vmul.f32 %v4205, %v4102
      %v4226 = vmul.f32 %v4208, %v4103
      %v4227 = vmul.f32 %v4213, %v4104
      %v4228 = vmul.f32 %v4216, %v4105
      %v4229 = vadd.f32 %v3893, %v4219
      %v4230 = vadd.f32 %v3894, %v4220
      %v4231 = vadd.f32 %v3895, %v4221
      %v4232 = vadd.f32 %v3896, %v4222
      %v4233 = vadd.f32 %v3897, %v4223
      %v4234 = vadd.f32 %v3898, %v4224
      %v4235 = vadd.f32 %v3899, %v4225
      %v4236 = vadd.f32 %v3900, %v4226
      %v4237 = vadd.f32 %v3901, %v4227
      %v4238 = vadd.f32 %v3902, %v4228
      %v4239 = vpack.c.bf16 %v3512, %v3509
      %v4240 = vpack.c.bf16 %v3520, %v3517
      %v4241 = vpack.c.bf16 %v3528, %v3525
      %v4242 = vpack.c.bf16 %v3536, %v3533
      %v4243 = vpack.c.bf16 %v3544, %v3541
      %v4244 = vmul.f32 %v3426, %v1913
      %v4245 = vmul.f32 %v3430, %v1913
      %v4246 = vmul.f32 %v3436, %v1913
      %v4247 = vmul.f32 %v3440, %v1913
      %v4248 = vmul.f32 %v3446, %v1913
      %v4249 = vmul.f32 %v3450, %v1913
      %v4250 = vmul.f32 %v3456, %v1913
      %v4251 = vmul.f32 %v3460, %v1913
      %v4252 = vmul.f32 %v3466, %v1913
      %v4253 = vmul.f32 %v3470, %v1913
      %v4254 = vpack.c.bf16 %v4245, %v4244
      %v4255 = vpack.c.bf16 %v4247, %v4246
      %v4256 = vpack.c.bf16 %v4249, %v4248
      %v4257 = vpack.c.bf16 %v4251, %v4250
      %v4258 = vpack.c.bf16 %v4253, %v4252
      %v4260 = vsel %vm1022, %v4254, 0
      %v4263 = vsel %vm1022, %v4255, 0
      %v4266 = vsel %vm1022, %v4256, 0
      %v4269 = vsel %vm1022, %v4257, 0
      %v4272 = vsel %vm1022, %v4258, 0
      %4274 = vmatprep.subr.bf16.mxu0 0
      %4275 = vmatpush1.bf16.xpose.msra.mxu0 %v3603
      %4276 = vmatprep.subr.bf16.mxu0 0
      %4277 = vmatpush1.bf16.xpose.msra.mxu0 %v3606
      %4278 = vmatprep.subr.bf16.mxu0 0
      %4279 = vmatpush1.bf16.xpose.msra.mxu0 %v3609
      %4280 = vmatprep.subr.bf16.mxu0 0
      %4281 = vmatpush1.bf16.xpose.msra.mxu0 %v3612
      %4282 = vmatprep.subr.bf16.mxu0 0
      %4283 = vmatpush1.bf16.xpose.msra.mxu0 %v3615
      %4284 = vmatprep.subr.bf16.mxu0 0
      %4285 = vmatpush1.bf16.xpose.msra.mxu0 0
      %4286 = vmatprep.subr.bf16.mxu0 0
      %4287 = vmatpush1.bf16.xpose.msra.mxu0 0
      %4288 = vmatprep.subr.bf16.mxu0 0
      %4289 = vmatpush1.bf16.xpose.msra.mxu0 0
      %4290 = vmatprep.subr.bf16.mxu0 0
      %4291 = vmatpush1.bf16.xpose.msra.mxu0 0
      %4292 = vmatprep.subr.bf16.mxu0 0
      %4293 = vmatpush1.bf16.xpose.msra.mxu0 0
      %4294 = vmatprep.subr.bf16.mxu0 0
      %4295 = vmatpush1.bf16.xpose.msra.mxu0 0
      %4296 = vmatprep.subr.bf16.mxu0 0
      %4297 = vmatpush1.bf16.xpose.msra.mxu0 0
      %4298 = vmatprep.subr.bf16.mxu0 0
      %4299 = vmatpush1.bf16.xpose.msra.mxu0 0
      %4300 = vmatprep.subr.bf16.mxu0 0
      %4301 = vmatpush1.bf16.xpose.msra.mxu0 0
      %4302 = vmatprep.subr.bf16.mxu0 0
      %4303 = vmatpush1.bf16.xpose.msra.mxu0 0
      %4304 = vmatprep.subr.bf16.mxu0 0
      %4305 = vmatpush1.bf16.xpose.msra.mxu0 0
      %4306 = vmatprep.mubr.bf16.mxu0 0
      %4307 = vmatmul.mubr.bf16.gmra.mrb[0].mxu0 %v4260
      %v4308 = vpop.f32.mrb[0].mxu0
      %v4309 = vadd.f32 %v785, %v4308
      %v4310 = vpop.f32.mrb[0].mxu0
      %v4311 = vpop.f32.mrb[0].mxu0
      %v4312 = vadd.f32 %v786, %v4311
      %v4313 = vpop.f32.mrb[0].mxu0
      %4314 = vmatprep.mubr.bf16.mxu0 0
      %4315 = vmatmul.mubr.bf16.gmra.mrb[0].mxu0 %v4263
      %v4316 = vpop.f32.mrb[0].mxu0
      %v4317 = vadd.f32 %v787, %v4316
      %v4318 = vpop.f32.mrb[0].mxu0
      %v4319 = vpop.f32.mrb[0].mxu0
      %v4320 = vadd.f32 %v788, %v4319
      %v4321 = vpop.f32.mrb[0].mxu0
      %4322 = vmatprep.mubr.bf16.mxu0 0
      %4323 = vmatmul.mubr.bf16.gmra.mrb[0].mxu0 %v4266
      %v4324 = vpop.f32.mrb[0].mxu0
      %v4325 = vadd.f32 %v789, %v4324
      %v4326 = vpop.f32.mrb[0].mxu0
      %v4327 = vpop.f32.mrb[0].mxu0
      %v4328 = vadd.f32 %v790, %v4327
      %v4329 = vpop.f32.mrb[0].mxu0
      %4330 = vmatprep.mubr.bf16.mxu0 0
      %4331 = vmatmul.mubr.bf16.gmra.mrb[0].mxu0 %v4269
      %v4332 = vpop.f32.mrb[0].mxu0
      %v4333 = vadd.f32 %v791, %v4332
      %v4334 = vpop.f32.mrb[0].mxu0
      %v4335 = vpop.f32.mrb[0].mxu0
      %v4336 = vadd.f32 %v792, %v4335
      %v4337 = vpop.f32.mrb[0].mxu0
      %4338 = vmatprep.mubr.bf16.mxu0 0
      %4339 = vmatmul.mubr.bf16.gmra.mrb[0].mxu0 %v4272
      %v4340 = vpop.f32.mrb[0].mxu0
      %v4341 = vadd.f32 %v793, %v4340
      %v4342 = vpop.f32.mrb[0].mxu0
      %v4343 = vpop.f32.mrb[0].mxu0
      %v4344 = vadd.f32 %v794, %v4343
      %v4345 = vpop.f32.mrb[0].mxu0
      %4346 = vdwg.mxu0
      %v4347 = vsel %vm1344, %v4309, -inf
      %4348 = vmax.xlane.f32.xlu0 %v4347
      %v4349 = vpop.xlane.xlu0 %4348
      %v4350 = vsel %vm1344, %v4312, -inf
      %4351 = vmax.xlane.f32.xlu0 %v4350
      %v4352 = vpop.xlane.xlu0 %4351
      %v4353 = vsel %vm1344, %v4317, -inf
      %4354 = vmax.xlane.f32.xlu0 %v4353
      %v4355 = vpop.xlane.xlu0 %4354
      %v4356 = vsel %vm1344, %v4320, -inf
      %4357 = vmax.xlane.f32.xlu0 %v4356
      %v4358 = vpop.xlane.xlu0 %4357
      %v4359 = vsel %vm1344, %v4325, -inf
      %4360 = vmax.xlane.f32.xlu0 %v4359
      %v4361 = vpop.xlane.xlu0 %4360
      %v4362 = vsel %vm1344, %v4328, -inf
      %4363 = vmax.xlane.f32.xlu0 %v4362
      %v4364 = vpop.xlane.xlu0 %4363
      %v4365 = vsel %vm1344, %v4333, -inf
      %4366 = vmax.xlane.f32.xlu0 %v4365
      %v4367 = vpop.xlane.xlu0 %4366
      %v4368 = vsel %vm1344, %v4336, -inf
      %4369 = vmax.xlane.f32.xlu0 %v4368
      %v4370 = vpop.xlane.xlu0 %4369
      %v4371 = vsel %vm1344, %v4341, -inf
      %4372 = vmax.xlane.f32.xlu0 %v4371
      %v4373 = vpop.xlane.xlu0 %4372
      %v4374 = vsel %vm1344, %v4344, -inf
      %4375 = vmax.xlane.f32.xlu0 %v4374
      %v4376 = vpop.xlane.xlu0 %4375
      %v4377 = vsub.f32 %v4309, %v4349
      %v4378 = vsub.f32 %v4312, %v4352
      %v4379 = vsub.f32 %v4317, %v4355
      %v4380 = vsub.f32 %v4320, %v4358
      %v4381 = vsub.f32 %v4325, %v4361
      %v4382 = vsub.f32 %v4328, %v4364
      %v4383 = vsub.f32 %v4333, %v4367
      %v4384 = vsub.f32 %v4336, %v4370
      %v4385 = vsub.f32 %v4341, %v4373
      %v4386 = vsub.f32 %v4344, %v4376
      %v4387 = vmul.f32 %v4377, 1.442695
      %v4388 = vpow.pop %v4387
      %v4389 = vmul.f32 %v4378, 1.442695
      %v4390 = vpow.pop %v4389
      %v4391 = vmul.f32 %v4379, 1.442695
      %v4392 = vpow.pop %v4391
      %v4393 = vmul.f32 %v4380, 1.442695
      %v4394 = vpow.pop %v4393
      %v4395 = vmul.f32 %v4381, 1.442695
      %v4396 = vpow.pop %v4395
      %v4397 = vmul.f32 %v4382, 1.442695
      %v4398 = vpow.pop %v4397
      %v4399 = vmul.f32 %v4383, 1.442695
      %v4400 = vpow.pop %v4399
      %v4401 = vmul.f32 %v4384, 1.442695
      %v4402 = vpow.pop %v4401
      %v4403 = vmul.f32 %v4385, 1.442695
      %v4404 = vpow.pop %v4403
      %v4405 = vmul.f32 %v4386, 1.442695
      %v4406 = vpow.pop %v4405
      %v4407 = vsel %vm1344, %v4388, 0.0
      %4408 = vadd.xlane.f32.xlu0 %v4407
      %v4409 = vpop.xlane.xlu0 %4408
      %v4410 = vsel %vm1344, %v4390, 0.0
      %4411 = vadd.xlane.f32.xlu0 %v4410
      %v4412 = vpop.xlane.xlu0 %4411
      %v4413 = vsel %vm1344, %v4392, 0.0
      %4414 = vadd.xlane.f32.xlu0 %v4413
      %v4415 = vpop.xlane.xlu0 %4414
      %v4416 = vsel %vm1344, %v4394, 0.0
      %4417 = vadd.xlane.f32.xlu0 %v4416
      %v4418 = vpop.xlane.xlu0 %4417
      %v4419 = vsel %vm1344, %v4396, 0.0
      %4420 = vadd.xlane.f32.xlu0 %v4419
      %v4421 = vpop.xlane.xlu0 %4420
      %v4422 = vsel %vm1344, %v4398, 0.0
      %4423 = vadd.xlane.f32.xlu0 %v4422
      %v4424 = vpop.xlane.xlu0 %4423
      %v4425 = vsel %vm1344, %v4400, 0.0
      %4426 = vadd.xlane.f32.xlu0 %v4425
      %v4427 = vpop.xlane.xlu0 %4426
      %v4428 = vsel %vm1344, %v4402, 0.0
      %4429 = vadd.xlane.f32.xlu0 %v4428
      %v4430 = vpop.xlane.xlu0 %4429
      %v4431 = vsel %vm1344, %v4404, 0.0
      %4432 = vadd.xlane.f32.xlu0 %v4431
      %v4433 = vpop.xlane.xlu0 %4432
      %v4434 = vsel %vm1344, %v4406, 0.0
      %4435 = vadd.xlane.f32.xlu0 %v4434
      %v4436 = vpop.xlane.xlu0 %4435
      %v4437 = vrcp.pop %v4409
      %v4438 = vrcp.pop %v4412
      %v4439 = vrcp.pop %v4415
      %v4440 = vrcp.pop %v4418
      %v4441 = vrcp.pop %v4421
      %v4442 = vrcp.pop %v4424
      %v4443 = vrcp.pop %v4427
      %v4444 = vrcp.pop %v4430
      %v4445 = vrcp.pop %v4433
      %v4446 = vrcp.pop %v4436
      %v4447 = vpack.c.bf16 %v4390, %v4388
      %v4448 = vpack.c.bf16 %v4394, %v4392
      %v4449 = vpack.c.bf16 %v4398, %v4396
      %v4450 = vpack.c.bf16 %v4402, %v4400
      %v4451 = vpack.c.bf16 %v4406, %v4404
      %v4453 = vsel %vm1344, %v4447, 0
      %v4456 = vsel %vm1344, %v4448, 0
      %v4459 = vsel %vm1344, %v4449, 0
      %v4462 = vsel %vm1344, %v4450, 0
      %v4465 = vsel %vm1344, %v4451, 0
      %4467 = vmatprep.subr.bf16.mxu0 0
      %4468 = vmatpush1.bf16.msra.mxu0 %v4239
      %4469 = vmatprep.subr.bf16.mxu0 0
      %4470 = vmatpush1.bf16.msra.mxu0 %v4240
      %4471 = vmatprep.subr.bf16.mxu0 0
      %4472 = vmatpush1.bf16.msra.mxu0 %v4241
      %4473 = vmatprep.subr.bf16.mxu0 0
      %4474 = vmatpush1.bf16.msra.mxu0 %v4242
      %4475 = vmatprep.subr.bf16.mxu0 0
      %4476 = vmatpush1.bf16.msra.mxu0 %v4243
      %4477 = vmatprep.subr.bf16.mxu0 0
      %4478 = vmatpush1.bf16.msra.mxu0 0
      %4479 = vmatprep.subr.bf16.mxu0 0
      %4480 = vmatpush1.bf16.msra.mxu0 0
      %4481 = vmatprep.subr.bf16.mxu0 0
      %4482 = vmatpush1.bf16.msra.mxu0 0
      %4483 = vmatprep.subr.bf16.mxu0 0
      %4484 = vmatpush1.bf16.msra.mxu0 0
      %4485 = vmatprep.subr.bf16.mxu0 0
      %4486 = vmatpush1.bf16.msra.mxu0 0
      %4487 = vmatprep.subr.bf16.mxu0 0
      %4488 = vmatpush1.bf16.msra.mxu0 0
      %4489 = vmatprep.subr.bf16.mxu0 0
      %4490 = vmatpush1.bf16.msra.mxu0 0
      %4491 = vmatprep.subr.bf16.mxu0 0
      %4492 = vmatpush1.bf16.msra.mxu0 0
      %4493 = vmatprep.subr.bf16.mxu0 0
      %4494 = vmatpush1.bf16.msra.mxu0 0
      %4495 = vmatprep.subr.bf16.mxu0 0
      %4496 = vmatpush1.bf16.msra.mxu0 0
      %4497 = vmatprep.subr.bf16.mxu0 0
      %4498 = vmatpush1.bf16.msra.mxu0 0
      %4499 = vmatprep.mubr.bf16.mxu0 0
      %4500 = vmatmul.mubr.bf16.gmra.mrb[0].mxu0 %v4453
      %v4501 = vpop.f32.mrb[0].mxu0
      %v4502 = vadd.f32 0.0, %v4501
      %v4503 = vpop.f32.mrb[0].mxu0
      %v4504 = vpop.f32.mrb[0].mxu0
      %v4505 = vadd.f32 0.0, %v4504
      %v4506 = vpop.f32.mrb[0].mxu0
      %4507 = vmatprep.mubr.bf16.mxu0 0
      %4508 = vmatmul.mubr.bf16.gmra.mrb[0].mxu0 %v4456
      %v4509 = vpop.f32.mrb[0].mxu0
      %v4510 = vadd.f32 0.0, %v4509
      %v4511 = vpop.f32.mrb[0].mxu0
      %v4512 = vpop.f32.mrb[0].mxu0
      %v4513 = vadd.f32 0.0, %v4512
      %v4514 = vpop.f32.mrb[0].mxu0
      %4515 = vmatprep.mubr.bf16.mxu0 0
      %4516 = vmatmul.mubr.bf16.gmra.mrb[0].mxu0 %v4459
      %v4517 = vpop.f32.mrb[0].mxu0
      %v4518 = vadd.f32 0.0, %v4517
      %v4519 = vpop.f32.mrb[0].mxu0
      %v4520 = vpop.f32.mrb[0].mxu0
      %v4521 = vadd.f32 0.0, %v4520
      %v4522 = vpop.f32.mrb[0].mxu0
      %4523 = vmatprep.mubr.bf16.mxu0 0
      %4524 = vmatmul.mubr.bf16.gmra.mrb[0].mxu0 %v4462
      %v4525 = vpop.f32.mrb[0].mxu0
      %v4526 = vadd.f32 0.0, %v4525
      %v4527 = vpop.f32.mrb[0].mxu0
      %v4528 = vpop.f32.mrb[0].mxu0
      %v4529 = vadd.f32 0.0, %v4528
      %v4530 = vpop.f32.mrb[0].mxu0
      %4531 = vmatprep.mubr.bf16.mxu0 0
      %4532 = vmatmul.mubr.bf16.gmra.mrb[0].mxu0 %v4465
      %v4533 = vpop.f32.mrb[0].mxu0
      %v4534 = vadd.f32 0.0, %v4533
      %v4535 = vpop.f32.mrb[0].mxu0
      %v4536 = vpop.f32.mrb[0].mxu0
      %v4537 = vadd.f32 0.0, %v4536
      %v4538 = vpop.f32.mrb[0].mxu0
      %4539 = vdwg.mxu0
      %v4540 = vmul.f32 %v4502, %v4437
      %v4541 = vmul.f32 %v4505, %v4438
      %v4542 = vmul.f32 %v4510, %v4439
      %v4543 = vmul.f32 %v4513, %v4440
      %v4544 = vmul.f32 %v4518, %v4441
      %v4545 = vmul.f32 %v4521, %v4442
      %v4546 = vmul.f32 %v4526, %v4443
      %v4547 = vmul.f32 %v4529, %v4444
      %v4548 = vmul.f32 %v4534, %v4445
      %v4549 = vmul.f32 %v4537, %v4446
      %v4550 = vadd.f32 %v4229, %v4540
      %v4551 = vadd.f32 %v4230, %v4541
      %v4552 = vadd.f32 %v4231, %v4542
      %v4553 = vadd.f32 %v4232, %v4543
      %v4554 = vadd.f32 %v4233, %v4544
      %v4555 = vadd.f32 %v4234, %v4545
      %v4556 = vadd.f32 %v4235, %v4546
      %v4557 = vadd.f32 %v4236, %v4547
      %v4558 = vadd.f32 %v4237, %v4548
      %v4559 = vadd.f32 %v4238, %v4549
      %v4560 = vmul.f32 %v3426, %v2237
      %v4561 = vmul.f32 %v3430, %v2237
      %v4562 = vmul.f32 %v3436, %v2237
      %v4563 = vmul.f32 %v3440, %v2237
      %v4564 = vmul.f32 %v3446, %v2237
      %v4565 = vmul.f32 %v3450, %v2237
      %v4566 = vmul.f32 %v3456, %v2237
      %v4567 = vmul.f32 %v3460, %v2237
      %v4568 = vmul.f32 %v3466, %v2237
      %v4569 = vmul.f32 %v3470, %v2237
      %v4570 = vpack.c.bf16 %v4561, %v4560
      %v4571 = vpack.c.bf16 %v4563, %v4562
      %v4572 = vpack.c.bf16 %v4565, %v4564
      %v4573 = vpack.c.bf16 %v4567, %v4566
      %v4574 = vpack.c.bf16 %v4569, %v4568
      %v4576 = vsel %vm1022, %v4570, 0
      %v4579 = vsel %vm1022, %v4571, 0
      %v4582 = vsel %vm1022, %v4572, 0
      %v4585 = vsel %vm1022, %v4573, 0
      %v4588 = vsel %vm1022, %v4574, 0
      %4590 = vmatprep.subr.bf16.mxu0 0
      %4591 = vmatpush1.bf16.xpose.msra.mxu0 %v3603
      %4592 = vmatprep.subr.bf16.mxu0 0
      %4593 = vmatpush1.bf16.xpose.msra.mxu0 %v3606
      %4594 = vmatprep.subr.bf16.mxu0 0
      %4595 = vmatpush1.bf16.xpose.msra.mxu0 %v3609
      %4596 = vmatprep.subr.bf16.mxu0 0
      %4597 = vmatpush1.bf16.xpose.msra.mxu0 %v3612
      %4598 = vmatprep.subr.bf16.mxu0 0
      %4599 = vmatpush1.bf16.xpose.msra.mxu0 %v3615
      %4600 = vmatprep.subr.bf16.mxu0 0
      %4601 = vmatpush1.bf16.xpose.msra.mxu0 0
      %4602 = vmatprep.subr.bf16.mxu0 0
      %4603 = vmatpush1.bf16.xpose.msra.mxu0 0
      %4604 = vmatprep.subr.bf16.mxu0 0
      %4605 = vmatpush1.bf16.xpose.msra.mxu0 0
      %4606 = vmatprep.subr.bf16.mxu0 0
      %4607 = vmatpush1.bf16.xpose.msra.mxu0 0
      %4608 = vmatprep.subr.bf16.mxu0 0
      %4609 = vmatpush1.bf16.xpose.msra.mxu0 0
      %4610 = vmatprep.subr.bf16.mxu0 0
      %4611 = vmatpush1.bf16.xpose.msra.mxu0 0
      %4612 = vmatprep.subr.bf16.mxu0 0
      %4613 = vmatpush1.bf16.xpose.msra.mxu0 0
      %4614 = vmatprep.subr.bf16.mxu0 0
      %4615 = vmatpush1.bf16.xpose.msra.mxu0 0
      %4616 = vmatprep.subr.bf16.mxu0 0
      %4617 = vmatpush1.bf16.xpose.msra.mxu0 0
      %4618 = vmatprep.subr.bf16.mxu0 0
      %4619 = vmatpush1.bf16.xpose.msra.mxu0 0
      %4620 = vmatprep.subr.bf16.mxu0 0
      %4621 = vmatpush1.bf16.xpose.msra.mxu0 0
      %4622 = vmatprep.mubr.bf16.mxu0 0
      %4623 = vmatmul.mubr.bf16.gmra.mrb[0].mxu0 %v4576
      %v4624 = vpop.f32.mrb[0].mxu0
      %v4625 = vadd.f32 %v785, %v4624
      %v4626 = vpop.f32.mrb[0].mxu0
      %v4627 = vpop.f32.mrb[0].mxu0
      %v4628 = vadd.f32 %v786, %v4627
      %v4629 = vpop.f32.mrb[0].mxu0
      %4630 = vmatprep.mubr.bf16.mxu0 0
      %4631 = vmatmul.mubr.bf16.gmra.mrb[0].mxu0 %v4579
      %v4632 = vpop.f32.mrb[0].mxu0
      %v4633 = vadd.f32 %v787, %v4632
      %v4634 = vpop.f32.mrb[0].mxu0
      %v4635 = vpop.f32.mrb[0].mxu0
      %v4636 = vadd.f32 %v788, %v4635
      %v4637 = vpop.f32.mrb[0].mxu0
      %4638 = vmatprep.mubr.bf16.mxu0 0
      %4639 = vmatmul.mubr.bf16.gmra.mrb[0].mxu0 %v4582
      %v4640 = vpop.f32.mrb[0].mxu0
      %v4641 = vadd.f32 %v789, %v4640
      %v4642 = vpop.f32.mrb[0].mxu0
      %v4643 = vpop.f32.mrb[0].mxu0
      %v4644 = vadd.f32 %v790, %v4643
      %v4645 = vpop.f32.mrb[0].mxu0
      %4646 = vmatprep.mubr.bf16.mxu0 0
      %4647 = vmatmul.mubr.bf16.gmra.mrb[0].mxu0 %v4585
      %v4648 = vpop.f32.mrb[0].mxu0
      %v4649 = vadd.f32 %v791, %v4648
      %v4650 = vpop.f32.mrb[0].mxu0
      %v4651 = vpop.f32.mrb[0].mxu0
      %v4652 = vadd.f32 %v792, %v4651
      %v4653 = vpop.f32.mrb[0].mxu0
      %4654 = vmatprep.mubr.bf16.mxu0 0
      %4655 = vmatmul.mubr.bf16.gmra.mrb[0].mxu0 %v4588
      %v4656 = vpop.f32.mrb[0].mxu0
      %v4657 = vadd.f32 %v793, %v4656
      %v4658 = vpop.f32.mrb[0].mxu0
      %v4659 = vpop.f32.mrb[0].mxu0
      %v4660 = vadd.f32 %v794, %v4659
      %v4661 = vpop.f32.mrb[0].mxu0
      %4662 = vdwg.mxu0
      %v4663 = vsel %vm1344, %v4625, -inf
      %4664 = vmax.xlane.f32.xlu0 %v4663
      %v4665 = vpop.xlane.xlu0 %4664
      %v4666 = vsel %vm1344, %v4628, -inf
      %4667 = vmax.xlane.f32.xlu0 %v4666
      %v4668 = vpop.xlane.xlu0 %4667
      %v4669 = vsel %vm1344, %v4633, -inf
      %4670 = vmax.xlane.f32.xlu0 %v4669
      %v4671 = vpop.xlane.xlu0 %4670
      %v4672 = vsel %vm1344, %v4636, -inf
      %4673 = vmax.xlane.f32.xlu0 %v4672
      %v4674 = vpop.xlane.xlu0 %4673
      %v4675 = vsel %vm1344, %v4641, -inf
      %4676 = vmax.xlane.f32.xlu0 %v4675
      %v4677 = vpop.xlane.xlu0 %4676
      %v4678 = vsel %vm1344, %v4644, -inf
      %4679 = vmax.xlane.f32.xlu0 %v4678
      %v4680 = vpop.xlane.xlu0 %4679
      %v4681 = vsel %vm1344, %v4649, -inf
      %4682 = vmax.xlane.f32.xlu0 %v4681
      %v4683 = vpop.xlane.xlu0 %4682
      %v4684 = vsel %vm1344, %v4652, -inf
      %4685 = vmax.xlane.f32.xlu0 %v4684
      %v4686 = vpop.xlane.xlu0 %4685
      %v4687 = vsel %vm1344, %v4657, -inf
      %4688 = vmax.xlane.f32.xlu0 %v4687
      %v4689 = vpop.xlane.xlu0 %4688
      %v4690 = vsel %vm1344, %v4660, -inf
      %4691 = vmax.xlane.f32.xlu0 %v4690
      %v4692 = vpop.xlane.xlu0 %4691
      %v4693 = vsub.f32 %v4625, %v4665
      %v4694 = vsub.f32 %v4628, %v4668
      %v4695 = vsub.f32 %v4633, %v4671
      %v4696 = vsub.f32 %v4636, %v4674
      %v4697 = vsub.f32 %v4641, %v4677
      %v4698 = vsub.f32 %v4644, %v4680
      %v4699 = vsub.f32 %v4649, %v4683
      %v4700 = vsub.f32 %v4652, %v4686
      %v4701 = vsub.f32 %v4657, %v4689
      %v4702 = vsub.f32 %v4660, %v4692
      %v4703 = vmul.f32 %v4693, 1.442695
      %v4704 = vpow.pop %v4703
      %v4705 = vmul.f32 %v4694, 1.442695
      %v4706 = vpow.pop %v4705
      %v4707 = vmul.f32 %v4695, 1.442695
      %v4708 = vpow.pop %v4707
      %v4709 = vmul.f32 %v4696, 1.442695
      %v4710 = vpow.pop %v4709
      %v4711 = vmul.f32 %v4697, 1.442695
      %v4712 = vpow.pop %v4711
      %v4713 = vmul.f32 %v4698, 1.442695
      %v4714 = vpow.pop %v4713
      %v4715 = vmul.f32 %v4699, 1.442695
      %v4716 = vpow.pop %v4715
      %v4717 = vmul.f32 %v4700, 1.442695
      %v4718 = vpow.pop %v4717
      %v4719 = vmul.f32 %v4701, 1.442695
      %v4720 = vpow.pop %v4719
      %v4721 = vmul.f32 %v4702, 1.442695
      %v4722 = vpow.pop %v4721
      %v4723 = vsel %vm1344, %v4704, 0.0
      %4724 = vadd.xlane.f32.xlu0 %v4723
      %v4725 = vpop.xlane.xlu0 %4724
      %v4726 = vsel %vm1344, %v4706, 0.0
      %4727 = vadd.xlane.f32.xlu0 %v4726
      %v4728 = vpop.xlane.xlu0 %4727
      %v4729 = vsel %vm1344, %v4708, 0.0
      %4730 = vadd.xlane.f32.xlu0 %v4729
      %v4731 = vpop.xlane.xlu0 %4730
      %v4732 = vsel %vm1344, %v4710, 0.0
      %4733 = vadd.xlane.f32.xlu0 %v4732
      %v4734 = vpop.xlane.xlu0 %4733
      %v4735 = vsel %vm1344, %v4712, 0.0
      %4736 = vadd.xlane.f32.xlu0 %v4735
      %v4737 = vpop.xlane.xlu0 %4736
      %v4738 = vsel %vm1344, %v4714, 0.0
      %4739 = vadd.xlane.f32.xlu0 %v4738
      %v4740 = vpop.xlane.xlu0 %4739
      %v4741 = vsel %vm1344, %v4716, 0.0
      %4742 = vadd.xlane.f32.xlu0 %v4741
      %v4743 = vpop.xlane.xlu0 %4742
      %v4744 = vsel %vm1344, %v4718, 0.0
      %4745 = vadd.xlane.f32.xlu0 %v4744
      %v4746 = vpop.xlane.xlu0 %4745
      %v4747 = vsel %vm1344, %v4720, 0.0
      %4748 = vadd.xlane.f32.xlu0 %v4747
      %v4749 = vpop.xlane.xlu0 %4748
      %v4750 = vsel %vm1344, %v4722, 0.0
      %4751 = vadd.xlane.f32.xlu0 %v4750
      %v4752 = vpop.xlane.xlu0 %4751
      %v4753 = vrcp.pop %v4725
      %v4754 = vrcp.pop %v4728
      %v4755 = vrcp.pop %v4731
      %v4756 = vrcp.pop %v4734
      %v4757 = vrcp.pop %v4737
      %v4758 = vrcp.pop %v4740
      %v4759 = vrcp.pop %v4743
      %v4760 = vrcp.pop %v4746
      %v4761 = vrcp.pop %v4749
      %v4762 = vrcp.pop %v4752
      %v4763 = vpack.c.bf16 %v4706, %v4704
      %v4764 = vpack.c.bf16 %v4710, %v4708
      %v4765 = vpack.c.bf16 %v4714, %v4712
      %v4766 = vpack.c.bf16 %v4718, %v4716
      %v4767 = vpack.c.bf16 %v4722, %v4720
      %4773 = vrot.lane.b32.xlu0 %v4239, 64
      %v4774 = vpop.permute.xlu0 %4773
      %4775 = vrot.lane.b32.xlu0 %v4240, 64
      %v4776 = vpop.permute.xlu0 %4775
      %4777 = vrot.lane.b32.xlu0 %v4241, 64
      %v4778 = vpop.permute.xlu0 %4777
      %4779 = vrot.lane.b32.xlu0 %v4242, 64
      %v4780 = vpop.permute.xlu0 %4779
      %4781 = vrot.lane.b32.xlu0 %v4243, 64
      %v4782 = vpop.permute.xlu0 %4781
      %v4789 = vsel %vm1344, %v4763, 0
      %v4792 = vsel %vm1344, %v4764, 0
      %v4795 = vsel %vm1344, %v4765, 0
      %v4798 = vsel %vm1344, %v4766, 0
      %v4801 = vsel %vm1344, %v4767, 0
      %4803 = vmatprep.subr.bf16.mxu0 0
      %4804 = vmatpush1.bf16.msra.mxu0 %v4774
      %4805 = vmatprep.subr.bf16.mxu0 0
      %4806 = vmatpush1.bf16.msra.mxu0 %v4776
      %4807 = vmatprep.subr.bf16.mxu0 0
      %4808 = vmatpush1.bf16.msra.mxu0 %v4778
      %4809 = vmatprep.subr.bf16.mxu0 0
      %4810 = vmatpush1.bf16.msra.mxu0 %v4780
      %4811 = vmatprep.subr.bf16.mxu0 0
      %4812 = vmatpush1.bf16.msra.mxu0 %v4782
      %4813 = vmatprep.subr.bf16.mxu0 0
      %4814 = vmatpush1.bf16.msra.mxu0 0
      %4815 = vmatprep.subr.bf16.mxu0 0
      %4816 = vmatpush1.bf16.msra.mxu0 0
      %4817 = vmatprep.subr.bf16.mxu0 0
      %4818 = vmatpush1.bf16.msra.mxu0 0
      %4819 = vmatprep.subr.bf16.mxu0 0
      %4820 = vmatpush1.bf16.msra.mxu0 0
      %4821 = vmatprep.subr.bf16.mxu0 0
      %4822 = vmatpush1.bf16.msra.mxu0 0
      %4823 = vmatprep.subr.bf16.mxu0 0
      %4824 = vmatpush1.bf16.msra.mxu0 0
      %4825 = vmatprep.subr.bf16.mxu0 0
      %4826 = vmatpush1.bf16.msra.mxu0 0
      %4827 = vmatprep.subr.bf16.mxu0 0
      %4828 = vmatpush1.bf16.msra.mxu0 0
      %4829 = vmatprep.subr.bf16.mxu0 0
      %4830 = vmatpush1.bf16.msra.mxu0 0
      %4831 = vmatprep.subr.bf16.mxu0 0
      %4832 = vmatpush1.bf16.msra.mxu0 0
      %4833 = vmatprep.subr.bf16.mxu0 0
      %4834 = vmatpush1.bf16.msra.mxu0 0
      %4835 = vmatprep.mubr.bf16.mxu0 0
      %4836 = vmatmul.mubr.bf16.gmra.mrb[0].mxu0 %v4789
      %v4837 = vpop.f32.mrb[0].mxu0
      %v4838 = vadd.f32 0.0, %v4837
      %v4839 = vpop.f32.mrb[0].mxu0
      %v4840 = vpop.f32.mrb[0].mxu0
      %v4841 = vadd.f32 0.0, %v4840
      %v4842 = vpop.f32.mrb[0].mxu0
      %4843 = vmatprep.mubr.bf16.mxu0 0
      %4844 = vmatmul.mubr.bf16.gmra.mrb[0].mxu0 %v4792
      %v4845 = vpop.f32.mrb[0].mxu0
      %v4846 = vadd.f32 0.0, %v4845
      %v4847 = vpop.f32.mrb[0].mxu0
      %v4848 = vpop.f32.mrb[0].mxu0
      %v4849 = vadd.f32 0.0, %v4848
      %v4850 = vpop.f32.mrb[0].mxu0
      %4851 = vmatprep.mubr.bf16.mxu0 0
      %4852 = vmatmul.mubr.bf16.gmra.mrb[0].mxu0 %v4795
      %v4853 = vpop.f32.mrb[0].mxu0
      %v4854 = vadd.f32 0.0, %v4853
      %v4855 = vpop.f32.mrb[0].mxu0
      %v4856 = vpop.f32.mrb[0].mxu0
      %v4857 = vadd.f32 0.0, %v4856
      %v4858 = vpop.f32.mrb[0].mxu0
      %4859 = vmatprep.mubr.bf16.mxu0 0
      %4860 = vmatmul.mubr.bf16.gmra.mrb[0].mxu0 %v4798
      %v4861 = vpop.f32.mrb[0].mxu0
      %v4862 = vadd.f32 0.0, %v4861
      %v4863 = vpop.f32.mrb[0].mxu0
      %v4864 = vpop.f32.mrb[0].mxu0
      %v4865 = vadd.f32 0.0, %v4864
      %v4866 = vpop.f32.mrb[0].mxu0
      %4867 = vmatprep.mubr.bf16.mxu0 0
      %4868 = vmatmul.mubr.bf16.gmra.mrb[0].mxu0 %v4801
      %v4869 = vpop.f32.mrb[0].mxu0
      %v4870 = vadd.f32 0.0, %v4869
      %v4871 = vpop.f32.mrb[0].mxu0
      %v4872 = vpop.f32.mrb[0].mxu0
      %v4873 = vadd.f32 0.0, %v4872
      %v4874 = vpop.f32.mrb[0].mxu0
      %4875 = vdwg.mxu0
      %v4876 = vmul.f32 %v4838, %v4753
      %v4877 = vmul.f32 %v4841, %v4754
      %v4878 = vmul.f32 %v4846, %v4755
      %v4879 = vmul.f32 %v4849, %v4756
      %v4880 = vmul.f32 %v4854, %v4757
      %v4881 = vmul.f32 %v4857, %v4758
      %v4882 = vmul.f32 %v4862, %v4759
      %v4883 = vmul.f32 %v4865, %v4760
      %v4884 = vmul.f32 %v4870, %v4761
      %v4885 = vmul.f32 %v4873, %v4762
      %v4886 = vadd.f32 %v4550, %v4876
      %v4887 = vadd.f32 %v4551, %v4877
      %v4888 = vadd.f32 %v4552, %v4878
      %v4889 = vadd.f32 %v4553, %v4879
      %v4890 = vadd.f32 %v4554, %v4880
      %v4891 = vadd.f32 %v4555, %v4881
      %v4892 = vadd.f32 %v4556, %v4882
      %v4893 = vadd.f32 %v4557, %v4883
      %v4894 = vadd.f32 %v4558, %v4884
      %v4895 = vadd.f32 %v4559, %v4885
      %v4896 = vadd.f32 %v3262, %v4886
      %v4897 = vadd.f32 %v3263, %v4887
      %v4898 = vadd.f32 %v3264, %v4888
      %v4899 = vadd.f32 %v3265, %v4889
      %v4900 = vadd.f32 %v3266, %v4890
      %v4901 = vadd.f32 %v3267, %v4891
      %v4902 = vadd.f32 %v3268, %v4892
      %v4903 = vadd.f32 %v3269, %v4893
      %v4904 = vadd.f32 %v3270, %v4894
      %v4905 = vadd.f32 %v3271, %v4895
      %s4906 = scalar_lea.vmem %s9, 1
      %v4907 = vld [vmem:[%s4906] sm:$0x1]
      %v4909 = vlaneseq
      %v4910 = vshrl.u32 %v4909, 7
      %v4911 = vsub.s32 0, %v4910
      %v4912 = vrot.slane %v4907, %v4911
      %v4914 = vadd.f32 %v4896, %v4912
      %v4915 = vadd.f32 %v4897, %v4912
      %v4916 = vadd.f32 %v4898, %v4912
      %v4917 = vadd.f32 %v4899, %v4912
      %v4918 = vadd.f32 %v4900, %v4912
      %v4919 = vadd.f32 %v4901, %v4912
      %v4920 = vadd.f32 %v4902, %v4912
      %v4921 = vadd.f32 %v4903, %v4912
      %v4922 = vadd.f32 %v4904, %v4912
      %v4923 = vadd.f32 %v4905, %v4912
      %s4924 = scalar_lea.vmem %s10, 1
      %v4925 = vld [vmem:[%s4924] sm:$0x1]
      %s4926 = scalar_lea.vmem %s11, 1
      %v4927 = vld [vmem:[%s4926] sm:$0x1]
      %v4928 = vsel %vm1022, %v4914, 0.0
      %4929 = vadd.xlane.f32.xlu0 %v4928
      %v4930 = vpop.xlane.xlu0 %4929
      %v4931 = vsel %vm1022, %v4915, 0.0
      %4932 = vadd.xlane.f32.xlu0 %v4931
      %v4933 = vpop.xlane.xlu0 %4932
      %v4934 = vsel %vm1022, %v4916, 0.0
      %4935 = vadd.xlane.f32.xlu0 %v4934
      %v4936 = vpop.xlane.xlu0 %4935
      %v4937 = vsel %vm1022, %v4917, 0.0
      %4938 = vadd.xlane.f32.xlu0 %v4937
      %v4939 = vpop.xlane.xlu0 %4938
      %v4940 = vsel %vm1022, %v4918, 0.0
      %4941 = vadd.xlane.f32.xlu0 %v4940
      %v4942 = vpop.xlane.xlu0 %4941
      %v4943 = vsel %vm1022, %v4919, 0.0
      %4944 = vadd.xlane.f32.xlu0 %v4943
      %v4945 = vpop.xlane.xlu0 %4944
      %v4946 = vsel %vm1022, %v4920, 0.0
      %4947 = vadd.xlane.f32.xlu0 %v4946
      %v4948 = vpop.xlane.xlu0 %4947
      %v4949 = vsel %vm1022, %v4921, 0.0
      %4950 = vadd.xlane.f32.xlu0 %v4949
      %v4951 = vpop.xlane.xlu0 %4950
      %v4952 = vsel %vm1022, %v4922, 0.0
      %4953 = vadd.xlane.f32.xlu0 %v4952
      %v4954 = vpop.xlane.xlu0 %4953
      %v4955 = vsel %vm1022, %v4923, 0.0
      %4956 = vadd.xlane.f32.xlu0 %v4955
      %v4957 = vpop.xlane.xlu0 %4956
      %v4958 = vmul.f32 %v4930, %v2634
      %v4959 = vmul.f32 %v4933, %v2634
      %v4960 = vmul.f32 %v4936, %v2634
      %v4961 = vmul.f32 %v4939, %v2634
      %v4962 = vmul.f32 %v4942, %v2634
      %v4963 = vmul.f32 %v4945, %v2634
      %v4964 = vmul.f32 %v4948, %v2634
      %v4965 = vmul.f32 %v4951, %v2634
      %v4966 = vmul.f32 %v4954, %v2634
      %v4967 = vmul.f32 %v4957, %v2634
      %v4968 = vmul.f32 %v4914, %v4914
      %v4969 = vmul.f32 %v4915, %v4915
      %v4970 = vmul.f32 %v4916, %v4916
      %v4971 = vmul.f32 %v4917, %v4917
      %v4972 = vmul.f32 %v4918, %v4918
      %v4973 = vmul.f32 %v4919, %v4919
      %v4974 = vmul.f32 %v4920, %v4920
      %v4975 = vmul.f32 %v4921, %v4921
      %v4976 = vmul.f32 %v4922, %v4922
      %v4977 = vmul.f32 %v4923, %v4923
      %v4978 = vsel %vm1022, %v4968, 0.0
      %4979 = vadd.xlane.f32.xlu0 %v4978
      %v4980 = vpop.xlane.xlu0 %4979
      %v4981 = vsel %vm1022, %v4969, 0.0
      %4982 = vadd.xlane.f32.xlu0 %v4981
      %v4983 = vpop.xlane.xlu0 %4982
      %v4984 = vsel %vm1022, %v4970, 0.0
      %4985 = vadd.xlane.f32.xlu0 %v4984
      %v4986 = vpop.xlane.xlu0 %4985
      %v4987 = vsel %vm1022, %v4971, 0.0
      %4988 = vadd.xlane.f32.xlu0 %v4987
      %v4989 = vpop.xlane.xlu0 %4988
      %v4990 = vsel %vm1022, %v4972, 0.0
      %4991 = vadd.xlane.f32.xlu0 %v4990
      %v4992 = vpop.xlane.xlu0 %4991
      %v4993 = vsel %vm1022, %v4973, 0.0
      %4994 = vadd.xlane.f32.xlu0 %v4993
      %v4995 = vpop.xlane.xlu0 %4994
      %v4996 = vsel %vm1022, %v4974, 0.0
      %4997 = vadd.xlane.f32.xlu0 %v4996
      %v4998 = vpop.xlane.xlu0 %4997
      %v4999 = vsel %vm1022, %v4975, 0.0
      %5000 = vadd.xlane.f32.xlu0 %v4999
      %v5001 = vpop.xlane.xlu0 %5000
      %v5002 = vsel %vm1022, %v4976, 0.0
      %5003 = vadd.xlane.f32.xlu0 %v5002
      %v5004 = vpop.xlane.xlu0 %5003
      %v5005 = vsel %vm1022, %v4977, 0.0
      %5006 = vadd.xlane.f32.xlu0 %v5005
      %v5007 = vpop.xlane.xlu0 %5006
      %v5008 = vmul.f32 %v4980, %v2634
      %v5009 = vmul.f32 %v4983, %v2634
      %v5010 = vmul.f32 %v4986, %v2634
      %v5011 = vmul.f32 %v4989, %v2634
      %v5012 = vmul.f32 %v4992, %v2634
      %v5013 = vmul.f32 %v4995, %v2634
      %v5014 = vmul.f32 %v4998, %v2634
      %v5015 = vmul.f32 %v5001, %v2634
      %v5016 = vmul.f32 %v5004, %v2634
      %v5017 = vmul.f32 %v5007, %v2634
      %v5018 = vmul.f32 %v4958, %v4958
      %v5019 = vmul.f32 %v4959, %v4959
      %v5020 = vmul.f32 %v4960, %v4960
      %v5021 = vmul.f32 %v4961, %v4961
      %v5022 = vmul.f32 %v4962, %v4962
      %v5023 = vmul.f32 %v4963, %v4963
      %v5024 = vmul.f32 %v4964, %v4964
      %v5025 = vmul.f32 %v4965, %v4965
      %v5026 = vmul.f32 %v4966, %v4966
      %v5027 = vmul.f32 %v4967, %v4967
      %v5028 = vsub.f32 %v5008, %v5018
      %v5029 = vsub.f32 %v5009, %v5019
      %v5030 = vsub.f32 %v5010, %v5020
      %v5031 = vsub.f32 %v5011, %v5021
      %v5032 = vsub.f32 %v5012, %v5022
      %v5033 = vsub.f32 %v5013, %v5023
      %v5034 = vsub.f32 %v5014, %v5024
      %v5035 = vsub.f32 %v5015, %v5025
      %v5036 = vsub.f32 %v5016, %v5026
      %v5037 = vsub.f32 %v5017, %v5027
      %v5038 = vsub.f32 %v4914, %v4958
      %v5039 = vsub.f32 %v4915, %v4959
      %v5040 = vsub.f32 %v4916, %v4960
      %v5041 = vsub.f32 %v4917, %v4961
      %v5042 = vsub.f32 %v4918, %v4962
      %v5043 = vsub.f32 %v4919, %v4963
      %v5044 = vsub.f32 %v4920, %v4964
      %v5045 = vsub.f32 %v4921, %v4965
      %v5046 = vsub.f32 %v4922, %v4966
      %v5047 = vsub.f32 %v4923, %v4967
      %v5048 = vadd.f32 %v5028, 1e-05
      %v5049 = vadd.f32 %v5029, 1e-05
      %v5050 = vadd.f32 %v5030, 1e-05
      %v5051 = vadd.f32 %v5031, 1e-05
      %v5052 = vadd.f32 %v5032, 1e-05
      %v5053 = vadd.f32 %v5033, 1e-05
      %v5054 = vadd.f32 %v5034, 1e-05
      %v5055 = vadd.f32 %v5035, 1e-05
      %v5056 = vadd.f32 %v5036, 1e-05
      %v5057 = vadd.f32 %v5037, 1e-05
      %v5058 = vrsqrt.pop %v5048
      %v5059 = vrsqrt.pop %v5049
      %v5060 = vrsqrt.pop %v5050
      %v5061 = vrsqrt.pop %v5051
      %v5062 = vrsqrt.pop %v5052
      %v5063 = vrsqrt.pop %v5053
      %v5064 = vrsqrt.pop %v5054
      %v5065 = vrsqrt.pop %v5055
      %v5066 = vrsqrt.pop %v5056
      %v5067 = vrsqrt.pop %v5057
      %v5068 = vmul.f32 %v5038, %v5058
      %v5069 = vmul.f32 %v5039, %v5059
      %v5070 = vmul.f32 %v5040, %v5060
      %v5071 = vmul.f32 %v5041, %v5061
      %v5072 = vmul.f32 %v5042, %v5062
      %v5073 = vmul.f32 %v5043, %v5063
      %v5074 = vmul.f32 %v5044, %v5064
      %v5075 = vmul.f32 %v5045, %v5065
      %v5076 = vmul.f32 %v5046, %v5066
      %v5077 = vmul.f32 %v5047, %v5067
      %v5079 = vlaneseq
      %v5080 = vshrl.u32 %v5079, 7
      %v5081 = vsub.s32 0, %v5080
      %v5082 = vrot.slane %v4925, %v5081
      %v5084 = vmul.f32 %v5068, %v5082
      %v5085 = vmul.f32 %v5069, %v5082
      %v5086 = vmul.f32 %v5070, %v5082
      %v5087 = vmul.f32 %v5071, %v5082
      %v5088 = vmul.f32 %v5072, %v5082
      %v5089 = vmul.f32 %v5073, %v5082
      %v5090 = vmul.f32 %v5074, %v5082
      %v5091 = vmul.f32 %v5075, %v5082
      %v5092 = vmul.f32 %v5076, %v5082
      %v5093 = vmul.f32 %v5077, %v5082
      %v5095 = vlaneseq
      %v5096 = vshrl.u32 %v5095, 7
      %v5097 = vsub.s32 0, %v5096
      %v5098 = vrot.slane %v4927, %v5097
      %v5100 = vadd.f32 %v5084, %v5098
      %v5101 = vadd.f32 %v5085, %v5098
      %v5102 = vadd.f32 %v5086, %v5098
      %v5103 = vadd.f32 %v5087, %v5098
      %v5104 = vadd.f32 %v5088, %v5098
      %v5105 = vadd.f32 %v5089, %v5098
      %v5106 = vadd.f32 %v5090, %v5098
      %v5107 = vadd.f32 %v5091, %v5098
      %v5108 = vadd.f32 %v5092, %v5098
      %v5109 = vadd.f32 %v5093, %v5098
      %v5110 = vpack.c.bf16 %v5101, %v5100
      %v5111 = vpack.c.bf16 %v5103, %v5102
      %v5112 = vpack.c.bf16 %v5105, %v5104
      %v5113 = vpack.c.bf16 %v5107, %v5106
      %v5114 = vpack.c.bf16 %v5109, %v5108
      %s5115 = scalar_lea.vmem %s12, 32
      %v5116 = vld [vmem:[%s5115] sm:$0xf]
      %v5117 = vld [vmem:[%s5115 + $0x4] sm:$0xf]
      %v5118 = vld [vmem:[%s5115 + $0x8] sm:$0xf]
      %v5119 = vld [vmem:[%s5115 + $0xc] sm:$0xf]
      %v5120 = vld [vmem:[%s5115 + $0x10] sm:$0xf]
      %v5121 = vld [vmem:[%s5115 + $0x14] sm:$0xf]
      %v5122 = vld [vmem:[%s5115 + $0x18] sm:$0xf]
      %v5123 = vld [vmem:[%s5115 + $0x1c] sm:$0xf]
      %s5124 = scalar_lea.vmem %s13, 1
      %v5125 = vld [vmem:[%s5124] sm:$0x1]
      %v5127 = vlaneseq
      %v5128 = vshrl.u32 %v5127, 7
      %v5129 = vsub.s32 0, %v5128
      %v5130 = vrot.slane %v5125, %v5129
      %v5140 = vunpack.c.l.b16 %v5116
      %v5141 = vunpack.c.l.b16 %v5117
      %v5142 = vunpack.c.l.b16 %v5118
      %v5143 = vunpack.c.l.b16 %v5119
      %v5144 = vunpack.c.l.b16 %v5120
      %v5145 = vunpack.c.l.b16 %v5121
      %v5146 = vunpack.c.l.b16 %v5122
      %v5147 = vunpack.c.l.b16 %v5123
      %v5148 = vpack.c.b16 %v5141, %v5140
      %v5149 = vpack.c.b16 %v5143, %v5142
      %v5150 = vpack.c.b16 %v5145, %v5144
      %v5151 = vpack.c.b16 %v5147, %v5146
      %v5157 = vsel %vm1022, %v5110, 0
      %v5160 = vsel %vm1022, %v5111, 0
      %v5163 = vsel %vm1022, %v5112, 0
      %v5166 = vsel %vm1022, %v5113, 0
      %v5169 = vsel %vm1022, %v5114, 0
      %5171 = vmatprep.subr.bf16.mxu0 0
      %5172 = vmatpush1.bf16.msra.mxu0 %v5148
      %5173 = vmatprep.subr.bf16.mxu0 0
      %5174 = vmatpush1.bf16.msra.mxu0 %v5149
      %5175 = vmatprep.subr.bf16.mxu0 0
      %5176 = vmatpush1.bf16.msra.mxu0 %v5150
      %5177 = vmatprep.subr.bf16.mxu0 0
      %5178 = vmatpush1.bf16.msra.mxu0 %v5151
      %5179 = vmatprep.subr.bf16.mxu0 0
      %5180 = vmatpush1.bf16.msra.mxu0 0
      %5181 = vmatprep.subr.bf16.mxu0 0
      %5182 = vmatpush1.bf16.msra.mxu0 0
      %5183 = vmatprep.subr.bf16.mxu0 0
      %5184 = vmatpush1.bf16.msra.mxu0 0
      %5185 = vmatprep.subr.bf16.mxu0 0
      %5186 = vmatpush1.bf16.msra.mxu0 0
      %5187 = vmatprep.subr.bf16.mxu0 0
      %5188 = vmatpush1.bf16.msra.mxu0 0
      %5189 = vmatprep.subr.bf16.mxu0 0
      %5190 = vmatpush1.bf16.msra.mxu0 0
      %5191 = vmatprep.subr.bf16.mxu0 0
      %5192 = vmatpush1.bf16.msra.mxu0 0
      %5193 = vmatprep.subr.bf16.mxu0 0
      %5194 = vmatpush1.bf16.msra.mxu0 0
      %5195 = vmatprep.subr.bf16.mxu0 0
      %5196 = vmatpush1.bf16.msra.mxu0 0
      %5197 = vmatprep.subr.bf16.mxu0 0
      %5198 = vmatpush1.bf16.msra.mxu0 0
      %5199 = vmatprep.subr.bf16.mxu0 0
      %5200 = vmatpush1.bf16.msra.mxu0 0
      %5201 = vmatprep.subr.bf16.mxu0 0
      %5202 = vmatpush1.bf16.msra.mxu0 0
      %5203 = vmatprep.mubr.bf16.mxu0 0
      %5204 = vmatmul.mubr.bf16.gmra.mrb[0].mxu0 %v5157
      %v5205 = vpop.f32.mrb[0].mxu0
      %v5206 = vadd.f32 %v5130, %v5205
      %v5207 = vpop.f32.mrb[0].mxu0
      %v5208 = vpop.f32.mrb[0].mxu0
      %v5209 = vadd.f32 %v5130, %v5208
      %v5210 = vpop.f32.mrb[0].mxu0
      %5211 = vmatprep.mubr.bf16.mxu0 0
      %5212 = vmatmul.mubr.bf16.gmra.mrb[0].mxu0 %v5160
      %v5213 = vpop.f32.mrb[0].mxu0
      %v5214 = vadd.f32 %v5130, %v5213
      %v5215 = vpop.f32.mrb[0].mxu0
      %v5216 = vpop.f32.mrb[0].mxu0
      %v5217 = vadd.f32 %v5130, %v5216
      %v5218 = vpop.f32.mrb[0].mxu0
      %5219 = vmatprep.mubr.bf16.mxu0 0
      %5220 = vmatmul.mubr.bf16.gmra.mrb[0].mxu0 %v5163
      %v5221 = vpop.f32.mrb[0].mxu0
      %v5222 = vadd.f32 %v5130, %v5221
      %v5223 = vpop.f32.mrb[0].mxu0
      %v5224 = vpop.f32.mrb[0].mxu0
      %v5225 = vadd.f32 %v5130, %v5224
      %v5226 = vpop.f32.mrb[0].mxu0
      %5227 = vmatprep.mubr.bf16.mxu0 0
      %5228 = vmatmul.mubr.bf16.gmra.mrb[0].mxu0 %v5166
      %v5229 = vpop.f32.mrb[0].mxu0
      %v5230 = vadd.f32 %v5130, %v5229
      %v5231 = vpop.f32.mrb[0].mxu0
      %v5232 = vpop.f32.mrb[0].mxu0
      %v5233 = vadd.f32 %v5130, %v5232
      %v5234 = vpop.f32.mrb[0].mxu0
      %5235 = vmatprep.mubr.bf16.mxu0 0
      %5236 = vmatmul.mubr.bf16.gmra.mrb[0].mxu0 %v5169
      %v5237 = vpop.f32.mrb[0].mxu0
      %v5238 = vadd.f32 %v5130, %v5237
      %v5239 = vpop.f32.mrb[0].mxu0
      %v5240 = vpop.f32.mrb[0].mxu0
      %v5241 = vadd.f32 %v5130, %v5240
      %v5242 = vpop.f32.mrb[0].mxu0
      %5243 = vdwg.mxu0
      %v5244 = vmax.f32 %v5206, 0.0
      %v5245 = vmax.f32 %v5209, 0.0
      %v5246 = vmax.f32 %v5214, 0.0
      %v5247 = vmax.f32 %v5217, 0.0
      %v5248 = vmax.f32 %v5222, 0.0
      %v5249 = vmax.f32 %v5225, 0.0
      %v5250 = vmax.f32 %v5230, 0.0
      %v5251 = vmax.f32 %v5233, 0.0
      %v5252 = vmax.f32 %v5238, 0.0
      %v5253 = vmax.f32 %v5241, 0.0
      %v5254 = vpack.c.bf16 %v5245, %v5244
      %v5255 = vpack.c.bf16 %v5247, %v5246
      %v5256 = vpack.c.bf16 %v5249, %v5248
      %v5257 = vpack.c.bf16 %v5251, %v5250
      %v5258 = vpack.c.bf16 %v5253, %v5252
      %s5259 = scalar_lea.vmem %s14, 64
      %v5260 = vld [vmem:[%s5259] sm:$0xf]
      %v5261 = vld [vmem:[%s5259 + $0x4] sm:$0xf]
      %v5262 = vld [vmem:[%s5259 + $0x8] sm:$0xf]
      %v5263 = vld [vmem:[%s5259 + $0xc] sm:$0xf]
      %v5264 = vld [vmem:[%s5259 + $0x10] sm:$0xf]
      %v5265 = vld [vmem:[%s5259 + $0x14] sm:$0xf]
      %v5266 = vld [vmem:[%s5259 + $0x18] sm:$0xf]
      %v5267 = vld [vmem:[%s5259 + $0x1c] sm:$0xf]
      %v5268 = vld [vmem:[%s5259 + $0x20] sm:$0xf]
      %v5269 = vld [vmem:[%s5259 + $0x24] sm:$0xf]
      %v5270 = vld [vmem:[%s5259 + $0x28] sm:$0xf]
      %v5271 = vld [vmem:[%s5259 + $0x2c] sm:$0xf]
      %v5272 = vld [vmem:[%s5259 + $0x30] sm:$0xf]
      %v5273 = vld [vmem:[%s5259 + $0x34] sm:$0xf]
      %v5274 = vld [vmem:[%s5259 + $0x38] sm:$0xf]
      %v5275 = vld [vmem:[%s5259 + $0x3c] sm:$0xf]
      %s5276 = scalar_lea.vmem %s15, 1
      %v5277 = vld [vmem:[%s5276] sm:$0x1]
      %v5279 = vlaneseq
      %v5280 = vshrl.u32 %v5279, 7
      %v5281 = vsub.s32 0, %v5280
      %v5282 = vrot.slane %v5277, %v5281
      %v5300 = vunpack.c.l.b16 %v5260
      %v5301 = vunpack.c.l.b16 %v5261
      %v5302 = vunpack.c.l.b16 %v5262
      %v5303 = vunpack.c.l.b16 %v5263
      %v5304 = vunpack.c.l.b16 %v5264
      %v5305 = vunpack.c.l.b16 %v5265
      %v5306 = vunpack.c.l.b16 %v5266
      %v5307 = vunpack.c.l.b16 %v5267
      %v5308 = vunpack.c.l.b16 %v5268
      %v5309 = vunpack.c.l.b16 %v5269
      %v5310 = vunpack.c.l.b16 %v5270
      %v5311 = vunpack.c.l.b16 %v5271
      %v5312 = vunpack.c.l.b16 %v5272
      %v5313 = vunpack.c.l.b16 %v5273
      %v5314 = vunpack.c.l.b16 %v5274
      %v5315 = vunpack.c.l.b16 %v5275
      %v5316 = vpack.c.b16 %v5301, %v5300
      %v5317 = vpack.c.b16 %v5303, %v5302
      %v5318 = vpack.c.b16 %v5305, %v5304
      %v5319 = vpack.c.b16 %v5307, %v5306
      %v5320 = vpack.c.b16 %v5309, %v5308
      %v5321 = vpack.c.b16 %v5311, %v5310
      %v5322 = vpack.c.b16 %v5313, %v5312
      %v5323 = vpack.c.b16 %v5315, %v5314
      %5332 = vmatprep.subr.bf16.mxu0 0
      %5333 = vmatpush1.bf16.msra.mxu0 %v5316
      %5334 = vmatprep.subr.bf16.mxu0 0
      %5335 = vmatpush1.bf16.msra.mxu0 %v5317
      %5336 = vmatprep.subr.bf16.mxu0 0
      %5337 = vmatpush1.bf16.msra.mxu0 %v5318
      %5338 = vmatprep.subr.bf16.mxu0 0
      %5339 = vmatpush1.bf16.msra.mxu0 %v5319
      %5340 = vmatprep.subr.bf16.mxu0 0
      %5341 = vmatpush1.bf16.msra.mxu0 %v5320
      %5342 = vmatprep.subr.bf16.mxu0 0
      %5343 = vmatpush1.bf16.msra.mxu0 %v5321
      %5344 = vmatprep.subr.bf16.mxu0 0
      %5345 = vmatpush1.bf16.msra.mxu0 %v5322
      %5346 = vmatprep.subr.bf16.mxu0 0
      %5347 = vmatpush1.bf16.msra.mxu0 %v5323
      %5348 = vmatprep.subr.bf16.mxu0 0
      %5349 = vmatpush1.bf16.msra.mxu0 0
      %5350 = vmatprep.subr.bf16.mxu0 0
      %5351 = vmatpush1.bf16.msra.mxu0 0
      %5352 = vmatprep.subr.bf16.mxu0 0
      %5353 = vmatpush1.bf16.msra.mxu0 0
      %5354 = vmatprep.subr.bf16.mxu0 0
      %5355 = vmatpush1.bf16.msra.mxu0 0
      %5356 = vmatprep.subr.bf16.mxu0 0
      %5357 = vmatpush1.bf16.msra.mxu0 0
      %5358 = vmatprep.subr.bf16.mxu0 0
      %5359 = vmatpush1.bf16.msra.mxu0 0
      %5360 = vmatprep.subr.bf16.mxu0 0
      %5361 = vmatpush1.bf16.msra.mxu0 0
      %5362 = vmatprep.subr.bf16.mxu0 0
      %5363 = vmatpush1.bf16.msra.mxu0 0
      %5364 = vmatprep.mubr.bf16.mxu0 0
      %5365 = vmatmul.mubr.bf16.gmra.mrb[0].mxu0 %v5254
      %v5366 = vpop.f32.mrb[0].mxu0
      %v5367 = vadd.f32 %v5282, %v5366
      %v5368 = vpop.f32.mrb[0].mxu0
      %v5369 = vpop.f32.mrb[0].mxu0
      %v5370 = vadd.f32 %v5282, %v5369
      %v5371 = vpop.f32.mrb[0].mxu0
      %5372 = vmatprep.mubr.bf16.mxu0 0
      %5373 = vmatmul.mubr.bf16.gmra.mrb[0].mxu0 %v5255
      %v5374 = vpop.f32.mrb[0].mxu0
      %v5375 = vadd.f32 %v5282, %v5374
      %v5376 = vpop.f32.mrb[0].mxu0
      %v5377 = vpop.f32.mrb[0].mxu0
      %v5378 = vadd.f32 %v5282, %v5377
      %v5379 = vpop.f32.mrb[0].mxu0
      %5380 = vmatprep.mubr.bf16.mxu0 0
      %5381 = vmatmul.mubr.bf16.gmra.mrb[0].mxu0 %v5256
      %v5382 = vpop.f32.mrb[0].mxu0
      %v5383 = vadd.f32 %v5282, %v5382
      %v5384 = vpop.f32.mrb[0].mxu0
      %v5385 = vpop.f32.mrb[0].mxu0
      %v5386 = vadd.f32 %v5282, %v5385
      %v5387 = vpop.f32.mrb[0].mxu0
      %5388 = vmatprep.mubr.bf16.mxu0 0
      %5389 = vmatmul.mubr.bf16.gmra.mrb[0].mxu0 %v5257
      %v5390 = vpop.f32.mrb[0].mxu0
      %v5391 = vadd.f32 %v5282, %v5390
      %v5392 = vpop.f32.mrb[0].mxu0
      %v5393 = vpop.f32.mrb[0].mxu0
      %v5394 = vadd.f32 %v5282, %v5393
      %v5395 = vpop.f32.mrb[0].mxu0
      %5396 = vmatprep.mubr.bf16.mxu0 0
      %5397 = vmatmul.mubr.bf16.gmra.mrb[0].mxu0 %v5258
      %v5398 = vpop.f32.mrb[0].mxu0
      %v5399 = vadd.f32 %v5282, %v5398
      %v5400 = vpop.f32.mrb[0].mxu0
      %v5401 = vpop.f32.mrb[0].mxu0
      %v5402 = vadd.f32 %v5282, %v5401
      %v5403 = vpop.f32.mrb[0].mxu0
      %5404 = vdwg.mxu0
      %v5405 = vadd.f32 %v5100, %v5367
      %v5406 = vadd.f32 %v5101, %v5370
      %v5407 = vadd.f32 %v5102, %v5375
      %v5408 = vadd.f32 %v5103, %v5378
      %v5409 = vadd.f32 %v5104, %v5383
      %v5410 = vadd.f32 %v5105, %v5386
      %v5411 = vadd.f32 %v5106, %v5391
      %v5412 = vadd.f32 %v5107, %v5394
      %v5413 = vadd.f32 %v5108, %v5399
      %v5414 = vadd.f32 %v5109, %v5402
      %s5415 = scalar_lea.vmem %s16, 1
      %v5416 = vld [vmem:[%s5415] sm:$0x1]
      %s5417 = scalar_lea.vmem %s17, 1
      %v5418 = vld [vmem:[%s5417] sm:$0x1]
      %v5419 = vsel %vm1022, %v5405, 0.0
      %5420 = vadd.xlane.f32.xlu0 %v5419
      %v5421 = vpop.xlane.xlu0 %5420
      %v5422 = vsel %vm1022, %v5406, 0.0
      %5423 = vadd.xlane.f32.xlu0 %v5422
      %v5424 = vpop.xlane.xlu0 %5423
      %v5425 = vsel %vm1022, %v5407, 0.0
      %5426 = vadd.xlane.f32.xlu0 %v5425
      %v5427 = vpop.xlane.xlu0 %5426
      %v5428 = vsel %vm1022, %v5408, 0.0
      %5429 = vadd.xlane.f32.xlu0 %v5428
      %v5430 = vpop.xlane.xlu0 %5429
      %v5431 = vsel %vm1022, %v5409, 0.0
      %5432 = vadd.xlane.f32.xlu0 %v5431
      %v5433 = vpop.xlane.xlu0 %5432
      %v5434 = vsel %vm1022, %v5410, 0.0
      %5435 = vadd.xlane.f32.xlu0 %v5434
      %v5436 = vpop.xlane.xlu0 %5435
      %v5437 = vsel %vm1022, %v5411, 0.0
      %5438 = vadd.xlane.f32.xlu0 %v5437
      %v5439 = vpop.xlane.xlu0 %5438
      %v5440 = vsel %vm1022, %v5412, 0.0
      %5441 = vadd.xlane.f32.xlu0 %v5440
      %v5442 = vpop.xlane.xlu0 %5441
      %v5443 = vsel %vm1022, %v5413, 0.0
      %5444 = vadd.xlane.f32.xlu0 %v5443
      %v5445 = vpop.xlane.xlu0 %5444
      %v5446 = vsel %vm1022, %v5414, 0.0
      %5447 = vadd.xlane.f32.xlu0 %v5446
      %v5448 = vpop.xlane.xlu0 %5447
      %v5449 = vmul.f32 %v5421, %v2634
      %v5450 = vmul.f32 %v5424, %v2634
      %v5451 = vmul.f32 %v5427, %v2634
      %v5452 = vmul.f32 %v5430, %v2634
      %v5453 = vmul.f32 %v5433, %v2634
      %v5454 = vmul.f32 %v5436, %v2634
      %v5455 = vmul.f32 %v5439, %v2634
      %v5456 = vmul.f32 %v5442, %v2634
      %v5457 = vmul.f32 %v5445, %v2634
      %v5458 = vmul.f32 %v5448, %v2634
      %v5459 = vmul.f32 %v5405, %v5405
      %v5460 = vmul.f32 %v5406, %v5406
      %v5461 = vmul.f32 %v5407, %v5407
      %v5462 = vmul.f32 %v5408, %v5408
      %v5463 = vmul.f32 %v5409, %v5409
      %v5464 = vmul.f32 %v5410, %v5410
      %v5465 = vmul.f32 %v5411, %v5411
      %v5466 = vmul.f32 %v5412, %v5412
      %v5467 = vmul.f32 %v5413, %v5413
      %v5468 = vmul.f32 %v5414, %v5414
      %v5469 = vsel %vm1022, %v5459, 0.0
      %5470 = vadd.xlane.f32.xlu0 %v5469
      %v5471 = vpop.xlane.xlu0 %5470
      %v5472 = vsel %vm1022, %v5460, 0.0
      %5473 = vadd.xlane.f32.xlu0 %v5472
      %v5474 = vpop.xlane.xlu0 %5473
      %v5475 = vsel %vm1022, %v5461, 0.0
      %5476 = vadd.xlane.f32.xlu0 %v5475
      %v5477 = vpop.xlane.xlu0 %5476
      %v5478 = vsel %vm1022, %v5462, 0.0
      %5479 = vadd.xlane.f32.xlu0 %v5478
      %v5480 = vpop.xlane.xlu0 %5479
      %v5481 = vsel %vm1022, %v5463, 0.0
      %5482 = vadd.xlane.f32.xlu0 %v5481
      %v5483 = vpop.xlane.xlu0 %5482
      %v5484 = vsel %vm1022, %v5464, 0.0
      %5485 = vadd.xlane.f32.xlu0 %v5484
      %v5486 = vpop.xlane.xlu0 %5485
      %v5487 = vsel %vm1022, %v5465, 0.0
      %5488 = vadd.xlane.f32.xlu0 %v5487
      %v5489 = vpop.xlane.xlu0 %5488
      %v5490 = vsel %vm1022, %v5466, 0.0
      %5491 = vadd.xlane.f32.xlu0 %v5490
      %v5492 = vpop.xlane.xlu0 %5491
      %v5493 = vsel %vm1022, %v5467, 0.0
      %5494 = vadd.xlane.f32.xlu0 %v5493
      %v5495 = vpop.xlane.xlu0 %5494
      %v5496 = vsel %vm1022, %v5468, 0.0
      %5497 = vadd.xlane.f32.xlu0 %v5496
      %v5498 = vpop.xlane.xlu0 %5497
      %v5499 = vmul.f32 %v5471, %v2634
      %v5500 = vmul.f32 %v5474, %v2634
      %v5501 = vmul.f32 %v5477, %v2634
      %v5502 = vmul.f32 %v5480, %v2634
      %v5503 = vmul.f32 %v5483, %v2634
      %v5504 = vmul.f32 %v5486, %v2634
      %v5505 = vmul.f32 %v5489, %v2634
      %v5506 = vmul.f32 %v5492, %v2634
      %v5507 = vmul.f32 %v5495, %v2634
      %v5508 = vmul.f32 %v5498, %v2634
      %v5509 = vmul.f32 %v5449, %v5449
      %v5510 = vmul.f32 %v5450, %v5450
      %v5511 = vmul.f32 %v5451, %v5451
      %v5512 = vmul.f32 %v5452, %v5452
      %v5513 = vmul.f32 %v5453, %v5453
      %v5514 = vmul.f32 %v5454, %v5454
      %v5515 = vmul.f32 %v5455, %v5455
      %v5516 = vmul.f32 %v5456, %v5456
      %v5517 = vmul.f32 %v5457, %v5457
      %v5518 = vmul.f32 %v5458, %v5458
      %v5519 = vsub.f32 %v5499, %v5509
      %v5520 = vsub.f32 %v5500, %v5510
      %v5521 = vsub.f32 %v5501, %v5511
      %v5522 = vsub.f32 %v5502, %v5512
      %v5523 = vsub.f32 %v5503, %v5513
      %v5524 = vsub.f32 %v5504, %v5514
      %v5525 = vsub.f32 %v5505, %v5515
      %v5526 = vsub.f32 %v5506, %v5516
      %v5527 = vsub.f32 %v5507, %v5517
      %v5528 = vsub.f32 %v5508, %v5518
      %v5529 = vsub.f32 %v5405, %v5449
      %v5530 = vsub.f32 %v5406, %v5450
      %v5531 = vsub.f32 %v5407, %v5451
      %v5532 = vsub.f32 %v5408, %v5452
      %v5533 = vsub.f32 %v5409, %v5453
      %v5534 = vsub.f32 %v5410, %v5454
      %v5535 = vsub.f32 %v5411, %v5455
      %v5536 = vsub.f32 %v5412, %v5456
      %v5537 = vsub.f32 %v5413, %v5457
      %v5538 = vsub.f32 %v5414, %v5458
      %v5539 = vadd.f32 %v5519, 1e-05
      %v5540 = vadd.f32 %v5520, 1e-05
      %v5541 = vadd.f32 %v5521, 1e-05
      %v5542 = vadd.f32 %v5522, 1e-05
      %v5543 = vadd.f32 %v5523, 1e-05
      %v5544 = vadd.f32 %v5524, 1e-05
      %v5545 = vadd.f32 %v5525, 1e-05
      %v5546 = vadd.f32 %v5526, 1e-05
      %v5547 = vadd.f32 %v5527, 1e-05
      %v5548 = vadd.f32 %v5528, 1e-05
      %v5549 = vrsqrt.pop %v5539
      %v5550 = vrsqrt.pop %v5540
      %v5551 = vrsqrt.pop %v5541
      %v5552 = vrsqrt.pop %v5542
      %v5553 = vrsqrt.pop %v5543
      %v5554 = vrsqrt.pop %v5544
      %v5555 = vrsqrt.pop %v5545
      %v5556 = vrsqrt.pop %v5546
      %v5557 = vrsqrt.pop %v5547
      %v5558 = vrsqrt.pop %v5548
      %v5559 = vmul.f32 %v5529, %v5549
      %v5560 = vmul.f32 %v5530, %v5550
      %v5561 = vmul.f32 %v5531, %v5551
      %v5562 = vmul.f32 %v5532, %v5552
      %v5563 = vmul.f32 %v5533, %v5553
      %v5564 = vmul.f32 %v5534, %v5554
      %v5565 = vmul.f32 %v5535, %v5555
      %v5566 = vmul.f32 %v5536, %v5556
      %v5567 = vmul.f32 %v5537, %v5557
      %v5568 = vmul.f32 %v5538, %v5558
      %v5570 = vlaneseq
      %v5571 = vshrl.u32 %v5570, 7
      %v5572 = vsub.s32 0, %v5571
      %v5573 = vrot.slane %v5416, %v5572
      %v5575 = vmul.f32 %v5559, %v5573
      %v5576 = vmul.f32 %v5560, %v5573
      %v5577 = vmul.f32 %v5561, %v5573
      %v5578 = vmul.f32 %v5562, %v5573
      %v5579 = vmul.f32 %v5563, %v5573
      %v5580 = vmul.f32 %v5564, %v5573
      %v5581 = vmul.f32 %v5565, %v5573
      %v5582 = vmul.f32 %v5566, %v5573
      %v5583 = vmul.f32 %v5567, %v5573
      %v5584 = vmul.f32 %v5568, %v5573
      %v5586 = vlaneseq
      %v5587 = vshrl.u32 %v5586, 7
      %v5588 = vsub.s32 0, %v5587
      %v5589 = vrot.slane %v5418, %v5588
      %v5591 = vadd.f32 %v5575, %v5589
      %v5592 = vadd.f32 %v5576, %v5589
      %v5593 = vadd.f32 %v5577, %v5589
      %v5594 = vadd.f32 %v5578, %v5589
      %v5595 = vadd.f32 %v5579, %v5589
      %v5596 = vadd.f32 %v5580, %v5589
      %v5597 = vadd.f32 %v5581, %v5589
      %v5598 = vadd.f32 %v5582, %v5589
      %v5599 = vadd.f32 %v5583, %v5589
      %v5600 = vadd.f32 %v5584, %v5589
      %v5601 = vld [vmem:[%s3] sm:$0xf]
      %v5602 = vpack.c.bf16 %v5592, %v5591
      %v5603 = vpack.c.bf16 %v5594, %v5593
      %v5604 = vpack.c.bf16 %v5596, %v5595
      %v5605 = vpack.c.bf16 %v5598, %v5597
      %v5606 = vpack.c.bf16 %v5600, %v5599
      %v5608 = vsel %vm1344, %v5601, 0
      %5610 = vmatprep.subr.bf16.mxu0 0
      %5611 = vmatpush1.bf16.msra.mxu0 %v5602
      %5612 = vmatprep.subr.bf16.mxu0 0
      %5613 = vmatpush1.bf16.msra.mxu0 %v5603
      %5614 = vmatprep.subr.bf16.mxu0 0
      %5615 = vmatpush1.bf16.msra.mxu0 %v5604
      %5616 = vmatprep.subr.bf16.mxu0 0
      %5617 = vmatpush1.bf16.msra.mxu0 %v5605
      %5618 = vmatprep.subr.bf16.mxu0 0
      %5619 = vmatpush1.bf16.msra.mxu0 %v5606
      %5620 = vmatprep.subr.bf16.mxu0 0
      %5621 = vmatpush1.bf16.msra.mxu0 0
      %5622 = vmatprep.subr.bf16.mxu0 0
      %5623 = vmatpush1.bf16.msra.mxu0 0
      %5624 = vmatprep.subr.bf16.mxu0 0
      %5625 = vmatpush1.bf16.msra.mxu0 0
      %5626 = vmatprep.subr.bf16.mxu0 0
      %5627 = vmatpush1.bf16.msra.mxu0 0
      %5628 = vmatprep.subr.bf16.mxu0 0
      %5629 = vmatpush1.bf16.msra.mxu0 0
      %5630 = vmatprep.subr.bf16.mxu0 0
      %5631 = vmatpush1.bf16.msra.mxu0 0
      %5632 = vmatprep.subr.bf16.mxu0 0
      %5633 = vmatpush1.bf16.msra.mxu0 0
      %5634 = vmatprep.subr.bf16.mxu0 0
      %5635 = vmatpush1.bf16.msra.mxu0 0
      %5636 = vmatprep.subr.bf16.mxu0 0
      %5637 = vmatpush1.bf16.msra.mxu0 0
      %5638 = vmatprep.subr.bf16.mxu0 0
      %5639 = vmatpush1.bf16.msra.mxu0 0
      %5640 = vmatprep.subr.bf16.mxu0 0
      %5641 = vmatpush1.bf16.msra.mxu0 0
      %5642 = vmatprep.mubr.bf16.mxu0 0
      %5643 = vmatmul.mubr.bf16.gmra.mrb[0].mxu0 %v5608
      %v5644 = vpop.f32.mrb[0].mxu0
      %v5645 = vadd.f32 0.0, %v5644
      %v5646 = vpop.f32.mrb[0].mxu0
      %v5647 = vpop.f32.mrb[0].mxu0
      %v5648 = vpop.f32.mrb[0].mxu0
      %5649 = vdwg.mxu0
      %v5650 = vld [vmem:[%s779] sm:$0xff]
      %v5651 = vpack.c.bf16 %v5650, %v5650
      %v5652 = vld [vmem:[%s18] sm:$0xf]
      %v5653 = vld [vmem:[%s18 + $0x4] sm:$0xf]
      %v5654 = vld [vmem:[%s18 + $0x8] sm:$0xf]
      %v5655 = vld [vmem:[%s19] sm:$0x1]
      %v5657 = vlaneseq
      %v5658 = vshrl.u32 %v5657, 7
      %v5659 = vsub.s32 0, %v5658
      %v5660 = vrot.slane %v5655, %v5659
      %v5665 = vunpack.c.l.b16 %v5652
      %v5666 = vunpack.c.l.b16 %v5653
      %v5667 = vunpack.c.l.b16 %v5654
      %v5668 = vpack.c.b16 %v5666, %v5665
      %v5669 = vpack.c.b16 %v5667, %v5667
      %vm5671 = vcmask 187392
      %v5673 = vsel %vm5671, %v5651, 0
      %vm5675 = vcmask 1042432
      %vm5676 = vcmask 1043456
      %v5677 = vsel %vm5675, 4294967295, 65535
      %v5678 = vsel %vm5676, %v5677, 0
      %v5680 = vand.u32 %v5669, %v5678
      %5682 = vmatprep.subr.bf16.mxu0 0
      %5683 = vmatpush1.bf16.msra.mxu0 %v5668
      %5684 = vmatprep.subr.bf16.mxu0 0
      %5685 = vmatpush1.bf16.msra.mxu0 %v5680
      %5686 = vmatprep.subr.bf16.mxu0 0
      %5687 = vmatpush1.bf16.msra.mxu0 0
      %5688 = vmatprep.subr.bf16.mxu0 0
      %5689 = vmatpush1.bf16.msra.mxu0 0
      %5690 = vmatprep.subr.bf16.mxu0 0
      %5691 = vmatpush1.bf16.msra.mxu0 0
      %5692 = vmatprep.subr.bf16.mxu0 0
      %5693 = vmatpush1.bf16.msra.mxu0 0
      %5694 = vmatprep.subr.bf16.mxu0 0
      %5695 = vmatpush1.bf16.msra.mxu0 0
      %5696 = vmatprep.subr.bf16.mxu0 0
      %5697 = vmatpush1.bf16.msra.mxu0 0
      %5698 = vmatprep.subr.bf16.mxu0 0
      %5699 = vmatpush1.bf16.msra.mxu0 0
      %5700 = vmatprep.subr.bf16.mxu0 0
      %5701 = vmatpush1.bf16.msra.mxu0 0
      %5702 = vmatprep.subr.bf16.mxu0 0
      %5703 = vmatpush1.bf16.msra.mxu0 0
      %5704 = vmatprep.subr.bf16.mxu0 0
      %5705 = vmatpush1.bf16.msra.mxu0 0
      %5706 = vmatprep.subr.bf16.mxu0 0
      %5707 = vmatpush1.bf16.msra.mxu0 0
      %5708 = vmatprep.subr.bf16.mxu0 0
      %5709 = vmatpush1.bf16.msra.mxu0 0
      %5710 = vmatprep.subr.bf16.mxu0 0
      %5711 = vmatpush1.bf16.msra.mxu0 0
      %5712 = vmatprep.subr.bf16.mxu0 0
      %5713 = vmatpush1.bf16.msra.mxu0 0
      %5714 = vmatprep.mubr.bf16.mxu0 0
      %5715 = vmatmul.mubr.bf16.gmra.mrb[0].mxu0 %v5673
      %v5716 = vpop.f32.mrb[0].mxu0
      %v5717 = vadd.f32 %v5660, %v5716
      %v5718 = vpop.f32.mrb[0].mxu0
      %v5719 = vpop.f32.mrb[0].mxu0
      %v5720 = vpop.f32.mrb[0].mxu0
      %5721 = vdwg.mxu0
      %v5722 = vmax.f32 %v5717, 0.0
      %v5723 = vpack.c.bf16 %v5645, %v5645
      %v5724 = vld [vmem:[%s20] sm:$0xf]
      %v5725 = vld [vmem:[%s20 + $0x4] sm:$0xf]
      %v5726 = vld [vmem:[%s20 + $0x8] sm:$0xf]
      %v5727 = vld [vmem:[%s20 + $0xc] sm:$0xf]
      %v5728 = vld [vmem:[%s20 + $0x10] sm:$0xf]
      %v5729 = vld [vmem:[%s20 + $0x14] sm:$0xf]
      %v5730 = vld [vmem:[%s20 + $0x18] sm:$0xf]
      %v5731 = vld [vmem:[%s20 + $0x1c] sm:$0xf]
      %v5732 = vpack.c.bf16 %v5722, %v5722
      %v5733 = vld [vmem:[%s21] sm:$0xf]
      %v5734 = vld [vmem:[%s21 + $0x4] sm:$0xf]
      %v5735 = vld [vmem:[%s21 + $0x8] sm:$0xf]
      %v5736 = vld [vmem:[%s21 + $0xc] sm:$0xf]
      %v5737 = vld [vmem:[%s21 + $0x10] sm:$0xf]
      %v5738 = vld [vmem:[%s21 + $0x14] sm:$0xf]
      %v5739 = vld [vmem:[%s21 + $0x18] sm:$0xf]
      %v5740 = vld [vmem:[%s21 + $0x1c] sm:$0xf]
      %v5741 = vld [vmem:[%s21 + $0x20] sm:$0xf]
      %v5742 = vld [vmem:[%s21 + $0x24] sm:$0xf]
      %v5743 = vld [vmem:[%s21 + $0x28] sm:$0xf]
      %v5744 = vld [vmem:[%s21 + $0x2c] sm:$0xf]
      %v5745 = vld [vmem:[%s21 + $0x30] sm:$0xf]
      %v5746 = vld [vmem:[%s21 + $0x34] sm:$0xf]
      %v5747 = vld [vmem:[%s21 + $0x38] sm:$0xf]
      %v5748 = vld [vmem:[%s21 + $0x3c] sm:$0xf]
      %v5765 = vunpack.c.l.b16 %v5733
      %v5766 = vunpack.c.l.b16 %v5734
      %v5767 = vunpack.c.l.b16 %v5735
      %v5768 = vunpack.c.l.b16 %v5736
      %v5769 = vunpack.c.l.b16 %v5737
      %v5770 = vunpack.c.l.b16 %v5738
      %v5771 = vunpack.c.l.b16 %v5739
      %v5772 = vunpack.c.l.b16 %v5740
      %v5773 = vunpack.c.l.b16 %v5741
      %v5774 = vunpack.c.l.b16 %v5742
      %v5775 = vunpack.c.l.b16 %v5743
      %v5776 = vunpack.c.l.b16 %v5744
      %v5777 = vunpack.c.l.b16 %v5745
      %v5778 = vunpack.c.l.b16 %v5746
      %v5779 = vunpack.c.l.b16 %v5747
      %v5780 = vunpack.c.l.b16 %v5748
      %v5781 = vpack.c.b16 %v5766, %v5765
      %v5782 = vpack.c.b16 %v5768, %v5767
      %v5783 = vpack.c.b16 %v5770, %v5769
      %v5784 = vpack.c.b16 %v5772, %v5771
      %v5785 = vpack.c.b16 %v5774, %v5773
      %v5786 = vpack.c.b16 %v5776, %v5775
      %v5787 = vpack.c.b16 %v5778, %v5777
      %v5788 = vpack.c.b16 %v5780, %v5779
      %5797 = vmatprep.subr.bf16.mxu0 0
      %5798 = vmatpush1.bf16.msra.mxu0 %v5781
      %5799 = vmatprep.subr.bf16.mxu0 0
      %5800 = vmatpush1.bf16.msra.mxu0 %v5782
      %5801 = vmatprep.subr.bf16.mxu0 0
      %5802 = vmatpush1.bf16.msra.mxu0 %v5783
      %5803 = vmatprep.subr.bf16.mxu0 0
      %5804 = vmatpush1.bf16.msra.mxu0 %v5784
      %5805 = vmatprep.subr.bf16.mxu0 0
      %5806 = vmatpush1.bf16.msra.mxu0 %v5785
      %5807 = vmatprep.subr.bf16.mxu0 0
      %5808 = vmatpush1.bf16.msra.mxu0 %v5786
      %5809 = vmatprep.subr.bf16.mxu0 0
      %5810 = vmatpush1.bf16.msra.mxu0 %v5787
      %5811 = vmatprep.subr.bf16.mxu0 0
      %5812 = vmatpush1.bf16.msra.mxu0 %v5788
      %5813 = vmatprep.subr.bf16.mxu0 0
      %5814 = vmatpush1.bf16.msra.mxu0 0
      %5815 = vmatprep.subr.bf16.mxu0 0
      %5816 = vmatpush1.bf16.msra.mxu0 0
      %5817 = vmatprep.subr.bf16.mxu0 0
      %5818 = vmatpush1.bf16.msra.mxu0 0
      %5819 = vmatprep.subr.bf16.mxu0 0
      %5820 = vmatpush1.bf16.msra.mxu0 0
      %5821 = vmatprep.subr.bf16.mxu0 0
      %5822 = vmatpush1.bf16.msra.mxu0 0
      %5823 = vmatprep.subr.bf16.mxu0 0
      %5824 = vmatpush1.bf16.msra.mxu0 0
      %5825 = vmatprep.subr.bf16.mxu0 0
      %5826 = vmatpush1.bf16.msra.mxu0 0
      %5827 = vmatprep.subr.bf16.mxu0 0
      %5828 = vmatpush1.bf16.msra.mxu0 0
      %5829 = vmatprep.mubr.bf16.mxu0 0
      %5830 = vmatmul.mubr.bf16.gmra.mrb[0].mxu0 %v5732
      %v5831 = vpop.f32.mrb[0].mxu0
      %v5832 = vadd.f32 0.0, %v5831
      %v5833 = vpop.f32.mrb[0].mxu0
      %v5834 = vpop.f32.mrb[0].mxu0
      %v5835 = vpop.f32.mrb[0].mxu0
      %5836 = vdwg.mxu0
      %v5845 = vunpack.c.l.b16 %v5724
      %v5846 = vunpack.c.l.b16 %v5725
      %v5847 = vunpack.c.l.b16 %v5726
      %v5848 = vunpack.c.l.b16 %v5727
      %v5849 = vunpack.c.l.b16 %v5728
      %v5850 = vunpack.c.l.b16 %v5729
      %v5851 = vunpack.c.l.b16 %v5730
      %v5852 = vunpack.c.l.b16 %v5731
      %v5853 = vpack.c.b16 %v5846, %v5845
      %v5854 = vpack.c.b16 %v5848, %v5847
      %v5855 = vpack.c.b16 %v5850, %v5849
      %v5856 = vpack.c.b16 %v5852, %v5851
      %v5862 = vsel %vm1022, %v5723, 0
      %5864 = vmatprep.subr.bf16.mxu0 0
      %5865 = vmatpush1.bf16.msra.mxu0 %v5853
      %5866 = vmatprep.subr.bf16.mxu0 0
      %5867 = vmatpush1.bf16.msra.mxu0 %v5854
      %5868 = vmatprep.subr.bf16.mxu0 0
      %5869 = vmatpush1.bf16.msra.mxu0 %v5855
      %5870 = vmatprep.subr.bf16.mxu0 0
      %5871 = vmatpush1.bf16.msra.mxu0 %v5856
      %5872 = vmatprep.subr.bf16.mxu0 0
      %5873 = vmatpush1.bf16.msra.mxu0 0
      %5874 = vmatprep.subr.bf16.mxu0 0
      %5875 = vmatpush1.bf16.msra.mxu0 0
      %5876 = vmatprep.subr.bf16.mxu0 0
      %5877 = vmatpush1.bf16.msra.mxu0 0
      %5878 = vmatprep.subr.bf16.mxu0 0
      %5879 = vmatpush1.bf16.msra.mxu0 0
      %5880 = vmatprep.subr.bf16.mxu0 0
      %5881 = vmatpush1.bf16.msra.mxu0 0
      %5882 = vmatprep.subr.bf16.mxu0 0
      %5883 = vmatpush1.bf16.msra.mxu0 0
      %5884 = vmatprep.subr.bf16.mxu0 0
      %5885 = vmatpush1.bf16.msra.mxu0 0
      %5886 = vmatprep.subr.bf16.mxu0 0
      %5887 = vmatpush1.bf16.msra.mxu0 0
      %5888 = vmatprep.subr.bf16.mxu0 0
      %5889 = vmatpush1.bf16.msra.mxu0 0
      %5890 = vmatprep.subr.bf16.mxu0 0
      %5891 = vmatpush1.bf16.msra.mxu0 0
      %5892 = vmatprep.subr.bf16.mxu0 0
      %5893 = vmatpush1.bf16.msra.mxu0 0
      %5894 = vmatprep.subr.bf16.mxu0 0
      %5895 = vmatpush1.bf16.msra.mxu0 0
      %5896 = vmatprep.mubr.bf16.mxu0 0
      %5897 = vmatmul.mubr.bf16.gmra.mrb[0].mxu0 %v5862
      %v5898 = vpop.f32.mrb[0].mxu0
      %v5899 = vadd.f32 %v5832, %v5898
      %v5900 = vpop.f32.mrb[0].mxu0
      %v5901 = vpop.f32.mrb[0].mxu0
      %v5902 = vpop.f32.mrb[0].mxu0
      %5903 = vdwg.mxu0
      %v5904 = vld [vmem:[%s22] sm:$0x1]
      %v5906 = vlaneseq
      %v5907 = vshrl.u32 %v5906, 7
      %v5908 = vsub.s32 0, %v5907
      %v5909 = vrot.slane %v5904, %v5908
      %v5911 = vadd.f32 %v5899, %v5909
      %v5912 = vmax.f32 %v5911, 0.0
      %v5913 = vpack.c.bf16 %v5912, %v5912
      %v5914 = vld [vmem:[%s23] sm:$0xf]
      %v5915 = vld [vmem:[%s23 + $0x4] sm:$0xf]
      %v5916 = vld [vmem:[%s23 + $0x8] sm:$0xf]
      %v5917 = vld [vmem:[%s23 + $0xc] sm:$0xf]
      %v5918 = vld [vmem:[%s23 + $0x10] sm:$0xf]
      %v5919 = vld [vmem:[%s23 + $0x14] sm:$0xf]
      %v5920 = vld [vmem:[%s23 + $0x18] sm:$0xf]
      %v5921 = vld [vmem:[%s23 + $0x1c] sm:$0xf]
      %v5922 = vld [vmem:[%s23 + $0x20] sm:$0xf]
      %v5923 = vld [vmem:[%s23 + $0x24] sm:$0xf]
      %v5924 = vld [vmem:[%s23 + $0x28] sm:$0xf]
      %v5925 = vld [vmem:[%s23 + $0x2c] sm:$0xf]
      %v5926 = vld [vmem:[%s23 + $0x30] sm:$0xf]
      %v5927 = vld [vmem:[%s23 + $0x34] sm:$0xf]
      %v5928 = vld [vmem:[%s23 + $0x38] sm:$0xf]
      %v5929 = vld [vmem:[%s23 + $0x3c] sm:$0xf]
      %v5930 = vld [vmem:[#allocation2] sm:$0x1]
      %v5932 = vlaneseq
      %v5933 = vshrl.u32 %v5932, 7
      %v5934 = vsub.s32 0, %v5933
      %v5935 = vrot.slane %v5930, %v5934
      %v5953 = vunpack.c.l.b16 %v5914
      %v5954 = vunpack.c.l.b16 %v5915
      %v5955 = vunpack.c.l.b16 %v5916
      %v5956 = vunpack.c.l.b16 %v5917
      %v5957 = vunpack.c.l.b16 %v5918
      %v5958 = vunpack.c.l.b16 %v5919
      %v5959 = vunpack.c.l.b16 %v5920
      %v5960 = vunpack.c.l.b16 %v5921
      %v5961 = vunpack.c.l.b16 %v5922
      %v5962 = vunpack.c.l.b16 %v5923
      %v5963 = vunpack.c.l.b16 %v5924
      %v5964 = vunpack.c.l.b16 %v5925
      %v5965 = vunpack.c.l.b16 %v5926
      %v5966 = vunpack.c.l.b16 %v5927
      %v5967 = vunpack.c.l.b16 %v5928
      %v5968 = vunpack.c.l.b16 %v5929
      %v5969 = vpack.c.b16 %v5954, %v5953
      %v5970 = vpack.c.b16 %v5956, %v5955
      %v5971 = vpack.c.b16 %v5958, %v5957
      %v5972 = vpack.c.b16 %v5960, %v5959
      %v5973 = vpack.c.b16 %v5962, %v5961
      %v5974 = vpack.c.b16 %v5964, %v5963
      %v5975 = vpack.c.b16 %v5966, %v5965
      %v5976 = vpack.c.b16 %v5968, %v5967
      %5985 = vmatprep.subr.bf16.mxu0 0
      %5986 = vmatpush1.bf16.msra.mxu0 %v5969
      %5987 = vmatprep.subr.bf16.mxu0 0
      %5988 = vmatpush1.bf16.msra.mxu0 %v5970
      %5989 = vmatprep.subr.bf16.mxu0 0
      %5990 = vmatpush1.bf16.msra.mxu0 %v5971
      %5991 = vmatprep.subr.bf16.mxu0 0
      %5992 = vmatpush1.bf16.msra.mxu0 %v5972
      %5993 = vmatprep.subr.bf16.mxu0 0
      %5994 = vmatpush1.bf16.msra.mxu0 %v5973
      %5995 = vmatprep.subr.bf16.mxu0 0
      %5996 = vmatpush1.bf16.msra.mxu0 %v5974
      %5997 = vmatprep.subr.bf16.mxu0 0
      %5998 = vmatpush1.bf16.msra.mxu0 %v5975
      %5999 = vmatprep.subr.bf16.mxu0 0
      %6000 = vmatpush1.bf16.msra.mxu0 %v5976
      %6001 = vmatprep.subr.bf16.mxu0 0
      %6002 = vmatpush1.bf16.msra.mxu0 0
      %6003 = vmatprep.subr.bf16.mxu0 0
      %6004 = vmatpush1.bf16.msra.mxu0 0
      %6005 = vmatprep.subr.bf16.mxu0 0
      %6006 = vmatpush1.bf16.msra.mxu0 0
      %6007 = vmatprep.subr.bf16.mxu0 0
      %6008 = vmatpush1.bf16.msra.mxu0 0
      %6009 = vmatprep.subr.bf16.mxu0 0
      %6010 = vmatpush1.bf16.msra.mxu0 0
      %6011 = vmatprep.subr.bf16.mxu0 0
      %6012 = vmatpush1.bf16.msra.mxu0 0
      %6013 = vmatprep.subr.bf16.mxu0 0
      %6014 = vmatpush1.bf16.msra.mxu0 0
      %6015 = vmatprep.subr.bf16.mxu0 0
      %6016 = vmatpush1.bf16.msra.mxu0 0
      %6017 = vmatprep.mubr.bf16.mxu0 0
      %6018 = vmatmul.mubr.bf16.gmra.mrb[0].mxu0 %v5913
      %v6019 = vpop.f32.mrb[0].mxu0
      %v6020 = vadd.f32 %v5935, %v6019
      %v6021 = vpop.f32.mrb[0].mxu0
      %v6022 = vpop.f32.mrb[0].mxu0
      %v6023 = vpop.f32.mrb[0].mxu0
      %6024 = vdwg.mxu0
      %vm6025 = vcmask 7168
      %6026 = vst.msk [vmem:[%s783] sm:$0xff] %vm6025, %v6020
      %p6027 = scmp.lt.s32.totalorder %s38, 5
      %s6028 = scalar_select %p6027, %s38, 5
      %s6029 = smul.addr %s6028, 8
      %s6030 = scalar_lea.vmem %s25, %s6029
      // Predicated region
      $region121: #{tpu_custom_call.1} parent=119 // pred_check
        %p6031 = pneg %p591
      $region122: #{tpu_custom_call.1} parent=119 // pred_check_branch
        %6033 = sbr.rel (%p6031) target = $region124
      $region123: #{tpu_custom_call.1} parent=119 // pred_region
        _
      $region124: #{tpu_custom_call.1} parent=119 // pred_fallthru
        _
    $region120: #{tpu_custom_call.1} parent=5 // pred_fallthru
      _
    %p6034 = scmp.le.s32.totalorder 2, %s33
    // Predicated region
    $region125: #{tpu_custom_call.1} parent=5 // pred_check
      %p6035 = pneg %p6034
    $region126: #{tpu_custom_call.1} parent=5 // pred_check_branch
      %6037 = sbr.rel (%p6035) target = $region128
    $region127: #{tpu_custom_call.1} parent=5 // pred_region
      %s6038 = ssub.s32 %s33, 2
      // Predicated region
      $region129: #{tpu_custom_call.1} parent=127 // pred_check
        %p6039 = pneg %p597
      $region130: #{tpu_custom_call.1} parent=127 // pred_check_branch
        %6041 = sbr.rel (%p6039) target = $region132
      $region131: #{tpu_custom_call.1} parent=127 // pred_region
        %p6042 = scmp.lt.s32.totalorder %s39, 5
        %s6043 = scalar_select %p6042, %s39, 5
        %s6044 = smul.addr %s6043, 8
        %s6045 = scalar_lea.vmem %s25, %s6044
      $region132: #{tpu_custom_call.1} parent=127 // pred_fallthru
        _
    $region128: #{tpu_custom_call.1} parent=5 // pred_fallthru
      _
  $region6: #{tpu_custom_call.1} parent=0 // loop_footer
    %s37 = sadd.s32 1, %s33
  $region7: #{tpu_custom_call.1} parent=0 // loop_footer_branch
    %32 = sbr.rel target = $region3
  $region8: #{tpu_custom_call.1} parent=0 // loop_exit
    _

</llo_original>
